<compile_context>
chip_gen: v5e
topology: v5e:2x2
jax: 0.10.0
libtpu: 0.0.40
codegen_flags: <defaults>
</compile_context>

<pallas_src>
import jax
import jax.numpy as jnp
from jax.experimental import pallas as pl
from jax.experimental.pallas import tpu as pltpu


# -----------------------------------------------------------------------------
# Fused conv stack: Conv(3->32)+ReLU -> Conv(32->64)+ReLU -> Conv(64->64)+ReLU
# -----------------------------------------------------------------------------
# Activations are row-flattened as (H*21, C) at every stage.  Columns beyond the
# true output width hold garbage that never reaches a valid output (a 2x2 /
# stride-1 conv only looks one column to the right), and the 3 garbage columns
# of the final stage are dropped by the (tiny) wrapper-side slice.
_H0, _W0, _C0 = 21, 21, 3
_PAD_ROWS = 448                       # >= 21*21 + 22 (largest shifted-slice end)
_OFF = (0, 1, _W0, _W0 + 1)           # (dy, dx) -> dy*21 + dx, with i = kh*2 + kw
_R1, _C1 = 20 * 21, 32                # conv1 "virtual" rows (h<20, w<21)
_R2, _C2 = 19 * 21, 64                # conv2 "virtual" rows
_R3, _C3 = 18 * 21, 64                # conv3 "virtual" rows


def _fused_conv_kernel(x_ref, w1_ref, b1_ref, w2_ref, b2_ref, w3_ref, b3_ref,
                       o_ref, h1_ref, h2_ref):
    # Zero the scratch so the few padding rows read below are defined (they only
    # ever feed garbage output columns, but keep them finite/clean).
    h1_ref[...] = jnp.zeros_like(h1_ref)
    h2_ref[...] = jnp.zeros_like(h2_ref)

    # conv1: (420, 3) x (3, 32), 4 shifted slices
    a1 = jnp.zeros((_R1, _C1), jnp.float32)
    for i in range(4):
        a1 += jnp.dot(x_ref[0, _OFF[i]:_OFF[i] + _R1, :], w1_ref[i],
                      preferred_element_type=jnp.float32)
    h1_ref[0:_R1, :] = jnp.maximum(a1 + b1_ref[...], 0.0)

    # conv2: (399, 32) x (32, 64)
    a2 = jnp.zeros((_R2, _C2), jnp.float32)
    for i in range(4):
        a2 += jnp.dot(h1_ref[_OFF[i]:_OFF[i] + _R2, :], w2_ref[i],
                      preferred_element_type=jnp.float32)
    h2_ref[0:_R2, :] = jnp.maximum(a2 + b2_ref[...], 0.0)

    # conv3: (378, 64) x (64, 64) -> bf16 output feeding the Linear
    a3 = jnp.zeros((_R3, _C3), jnp.float32)
    for i in range(4):
        a3 += jnp.dot(h2_ref[_OFF[i]:_OFF[i] + _R3, :], w3_ref[i],
                      preferred_element_type=jnp.float32)
    o_ref[0] = jnp.maximum(a3 + b3_ref[...], 0.0).astype(o_ref.dtype)


def fused_convs(x_pad, w1, b1, w2, b2, w3, b3):
    """x_pad: (N, 448, 3) f32 row-flattened NHWC input.  Returns (N, 378, 64) bf16."""
    n = x_pad.shape[0]
    return pl.pallas_call(
        _fused_conv_kernel,
        out_shape=jax.ShapeDtypeStruct((n, _R3, _C3), jnp.bfloat16),
        grid_spec=pltpu.PrefetchScalarGridSpec(
            num_scalar_prefetch=0,
            grid=(n,),
            in_specs=[
                pl.BlockSpec((1, _PAD_ROWS, _C0), lambda b: (b, 0, 0)),
                pl.BlockSpec((4, _C0, _C1), lambda b: (0, 0, 0)),
                pl.BlockSpec((1, _C1), lambda b: (0, 0)),
                pl.BlockSpec((4, _C1, _C2), lambda b: (0, 0, 0)),
                pl.BlockSpec((1, _C2), lambda b: (0, 0)),
                pl.BlockSpec((4, _C2, _C3), lambda b: (0, 0, 0)),
                pl.BlockSpec((1, _C3), lambda b: (0, 0)),
            ],
            out_specs=pl.BlockSpec((1, _R3, _C3), lambda b: (b, 0, 0)),
            scratch_shapes=[pltpu.VMEM((_PAD_ROWS, _C1), jnp.float32),
                            pltpu.VMEM((_PAD_ROWS, _C2), jnp.float32)]),
        compiler_params=pltpu.CompilerParams(
            dimension_semantics=("parallel",)),
    )(x_pad, w1, b1, w2, b2, w3, b3)


# -----------------------------------------------------------------------------
# Linear(20736, 512) + ReLU : bf16 weight streaming, fp32 accumulate
# -----------------------------------------------------------------------------
def _linear_bias_relu_kernel(x_ref, w_ref, b_ref, o_ref, acc_ref):
    k = pl.program_id(1)

    @pl.when(k == 0)
    def _():
        acc_ref[...] = jnp.zeros_like(acc_ref)

    acc_ref[...] += jnp.dot(x_ref[...], w_ref[...],
                            preferred_element_type=jnp.float32)

    @pl.when(k == pl.num_programs(1) - 1)
    def _():
        o_ref[...] = jnp.maximum(acc_ref[...] + b_ref[...], 0.0).astype(o_ref.dtype)


def linear_bias_relu(x, w, b, *, kt=6912, tn=256):
    """y = relu(x @ w + b); x (M,K) bf16, w (K,N) bf16, b (1,N) f32 -> (M,N) f32."""
    m, kdim = x.shape
    ndim = w.shape[1]
    assert kdim % kt == 0 and ndim % tn == 0
    nk, nn = kdim // kt, ndim // tn
    cost = pl.CostEstimate(
        flops=2 * m * kdim * ndim,
        transcendentals=0,
        bytes_accessed=(kdim * ndim * w.dtype.itemsize
                        + m * kdim * x.dtype.itemsize
                        + m * ndim * 4 + ndim * 4))
    return pl.pallas_call(
        _linear_bias_relu_kernel,
        out_shape=jax.ShapeDtypeStruct((m, ndim), jnp.float32),
        grid_spec=pltpu.PrefetchScalarGridSpec(
            num_scalar_prefetch=0,
            grid=(nn, nk),                      # N-tiles parallel (2 TCs on v7x), K innermost
            in_specs=[pl.BlockSpec((m, kt), lambda n, k: (0, k)),
                      pl.BlockSpec((kt, tn), lambda n, k: (k, n)),
                      pl.BlockSpec((1, tn), lambda n, k: (0, n))],
            out_specs=pl.BlockSpec((m, tn), lambda n, k: (0, n)),
            scratch_shapes=[pltpu.VMEM((m, tn), jnp.float32)]),
        compiler_params=pltpu.CompilerParams(
            dimension_semantics=("parallel", "arbitrary"),
            vmem_limit_bytes=24 * 1024 * 1024),   # bf16 tiles: ~7 MiB double-buffered
        cost_estimate=cost,
    )(x, w, b)


# -----------------------------------------------------------------------------
# Parameters (PyTorch layout) + one-time conversion to kernel layout
# -----------------------------------------------------------------------------
def init_params(key):
    """Parameters in PyTorch layout (as produced by nn.Conv2d / nn.Linear)."""
    ks = jax.random.split(key, 8)

    def u(k, shape, fan_in):
        bound = 1.0 / jnp.sqrt(float(fan_in))
        return jax.random.uniform(k, shape, jnp.float32, -bound, bound)

    return {
        "w1": u(ks[0], (32, 3, 2, 2), 3 * 4),
        "b1": u(ks[1], (32,), 3 * 4),
        "w2": u(ks[2], (64, 32, 2, 2), 32 * 4),
        "b2": u(ks[3], (64,), 32 * 4),
        "w3": u(ks[4], (64, 64, 2, 2), 64 * 4),
        "b3": u(ks[5], (64,), 64 * 4),
        "w4": u(ks[6], (512, 20736), 20736),   # nn.Linear weight (out, in)
        "b4": u(ks[7], (512,), 20736),
    }


def prepare_params(p):
    """One-time conversion: conv weights -> (4, Cin, Cout); Linear weight rows
    permuted from PyTorch's NCHW-flatten order (c*324 + h*18 + w) to NHWC order
    (h*1152 + w*64 + c) and cast to bf16 (it is pure HBM bandwidth at small batch)."""
    def conv_w(w):   # (Cout, Cin, 2, 2) -> (4, Cin, Cout), i = kh*2 + kw
        cout, cin = w.shape[0], w.shape[1]
        return jnp.transpose(w, (2, 3, 1, 0)).reshape(4, cin, cout)

    w4 = jnp.transpose(p["w4"])                                 # (20736, 512), row = c*324+h*18+w
    w4 = w4.reshape(64, 18, 18, 512)                            # [c, h, w, :]
    w4 = jnp.transpose(w4, (1, 2, 0, 3)).reshape(20736, 512)    # row = h*1152 + w*64 + c
    return {
        "w1": conv_w(p["w1"]), "b1": p["b1"].reshape(1, -1),
        "w2": conv_w(p["w2"]), "b2": p["b2"].reshape(1, -1),
        "w3": conv_w(p["w3"]), "b3": p["b3"].reshape(1, -1),
        "w4": w4.astype(jnp.bfloat16),
        "b4": p["b4"].reshape(1, -1),
    }


# -----------------------------------------------------------------------------
# Forward pass
# -----------------------------------------------------------------------------
@jax.jit
def custom_policy_forward(obs_nchw, kparams):
    # obs_nchw: (N, 3, 21, 21) f32, PyTorch NCHW convention.
    n = obs_nchw.shape[0]
    x = jnp.transpose(obs_nchw, (0, 2, 3, 1)).reshape(n, _H0 * _W0, _C0)  # tiny
    x = jnp.pad(x, ((0, 0), (0, _PAD_ROWS - _H0 * _W0), (0, 0)))
    feat = fused_convs(x, kparams["w1"], kparams["b1"], kparams["w2"],
                       kparams["b2"], kparams["w3"], kparams["b3"])       # (N,378,64) bf16
    # Drop the 3 garbage columns (w = 18..20) and flatten NHWC -> (N, 20736).
    # The Linear weight rows were pre-permuted to this order in prepare_params.
    flat = feat.reshape(n, 18, 21, 64)[:, :, :18, :].reshape(n, 18 * 18 * 64)
    return linear_bias_relu(flat, kparams["w4"], kparams["b4"], kt=6912, tn=256)


if __name__ == "__main__":
    key = jax.random.PRNGKey(0)
    pkey, xkey = jax.random.split(key)
    params = prepare_params(init_params(pkey))
    obs = jax.random.uniform(xkey, (2, 3, 21, 21), jnp.float32)
    out = custom_policy_forward(obs, params)
    jax.block_until_ready(out)
    assert out.shape == (2, 512), out.shape
    assert bool(jnp.all(jnp.isfinite(out)))
    print("KERNEL_OK")
</pallas_src>

<mosaic_0001>
module attributes {stable_mosaic.version = 11 : i64} {
  func.func @_fused_conv_kernel(%arg0: i32, %arg1: memref<1x448x3xf32, #tpu.memory_space<vmem>>, %arg2: memref<4x3x32xf32, #tpu.memory_space<vmem>>, %arg3: memref<1x32xf32, #tpu.memory_space<vmem>>, %arg4: memref<4x32x64xf32, #tpu.memory_space<vmem>>, %arg5: memref<1x64xf32, #tpu.memory_space<vmem>>, %arg6: memref<4x64x64xf32, #tpu.memory_space<vmem>>, %arg7: memref<1x64xf32, #tpu.memory_space<vmem>>, %arg8: memref<1x378x64xbf16, #tpu.memory_space<vmem>>, %arg9: memref<448x32xf32, #tpu.memory_space<vmem>>, %arg10: memref<448x64xf32, #tpu.memory_space<vmem>>) attributes {dimension_semantics = [#tpu.dimension_semantics<parallel>], iteration_bounds = array<i64: 2>, scalar_prefetch = 0 : i64, scratch_operands = 2 : i64, tpu.core_type = #tpu.core_type<tc>, window_params = [{transform_indices = @transform_0, window_bounds = array<i64: 1, 448, 3>}, {pipeline_mode = #tpu.pipeline_mode<synchronous>, transform_indices = @transform_1, window_bounds = array<i64: 4, 3, 32>}, {pipeline_mode = #tpu.pipeline_mode<synchronous>, transform_indices = @transform_2, window_bounds = array<i64: 1, 32>}, {pipeline_mode = #tpu.pipeline_mode<synchronous>, transform_indices = @transform_3, window_bounds = array<i64: 4, 32, 64>}, {pipeline_mode = #tpu.pipeline_mode<synchronous>, transform_indices = @transform_4, window_bounds = array<i64: 1, 64>}, {pipeline_mode = #tpu.pipeline_mode<synchronous>, transform_indices = @transform_5, window_bounds = array<i64: 4, 64, 64>}, {pipeline_mode = #tpu.pipeline_mode<synchronous>, transform_indices = @transform_6, window_bounds = array<i64: 1, 64>}, {transform_indices = @transform_7, window_bounds = array<i64: 1, 378, 64>}]} {
    %cst = arith.constant 0.000000e+00 : f32
    %0 = vector.broadcast %cst : f32 to vector<448x32xf32>
    %c0 = arith.constant 0 : index
    %c0_0 = arith.constant 0 : index
    %1 = vector.load %arg9[%c0, %c0_0] : memref<448x32xf32, #tpu.memory_space<vmem>>, vector<448x32xf32>
    tpu.vector_store %arg9[%c0, %c0_0], %0 {strides = array<i32>} : memref<448x32xf32, #tpu.memory_space<vmem>>, vector<448x32xf32>,
    %cst_1 = arith.constant 0.000000e+00 : f32
    %2 = vector.broadcast %cst_1 : f32 to vector<448x64xf32>
    %c0_2 = arith.constant 0 : index
    %c0_3 = arith.constant 0 : index
    %3 = vector.load %arg10[%c0_2, %c0_3] : memref<448x64xf32, #tpu.memory_space<vmem>>, vector<448x64xf32>
    tpu.vector_store %arg10[%c0_2, %c0_3], %2 {strides = array<i32>} : memref<448x64xf32, #tpu.memory_space<vmem>>, vector<448x64xf32>,
    %cst_4 = arith.constant 0.000000e+00 : f32
    %4 = vector.broadcast %cst_4 : f32 to vector<420x32xf32>
    %c0_5 = arith.constant 0 : index
    %c0_6 = arith.constant 0 : index
    %c0_7 = arith.constant 0 : index
    %5 = vector.load %arg1[%c0_5, %c0_6, %c0_7] : memref<1x448x3xf32, #tpu.memory_space<vmem>>, vector<1x420x3xf32>
    %6 = vector.shape_cast %5 : vector<1x420x3xf32> to vector<420x3xf32>
    %c0_8 = arith.constant 0 : index
    %c0_9 = arith.constant 0 : index
    %c0_10 = arith.constant 0 : index
    %7 = vector.load %arg2[%c0_8, %c0_9, %c0_10] : memref<4x3x32xf32, #tpu.memory_space<vmem>>, vector<1x3x32xf32>
    %8 = vector.shape_cast %7 : vector<1x3x32xf32> to vector<3x32xf32>
    %cst_11 = arith.constant dense<0.000000e+00> : vector<420x32xf32>
    %9 = tpu.matmul %6, %8, %cst_11 {dimension_numbers = #tpu.dot_dimension_numbers<[1], [0], [0], [1], [0, 0, 1, 1], [], []>} : vector<420x3xf32>, vector<3x32xf32>, vector<420x32xf32> -> vector<420x32xf32>
    %10 = arith.addf %4, %9 : vector<420x32xf32>
    %c0_12 = arith.constant 0 : index
    %c1 = arith.constant 1 : index
    %c0_13 = arith.constant 0 : index
    %11 = vector.load %arg1[%c0_12, %c1, %c0_13] : memref<1x448x3xf32, #tpu.memory_space<vmem>>, vector<1x420x3xf32>
    %12 = vector.shape_cast %11 : vector<1x420x3xf32> to vector<420x3xf32>
    %c1_14 = arith.constant 1 : index
    %c0_15 = arith.constant 0 : index
    %c0_16 = arith.constant 0 : index
    %13 = vector.load %arg2[%c1_14, %c0_15, %c0_16] : memref<4x3x32xf32, #tpu.memory_space<vmem>>, vector<1x3x32xf32>
    %14 = vector.shape_cast %13 : vector<1x3x32xf32> to vector<3x32xf32>
    %cst_17 = arith.constant dense<0.000000e+00> : vector<420x32xf32>
    %15 = tpu.matmul %12, %14, %cst_17 {dimension_numbers = #tpu.dot_dimension_numbers<[1], [0], [0], [1], [0, 0, 1, 1], [], []>} : vector<420x3xf32>, vector<3x32xf32>, vector<420x32xf32> -> vector<420x32xf32>
    %16 = arith.addf %10, %15 : vector<420x32xf32>
    %c0_18 = arith.constant 0 : index
    %c21 = arith.constant 21 : index
    %c0_19 = arith.constant 0 : index
    %17 = vector.load %arg1[%c0_18, %c21, %c0_19] : memref<1x448x3xf32, #tpu.memory_space<vmem>>, vector<1x420x3xf32>
    %18 = vector.shape_cast %17 : vector<1x420x3xf32> to vector<420x3xf32>
    %c2 = arith.constant 2 : index
    %c0_20 = arith.constant 0 : index
    %c0_21 = arith.constant 0 : index
    %19 = vector.load %arg2[%c2, %c0_20, %c0_21] : memref<4x3x32xf32, #tpu.memory_space<vmem>>, vector<1x3x32xf32>
    %20 = vector.shape_cast %19 : vector<1x3x32xf32> to vector<3x32xf32>
    %cst_22 = arith.constant dense<0.000000e+00> : vector<420x32xf32>
    %21 = tpu.matmul %18, %20, %cst_22 {dimension_numbers = #tpu.dot_dimension_numbers<[1], [0], [0], [1], [0, 0, 1, 1], [], []>} : vector<420x3xf32>, vector<3x32xf32>, vector<420x32xf32> -> vector<420x32xf32>
    %22 = arith.addf %16, %21 : vector<420x32xf32>
    %c0_23 = arith.constant 0 : index
    %c22 = arith.constant 22 : index
    %c0_24 = arith.constant 0 : index
    %23 = vector.load %arg1[%c0_23, %c22, %c0_24] : memref<1x448x3xf32, #tpu.memory_space<vmem>>, vector<1x420x3xf32>
    %24 = vector.shape_cast %23 : vector<1x420x3xf32> to vector<420x3xf32>
    %c3 = arith.constant 3 : index
    %c0_25 = arith.constant 0 : index
    %c0_26 = arith.constant 0 : index
    %25 = vector.load %arg2[%c3, %c0_25, %c0_26] : memref<4x3x32xf32, #tpu.memory_space<vmem>>, vector<1x3x32xf32>
    %26 = vector.shape_cast %25 : vector<1x3x32xf32> to vector<3x32xf32>
    %cst_27 = arith.constant dense<0.000000e+00> : vector<420x32xf32>
    %27 = tpu.matmul %24, %26, %cst_27 {dimension_numbers = #tpu.dot_dimension_numbers<[1], [0], [0], [1], [0, 0, 1, 1], [], []>} : vector<420x3xf32>, vector<3x32xf32>, vector<420x32xf32> -> vector<420x32xf32>
    %28 = arith.addf %22, %27 : vector<420x32xf32>
    %c0_28 = arith.constant 0 : index
    %c0_29 = arith.constant 0 : index
    %29 = vector.load %arg3[%c0_28, %c0_29] : memref<1x32xf32, #tpu.memory_space<vmem>>, vector<1x32xf32>
    %30 = vector.broadcast %29 : vector<1x32xf32> to vector<420x32xf32>
    %31 = arith.addf %28, %30 : vector<420x32xf32>
    %cst_30 = arith.constant 0.000000e+00 : f32
    %32 = vector.broadcast %cst_30 : f32 to vector<420x32xf32>
    %33 = arith.maximumf %31, %32 : vector<420x32xf32>
    %c0_31 = arith.constant 0 : index
    %c0_32 = arith.constant 0 : index
    %34 = vector.load %arg9[%c0_31, %c0_32] : memref<448x32xf32, #tpu.memory_space<vmem>>, vector<420x32xf32>
    tpu.vector_store %arg9[%c0_31, %c0_32], %33 {strides = array<i32>} : memref<448x32xf32, #tpu.memory_space<vmem>>, vector<420x32xf32>,
    %cst_33 = arith.constant 0.000000e+00 : f32
    %35 = vector.broadcast %cst_33 : f32 to vector<399x64xf32>
    %c0_34 = arith.constant 0 : index
    %c0_35 = arith.constant 0 : index
    %36 = vector.load %arg9[%c0_34, %c0_35] : memref<448x32xf32, #tpu.memory_space<vmem>>, vector<399x32xf32>
    %c0_36 = arith.constant 0 : index
    %c0_37 = arith.constant 0 : index
    %c0_38 = arith.constant 0 : index
    %37 = vector.load %arg4[%c0_36, %c0_37, %c0_38] : memref<4x32x64xf32, #tpu.memory_space<vmem>>, vector<1x32x64xf32>
    %38 = vector.shape_cast %37 : vector<1x32x64xf32> to vector<32x64xf32>
    %cst_39 = arith.constant dense<0.000000e+00> : vector<399x64xf32>
    %39 = tpu.matmul %36, %38, %cst_39 {dimension_numbers = #tpu.dot_dimension_numbers<[1], [0], [0], [1], [0, 0, 1, 1], [], []>} : vector<399x32xf32>, vector<32x64xf32>, vector<399x64xf32> -> vector<399x64xf32>
    %40 = arith.addf %35, %39 : vector<399x64xf32>
    %c1_40 = arith.constant 1 : index
    %c0_41 = arith.constant 0 : index
    %41 = vector.load %arg9[%c1_40, %c0_41] : memref<448x32xf32, #tpu.memory_space<vmem>>, vector<399x32xf32>
    %c1_42 = arith.constant 1 : index
    %c0_43 = arith.constant 0 : index
    %c0_44 = arith.constant 0 : index
    %42 = vector.load %arg4[%c1_42, %c0_43, %c0_44] : memref<4x32x64xf32, #tpu.memory_space<vmem>>, vector<1x32x64xf32>
    %43 = vector.shape_cast %42 : vector<1x32x64xf32> to vector<32x64xf32>
    %cst_45 = arith.constant dense<0.000000e+00> : vector<399x64xf32>
    %44 = tpu.matmul %41, %43, %cst_45 {dimension_numbers = #tpu.dot_dimension_numbers<[1], [0], [0], [1], [0, 0, 1, 1], [], []>} : vector<399x32xf32>, vector<32x64xf32>, vector<399x64xf32> -> vector<399x64xf32>
    %45 = arith.addf %40, %44 : vector<399x64xf32>
    %c21_46 = arith.constant 21 : index
    %c0_47 = arith.constant 0 : index
    %46 = vector.load %arg9[%c21_46, %c0_47] : memref<448x32xf32, #tpu.memory_space<vmem>>, vector<399x32xf32>
    %c2_48 = arith.constant 2 : index
    %c0_49 = arith.constant 0 : index
    %c0_50 = arith.constant 0 : index
    %47 = vector.load %arg4[%c2_48, %c0_49, %c0_50] : memref<4x32x64xf32, #tpu.memory_space<vmem>>, vector<1x32x64xf32>
    %48 = vector.shape_cast %47 : vector<1x32x64xf32> to vector<32x64xf32>
    %cst_51 = arith.constant dense<0.000000e+00> : vector<399x64xf32>
    %49 = tpu.matmul %46, %48, %cst_51 {dimension_numbers = #tpu.dot_dimension_numbers<[1], [0], [0], [1], [0, 0, 1, 1], [], []>} : vector<399x32xf32>, vector<32x64xf32>, vector<399x64xf32> -> vector<399x64xf32>
    %50 = arith.addf %45, %49 : vector<399x64xf32>
    %c22_52 = arith.constant 22 : index
    %c0_53 = arith.constant 0 : index
    %51 = vector.load %arg9[%c22_52, %c0_53] : memref<448x32xf32, #tpu.memory_space<vmem>>, vector<399x32xf32>
    %c3_54 = arith.constant 3 : index
    %c0_55 = arith.constant 0 : index
    %c0_56 = arith.constant 0 : index
    %52 = vector.load %arg4[%c3_54, %c0_55, %c0_56] : memref<4x32x64xf32, #tpu.memory_space<vmem>>, vector<1x32x64xf32>
    %53 = vector.shape_cast %52 : vector<1x32x64xf32> to vector<32x64xf32>
    %cst_57 = arith.constant dense<0.000000e+00> : vector<399x64xf32>
    %54 = tpu.matmul %51, %53, %cst_57 {dimension_numbers = #tpu.dot_dimension_numbers<[1], [0], [0], [1], [0, 0, 1, 1], [], []>} : vector<399x32xf32>, vector<32x64xf32>, vector<399x64xf32> -> vector<399x64xf32>
    %55 = arith.addf %50, %54 : vector<399x64xf32>
    %c0_58 = arith.constant 0 : index
    %c0_59 = arith.constant 0 : index
    %56 = vector.load %arg5[%c0_58, %c0_59] : memref<1x64xf32, #tpu.memory_space<vmem>>, vector<1x64xf32>
    %57 = vector.broadcast %56 : vector<1x64xf32> to vector<399x64xf32>
    %58 = arith.addf %55, %57 : vector<399x64xf32>
    %cst_60 = arith.constant 0.000000e+00 : f32
    %59 = vector.broadcast %cst_60 : f32 to vector<399x64xf32>
    %60 = arith.maximumf %58, %59 : vector<399x64xf32>
    %c0_61 = arith.constant 0 : index
    %c0_62 = arith.constant 0 : index
    %61 = vector.load %arg10[%c0_61, %c0_62] : memref<448x64xf32, #tpu.memory_space<vmem>>, vector<399x64xf32>
    tpu.vector_store %arg10[%c0_61, %c0_62], %60 {strides = array<i32>} : memref<448x64xf32, #tpu.memory_space<vmem>>, vector<399x64xf32>,
    %cst_63 = arith.constant 0.000000e+00 : f32
    %62 = vector.broadcast %cst_63 : f32 to vector<378x64xf32>
    %c0_64 = arith.constant 0 : index
    %c0_65 = arith.constant 0 : index
    %63 = vector.load %arg10[%c0_64, %c0_65] : memref<448x64xf32, #tpu.memory_space<vmem>>, vector<378x64xf32>
    %c0_66 = arith.constant 0 : index
    %c0_67 = arith.constant 0 : index
    %c0_68 = arith.constant 0 : index
    %64 = vector.load %arg6[%c0_66, %c0_67, %c0_68] : memref<4x64x64xf32, #tpu.memory_space<vmem>>, vector<1x64x64xf32>
    %65 = vector.shape_cast %64 : vector<1x64x64xf32> to vector<64x64xf32>
    %cst_69 = arith.constant dense<0.000000e+00> : vector<378x64xf32>
    %66 = tpu.matmul %63, %65, %cst_69 {dimension_numbers = #tpu.dot_dimension_numbers<[1], [0], [0], [1], [0, 0, 1, 1], [], []>} : vector<378x64xf32>, vector<64x64xf32>, vector<378x64xf32> -> vector<378x64xf32>
    %67 = arith.addf %62, %66 : vector<378x64xf32>
    %c1_70 = arith.constant 1 : index
    %c0_71 = arith.constant 0 : index
    %68 = vector.load %arg10[%c1_70, %c0_71] : memref<448x64xf32, #tpu.memory_space<vmem>>, vector<378x64xf32>
    %c1_72 = arith.constant 1 : index
    %c0_73 = arith.constant 0 : index
    %c0_74 = arith.constant 0 : index
    %69 = vector.load %arg6[%c1_72, %c0_73, %c0_74] : memref<4x64x64xf32, #tpu.memory_space<vmem>>, vector<1x64x64xf32>
    %70 = vector.shape_cast %69 : vector<1x64x64xf32> to vector<64x64xf32>
    %cst_75 = arith.constant dense<0.000000e+00> : vector<378x64xf32>
    %71 = tpu.matmul %68, %70, %cst_75 {dimension_numbers = #tpu.dot_dimension_numbers<[1], [0], [0], [1], [0, 0, 1, 1], [], []>} : vector<378x64xf32>, vector<64x64xf32>, vector<378x64xf32> -> vector<378x64xf32>
    %72 = arith.addf %67, %71 : vector<378x64xf32>
    %c21_76 = arith.constant 21 : index
    %c0_77 = arith.constant 0 : index
    %73 = vector.load %arg10[%c21_76, %c0_77] : memref<448x64xf32, #tpu.memory_space<vmem>>, vector<378x64xf32>
    %c2_78 = arith.constant 2 : index
    %c0_79 = arith.constant 0 : index
    %c0_80 = arith.constant 0 : index
    %74 = vector.load %arg6[%c2_78, %c0_79, %c0_80] : memref<4x64x64xf32, #tpu.memory_space<vmem>>, vector<1x64x64xf32>
    %75 = vector.shape_cast %74 : vector<1x64x64xf32> to vector<64x64xf32>
    %cst_81 = arith.constant dense<0.000000e+00> : vector<378x64xf32>
    %76 = tpu.matmul %73, %75, %cst_81 {dimension_numbers = #tpu.dot_dimension_numbers<[1], [0], [0], [1], [0, 0, 1, 1], [], []>} : vector<378x64xf32>, vector<64x64xf32>, vector<378x64xf32> -> vector<378x64xf32>
    %77 = arith.addf %72, %76 : vector<378x64xf32>
    %c22_82 = arith.constant 22 : index
    %c0_83 = arith.constant 0 : index
    %78 = vector.load %arg10[%c22_82, %c0_83] : memref<448x64xf32, #tpu.memory_space<vmem>>, vector<378x64xf32>
    %c3_84 = arith.constant 3 : index
    %c0_85 = arith.constant 0 : index
    %c0_86 = arith.constant 0 : index
    %79 = vector.load %arg6[%c3_84, %c0_85, %c0_86] : memref<4x64x64xf32, #tpu.memory_space<vmem>>, vector<1x64x64xf32>
    %80 = vector.shape_cast %79 : vector<1x64x64xf32> to vector<64x64xf32>
    %cst_87 = arith.constant dense<0.000000e+00> : vector<378x64xf32>
    %81 = tpu.matmul %78, %80, %cst_87 {dimension_numbers = #tpu.dot_dimension_numbers<[1], [0], [0], [1], [0, 0, 1, 1], [], []>} : vector<378x64xf32>, vector<64x64xf32>, vector<378x64xf32> -> vector<378x64xf32>
    %82 = arith.addf %77, %81 : vector<378x64xf32>
    %c0_88 = arith.constant 0 : index
    %c0_89 = arith.constant 0 : index
    %83 = vector.load %arg7[%c0_88, %c0_89] : memref<1x64xf32, #tpu.memory_space<vmem>>, vector<1x64xf32>
    %84 = vector.broadcast %83 : vector<1x64xf32> to vector<378x64xf32>
    %85 = arith.addf %82, %84 : vector<378x64xf32>
    %cst_90 = arith.constant 0.000000e+00 : f32
    %86 = vector.broadcast %cst_90 : f32 to vector<378x64xf32>
    %87 = arith.maximumf %85, %86 : vector<378x64xf32>
    %88 = arith.truncf %87 : vector<378x64xf32> to vector<378x64xbf16>
    %c0_91 = arith.constant 0 : index
    %c0_92 = arith.constant 0 : index
    %c0_93 = arith.constant 0 : index
    %89 = vector.load %arg8[%c0_91, %c0_92, %c0_93] : memref<1x378x64xbf16, #tpu.memory_space<vmem>>, vector<1x378x64xbf16>
    %90 = vector.shape_cast %89 : vector<1x378x64xbf16> to vector<378x64xbf16>
    %91 = vector.shape_cast %88 : vector<378x64xbf16> to vector<1x378x64xbf16>
    tpu.vector_store %arg8[%c0_91, %c0_92, %c0_93], %91 {strides = array<i32>} : memref<1x378x64xbf16, #tpu.memory_space<vmem>>, vector<1x378x64xbf16>,
    return
  }
  func.func @transform_0(%arg0: i32) -> (i32, i32, i32) {
    %c0_i32 = arith.constant 0 : i32
    %c0_i32_0 = arith.constant 0 : i32
    %c0_i32_1 = arith.constant 0 : i32
    return %arg0, %c0_i32, %c0_i32_0 : i32, i32, i32
  }
  func.func @transform_1(%arg0: i32) -> (i32, i32, i32) {
    %c0_i32 = arith.constant 0 : i32
    %c0_i32_0 = arith.constant 0 : i32
    %c0_i32_1 = arith.constant 0 : i32
    %c0_i32_2 = arith.constant 0 : i32
    return %c0_i32, %c0_i32_0, %c0_i32_1 : i32, i32, i32
  }
  func.func @transform_2(%arg0: i32) -> (i32, i32) {
    %c0_i32 = arith.constant 0 : i32
    %c0_i32_0 = arith.constant 0 : i32
    %c0_i32_1 = arith.constant 0 : i32
    return %c0_i32, %c0_i32_0 : i32, i32
  }
  func.func @transform_3(%arg0: i32) -> (i32, i32, i32) {
    %c0_i32 = arith.constant 0 : i32
    %c0_i32_0 = arith.constant 0 : i32
    %c0_i32_1 = arith.constant 0 : i32
    %c0_i32_2 = arith.constant 0 : i32
    return %c0_i32, %c0_i32_0, %c0_i32_1 : i32, i32, i32
  }
  func.func @transform_4(%arg0: i32) -> (i32, i32) {
    %c0_i32 = arith.constant 0 : i32
    %c0_i32_0 = arith.constant 0 : i32
    %c0_i32_1 = arith.constant 0 : i32
    return %c0_i32, %c0_i32_0 : i32, i32
  }
  func.func @transform_5(%arg0: i32) -> (i32, i32, i32) {
    %c0_i32 = arith.constant 0 : i32
    %c0_i32_0 = arith.constant 0 : i32
    %c0_i32_1 = arith.constant 0 : i32
    %c0_i32_2 = arith.constant 0 : i32
    return %c0_i32, %c0_i32_0, %c0_i32_1 : i32, i32, i32
  }
  func.func @transform_6(%arg0: i32) -> (i32, i32) {
    %c0_i32 = arith.constant 0 : i32
    %c0_i32_0 = arith.constant 0 : i32
    %c0_i32_1 = arith.constant 0 : i32
    return %c0_i32, %c0_i32_0 : i32, i32
  }
  func.func @transform_7(%arg0: i32) -> (i32, i32, i32) {
    %c0_i32 = arith.constant 0 : i32
    %c0_i32_0 = arith.constant 0 : i32
    %c0_i32_1 = arith.constant 0 : i32
    return %arg0, %c0_i32, %c0_i32_0 : i32, i32, i32
  }
}

module attributes {stable_mosaic.version = 11 : i64} {
  func.func @_linear_bias_relu_kernel(%arg0: i32, %arg1: i32, %arg2: memref<2x6912xbf16, #tpu.memory_space<vmem>>, %arg3: memref<6912x256xbf16, #tpu.memory_space<vmem>>, %arg4: memref<1x256xf32, #tpu.memory_space<vmem>>, %arg5: memref<2x256xf32, #tpu.memory_space<vmem>>, %arg6: memref<2x256xf32, #tpu.memory_space<vmem>>) attributes {dimension_semantics = [#tpu.dimension_semantics<parallel>, #tpu.dimension_semantics<arbitrary>], iteration_bounds = array<i64: 2, 3>, scalar_prefetch = 0 : i64, scratch_operands = 1 : i64, tpu.core_type = #tpu.core_type<tc>, window_params = [{transform_indices = @transform_0, window_bounds = array<i64: 2, 6912>}, {transform_indices = @transform_1, window_bounds = array<i64: 6912, 256>}, {transform_indices = @transform_2, window_bounds = array<i64: 1, 256>}, {transform_indices = @transform_3, window_bounds = array<i64: 2, 256>}]} {
    %c0_i32 = arith.constant 0 : i32
    %0 = arith.cmpi eq, %arg1, %c0_i32 : i32
    %1 = arith.extui %0 : i1 to i32
    %c0_i32_0 = arith.constant 0 : i32
    %2 = arith.cmpi ne, %1, %c0_i32_0 : i32
    scf.if %2 {
      %cst_9 = arith.constant 0.000000e+00 : f32
      %12 = vector.broadcast %cst_9 : f32 to vector<2x256xf32>
      %c0_10 = arith.constant 0 : index
      %c0_11 = arith.constant 0 : index
      %13 = vector.load %arg6[%c0_10, %c0_11] : memref<2x256xf32, #tpu.memory_space<vmem>>, vector<2x256xf32>
      tpu.vector_store %arg6[%c0_10, %c0_11], %12 {strides = array<i32>} : memref<2x256xf32, #tpu.memory_space<vmem>>, vector<2x256xf32>,
    } else {
    }
    %c0 = arith.constant 0 : index
    %c0_1 = arith.constant 0 : index
    %3 = vector.load %arg6[%c0, %c0_1] : memref<2x256xf32, #tpu.memory_space<vmem>>, vector<2x256xf32>
    %c0_2 = arith.constant 0 : index
    %c0_3 = arith.constant 0 : index
    %4 = vector.load %arg2[%c0_2, %c0_3] : memref<2x6912xbf16, #tpu.memory_space<vmem>>, vector<2x6912xbf16>
    %c0_4 = arith.constant 0 : index
    %c0_5 = arith.constant 0 : index
    %5 = vector.load %arg3[%c0_4, %c0_5] : memref<6912x256xbf16, #tpu.memory_space<vmem>>, vector<6912x256xbf16>
    %cst = arith.constant dense<0.000000e+00> : vector<2x256xf32>
    %6 = tpu.matmul %4, %5, %cst {dimension_numbers = #tpu.dot_dimension_numbers<[1], [0], [0], [1], [0, 0, 1, 1], [], []>} : vector<2x6912xbf16>, vector<6912x256xbf16>, vector<2x256xf32> -> vector<2x256xf32>
    %7 = arith.addf %3, %6 : vector<2x256xf32>
    %c0_6 = arith.constant 0 : index
    %c0_7 = arith.constant 0 : index
    %8 = vector.load %arg6[%c0_6, %c0_7] : memref<2x256xf32, #tpu.memory_space<vmem>>, vector<2x256xf32>
    tpu.vector_store %arg6[%c0_6, %c0_7], %7 {strides = array<i32>} : memref<2x256xf32, #tpu.memory_space<vmem>>, vector<2x256xf32>,
    %c2_i32 = arith.constant 2 : i32
    %9 = arith.cmpi eq, %arg1, %c2_i32 : i32
    %10 = arith.extui %9 : i1 to i32
    %c0_i32_8 = arith.constant 0 : i32
    %11 = arith.cmpi ne, %10, %c0_i32_8 : i32
    scf.if %11 {
      %c0_9 = arith.constant 0 : index
      %c0_10 = arith.constant 0 : index
      %12 = vector.load %arg6[%c0_9, %c0_10] : memref<2x256xf32, #tpu.memory_space<vmem>>, vector<2x256xf32>
      %c0_11 = arith.constant 0 : index
      %c0_12 = arith.constant 0 : index
      %13 = vector.load %arg4[%c0_11, %c0_12] : memref<1x256xf32, #tpu.memory_space<vmem>>, vector<1x256xf32>
      %14 = vector.broadcast %13 : vector<1x256xf32> to vector<2x256xf32>
      %15 = arith.addf %12, %14 : vector<2x256xf32>
      %cst_13 = arith.constant 0.000000e+00 : f32
      %16 = vector.broadcast %cst_13 : f32 to vector<2x256xf32>
      %17 = arith.maximumf %15, %16 : vector<2x256xf32>
      %c0_14 = arith.constant 0 : index
      %c0_15 = arith.constant 0 : index
      %18 = vector.load %arg5[%c0_14, %c0_15] : memref<2x256xf32, #tpu.memory_space<vmem>>, vector<2x256xf32>
      tpu.vector_store %arg5[%c0_14, %c0_15], %17 {strides = array<i32>} : memref<2x256xf32, #tpu.memory_space<vmem>>, vector<2x256xf32>,
    } else {
    }
    return
  }
  func.func @transform_0(%arg0: i32, %arg1: i32) -> (i32, i32) {
    %c0_i32 = arith.constant 0 : i32
    %c0_i32_0 = arith.constant 0 : i32
    return %c0_i32, %arg1 : i32, i32
  }
  func.func @transform_1(%arg0: i32, %arg1: i32) -> (i32, i32) {
    %c0_i32 = arith.constant 0 : i32
    return %arg1, %arg0 : i32, i32
  }
  func.func @transform_2(%arg0: i32, %arg1: i32) -> (i32, i32) {
    %c0_i32 = arith.constant 0 : i32
    %c0_i32_0 = arith.constant 0 : i32
    return %c0_i32, %arg0 : i32, i32
  }
  func.func @transform_3(%arg0: i32, %arg1: i32) -> (i32, i32) {
    %c0_i32 = arith.constant 0 : i32
    %c0_i32_0 = arith.constant 0 : i32
    return %c0_i32, %arg0 : i32, i32
  }
}

</mosaic_0001>

<llo_original>
// kernel: custom_policy_forward.2
$region0: #{custom_policy_forward.2}
  #allocation0 [shape = 'u32[]', space=smem, size = 0x4, offset = 0x4, fixed_abs, tag = 'smem constant byte address 0x4 - core index']
  #allocation1 [shape = 'u32[72,128]{1,0:T(1,128)}', space=vmem, size = 0x9000, scoped, tag = 'internal scratch']
  #allocation2 [shape = 'f32[448,32]{1,0:T(8,128)}', space=vmem, size = 0x38000, scoped, tag = 'scratch operand']
  #allocation3 [shape = 'f32[448,64]{1,0:T(8,128)}', space=vmem, size = 0x38000, scoped, tag = 'scratch operand']
  %s0 = inlined_call_operand.vmem [shape: f32[2,448,3], index: 0, kind: input, shape index: {}]
  %s1 = inlined_call_operand.vmem [shape: f32[4,3,32], index: 1, kind: input, shape index: {}]
  %s2 = inlined_call_operand.hbm [shape: f32[1,32], index: 2, kind: input, shape index: {}]
  %s3 = inlined_call_operand.hbm [shape: f32[4,32,64], index: 3, kind: input, shape index: {}]
  %s4 = inlined_call_operand.hbm [shape: f32[1,64], index: 4, kind: input, shape index: {}]
  %s5 = inlined_call_operand.hbm [shape: f32[4,64,64], index: 5, kind: input, shape index: {}]
  %s6 = inlined_call_operand.hbm [shape: f32[1,64], index: 6, kind: input, shape index: {}]
  %s7 = inlined_call_operand.vmem [shape: bf16[2,378,64], index: 7, kind: output, shape index: {}]
  %s8 = sld [smem:[#allocation0]]
  $region81: #{custom_policy_forward.2} parent=0
    _
  %s10 = ssub.s32 1, %s8
  %s11 = scalar_select 0, %s10, %s8
  $region1: #{custom_policy_forward.2} parent=0
    #allocation4 [shape = 'u8[512]{0}', space=vmem, size = 0x400, scoped, tag = 'input window, operand 2, single buffered']
    #allocation5 [shape = 's32[2]{0}', space=sflag, size = 0x8, scoped, tag = 'scoped memory for custom_policy_forward.2']
    #allocation6 [shape = 'u8[65536]{0}', space=vmem, size = 0x10000, scoped, tag = 'input window, operand 3, single buffered']
    #allocation7 [shape = 's32[1]{0}', space=sflag, size = 0x4, scoped, tag = 'scoped memory for custom_policy_forward.2']
    #allocation8 [shape = 'u8[512]{0}', space=vmem, size = 0x400, scoped, tag = 'input window, operand 4, single buffered']
    #allocation9 [shape = 'u8[131072]{0}', space=vmem, size = 0x20000, scoped, tag = 'input window, operand 5, single buffered']
    #allocation10 [shape = 's32[1]{0}', space=sflag, size = 0x4, scoped, tag = 'scoped memory for custom_policy_forward.2']
    #allocation11 [shape = 'u8[512]{0}', space=vmem, size = 0x400, scoped, tag = 'input window, operand 6, single buffered']
    %12 = vsyncpa [#allocation5], 0
    %13 = vsyncpa [#allocation7], 0
    %14 = vsyncpa [#allocation10], 0
    loop: start=0, step=1, limit=4
    $region2: #{custom_policy_forward.2} parent=1 // loop_pre_header
      _
    $region3: #{custom_policy_forward.2} parent=1 // loop_header
      %s16 = sphi 0, %s20
      %p17 = scmp.ge.s32.totalorder %s16, 4
      %s26 = sphi 0, %s28
      %s29 = sphi 0, %s26
      %s30 = sphi 0, %s29
      %s46 = sphi 0, %s30
      %s50 = sphi 0, %s50
      %s52 = sphi 0, %s50
      %s53 = sphi 0, %s52
      %s67 = sphi 0, %s53
      %s71 = sphi 0, %s71
      %s73 = sphi 0, %s71
      %s74 = sphi 0, %s73
      %s88 = sphi 0, %s74
      %s92 = sphi 0, %s92
      %s94 = sphi 0, %s92
      %s95 = sphi 0, %s94
      %s109 = sphi 0, %s95
      %s113 = sphi 0, %s113
      %s115 = sphi 0, %s113
      %s116 = sphi 0, %s115
      %s130 = sphi 0, %s116
      %s134 = sphi 0, %s134
      %s136 = sphi 0, %s134
      %s137 = sphi 0, %s136
      %s151 = sphi 0, %s137
      %s155 = sphi 0, %s155
      %s157 = sphi 0, %s155
      %s158 = sphi 0, %s157
      %s172 = sphi 0, %s158
      %s178 = sphi 0, %s180
      %s181 = sphi 0, %s178
      %s182 = sphi 0, %s181
      %s198 = sphi 0, %s182
    $region4: #{custom_policy_forward.2} parent=1 // loop_header_branch
      %19 = sbr.rel (%p17) target = $region8
    $region5: #{custom_policy_forward.2} parent=1 // loop_body
      %s21 = ssub.s32 %s16, 1
      %s22 = ssub.s32 %s16, 2
      %s23 = sadd.s32 %s16, 1
      %s24 = ssub.s32 %s16, %s23
      %p25 = scmp.eq.s32.totalorder %s24, 0
      %s27 = sadd.s32 %s26, 1
      %s28 = scalar_select %p25, %s26, %s27
      %p31 = pneg %p25
      %p32 = scmp.eq.s32.totalorder %s16, 1
      %p33 = por %p31, %p32
      %p34 = scmp.ne.s32.totalorder %s26, %s29
      %p35 = scmp.eq.s32.totalorder %s16, 0
      %p36 = por %p34, %p35
      %p37 = scmp.ne.s32.totalorder %s26, %s29
      %p38 = scmp.eq.s32.totalorder %s21, 1
      %p39 = por %p37, %p38
      %p40 = scmp.ne.s32.totalorder %s29, %s30
      %p41 = scmp.eq.s32.totalorder %s21, 0
      %p42 = por %p40, %p41
      %p43 = scmp.ne.s32.totalorder %s29, %s30
      %p44 = scmp.eq.s32.totalorder %s22, 1
      %p45 = por %p43, %p44
      %p47 = scmp.ne.s32.totalorder %s30, %s46
      %p48 = scmp.eq.s32.totalorder %s22, 0
      %p49 = por %p47, %p48
      %s51 = sadd.s32 %s50, 1
      %p54 = scmp.eq.s32.totalorder %s16, 1
      %p55 = scmp.ne.s32.totalorder %s50, %s52
      %p56 = scmp.eq.s32.totalorder %s16, 0
      %p57 = por %p55, %p56
      %p58 = scmp.ne.s32.totalorder %s50, %s52
      %p59 = scmp.eq.s32.totalorder %s21, 1
      %p60 = por %p58, %p59
      %p61 = scmp.ne.s32.totalorder %s52, %s53
      %p62 = scmp.eq.s32.totalorder %s21, 0
      %p63 = por %p61, %p62
      %p64 = scmp.ne.s32.totalorder %s52, %s53
      %p65 = scmp.eq.s32.totalorder %s22, 1
      %p66 = por %p64, %p65
      %p68 = scmp.ne.s32.totalorder %s53, %s67
      %p69 = scmp.eq.s32.totalorder %s22, 0
      %p70 = por %p68, %p69
      %s72 = sadd.s32 %s71, 1
      %p75 = scmp.eq.s32.totalorder %s16, 1
      %p76 = scmp.ne.s32.totalorder %s71, %s73
      %p77 = scmp.eq.s32.totalorder %s16, 0
      %p78 = por %p76, %p77
      %p79 = scmp.ne.s32.totalorder %s71, %s73
      %p80 = scmp.eq.s32.totalorder %s21, 1
      %p81 = por %p79, %p80
      %p82 = scmp.ne.s32.totalorder %s73, %s74
      %p83 = scmp.eq.s32.totalorder %s21, 0
      %p84 = por %p82, %p83
      %p85 = scmp.ne.s32.totalorder %s73, %s74
      %p86 = scmp.eq.s32.totalorder %s22, 1
      %p87 = por %p85, %p86
      %p89 = scmp.ne.s32.totalorder %s74, %s88
      %p90 = scmp.eq.s32.totalorder %s22, 0
      %p91 = por %p89, %p90
      %s93 = sadd.s32 %s92, 1
      %p96 = scmp.eq.s32.totalorder %s16, 1
      %p97 = scmp.ne.s32.totalorder %s92, %s94
      %p98 = scmp.eq.s32.totalorder %s16, 0
      %p99 = por %p97, %p98
      %p100 = scmp.ne.s32.totalorder %s92, %s94
      %p101 = scmp.eq.s32.totalorder %s21, 1
      %p102 = por %p100, %p101
      %p103 = scmp.ne.s32.totalorder %s94, %s95
      %p104 = scmp.eq.s32.totalorder %s21, 0
      %p105 = por %p103, %p104
      %p106 = scmp.ne.s32.totalorder %s94, %s95
      %p107 = scmp.eq.s32.totalorder %s22, 1
      %p108 = por %p106, %p107
      %p110 = scmp.ne.s32.totalorder %s95, %s109
      %p111 = scmp.eq.s32.totalorder %s22, 0
      %p112 = por %p110, %p111
      %s114 = sadd.s32 %s113, 1
      %p117 = scmp.eq.s32.totalorder %s16, 1
      %p118 = scmp.ne.s32.totalorder %s113, %s115
      %p119 = scmp.eq.s32.totalorder %s16, 0
      %p120 = por %p118, %p119
      %p121 = scmp.ne.s32.totalorder %s113, %s115
      %p122 = scmp.eq.s32.totalorder %s21, 1
      %p123 = por %p121, %p122
      %p124 = scmp.ne.s32.totalorder %s115, %s116
      %p125 = scmp.eq.s32.totalorder %s21, 0
      %p126 = por %p124, %p125
      %p127 = scmp.ne.s32.totalorder %s115, %s116
      %p128 = scmp.eq.s32.totalorder %s22, 1
      %p129 = por %p127, %p128
      %p131 = scmp.ne.s32.totalorder %s116, %s130
      %p132 = scmp.eq.s32.totalorder %s22, 0
      %p133 = por %p131, %p132
      %s135 = sadd.s32 %s134, 1
      %p138 = scmp.eq.s32.totalorder %s16, 1
      %p139 = scmp.ne.s32.totalorder %s134, %s136
      %p140 = scmp.eq.s32.totalorder %s16, 0
      %p141 = por %p139, %p140
      %p142 = scmp.ne.s32.totalorder %s134, %s136
      %p143 = scmp.eq.s32.totalorder %s21, 1
      %p144 = por %p142, %p143
      %p145 = scmp.ne.s32.totalorder %s136, %s137
      %p146 = scmp.eq.s32.totalorder %s21, 0
      %p147 = por %p145, %p146
      %p148 = scmp.ne.s32.totalorder %s136, %s137
      %p149 = scmp.eq.s32.totalorder %s22, 1
      %p150 = por %p148, %p149
      %p152 = scmp.ne.s32.totalorder %s137, %s151
      %p153 = scmp.eq.s32.totalorder %s22, 0
      %p154 = por %p152, %p153
      %s156 = sadd.s32 %s155, 1
      %p159 = scmp.eq.s32.totalorder %s16, 1
      %p160 = scmp.ne.s32.totalorder %s155, %s157
      %p161 = scmp.eq.s32.totalorder %s16, 0
      %p162 = por %p160, %p161
      %p163 = scmp.ne.s32.totalorder %s155, %s157
      %p164 = scmp.eq.s32.totalorder %s21, 1
      %p165 = por %p163, %p164
      %p166 = scmp.ne.s32.totalorder %s157, %s158
      %p167 = scmp.eq.s32.totalorder %s21, 0
      %p168 = por %p166, %p167
      %p169 = scmp.ne.s32.totalorder %s157, %s158
      %p170 = scmp.eq.s32.totalorder %s22, 1
      %p171 = por %p169, %p170
      %p173 = scmp.ne.s32.totalorder %s158, %s172
      %p174 = scmp.eq.s32.totalorder %s22, 0
      %p175 = por %p173, %p174
      %s176 = ssub.s32 %s16, %s23
      %p177 = scmp.eq.s32.totalorder %s176, 0
      %s179 = sadd.s32 %s178, 1
      %s180 = scalar_select %p177, %s178, %s179
      %p183 = pneg %p177
      %p184 = scmp.eq.s32.totalorder %s16, 1
      %p185 = por %p183, %p184
      %p186 = scmp.ne.s32.totalorder %s178, %s181
      %p187 = scmp.eq.s32.totalorder %s16, 0
      %p188 = por %p186, %p187
      %p189 = scmp.ne.s32.totalorder %s178, %s181
      %p190 = scmp.eq.s32.totalorder %s21, 1
      %p191 = por %p189, %p190
      %p192 = scmp.ne.s32.totalorder %s181, %s182
      %p193 = scmp.eq.s32.totalorder %s21, 0
      %p194 = por %p192, %p193
      %p195 = scmp.ne.s32.totalorder %s181, %s182
      %p196 = scmp.eq.s32.totalorder %s22, 1
      %p197 = por %p195, %p196
      %p199 = scmp.ne.s32.totalorder %s182, %s198
      %p200 = scmp.eq.s32.totalorder %s22, 0
      %p201 = por %p199, %p200
      %p202 = scmp.le.s32.totalorder 1, %s16
      %p203 = scmp.lt.s32.totalorder %s16, 3
      %p204 = pnand %p202, %p203
      %p205 = pneg %p204
      // Predicated region
      $region9: #{custom_policy_forward.2} parent=5 // pred_check
        _
      $region10: #{custom_policy_forward.2} parent=5 // pred_check_branch
        %207 = sbr.rel (%p204) target = $region12
      $region11: #{custom_policy_forward.2} parent=5 // pred_region
        %s208 = ssub.s32 %s16, 1
        // Predicated region
        $region13: #{custom_policy_forward.2} parent=11 // pred_check
          %p209 = pneg %p63
        $region14: #{custom_policy_forward.2} parent=11 // pred_check_branch
          %211 = sbr.rel (%p209) target = $region16
        $region15: #{custom_policy_forward.2} parent=11 // pred_region
          _
        $region16: #{custom_policy_forward.2} parent=11 // pred_fallthru
          _
        // Predicated region
        $region17: #{custom_policy_forward.2} parent=11 // pred_check
          %p212 = pneg %p84
        $region18: #{custom_policy_forward.2} parent=11 // pred_check_branch
          %214 = sbr.rel (%p212) target = $region20
        $region19: #{custom_policy_forward.2} parent=11 // pred_region
          %216 = vsyncadd [#allocation5], 0
          %s218 = sshll.u32 %s2, 4
          %s219 = int_to_ptr.hbm [resolvable:$true] %s218
          %s220 = sshll.u32 [#allocation4], 4
          %s221 = int_to_ptr.vmem [resolvable:$true] %s220
          %223 = dma.hbm_to_vmem [thread:$0]  %s219, 16, %s221, [#allocation5]
        $region20: #{custom_policy_forward.2} parent=11 // pred_fallthru
          _
        // Predicated region
        $region21: #{custom_policy_forward.2} parent=11 // pred_check
          %p224 = pneg %p105
        $region22: #{custom_policy_forward.2} parent=11 // pred_check_branch
          %226 = sbr.rel (%p224) target = $region24
        $region23: #{custom_policy_forward.2} parent=11 // pred_region
          %228 = vsyncadd [#allocation7], 0
          %s229 = sshll.u32 %s3, 4
          %s230 = int_to_ptr.hbm [resolvable:$true] %s229
          %s231 = sshll.u32 [#allocation6], 4
          %s232 = int_to_ptr.vmem [resolvable:$true] %s231
          %237 = dma.hbm_to_vmem [thread:$0]  %s230, 2048, %s232, [#allocation7], 128, 128, 8
        $region24: #{custom_policy_forward.2} parent=11 // pred_fallthru
          _
        // Predicated region
        $region25: #{custom_policy_forward.2} parent=11 // pred_check
          %p238 = pneg %p126
        $region26: #{custom_policy_forward.2} parent=11 // pred_check_branch
          %240 = sbr.rel (%p238) target = $region28
        $region27: #{custom_policy_forward.2} parent=11 // pred_region
          %242 = vsyncadd [#allocation7], 0
          %s244 = sshll.u32 %s4, 4
          %s245 = int_to_ptr.hbm [resolvable:$true] %s244
          %s246 = sshll.u32 [#allocation8], 4
          %s247 = int_to_ptr.vmem [resolvable:$true] %s246
          %249 = dma.hbm_to_vmem [thread:$0]  %s245, 16, %s247, [#allocation7]
        $region28: #{custom_policy_forward.2} parent=11 // pred_fallthru
          _
        // Predicated region
        $region29: #{custom_policy_forward.2} parent=11 // pred_check
          %p250 = pneg %p147
        $region30: #{custom_policy_forward.2} parent=11 // pred_check_branch
          %252 = sbr.rel (%p250) target = $region32
        $region31: #{custom_policy_forward.2} parent=11 // pred_region
          %254 = vsyncadd [#allocation10], 0
          %s255 = sshll.u32 %s5, 4
          %s256 = int_to_ptr.hbm [resolvable:$true] %s255
          %s257 = sshll.u32 [#allocation9], 4
          %s258 = int_to_ptr.vmem [resolvable:$true] %s257
          %263 = dma.hbm_to_vmem [thread:$0]  %s256, 4096, %s258, [#allocation10], 128, 128, 8
        $region32: #{custom_policy_forward.2} parent=11 // pred_fallthru
          _
        // Predicated region
        $region33: #{custom_policy_forward.2} parent=11 // pred_check
          %p264 = pneg %p168
        $region34: #{custom_policy_forward.2} parent=11 // pred_check_branch
          %266 = sbr.rel (%p264) target = $region36
        $region35: #{custom_policy_forward.2} parent=11 // pred_region
          %268 = vsyncadd [#allocation10], 0
          %s270 = sshll.u32 %s6, 4
          %s271 = int_to_ptr.hbm [resolvable:$true] %s270
          %s272 = sshll.u32 [#allocation11], 4
          %s273 = int_to_ptr.vmem [resolvable:$true] %s272
          %275 = dma.hbm_to_vmem [thread:$0]  %s271, 16, %s273, [#allocation10]
        $region36: #{custom_policy_forward.2} parent=11 // pred_fallthru
          _
      $region12: #{custom_policy_forward.2} parent=5 // pred_fallthru
        _
      %p276 = scmp.lt.s32.totalorder %s16, 2
      // Predicated region
      $region37: #{custom_policy_forward.2} parent=5 // pred_check
        %p277 = pneg %p276
      $region38: #{custom_policy_forward.2} parent=5 // pred_check_branch
        %279 = sbr.rel (%p277) target = $region40
      $region39: #{custom_policy_forward.2} parent=5 // pred_region
        // Predicated region
        $region41: #{custom_policy_forward.2} parent=39 // pred_check
          %p280 = pneg %p36
        $region42: #{custom_policy_forward.2} parent=39 // pred_check_branch
          %282 = sbr.rel (%p280) target = $region44
        $region43: #{custom_policy_forward.2} parent=39 // pred_region
          %p283 = scmp.lt.s32.totalorder %s16, 1
          %s284 = scalar_select %p283, %s16, 1
          %s285 = smul.addr %s284, 56
          %s286 = smul.addr %s285, 8
          %s287 = scalar_lea.vmem %s0, %s286
        $region44: #{custom_policy_forward.2} parent=39 // pred_fallthru
          _
      $region40: #{custom_policy_forward.2} parent=5 // pred_fallthru
        _
      %p288 = scmp.le.s32.totalorder 1, %s16
      %p289 = scmp.lt.s32.totalorder %s16, 3
      %p290 = pnand %p288, %p289
      %p291 = pneg %p290
      // Predicated region
      $region45: #{custom_policy_forward.2} parent=5 // pred_check
        _
      $region46: #{custom_policy_forward.2} parent=5 // pred_check_branch
        %293 = sbr.rel (%p290) target = $region48
      $region47: #{custom_policy_forward.2} parent=5 // pred_region
        %s294 = ssub.s32 %s16, 1
        // Predicated region
        $region49: #{custom_policy_forward.2} parent=47 // pred_check
          %p295 = pneg %p84
        $region50: #{custom_policy_forward.2} parent=47 // pred_check_branch
          %297 = sbr.rel (%p295) target = $region52
        $region51: #{custom_policy_forward.2} parent=47 // pred_region
          %299 = dma.done [#allocation5], 16
        $region52: #{custom_policy_forward.2} parent=47 // pred_fallthru
          _
        // Predicated region
        $region53: #{custom_policy_forward.2} parent=47 // pred_check
          %p300 = pneg %p105
        $region54: #{custom_policy_forward.2} parent=47 // pred_check_branch
          %302 = sbr.rel (%p300) target = $region56
        $region55: #{custom_policy_forward.2} parent=47 // pred_region
          %304 = dma.done [#allocation7], 2048
        $region56: #{custom_policy_forward.2} parent=47 // pred_fallthru
          _
        // Predicated region
        $region57: #{custom_policy_forward.2} parent=47 // pred_check
          %p305 = pneg %p126
        $region58: #{custom_policy_forward.2} parent=47 // pred_check_branch
          %307 = sbr.rel (%p305) target = $region60
        $region59: #{custom_policy_forward.2} parent=47 // pred_region
          %309 = dma.done [#allocation7], 16
        $region60: #{custom_policy_forward.2} parent=47 // pred_fallthru
          _
        // Predicated region
        $region61: #{custom_policy_forward.2} parent=47 // pred_check
          %p310 = pneg %p147
        $region62: #{custom_policy_forward.2} parent=47 // pred_check_branch
          %312 = sbr.rel (%p310) target = $region64
        $region63: #{custom_policy_forward.2} parent=47 // pred_region
          %314 = dma.done [#allocation10], 4096
        $region64: #{custom_policy_forward.2} parent=47 // pred_fallthru
          _
        // Predicated region
        $region65: #{custom_policy_forward.2} parent=47 // pred_check
          %p315 = pneg %p168
        $region66: #{custom_policy_forward.2} parent=47 // pred_check_branch
          %317 = sbr.rel (%p315) target = $region68
        $region67: #{custom_policy_forward.2} parent=47 // pred_region
          %319 = dma.done [#allocation10], 16
        $region68: #{custom_policy_forward.2} parent=47 // pred_fallthru
          _
        %p320 = scmp.lt.s32.totalorder %s21, 1
        %s321 = scalar_select %p320, %s21, 1
        %s322 = smul.addr %s321, 56
        %s323 = smul.addr %s322, 8
        %s324 = scalar_lea.vmem %s0, %s323
        %p325 = pneg %p42
        %p326 = pneg %p39
        %p327 = pneg %p63
        %p328 = pneg %p60
        %p329 = pneg %p84
        %p330 = pneg %p81
        %p331 = pneg %p105
        %p332 = pneg %p102
        %p333 = pneg %p126
        %p334 = pneg %p123
        %p335 = pneg %p147
        %p336 = pneg %p144
        %p337 = pneg %p168
        %p338 = pneg %p165
        %p339 = pneg %p194
        %p340 = pneg %p191
        %p341 = scmp.lt.s32.totalorder %s21, 1
        %s342 = scalar_select %p341, %s21, 1
        %s343 = smul.addr %s342, 48
        %s344 = smul.addr %s343, 4
        %s345 = scalar_lea.vmem %s7, %s344
        %p346 = scmp.lt.s32.totalorder %s21, 1
        %s347 = scalar_select %p346, %s21, 1
        %s348 = smul.addr %s347, 56
        %s349 = smul.addr %s348, 8
        %s350 = scalar_lea.vmem %s0, %s349
        %p351 = scmp.lt.s32.totalorder %s21, 1
        %s352 = scalar_select %p351, %s21, 1
        %s353 = smul.addr %s352, 48
        %s354 = smul.addr %s353, 4
        %s355 = scalar_lea.vmem %s7, %s354
        %vm356 = vcmask 261120
        %357 = vst.msk [vmem:[#allocation2] sm:$0xff] %vm356, 0.0
        %358 = vst.msk [vmem:[#allocation2 + $0x8] sm:$0xff] %vm356, 0.0
        %359 = vst.msk [vmem:[#allocation2 + $0x10] sm:$0xff] %vm356, 0.0
        %360 = vst.msk [vmem:[#allocation2 + $0x18] sm:$0xff] %vm356, 0.0
        %361 = vst.msk [vmem:[#allocation2 + $0x20] sm:$0xff] %vm356, 0.0
        %362 = vst.msk [vmem:[#allocation2 + $0x28] sm:$0xff] %vm356, 0.0
        %363 = vst.msk [vmem:[#allocation2 + $0x30] sm:$0xff] %vm356, 0.0
        %364 = vst.msk [vmem:[#allocation2 + $0x38] sm:$0xff] %vm356, 0.0
        %365 = vst.msk [vmem:[#allocation2 + $0x40] sm:$0xff] %vm356, 0.0
        %366 = vst.msk [vmem:[#allocation2 + $0x48] sm:$0xff] %vm356, 0.0
        %367 = vst.msk [vmem:[#allocation2 + $0x50] sm:$0xff] %vm356, 0.0
        %368 = vst.msk [vmem:[#allocation2 + $0x58] sm:$0xff] %vm356, 0.0
        %369 = vst.msk [vmem:[#allocation2 + $0x60] sm:$0xff] %vm356, 0.0
        %370 = vst.msk [vmem:[#allocation2 + $0x68] sm:$0xff] %vm356, 0.0
        %371 = vst.msk [vmem:[#allocation2 + $0x70] sm:$0xff] %vm356, 0.0
        %372 = vst.msk [vmem:[#allocation2 + $0x78] sm:$0xff] %vm356, 0.0
        %373 = vst.msk [vmem:[#allocation2 + $0x80] sm:$0xff] %vm356, 0.0
        %374 = vst.msk [vmem:[#allocation2 + $0x88] sm:$0xff] %vm356, 0.0
        %375 = vst.msk [vmem:[#allocation2 + $0x90] sm:$0xff] %vm356, 0.0
        %376 = vst.msk [vmem:[#allocation2 + $0x98] sm:$0xff] %vm356, 0.0
        %377 = vst.msk [vmem:[#allocation2 + $0xa0] sm:$0xff] %vm356, 0.0
        %378 = vst.msk [vmem:[#allocation2 + $0xa8] sm:$0xff] %vm356, 0.0
        %379 = vst.msk [vmem:[#allocation2 + $0xb0] sm:$0xff] %vm356, 0.0
        %380 = vst.msk [vmem:[#allocation2 + $0xb8] sm:$0xff] %vm356, 0.0
        %381 = vst.msk [vmem:[#allocation2 + $0xc0] sm:$0xff] %vm356, 0.0
        %382 = vst.msk [vmem:[#allocation2 + $0xc8] sm:$0xff] %vm356, 0.0
        %383 = vst.msk [vmem:[#allocation2 + $0xd0] sm:$0xff] %vm356, 0.0
        %384 = vst.msk [vmem:[#allocation2 + $0xd8] sm:$0xff] %vm356, 0.0
        %385 = vst.msk [vmem:[#allocation2 + $0xe0] sm:$0xff] %vm356, 0.0
        %386 = vst.msk [vmem:[#allocation2 + $0xe8] sm:$0xff] %vm356, 0.0
        %387 = vst.msk [vmem:[#allocation2 + $0xf0] sm:$0xff] %vm356, 0.0
        %388 = vst.msk [vmem:[#allocation2 + $0xf8] sm:$0xff] %vm356, 0.0
        %389 = vst.msk [vmem:[#allocation2 + $0x100] sm:$0xff] %vm356, 0.0
        %390 = vst.msk [vmem:[#allocation2 + $0x108] sm:$0xff] %vm356, 0.0
        %391 = vst.msk [vmem:[#allocation2 + $0x110] sm:$0xff] %vm356, 0.0
        %392 = vst.msk [vmem:[#allocation2 + $0x118] sm:$0xff] %vm356, 0.0
        %393 = vst.msk [vmem:[#allocation2 + $0x120] sm:$0xff] %vm356, 0.0
        %394 = vst.msk [vmem:[#allocation2 + $0x128] sm:$0xff] %vm356, 0.0
        %395 = vst.msk [vmem:[#allocation2 + $0x130] sm:$0xff] %vm356, 0.0
        %396 = vst.msk [vmem:[#allocation2 + $0x138] sm:$0xff] %vm356, 0.0
        %397 = vst.msk [vmem:[#allocation2 + $0x140] sm:$0xff] %vm356, 0.0
        %398 = vst.msk [vmem:[#allocation2 + $0x148] sm:$0xff] %vm356, 0.0
        %399 = vst.msk [vmem:[#allocation2 + $0x150] sm:$0xff] %vm356, 0.0
        %400 = vst.msk [vmem:[#allocation2 + $0x158] sm:$0xff] %vm356, 0.0
        %401 = vst.msk [vmem:[#allocation2 + $0x160] sm:$0xff] %vm356, 0.0
        %402 = vst.msk [vmem:[#allocation2 + $0x168] sm:$0xff] %vm356, 0.0
        %403 = vst.msk [vmem:[#allocation2 + $0x170] sm:$0xff] %vm356, 0.0
        %404 = vst.msk [vmem:[#allocation2 + $0x178] sm:$0xff] %vm356, 0.0
        %405 = vst.msk [vmem:[#allocation2 + $0x180] sm:$0xff] %vm356, 0.0
        %406 = vst.msk [vmem:[#allocation2 + $0x188] sm:$0xff] %vm356, 0.0
        %407 = vst.msk [vmem:[#allocation2 + $0x190] sm:$0xff] %vm356, 0.0
        %408 = vst.msk [vmem:[#allocation2 + $0x198] sm:$0xff] %vm356, 0.0
        %409 = vst.msk [vmem:[#allocation2 + $0x1a0] sm:$0xff] %vm356, 0.0
        %410 = vst.msk [vmem:[#allocation2 + $0x1a8] sm:$0xff] %vm356, 0.0
        %411 = vst.msk [vmem:[#allocation2 + $0x1b0] sm:$0xff] %vm356, 0.0
        %412 = vst.msk [vmem:[#allocation2 + $0x1b8] sm:$0xff] %vm356, 0.0
        %vm413 = vcmask 523264
        %414 = vst.msk [vmem:[#allocation3] sm:$0xff] %vm413, 0.0
        %415 = vst.msk [vmem:[#allocation3 + $0x8] sm:$0xff] %vm413, 0.0
        %416 = vst.msk [vmem:[#allocation3 + $0x10] sm:$0xff] %vm413, 0.0
        %417 = vst.msk [vmem:[#allocation3 + $0x18] sm:$0xff] %vm413, 0.0
        %418 = vst.msk [vmem:[#allocation3 + $0x20] sm:$0xff] %vm413, 0.0
        %419 = vst.msk [vmem:[#allocation3 + $0x28] sm:$0xff] %vm413, 0.0
        %420 = vst.msk [vmem:[#allocation3 + $0x30] sm:$0xff] %vm413, 0.0
        %421 = vst.msk [vmem:[#allocation3 + $0x38] sm:$0xff] %vm413, 0.0
        %422 = vst.msk [vmem:[#allocation3 + $0x40] sm:$0xff] %vm413, 0.0
        %423 = vst.msk [vmem:[#allocation3 + $0x48] sm:$0xff] %vm413, 0.0
        %424 = vst.msk [vmem:[#allocation3 + $0x50] sm:$0xff] %vm413, 0.0
        %425 = vst.msk [vmem:[#allocation3 + $0x58] sm:$0xff] %vm413, 0.0
        %426 = vst.msk [vmem:[#allocation3 + $0x60] sm:$0xff] %vm413, 0.0
        %427 = vst.msk [vmem:[#allocation3 + $0x68] sm:$0xff] %vm413, 0.0
        %428 = vst.msk [vmem:[#allocation3 + $0x70] sm:$0xff] %vm413, 0.0
        %429 = vst.msk [vmem:[#allocation3 + $0x78] sm:$0xff] %vm413, 0.0
        %430 = vst.msk [vmem:[#allocation3 + $0x80] sm:$0xff] %vm413, 0.0
        %431 = vst.msk [vmem:[#allocation3 + $0x88] sm:$0xff] %vm413, 0.0
        %432 = vst.msk [vmem:[#allocation3 + $0x90] sm:$0xff] %vm413, 0.0
        %433 = vst.msk [vmem:[#allocation3 + $0x98] sm:$0xff] %vm413, 0.0
        %434 = vst.msk [vmem:[#allocation3 + $0xa0] sm:$0xff] %vm413, 0.0
        %435 = vst.msk [vmem:[#allocation3 + $0xa8] sm:$0xff] %vm413, 0.0
        %436 = vst.msk [vmem:[#allocation3 + $0xb0] sm:$0xff] %vm413, 0.0
        %437 = vst.msk [vmem:[#allocation3 + $0xb8] sm:$0xff] %vm413, 0.0
        %438 = vst.msk [vmem:[#allocation3 + $0xc0] sm:$0xff] %vm413, 0.0
        %439 = vst.msk [vmem:[#allocation3 + $0xc8] sm:$0xff] %vm413, 0.0
        %440 = vst.msk [vmem:[#allocation3 + $0xd0] sm:$0xff] %vm413, 0.0
        %441 = vst.msk [vmem:[#allocation3 + $0xd8] sm:$0xff] %vm413, 0.0
        %442 = vst.msk [vmem:[#allocation3 + $0xe0] sm:$0xff] %vm413, 0.0
        %443 = vst.msk [vmem:[#allocation3 + $0xe8] sm:$0xff] %vm413, 0.0
        %444 = vst.msk [vmem:[#allocation3 + $0xf0] sm:$0xff] %vm413, 0.0
        %445 = vst.msk [vmem:[#allocation3 + $0xf8] sm:$0xff] %vm413, 0.0
        %446 = vst.msk [vmem:[#allocation3 + $0x100] sm:$0xff] %vm413, 0.0
        %447 = vst.msk [vmem:[#allocation3 + $0x108] sm:$0xff] %vm413, 0.0
        %448 = vst.msk [vmem:[#allocation3 + $0x110] sm:$0xff] %vm413, 0.0
        %449 = vst.msk [vmem:[#allocation3 + $0x118] sm:$0xff] %vm413, 0.0
        %450 = vst.msk [vmem:[#allocation3 + $0x120] sm:$0xff] %vm413, 0.0
        %451 = vst.msk [vmem:[#allocation3 + $0x128] sm:$0xff] %vm413, 0.0
        %452 = vst.msk [vmem:[#allocation3 + $0x130] sm:$0xff] %vm413, 0.0
        %453 = vst.msk [vmem:[#allocation3 + $0x138] sm:$0xff] %vm413, 0.0
        %454 = vst.msk [vmem:[#allocation3 + $0x140] sm:$0xff] %vm413, 0.0
        %455 = vst.msk [vmem:[#allocation3 + $0x148] sm:$0xff] %vm413, 0.0
        %456 = vst.msk [vmem:[#allocation3 + $0x150] sm:$0xff] %vm413, 0.0
        %457 = vst.msk [vmem:[#allocation3 + $0x158] sm:$0xff] %vm413, 0.0
        %458 = vst.msk [vmem:[#allocation3 + $0x160] sm:$0xff] %vm413, 0.0
        %459 = vst.msk [vmem:[#allocation3 + $0x168] sm:$0xff] %vm413, 0.0
        %460 = vst.msk [vmem:[#allocation3 + $0x170] sm:$0xff] %vm413, 0.0
        %461 = vst.msk [vmem:[#allocation3 + $0x178] sm:$0xff] %vm413, 0.0
        %462 = vst.msk [vmem:[#allocation3 + $0x180] sm:$0xff] %vm413, 0.0
        %463 = vst.msk [vmem:[#allocation3 + $0x188] sm:$0xff] %vm413, 0.0
        %464 = vst.msk [vmem:[#allocation3 + $0x190] sm:$0xff] %vm413, 0.0
        %465 = vst.msk [vmem:[#allocation3 + $0x198] sm:$0xff] %vm413, 0.0
        %466 = vst.msk [vmem:[#allocation3 + $0x1a0] sm:$0xff] %vm413, 0.0
        %467 = vst.msk [vmem:[#allocation3 + $0x1a8] sm:$0xff] %vm413, 0.0
        %468 = vst.msk [vmem:[#allocation3 + $0x1b0] sm:$0xff] %vm413, 0.0
        %469 = vst.msk [vmem:[#allocation3 + $0x1b8] sm:$0xff] %vm413, 0.0
        %v470 = vld [vmem:[%s350] sm:$0xff]
        %v471 = vld [vmem:[%s350 + $0x8] sm:$0xff]
        %v472 = vld [vmem:[%s350 + $0x10] sm:$0xff]
        %v473 = vld [vmem:[%s350 + $0x18] sm:$0xff]
        %v474 = vld [vmem:[%s350 + $0x20] sm:$0xff]
        %v475 = vld [vmem:[%s350 + $0x28] sm:$0xff]
        %v476 = vld [vmem:[%s350 + $0x30] sm:$0xff]
        %v477 = vld [vmem:[%s350 + $0x38] sm:$0xff]
        %v478 = vld [vmem:[%s350 + $0x40] sm:$0xff]
        %v479 = vld [vmem:[%s350 + $0x48] sm:$0xff]
        %v480 = vld [vmem:[%s350 + $0x50] sm:$0xff]
        %v481 = vld [vmem:[%s350 + $0x58] sm:$0xff]
        %v482 = vld [vmem:[%s350 + $0x60] sm:$0xff]
        %v483 = vld [vmem:[%s350 + $0x68] sm:$0xff]
        %v484 = vld [vmem:[%s350 + $0x70] sm:$0xff]
        %v485 = vld [vmem:[%s350 + $0x78] sm:$0xff]
        %v486 = vld [vmem:[%s350 + $0x80] sm:$0xff]
        %v487 = vld [vmem:[%s350 + $0x88] sm:$0xff]
        %v488 = vld [vmem:[%s350 + $0x90] sm:$0xff]
        %v489 = vld [vmem:[%s350 + $0x98] sm:$0xff]
        %v490 = vld [vmem:[%s350 + $0xa0] sm:$0xff]
        %v491 = vld [vmem:[%s350 + $0xa8] sm:$0xff]
        %v492 = vld [vmem:[%s350 + $0xb0] sm:$0xff]
        %v493 = vld [vmem:[%s350 + $0xb8] sm:$0xff]
        %v494 = vld [vmem:[%s350 + $0xc0] sm:$0xff]
        %v495 = vld [vmem:[%s350 + $0xc8] sm:$0xff]
        %v496 = vld [vmem:[%s350 + $0xd0] sm:$0xff]
        %v497 = vld [vmem:[%s350 + $0xd8] sm:$0xff]
        %v498 = vld [vmem:[%s350 + $0xe0] sm:$0xff]
        %v499 = vld [vmem:[%s350 + $0xe8] sm:$0xff]
        %v500 = vld [vmem:[%s350 + $0xf0] sm:$0xff]
        %v501 = vld [vmem:[%s350 + $0xf8] sm:$0xff]
        %v502 = vld [vmem:[%s350 + $0x100] sm:$0xff]
        %v503 = vld [vmem:[%s350 + $0x108] sm:$0xff]
        %v504 = vld [vmem:[%s350 + $0x110] sm:$0xff]
        %v505 = vld [vmem:[%s350 + $0x118] sm:$0xff]
        %v506 = vld [vmem:[%s350 + $0x120] sm:$0xff]
        %v507 = vld [vmem:[%s350 + $0x128] sm:$0xff]
        %v508 = vld [vmem:[%s350 + $0x130] sm:$0xff]
        %v509 = vld [vmem:[%s350 + $0x138] sm:$0xff]
        %v510 = vld [vmem:[%s350 + $0x140] sm:$0xff]
        %v511 = vld [vmem:[%s350 + $0x148] sm:$0xff]
        %v512 = vld [vmem:[%s350 + $0x150] sm:$0xff]
        %v513 = vld [vmem:[%s350 + $0x158] sm:$0xff]
        %v514 = vld [vmem:[%s350 + $0x160] sm:$0xff]
        %v515 = vld [vmem:[%s350 + $0x168] sm:$0xff]
        %v516 = vld [vmem:[%s350 + $0x170] sm:$0xff]
        %v517 = vld [vmem:[%s350 + $0x178] sm:$0xff]
        %v518 = vld [vmem:[%s350 + $0x180] sm:$0xff]
        %v519 = vld [vmem:[%s350 + $0x188] sm:$0xff]
        %v520 = vld [vmem:[%s350 + $0x190] sm:$0xff]
        %v521 = vld [vmem:[%s350 + $0x198] sm:$0xff]
        %v522 = vld [vmem:[%s350 + $0x1a0] sm:$0xf]
        %v523 = vld [vmem:[%s1] sm:$0x7]
        %v524 = vld [vmem:[%s350 + $0x1] sm:$0xff]
        %v525 = vld [vmem:[%s350 + $0x9] sm:$0xff]
        %v526 = vld [vmem:[%s350 + $0x11] sm:$0xff]
        %v527 = vld [vmem:[%s350 + $0x19] sm:$0xff]
        %v528 = vld [vmem:[%s350 + $0x21] sm:$0xff]
        %v529 = vld [vmem:[%s350 + $0x29] sm:$0xff]
        %v530 = vld [vmem:[%s350 + $0x31] sm:$0xff]
        %v531 = vld [vmem:[%s350 + $0x39] sm:$0xff]
        %v532 = vld [vmem:[%s350 + $0x41] sm:$0xff]
        %v533 = vld [vmem:[%s350 + $0x49] sm:$0xff]
        %v534 = vld [vmem:[%s350 + $0x51] sm:$0xff]
        %v535 = vld [vmem:[%s350 + $0x59] sm:$0xff]
        %v536 = vld [vmem:[%s350 + $0x61] sm:$0xff]
        %v537 = vld [vmem:[%s350 + $0x69] sm:$0xff]
        %v538 = vld [vmem:[%s350 + $0x71] sm:$0xff]
        %v539 = vld [vmem:[%s350 + $0x79] sm:$0xff]
        %v540 = vld [vmem:[%s350 + $0x81] sm:$0xff]
        %v541 = vld [vmem:[%s350 + $0x89] sm:$0xff]
        %v542 = vld [vmem:[%s350 + $0x91] sm:$0xff]
        %v543 = vld [vmem:[%s350 + $0x99] sm:$0xff]
        %v544 = vld [vmem:[%s350 + $0xa1] sm:$0xff]
        %v545 = vld [vmem:[%s350 + $0xa9] sm:$0xff]
        %v546 = vld [vmem:[%s350 + $0xb1] sm:$0xff]
        %v547 = vld [vmem:[%s350 + $0xb9] sm:$0xff]
        %v548 = vld [vmem:[%s350 + $0xc1] sm:$0xff]
        %v549 = vld [vmem:[%s350 + $0xc9] sm:$0xff]
        %v550 = vld [vmem:[%s350 + $0xd1] sm:$0xff]
        %v551 = vld [vmem:[%s350 + $0xd9] sm:$0xff]
        %v552 = vld [vmem:[%s350 + $0xe1] sm:$0xff]
        %v553 = vld [vmem:[%s350 + $0xe9] sm:$0xff]
        %v554 = vld [vmem:[%s350 + $0xf1] sm:$0xff]
        %v555 = vld [vmem:[%s350 + $0xf9] sm:$0xff]
        %v556 = vld [vmem:[%s350 + $0x101] sm:$0xff]
        %v557 = vld [vmem:[%s350 + $0x109] sm:$0xff]
        %v558 = vld [vmem:[%s350 + $0x111] sm:$0xff]
        %v559 = vld [vmem:[%s350 + $0x119] sm:$0xff]
        %v560 = vld [vmem:[%s350 + $0x121] sm:$0xff]
        %v561 = vld [vmem:[%s350 + $0x129] sm:$0xff]
        %v562 = vld [vmem:[%s350 + $0x131] sm:$0xff]
        %v563 = vld [vmem:[%s350 + $0x139] sm:$0xff]
        %v564 = vld [vmem:[%s350 + $0x141] sm:$0xff]
        %v565 = vld [vmem:[%s350 + $0x149] sm:$0xff]
        %v566 = vld [vmem:[%s350 + $0x151] sm:$0xff]
        %v567 = vld [vmem:[%s350 + $0x159] sm:$0xff]
        %v568 = vld [vmem:[%s350 + $0x161] sm:$0xff]
        %v569 = vld [vmem:[%s350 + $0x169] sm:$0xff]
        %v570 = vld [vmem:[%s350 + $0x171] sm:$0xff]
        %v571 = vld [vmem:[%s350 + $0x179] sm:$0xff]
        %v572 = vld [vmem:[%s350 + $0x181] sm:$0xff]
        %v573 = vld [vmem:[%s350 + $0x189] sm:$0xff]
        %v574 = vld [vmem:[%s350 + $0x191] sm:$0xff]
        %v575 = vld [vmem:[%s350 + $0x199] sm:$0xff]
        %v576 = vld [vmem:[%s350 + $0x1a1] sm:$0xf]
        %s577 = scalar_lea.vmem %s1, 4
        %v578 = vld [vmem:[%s577] sm:$0x7]
        %vm579 = vcmask 23552
        %v581 = vsel %vm579, %v524, 0
        %v584 = vsel %vm579, %v525, 0
        %v587 = vsel %vm579, %v526, 0
        %v590 = vsel %vm579, %v527, 0
        %v593 = vsel %vm579, %v528, 0
        %v596 = vsel %vm579, %v529, 0
        %v599 = vsel %vm579, %v530, 0
        %v602 = vsel %vm579, %v531, 0
        %v605 = vsel %vm579, %v532, 0
        %v608 = vsel %vm579, %v533, 0
        %v611 = vsel %vm579, %v534, 0
        %v614 = vsel %vm579, %v535, 0
        %v617 = vsel %vm579, %v536, 0
        %v620 = vsel %vm579, %v537, 0
        %v623 = vsel %vm579, %v538, 0
        %v626 = vsel %vm579, %v539, 0
        %v629 = vsel %vm579, %v540, 0
        %v632 = vsel %vm579, %v541, 0
        %v635 = vsel %vm579, %v542, 0
        %v638 = vsel %vm579, %v543, 0
        %v641 = vsel %vm579, %v544, 0
        %v644 = vsel %vm579, %v545, 0
        %v647 = vsel %vm579, %v546, 0
        %v650 = vsel %vm579, %v547, 0
        %v653 = vsel %vm579, %v548, 0
        %v656 = vsel %vm579, %v549, 0
        %v659 = vsel %vm579, %v550, 0
        %v662 = vsel %vm579, %v551, 0
        %v665 = vsel %vm579, %v552, 0
        %v668 = vsel %vm579, %v553, 0
        %v671 = vsel %vm579, %v554, 0
        %v674 = vsel %vm579, %v555, 0
        %v677 = vsel %vm579, %v556, 0
        %v680 = vsel %vm579, %v557, 0
        %v683 = vsel %vm579, %v558, 0
        %v686 = vsel %vm579, %v559, 0
        %v689 = vsel %vm579, %v560, 0
        %v692 = vsel %vm579, %v561, 0
        %v695 = vsel %vm579, %v562, 0
        %v698 = vsel %vm579, %v563, 0
        %v701 = vsel %vm579, %v564, 0
        %v704 = vsel %vm579, %v565, 0
        %v707 = vsel %vm579, %v566, 0
        %v710 = vsel %vm579, %v567, 0
        %v713 = vsel %vm579, %v568, 0
        %v716 = vsel %vm579, %v569, 0
        %v719 = vsel %vm579, %v570, 0
        %v722 = vsel %vm579, %v571, 0
        %v725 = vsel %vm579, %v572, 0
        %v728 = vsel %vm579, %v573, 0
        %v731 = vsel %vm579, %v574, 0
        %v734 = vsel %vm579, %v575, 0
        %v737 = vsel %vm579, %v576, 0
        %vm739 = vcmask 1042432
        %v741 = vsel %vm739, %v578, 0
        %743 = vmatpush.msra.mxu0 0.0
        %744 = vmatpush.msra.mxu0 0.0
        %745 = vmatpush.msra.mxu0 0.0
        %746 = vmatpush.msra.mxu0 0.0
        %747 = vmatpush.msra.mxu0 0.0
        %748 = vmatpush.msra.mxu0 0.0
        %749 = vmatpush.msra.mxu0 0.0
        %750 = vmatpush.msra.mxu0 0.0
        %751 = vmatpush.msra.mxu0 0.0
        %752 = vmatpush.msra.mxu0 0.0
        %753 = vmatpush.msra.mxu0 0.0
        %754 = vmatpush.msra.mxu0 0.0
        %755 = vmatpush.msra.mxu0 0.0
        %756 = vmatpush.msra.mxu0 0.0
        %757 = vmatpush.msra.mxu0 0.0
        %758 = vmatpush.msra.mxu0 %v741
        %759 = vmatmul.f32.gmra.mxu0 %v581
        %v760 = vpop.f32.mrf.mxu0
        %v761 = vadd.f32 0.0, %v760
        %762 = vmatmul.f32.gmra.mxu0 %v584
        %v763 = vpop.f32.mrf.mxu0
        %v764 = vadd.f32 0.0, %v763
        %765 = vmatmul.f32.gmra.mxu0 %v587
        %v766 = vpop.f32.mrf.mxu0
        %v767 = vadd.f32 0.0, %v766
        %768 = vmatmul.f32.gmra.mxu0 %v590
        %v769 = vpop.f32.mrf.mxu0
        %v770 = vadd.f32 0.0, %v769
        %771 = vmatmul.f32.gmra.mxu0 %v593
        %v772 = vpop.f32.mrf.mxu0
        %v773 = vadd.f32 0.0, %v772
        %774 = vmatmul.f32.gmra.mxu0 %v596
        %v775 = vpop.f32.mrf.mxu0
        %v776 = vadd.f32 0.0, %v775
        %777 = vmatmul.f32.gmra.mxu0 %v599
        %v778 = vpop.f32.mrf.mxu0
        %v779 = vadd.f32 0.0, %v778
        %780 = vmatmul.f32.gmra.mxu0 %v602
        %v781 = vpop.f32.mrf.mxu0
        %v782 = vadd.f32 0.0, %v781
        %783 = vmatmul.f32.gmra.mxu0 %v605
        %v784 = vpop.f32.mrf.mxu0
        %v785 = vadd.f32 0.0, %v784
        %786 = vmatmul.f32.gmra.mxu0 %v608
        %v787 = vpop.f32.mrf.mxu0
        %v788 = vadd.f32 0.0, %v787
        %789 = vmatmul.f32.gmra.mxu0 %v611
        %v790 = vpop.f32.mrf.mxu0
        %v791 = vadd.f32 0.0, %v790
        %792 = vmatmul.f32.gmra.mxu0 %v614
        %v793 = vpop.f32.mrf.mxu0
        %v794 = vadd.f32 0.0, %v793
        %795 = vmatmul.f32.gmra.mxu0 %v617
        %v796 = vpop.f32.mrf.mxu0
        %v797 = vadd.f32 0.0, %v796
        %798 = vmatmul.f32.gmra.mxu0 %v620
        %v799 = vpop.f32.mrf.mxu0
        %v800 = vadd.f32 0.0, %v799
        %801 = vmatmul.f32.gmra.mxu0 %v623
        %v802 = vpop.f32.mrf.mxu0
        %v803 = vadd.f32 0.0, %v802
        %804 = vmatmul.f32.gmra.mxu0 %v626
        %v805 = vpop.f32.mrf.mxu0
        %v806 = vadd.f32 0.0, %v805
        %807 = vmatmul.f32.gmra.mxu0 %v629
        %v808 = vpop.f32.mrf.mxu0
        %v809 = vadd.f32 0.0, %v808
        %810 = vmatmul.f32.gmra.mxu0 %v632
        %v811 = vpop.f32.mrf.mxu0
        %v812 = vadd.f32 0.0, %v811
        %813 = vmatmul.f32.gmra.mxu0 %v635
        %v814 = vpop.f32.mrf.mxu0
        %v815 = vadd.f32 0.0, %v814
        %816 = vmatmul.f32.gmra.mxu0 %v638
        %v817 = vpop.f32.mrf.mxu0
        %v818 = vadd.f32 0.0, %v817
        %819 = vmatmul.f32.gmra.mxu0 %v641
        %v820 = vpop.f32.mrf.mxu0
        %v821 = vadd.f32 0.0, %v820
        %822 = vmatmul.f32.gmra.mxu0 %v644
        %v823 = vpop.f32.mrf.mxu0
        %v824 = vadd.f32 0.0, %v823
        %825 = vmatmul.f32.gmra.mxu0 %v647
        %v826 = vpop.f32.mrf.mxu0
        %v827 = vadd.f32 0.0, %v826
        %828 = vmatmul.f32.gmra.mxu0 %v650
        %v829 = vpop.f32.mrf.mxu0
        %v830 = vadd.f32 0.0, %v829
        %831 = vmatmul.f32.gmra.mxu0 %v653
        %v832 = vpop.f32.mrf.mxu0
        %v833 = vadd.f32 0.0, %v832
        %834 = vmatmul.f32.gmra.mxu0 %v656
        %v835 = vpop.f32.mrf.mxu0
        %v836 = vadd.f32 0.0, %v835
        %837 = vmatmul.f32.gmra.mxu0 %v659
        %v838 = vpop.f32.mrf.mxu0
        %v839 = vadd.f32 0.0, %v838
        %840 = vmatmul.f32.gmra.mxu0 %v662
        %v841 = vpop.f32.mrf.mxu0
        %v842 = vadd.f32 0.0, %v841
        %843 = vmatmul.f32.gmra.mxu0 %v665
        %v844 = vpop.f32.mrf.mxu0
        %v845 = vadd.f32 0.0, %v844
        %846 = vmatmul.f32.gmra.mxu0 %v668
        %v847 = vpop.f32.mrf.mxu0
        %v848 = vadd.f32 0.0, %v847
        %849 = vmatmul.f32.gmra.mxu0 %v671
        %v850 = vpop.f32.mrf.mxu0
        %v851 = vadd.f32 0.0, %v850
        %852 = vmatmul.f32.gmra.mxu0 %v674
        %v853 = vpop.f32.mrf.mxu0
        %v854 = vadd.f32 0.0, %v853
        %855 = vmatmul.f32.gmra.mxu0 %v677
        %v856 = vpop.f32.mrf.mxu0
        %v857 = vadd.f32 0.0, %v856
        %858 = vmatmul.f32.gmra.mxu0 %v680
        %v859 = vpop.f32.mrf.mxu0
        %v860 = vadd.f32 0.0, %v859
        %861 = vmatmul.f32.gmra.mxu0 %v683
        %v862 = vpop.f32.mrf.mxu0
        %v863 = vadd.f32 0.0, %v862
        %864 = vmatmul.f32.gmra.mxu0 %v686
        %v865 = vpop.f32.mrf.mxu0
        %v866 = vadd.f32 0.0, %v865
        %867 = vmatmul.f32.gmra.mxu0 %v689
        %v868 = vpop.f32.mrf.mxu0
        %v869 = vadd.f32 0.0, %v868
        %870 = vmatmul.f32.gmra.mxu0 %v692
        %v871 = vpop.f32.mrf.mxu0
        %v872 = vadd.f32 0.0, %v871
        %873 = vmatmul.f32.gmra.mxu0 %v695
        %v874 = vpop.f32.mrf.mxu0
        %v875 = vadd.f32 0.0, %v874
        %876 = vmatmul.f32.gmra.mxu0 %v698
        %v877 = vpop.f32.mrf.mxu0
        %v878 = vadd.f32 0.0, %v877
        %879 = vmatmul.f32.gmra.mxu0 %v701
        %v880 = vpop.f32.mrf.mxu0
        %v881 = vadd.f32 0.0, %v880
        %882 = vmatmul.f32.gmra.mxu0 %v704
        %v883 = vpop.f32.mrf.mxu0
        %v884 = vadd.f32 0.0, %v883
        %885 = vmatmul.f32.gmra.mxu0 %v707
        %v886 = vpop.f32.mrf.mxu0
        %v887 = vadd.f32 0.0, %v886
        %888 = vmatmul.f32.gmra.mxu0 %v710
        %v889 = vpop.f32.mrf.mxu0
        %v890 = vadd.f32 0.0, %v889
        %891 = vmatmul.f32.gmra.mxu0 %v713
        %v892 = vpop.f32.mrf.mxu0
        %v893 = vadd.f32 0.0, %v892
        %894 = vmatmul.f32.gmra.mxu0 %v716
        %v895 = vpop.f32.mrf.mxu0
        %v896 = vadd.f32 0.0, %v895
        %897 = vmatmul.f32.gmra.mxu0 %v719
        %v898 = vpop.f32.mrf.mxu0
        %v899 = vadd.f32 0.0, %v898
        %900 = vmatmul.f32.gmra.mxu0 %v722
        %v901 = vpop.f32.mrf.mxu0
        %v902 = vadd.f32 0.0, %v901
        %903 = vmatmul.f32.gmra.mxu0 %v725
        %v904 = vpop.f32.mrf.mxu0
        %v905 = vadd.f32 0.0, %v904
        %906 = vmatmul.f32.gmra.mxu0 %v728
        %v907 = vpop.f32.mrf.mxu0
        %v908 = vadd.f32 0.0, %v907
        %909 = vmatmul.f32.gmra.mxu0 %v731
        %v910 = vpop.f32.mrf.mxu0
        %v911 = vadd.f32 0.0, %v910
        %912 = vmatmul.f32.gmra.mxu0 %v734
        %v913 = vpop.f32.mrf.mxu0
        %v914 = vadd.f32 0.0, %v913
        %915 = vmatmul.f32.gmra.mxu0 %v737
        %v916 = vpop.f32.mrf.mxu0
        %v917 = vadd.f32 0.0, %v916
        %918 = vdwg.mxu0
        %v920 = vsel %vm579, %v470, 0
        %v923 = vsel %vm579, %v471, 0
        %v926 = vsel %vm579, %v472, 0
        %v929 = vsel %vm579, %v473, 0
        %v932 = vsel %vm579, %v474, 0
        %v935 = vsel %vm579, %v475, 0
        %v938 = vsel %vm579, %v476, 0
        %v941 = vsel %vm579, %v477, 0
        %v944 = vsel %vm579, %v478, 0
        %v947 = vsel %vm579, %v479, 0
        %v950 = vsel %vm579, %v480, 0
        %v953 = vsel %vm579, %v481, 0
        %v956 = vsel %vm579, %v482, 0
        %v959 = vsel %vm579, %v483, 0
        %v962 = vsel %vm579, %v484, 0
        %v965 = vsel %vm579, %v485, 0
        %v968 = vsel %vm579, %v486, 0
        %v971 = vsel %vm579, %v487, 0
        %v974 = vsel %vm579, %v488, 0
        %v977 = vsel %vm579, %v489, 0
        %v980 = vsel %vm579, %v490, 0
        %v983 = vsel %vm579, %v491, 0
        %v986 = vsel %vm579, %v492, 0
        %v989 = vsel %vm579, %v493, 0
        %v992 = vsel %vm579, %v494, 0
        %v995 = vsel %vm579, %v495, 0
        %v998 = vsel %vm579, %v496, 0
        %v1001 = vsel %vm579, %v497, 0
        %v1004 = vsel %vm579, %v498, 0
        %v1007 = vsel %vm579, %v499, 0
        %v1010 = vsel %vm579, %v500, 0
        %v1013 = vsel %vm579, %v501, 0
        %v1016 = vsel %vm579, %v502, 0
        %v1019 = vsel %vm579, %v503, 0
        %v1022 = vsel %vm579, %v504, 0
        %v1025 = vsel %vm579, %v505, 0
        %v1028 = vsel %vm579, %v506, 0
        %v1031 = vsel %vm579, %v507, 0
        %v1034 = vsel %vm579, %v508, 0
        %v1037 = vsel %vm579, %v509, 0
        %v1040 = vsel %vm579, %v510, 0
        %v1043 = vsel %vm579, %v511, 0
        %v1046 = vsel %vm579, %v512, 0
        %v1049 = vsel %vm579, %v513, 0
        %v1052 = vsel %vm579, %v514, 0
        %v1055 = vsel %vm579, %v515, 0
        %v1058 = vsel %vm579, %v516, 0
        %v1061 = vsel %vm579, %v517, 0
        %v1064 = vsel %vm579, %v518, 0
        %v1067 = vsel %vm579, %v519, 0
        %v1070 = vsel %vm579, %v520, 0
        %v1073 = vsel %vm579, %v521, 0
        %v1076 = vsel %vm579, %v522, 0
        %v1079 = vsel %vm739, %v523, 0
        %1081 = vmatpush.msra.mxu0 0.0
        %1082 = vmatpush.msra.mxu0 0.0
        %1083 = vmatpush.msra.mxu0 0.0
        %1084 = vmatpush.msra.mxu0 0.0
        %1085 = vmatpush.msra.mxu0 0.0
        %1086 = vmatpush.msra.mxu0 0.0
        %1087 = vmatpush.msra.mxu0 0.0
        %1088 = vmatpush.msra.mxu0 0.0
        %1089 = vmatpush.msra.mxu0 0.0
        %1090 = vmatpush.msra.mxu0 0.0
        %1091 = vmatpush.msra.mxu0 0.0
        %1092 = vmatpush.msra.mxu0 0.0
        %1093 = vmatpush.msra.mxu0 0.0
        %1094 = vmatpush.msra.mxu0 0.0
        %1095 = vmatpush.msra.mxu0 0.0
        %1096 = vmatpush.msra.mxu0 %v1079
        %1097 = vmatmul.f32.gmra.mxu0 %v920
        %v1098 = vpop.f32.mrf.mxu0
        %v1099 = vadd.f32 %v761, %v1098
        %1100 = vmatmul.f32.gmra.mxu0 %v923
        %v1101 = vpop.f32.mrf.mxu0
        %v1102 = vadd.f32 %v764, %v1101
        %1103 = vmatmul.f32.gmra.mxu0 %v926
        %v1104 = vpop.f32.mrf.mxu0
        %v1105 = vadd.f32 %v767, %v1104
        %1106 = vmatmul.f32.gmra.mxu0 %v929
        %v1107 = vpop.f32.mrf.mxu0
        %v1108 = vadd.f32 %v770, %v1107
        %1109 = vmatmul.f32.gmra.mxu0 %v932
        %v1110 = vpop.f32.mrf.mxu0
        %v1111 = vadd.f32 %v773, %v1110
        %1112 = vmatmul.f32.gmra.mxu0 %v935
        %v1113 = vpop.f32.mrf.mxu0
        %v1114 = vadd.f32 %v776, %v1113
        %1115 = vmatmul.f32.gmra.mxu0 %v938
        %v1116 = vpop.f32.mrf.mxu0
        %v1117 = vadd.f32 %v779, %v1116
        %1118 = vmatmul.f32.gmra.mxu0 %v941
        %v1119 = vpop.f32.mrf.mxu0
        %v1120 = vadd.f32 %v782, %v1119
        %1121 = vmatmul.f32.gmra.mxu0 %v944
        %v1122 = vpop.f32.mrf.mxu0
        %v1123 = vadd.f32 %v785, %v1122
        %1124 = vmatmul.f32.gmra.mxu0 %v947
        %v1125 = vpop.f32.mrf.mxu0
        %v1126 = vadd.f32 %v788, %v1125
        %1127 = vmatmul.f32.gmra.mxu0 %v950
        %v1128 = vpop.f32.mrf.mxu0
        %v1129 = vadd.f32 %v791, %v1128
        %1130 = vmatmul.f32.gmra.mxu0 %v953
        %v1131 = vpop.f32.mrf.mxu0
        %v1132 = vadd.f32 %v794, %v1131
        %1133 = vmatmul.f32.gmra.mxu0 %v956
        %v1134 = vpop.f32.mrf.mxu0
        %v1135 = vadd.f32 %v797, %v1134
        %1136 = vmatmul.f32.gmra.mxu0 %v959
        %v1137 = vpop.f32.mrf.mxu0
        %v1138 = vadd.f32 %v800, %v1137
        %1139 = vmatmul.f32.gmra.mxu0 %v962
        %v1140 = vpop.f32.mrf.mxu0
        %v1141 = vadd.f32 %v803, %v1140
        %1142 = vmatmul.f32.gmra.mxu0 %v965
        %v1143 = vpop.f32.mrf.mxu0
        %v1144 = vadd.f32 %v806, %v1143
        %1145 = vmatmul.f32.gmra.mxu0 %v968
        %v1146 = vpop.f32.mrf.mxu0
        %v1147 = vadd.f32 %v809, %v1146
        %1148 = vmatmul.f32.gmra.mxu0 %v971
        %v1149 = vpop.f32.mrf.mxu0
        %v1150 = vadd.f32 %v812, %v1149
        %1151 = vmatmul.f32.gmra.mxu0 %v974
        %v1152 = vpop.f32.mrf.mxu0
        %v1153 = vadd.f32 %v815, %v1152
        %1154 = vmatmul.f32.gmra.mxu0 %v977
        %v1155 = vpop.f32.mrf.mxu0
        %v1156 = vadd.f32 %v818, %v1155
        %1157 = vmatmul.f32.gmra.mxu0 %v980
        %v1158 = vpop.f32.mrf.mxu0
        %v1159 = vadd.f32 %v821, %v1158
        %1160 = vmatmul.f32.gmra.mxu0 %v983
        %v1161 = vpop.f32.mrf.mxu0
        %v1162 = vadd.f32 %v824, %v1161
        %1163 = vmatmul.f32.gmra.mxu0 %v986
        %v1164 = vpop.f32.mrf.mxu0
        %v1165 = vadd.f32 %v827, %v1164
        %1166 = vmatmul.f32.gmra.mxu0 %v989
        %v1167 = vpop.f32.mrf.mxu0
        %v1168 = vadd.f32 %v830, %v1167
        %1169 = vmatmul.f32.gmra.mxu0 %v992
        %v1170 = vpop.f32.mrf.mxu0
        %v1171 = vadd.f32 %v833, %v1170
        %1172 = vmatmul.f32.gmra.mxu0 %v995
        %v1173 = vpop.f32.mrf.mxu0
        %v1174 = vadd.f32 %v836, %v1173
        %1175 = vmatmul.f32.gmra.mxu0 %v998
        %v1176 = vpop.f32.mrf.mxu0
        %v1177 = vadd.f32 %v839, %v1176
        %1178 = vmatmul.f32.gmra.mxu0 %v1001
        %v1179 = vpop.f32.mrf.mxu0
        %v1180 = vadd.f32 %v842, %v1179
        %1181 = vmatmul.f32.gmra.mxu0 %v1004
        %v1182 = vpop.f32.mrf.mxu0
        %v1183 = vadd.f32 %v845, %v1182
        %1184 = vmatmul.f32.gmra.mxu0 %v1007
        %v1185 = vpop.f32.mrf.mxu0
        %v1186 = vadd.f32 %v848, %v1185
        %1187 = vmatmul.f32.gmra.mxu0 %v1010
        %v1188 = vpop.f32.mrf.mxu0
        %v1189 = vadd.f32 %v851, %v1188
        %1190 = vmatmul.f32.gmra.mxu0 %v1013
        %v1191 = vpop.f32.mrf.mxu0
        %v1192 = vadd.f32 %v854, %v1191
        %1193 = vmatmul.f32.gmra.mxu0 %v1016
        %v1194 = vpop.f32.mrf.mxu0
        %v1195 = vadd.f32 %v857, %v1194
        %1196 = vmatmul.f32.gmra.mxu0 %v1019
        %v1197 = vpop.f32.mrf.mxu0
        %v1198 = vadd.f32 %v860, %v1197
        %1199 = vmatmul.f32.gmra.mxu0 %v1022
        %v1200 = vpop.f32.mrf.mxu0
        %v1201 = vadd.f32 %v863, %v1200
        %1202 = vmatmul.f32.gmra.mxu0 %v1025
        %v1203 = vpop.f32.mrf.mxu0
        %v1204 = vadd.f32 %v866, %v1203
        %1205 = vmatmul.f32.gmra.mxu0 %v1028
        %v1206 = vpop.f32.mrf.mxu0
        %v1207 = vadd.f32 %v869, %v1206
        %1208 = vmatmul.f32.gmra.mxu0 %v1031
        %v1209 = vpop.f32.mrf.mxu0
        %v1210 = vadd.f32 %v872, %v1209
        %1211 = vmatmul.f32.gmra.mxu0 %v1034
        %v1212 = vpop.f32.mrf.mxu0
        %v1213 = vadd.f32 %v875, %v1212
        %1214 = vmatmul.f32.gmra.mxu0 %v1037
        %v1215 = vpop.f32.mrf.mxu0
        %v1216 = vadd.f32 %v878, %v1215
        %1217 = vmatmul.f32.gmra.mxu0 %v1040
        %v1218 = vpop.f32.mrf.mxu0
        %v1219 = vadd.f32 %v881, %v1218
        %1220 = vmatmul.f32.gmra.mxu0 %v1043
        %v1221 = vpop.f32.mrf.mxu0
        %v1222 = vadd.f32 %v884, %v1221
        %1223 = vmatmul.f32.gmra.mxu0 %v1046
        %v1224 = vpop.f32.mrf.mxu0
        %v1225 = vadd.f32 %v887, %v1224
        %1226 = vmatmul.f32.gmra.mxu0 %v1049
        %v1227 = vpop.f32.mrf.mxu0
        %v1228 = vadd.f32 %v890, %v1227
        %1229 = vmatmul.f32.gmra.mxu0 %v1052
        %v1230 = vpop.f32.mrf.mxu0
        %v1231 = vadd.f32 %v893, %v1230
        %1232 = vmatmul.f32.gmra.mxu0 %v1055
        %v1233 = vpop.f32.mrf.mxu0
        %v1234 = vadd.f32 %v896, %v1233
        %1235 = vmatmul.f32.gmra.mxu0 %v1058
        %v1236 = vpop.f32.mrf.mxu0
        %v1237 = vadd.f32 %v899, %v1236
        %1238 = vmatmul.f32.gmra.mxu0 %v1061
        %v1239 = vpop.f32.mrf.mxu0
        %v1240 = vadd.f32 %v902, %v1239
        %1241 = vmatmul.f32.gmra.mxu0 %v1064
        %v1242 = vpop.f32.mrf.mxu0
        %v1243 = vadd.f32 %v905, %v1242
        %1244 = vmatmul.f32.gmra.mxu0 %v1067
        %v1245 = vpop.f32.mrf.mxu0
        %v1246 = vadd.f32 %v908, %v1245
        %1247 = vmatmul.f32.gmra.mxu0 %v1070
        %v1248 = vpop.f32.mrf.mxu0
        %v1249 = vadd.f32 %v911, %v1248
        %1250 = vmatmul.f32.gmra.mxu0 %v1073
        %v1251 = vpop.f32.mrf.mxu0
        %v1252 = vadd.f32 %v914, %v1251
        %1253 = vmatmul.f32.gmra.mxu0 %v1076
        %v1254 = vpop.f32.mrf.mxu0
        %v1255 = vadd.f32 %v917, %v1254
        %1256 = vdwg.mxu0
        %v1257 = vld [vmem:[%s350 + $0x15] sm:$0xff]
        %v1258 = vld [vmem:[%s350 + $0x1d] sm:$0xff]
        %v1259 = vld [vmem:[%s350 + $0x25] sm:$0xff]
        %v1260 = vld [vmem:[%s350 + $0x2d] sm:$0xff]
        %v1261 = vld [vmem:[%s350 + $0x35] sm:$0xff]
        %v1262 = vld [vmem:[%s350 + $0x3d] sm:$0xff]
        %v1263 = vld [vmem:[%s350 + $0x45] sm:$0xff]
        %v1264 = vld [vmem:[%s350 + $0x4d] sm:$0xff]
        %v1265 = vld [vmem:[%s350 + $0x55] sm:$0xff]
        %v1266 = vld [vmem:[%s350 + $0x5d] sm:$0xff]
        %v1267 = vld [vmem:[%s350 + $0x65] sm:$0xff]
        %v1268 = vld [vmem:[%s350 + $0x6d] sm:$0xff]
        %v1269 = vld [vmem:[%s350 + $0x75] sm:$0xff]
        %v1270 = vld [vmem:[%s350 + $0x7d] sm:$0xff]
        %v1271 = vld [vmem:[%s350 + $0x85] sm:$0xff]
        %v1272 = vld [vmem:[%s350 + $0x8d] sm:$0xff]
        %v1273 = vld [vmem:[%s350 + $0x95] sm:$0xff]
        %v1274 = vld [vmem:[%s350 + $0x9d] sm:$0xff]
        %v1275 = vld [vmem:[%s350 + $0xa5] sm:$0xff]
        %v1276 = vld [vmem:[%s350 + $0xad] sm:$0xff]
        %v1277 = vld [vmem:[%s350 + $0xb5] sm:$0xff]
        %v1278 = vld [vmem:[%s350 + $0xbd] sm:$0xff]
        %v1279 = vld [vmem:[%s350 + $0xc5] sm:$0xff]
        %v1280 = vld [vmem:[%s350 + $0xcd] sm:$0xff]
        %v1281 = vld [vmem:[%s350 + $0xd5] sm:$0xff]
        %v1282 = vld [vmem:[%s350 + $0xdd] sm:$0xff]
        %v1283 = vld [vmem:[%s350 + $0xe5] sm:$0xff]
        %v1284 = vld [vmem:[%s350 + $0xed] sm:$0xff]
        %v1285 = vld [vmem:[%s350 + $0xf5] sm:$0xff]
        %v1286 = vld [vmem:[%s350 + $0xfd] sm:$0xff]
        %v1287 = vld [vmem:[%s350 + $0x105] sm:$0xff]
        %v1288 = vld [vmem:[%s350 + $0x10d] sm:$0xff]
        %v1289 = vld [vmem:[%s350 + $0x115] sm:$0xff]
        %v1290 = vld [vmem:[%s350 + $0x11d] sm:$0xff]
        %v1291 = vld [vmem:[%s350 + $0x125] sm:$0xff]
        %v1292 = vld [vmem:[%s350 + $0x12d] sm:$0xff]
        %v1293 = vld [vmem:[%s350 + $0x135] sm:$0xff]
        %v1294 = vld [vmem:[%s350 + $0x13d] sm:$0xff]
        %v1295 = vld [vmem:[%s350 + $0x145] sm:$0xff]
        %v1296 = vld [vmem:[%s350 + $0x14d] sm:$0xff]
        %v1297 = vld [vmem:[%s350 + $0x155] sm:$0xff]
        %v1298 = vld [vmem:[%s350 + $0x15d] sm:$0xff]
        %v1299 = vld [vmem:[%s350 + $0x165] sm:$0xff]
        %v1300 = vld [vmem:[%s350 + $0x16d] sm:$0xff]
        %v1301 = vld [vmem:[%s350 + $0x175] sm:$0xff]
        %v1302 = vld [vmem:[%s350 + $0x17d] sm:$0xff]
        %v1303 = vld [vmem:[%s350 + $0x185] sm:$0xff]
        %v1304 = vld [vmem:[%s350 + $0x18d] sm:$0xff]
        %v1305 = vld [vmem:[%s350 + $0x195] sm:$0xff]
        %v1306 = vld [vmem:[%s350 + $0x19d] sm:$0xff]
        %v1307 = vld [vmem:[%s350 + $0x1a5] sm:$0xff]
        %v1308 = vld [vmem:[%s350 + $0x1ad] sm:$0xff]
        %v1309 = vld [vmem:[%s350 + $0x1b5] sm:$0xf]
        %s1310 = scalar_lea.vmem %s1, 8
        %v1311 = vld [vmem:[%s1310] sm:$0x7]
        %v1313 = vsel %vm579, %v1257, 0
        %v1316 = vsel %vm579, %v1258, 0
        %v1319 = vsel %vm579, %v1259, 0
        %v1322 = vsel %vm579, %v1260, 0
        %v1325 = vsel %vm579, %v1261, 0
        %v1328 = vsel %vm579, %v1262, 0
        %v1331 = vsel %vm579, %v1263, 0
        %v1334 = vsel %vm579, %v1264, 0
        %v1337 = vsel %vm579, %v1265, 0
        %v1340 = vsel %vm579, %v1266, 0
        %v1343 = vsel %vm579, %v1267, 0
        %v1346 = vsel %vm579, %v1268, 0
        %v1349 = vsel %vm579, %v1269, 0
        %v1352 = vsel %vm579, %v1270, 0
        %v1355 = vsel %vm579, %v1271, 0
        %v1358 = vsel %vm579, %v1272, 0
        %v1361 = vsel %vm579, %v1273, 0
        %v1364 = vsel %vm579, %v1274, 0
        %v1367 = vsel %vm579, %v1275, 0
        %v1370 = vsel %vm579, %v1276, 0
        %v1373 = vsel %vm579, %v1277, 0
        %v1376 = vsel %vm579, %v1278, 0
        %v1379 = vsel %vm579, %v1279, 0
        %v1382 = vsel %vm579, %v1280, 0
        %v1385 = vsel %vm579, %v1281, 0
        %v1388 = vsel %vm579, %v1282, 0
        %v1391 = vsel %vm579, %v1283, 0
        %v1394 = vsel %vm579, %v1284, 0
        %v1397 = vsel %vm579, %v1285, 0
        %v1400 = vsel %vm579, %v1286, 0
        %v1403 = vsel %vm579, %v1287, 0
        %v1406 = vsel %vm579, %v1288, 0
        %v1409 = vsel %vm579, %v1289, 0
        %v1412 = vsel %vm579, %v1290, 0
        %v1415 = vsel %vm579, %v1291, 0
        %v1418 = vsel %vm579, %v1292, 0
        %v1421 = vsel %vm579, %v1293, 0
        %v1424 = vsel %vm579, %v1294, 0
        %v1427 = vsel %vm579, %v1295, 0
        %v1430 = vsel %vm579, %v1296, 0
        %v1433 = vsel %vm579, %v1297, 0
        %v1436 = vsel %vm579, %v1298, 0
        %v1439 = vsel %vm579, %v1299, 0
        %v1442 = vsel %vm579, %v1300, 0
        %v1445 = vsel %vm579, %v1301, 0
        %v1448 = vsel %vm579, %v1302, 0
        %v1451 = vsel %vm579, %v1303, 0
        %v1454 = vsel %vm579, %v1304, 0
        %v1457 = vsel %vm579, %v1305, 0
        %v1460 = vsel %vm579, %v1306, 0
        %v1463 = vsel %vm579, %v1307, 0
        %v1466 = vsel %vm579, %v1308, 0
        %v1469 = vsel %vm579, %v1309, 0
        %v1472 = vsel %vm739, %v1311, 0
        %1474 = vmatpush.msra.mxu0 0.0
        %1475 = vmatpush.msra.mxu0 0.0
        %1476 = vmatpush.msra.mxu0 0.0
        %1477 = vmatpush.msra.mxu0 0.0
        %1478 = vmatpush.msra.mxu0 0.0
        %1479 = vmatpush.msra.mxu0 0.0
        %1480 = vmatpush.msra.mxu0 0.0
        %1481 = vmatpush.msra.mxu0 0.0
        %1482 = vmatpush.msra.mxu0 0.0
        %1483 = vmatpush.msra.mxu0 0.0
        %1484 = vmatpush.msra.mxu0 0.0
        %1485 = vmatpush.msra.mxu0 0.0
        %1486 = vmatpush.msra.mxu0 0.0
        %1487 = vmatpush.msra.mxu0 0.0
        %1488 = vmatpush.msra.mxu0 0.0
        %1489 = vmatpush.msra.mxu0 %v1472
        %1490 = vmatmul.f32.gmra.mxu0 %v1313
        %v1491 = vpop.f32.mrf.mxu0
        %v1492 = vadd.f32 0.0, %v1491
        %1493 = vmatmul.f32.gmra.mxu0 %v1316
        %v1494 = vpop.f32.mrf.mxu0
        %v1495 = vadd.f32 0.0, %v1494
        %1496 = vmatmul.f32.gmra.mxu0 %v1319
        %v1497 = vpop.f32.mrf.mxu0
        %v1498 = vadd.f32 0.0, %v1497
        %1499 = vmatmul.f32.gmra.mxu0 %v1322
        %v1500 = vpop.f32.mrf.mxu0
        %v1501 = vadd.f32 0.0, %v1500
        %1502 = vmatmul.f32.gmra.mxu0 %v1325
        %v1503 = vpop.f32.mrf.mxu0
        %v1504 = vadd.f32 0.0, %v1503
        %1505 = vmatmul.f32.gmra.mxu0 %v1328
        %v1506 = vpop.f32.mrf.mxu0
        %v1507 = vadd.f32 0.0, %v1506
        %1508 = vmatmul.f32.gmra.mxu0 %v1331
        %v1509 = vpop.f32.mrf.mxu0
        %v1510 = vadd.f32 0.0, %v1509
        %1511 = vmatmul.f32.gmra.mxu0 %v1334
        %v1512 = vpop.f32.mrf.mxu0
        %v1513 = vadd.f32 0.0, %v1512
        %1514 = vmatmul.f32.gmra.mxu0 %v1337
        %v1515 = vpop.f32.mrf.mxu0
        %v1516 = vadd.f32 0.0, %v1515
        %1517 = vmatmul.f32.gmra.mxu0 %v1340
        %v1518 = vpop.f32.mrf.mxu0
        %v1519 = vadd.f32 0.0, %v1518
        %1520 = vmatmul.f32.gmra.mxu0 %v1343
        %v1521 = vpop.f32.mrf.mxu0
        %v1522 = vadd.f32 0.0, %v1521
        %1523 = vmatmul.f32.gmra.mxu0 %v1346
        %v1524 = vpop.f32.mrf.mxu0
        %v1525 = vadd.f32 0.0, %v1524
        %1526 = vmatmul.f32.gmra.mxu0 %v1349
        %v1527 = vpop.f32.mrf.mxu0
        %v1528 = vadd.f32 0.0, %v1527
        %1529 = vmatmul.f32.gmra.mxu0 %v1352
        %v1530 = vpop.f32.mrf.mxu0
        %v1531 = vadd.f32 0.0, %v1530
        %1532 = vmatmul.f32.gmra.mxu0 %v1355
        %v1533 = vpop.f32.mrf.mxu0
        %v1534 = vadd.f32 0.0, %v1533
        %1535 = vmatmul.f32.gmra.mxu0 %v1358
        %v1536 = vpop.f32.mrf.mxu0
        %v1537 = vadd.f32 0.0, %v1536
        %1538 = vmatmul.f32.gmra.mxu0 %v1361
        %v1539 = vpop.f32.mrf.mxu0
        %v1540 = vadd.f32 0.0, %v1539
        %1541 = vmatmul.f32.gmra.mxu0 %v1364
        %v1542 = vpop.f32.mrf.mxu0
        %v1543 = vadd.f32 0.0, %v1542
        %1544 = vmatmul.f32.gmra.mxu0 %v1367
        %v1545 = vpop.f32.mrf.mxu0
        %v1546 = vadd.f32 0.0, %v1545
        %1547 = vmatmul.f32.gmra.mxu0 %v1370
        %v1548 = vpop.f32.mrf.mxu0
        %v1549 = vadd.f32 0.0, %v1548
        %1550 = vmatmul.f32.gmra.mxu0 %v1373
        %v1551 = vpop.f32.mrf.mxu0
        %v1552 = vadd.f32 0.0, %v1551
        %1553 = vmatmul.f32.gmra.mxu0 %v1376
        %v1554 = vpop.f32.mrf.mxu0
        %v1555 = vadd.f32 0.0, %v1554
        %1556 = vmatmul.f32.gmra.mxu0 %v1379
        %v1557 = vpop.f32.mrf.mxu0
        %v1558 = vadd.f32 0.0, %v1557
        %1559 = vmatmul.f32.gmra.mxu0 %v1382
        %v1560 = vpop.f32.mrf.mxu0
        %v1561 = vadd.f32 0.0, %v1560
        %1562 = vmatmul.f32.gmra.mxu0 %v1385
        %v1563 = vpop.f32.mrf.mxu0
        %v1564 = vadd.f32 0.0, %v1563
        %1565 = vmatmul.f32.gmra.mxu0 %v1388
        %v1566 = vpop.f32.mrf.mxu0
        %v1567 = vadd.f32 0.0, %v1566
        %1568 = vmatmul.f32.gmra.mxu0 %v1391
        %v1569 = vpop.f32.mrf.mxu0
        %v1570 = vadd.f32 0.0, %v1569
        %1571 = vmatmul.f32.gmra.mxu0 %v1394
        %v1572 = vpop.f32.mrf.mxu0
        %v1573 = vadd.f32 0.0, %v1572
        %1574 = vmatmul.f32.gmra.mxu0 %v1397
        %v1575 = vpop.f32.mrf.mxu0
        %v1576 = vadd.f32 0.0, %v1575
        %1577 = vmatmul.f32.gmra.mxu0 %v1400
        %v1578 = vpop.f32.mrf.mxu0
        %v1579 = vadd.f32 0.0, %v1578
        %1580 = vmatmul.f32.gmra.mxu0 %v1403
        %v1581 = vpop.f32.mrf.mxu0
        %v1582 = vadd.f32 0.0, %v1581
        %1583 = vmatmul.f32.gmra.mxu0 %v1406
        %v1584 = vpop.f32.mrf.mxu0
        %v1585 = vadd.f32 0.0, %v1584
        %1586 = vmatmul.f32.gmra.mxu0 %v1409
        %v1587 = vpop.f32.mrf.mxu0
        %v1588 = vadd.f32 0.0, %v1587
        %1589 = vmatmul.f32.gmra.mxu0 %v1412
        %v1590 = vpop.f32.mrf.mxu0
        %v1591 = vadd.f32 0.0, %v1590
        %1592 = vmatmul.f32.gmra.mxu0 %v1415
        %v1593 = vpop.f32.mrf.mxu0
        %v1594 = vadd.f32 0.0, %v1593
        %1595 = vmatmul.f32.gmra.mxu0 %v1418
        %v1596 = vpop.f32.mrf.mxu0
        %v1597 = vadd.f32 0.0, %v1596
        %1598 = vmatmul.f32.gmra.mxu0 %v1421
        %v1599 = vpop.f32.mrf.mxu0
        %v1600 = vadd.f32 0.0, %v1599
        %1601 = vmatmul.f32.gmra.mxu0 %v1424
        %v1602 = vpop.f32.mrf.mxu0
        %v1603 = vadd.f32 0.0, %v1602
        %1604 = vmatmul.f32.gmra.mxu0 %v1427
        %v1605 = vpop.f32.mrf.mxu0
        %v1606 = vadd.f32 0.0, %v1605
        %1607 = vmatmul.f32.gmra.mxu0 %v1430
        %v1608 = vpop.f32.mrf.mxu0
        %v1609 = vadd.f32 0.0, %v1608
        %1610 = vmatmul.f32.gmra.mxu0 %v1433
        %v1611 = vpop.f32.mrf.mxu0
        %v1612 = vadd.f32 0.0, %v1611
        %1613 = vmatmul.f32.gmra.mxu0 %v1436
        %v1614 = vpop.f32.mrf.mxu0
        %v1615 = vadd.f32 0.0, %v1614
        %1616 = vmatmul.f32.gmra.mxu0 %v1439
        %v1617 = vpop.f32.mrf.mxu0
        %v1618 = vadd.f32 0.0, %v1617
        %1619 = vmatmul.f32.gmra.mxu0 %v1442
        %v1620 = vpop.f32.mrf.mxu0
        %v1621 = vadd.f32 0.0, %v1620
        %1622 = vmatmul.f32.gmra.mxu0 %v1445
        %v1623 = vpop.f32.mrf.mxu0
        %v1624 = vadd.f32 0.0, %v1623
        %1625 = vmatmul.f32.gmra.mxu0 %v1448
        %v1626 = vpop.f32.mrf.mxu0
        %v1627 = vadd.f32 0.0, %v1626
        %1628 = vmatmul.f32.gmra.mxu0 %v1451
        %v1629 = vpop.f32.mrf.mxu0
        %v1630 = vadd.f32 0.0, %v1629
        %1631 = vmatmul.f32.gmra.mxu0 %v1454
        %v1632 = vpop.f32.mrf.mxu0
        %v1633 = vadd.f32 0.0, %v1632
        %1634 = vmatmul.f32.gmra.mxu0 %v1457
        %v1635 = vpop.f32.mrf.mxu0
        %v1636 = vadd.f32 0.0, %v1635
        %1637 = vmatmul.f32.gmra.mxu0 %v1460
        %v1638 = vpop.f32.mrf.mxu0
        %v1639 = vadd.f32 0.0, %v1638
        %1640 = vmatmul.f32.gmra.mxu0 %v1463
        %v1641 = vpop.f32.mrf.mxu0
        %v1642 = vadd.f32 0.0, %v1641
        %1643 = vmatmul.f32.gmra.mxu0 %v1466
        %v1644 = vpop.f32.mrf.mxu0
        %v1645 = vadd.f32 0.0, %v1644
        %1646 = vmatmul.f32.gmra.mxu0 %v1469
        %v1647 = vpop.f32.mrf.mxu0
        %v1648 = vadd.f32 0.0, %v1647
        %1649 = vdwg.mxu0
        %v1650 = vadd.f32 %v1099, %v1492
        %v1651 = vadd.f32 %v1102, %v1495
        %v1652 = vadd.f32 %v1105, %v1498
        %v1653 = vadd.f32 %v1108, %v1501
        %v1654 = vadd.f32 %v1111, %v1504
        %v1655 = vadd.f32 %v1114, %v1507
        %v1656 = vadd.f32 %v1117, %v1510
        %v1657 = vadd.f32 %v1120, %v1513
        %v1658 = vadd.f32 %v1123, %v1516
        %v1659 = vadd.f32 %v1126, %v1519
        %v1660 = vadd.f32 %v1129, %v1522
        %v1661 = vadd.f32 %v1132, %v1525
        %v1662 = vadd.f32 %v1135, %v1528
        %v1663 = vadd.f32 %v1138, %v1531
        %v1664 = vadd.f32 %v1141, %v1534
        %v1665 = vadd.f32 %v1144, %v1537
        %v1666 = vadd.f32 %v1147, %v1540
        %v1667 = vadd.f32 %v1150, %v1543
        %v1668 = vadd.f32 %v1153, %v1546
        %v1669 = vadd.f32 %v1156, %v1549
        %v1670 = vadd.f32 %v1159, %v1552
        %v1671 = vadd.f32 %v1162, %v1555
        %v1672 = vadd.f32 %v1165, %v1558
        %v1673 = vadd.f32 %v1168, %v1561
        %v1674 = vadd.f32 %v1171, %v1564
        %v1675 = vadd.f32 %v1174, %v1567
        %v1676 = vadd.f32 %v1177, %v1570
        %v1677 = vadd.f32 %v1180, %v1573
        %v1678 = vadd.f32 %v1183, %v1576
        %v1679 = vadd.f32 %v1186, %v1579
        %v1680 = vadd.f32 %v1189, %v1582
        %v1681 = vadd.f32 %v1192, %v1585
        %v1682 = vadd.f32 %v1195, %v1588
        %v1683 = vadd.f32 %v1198, %v1591
        %v1684 = vadd.f32 %v1201, %v1594
        %v1685 = vadd.f32 %v1204, %v1597
        %v1686 = vadd.f32 %v1207, %v1600
        %v1687 = vadd.f32 %v1210, %v1603
        %v1688 = vadd.f32 %v1213, %v1606
        %v1689 = vadd.f32 %v1216, %v1609
        %v1690 = vadd.f32 %v1219, %v1612
        %v1691 = vadd.f32 %v1222, %v1615
        %v1692 = vadd.f32 %v1225, %v1618
        %v1693 = vadd.f32 %v1228, %v1621
        %v1694 = vadd.f32 %v1231, %v1624
        %v1695 = vadd.f32 %v1234, %v1627
        %v1696 = vadd.f32 %v1237, %v1630
        %v1697 = vadd.f32 %v1240, %v1633
        %v1698 = vadd.f32 %v1243, %v1636
        %v1699 = vadd.f32 %v1246, %v1639
        %v1700 = vadd.f32 %v1249, %v1642
        %v1701 = vadd.f32 %v1252, %v1645
        %v1702 = vadd.f32 %v1255, %v1648
        %v1703 = vld [vmem:[%s350 + $0x16] sm:$0xff]
        %v1704 = vld [vmem:[%s350 + $0x1e] sm:$0xff]
        %v1705 = vld [vmem:[%s350 + $0x26] sm:$0xff]
        %v1706 = vld [vmem:[%s350 + $0x2e] sm:$0xff]
        %v1707 = vld [vmem:[%s350 + $0x36] sm:$0xff]
        %v1708 = vld [vmem:[%s350 + $0x3e] sm:$0xff]
        %v1709 = vld [vmem:[%s350 + $0x46] sm:$0xff]
        %v1710 = vld [vmem:[%s350 + $0x4e] sm:$0xff]
        %v1711 = vld [vmem:[%s350 + $0x56] sm:$0xff]
        %v1712 = vld [vmem:[%s350 + $0x5e] sm:$0xff]
        %v1713 = vld [vmem:[%s350 + $0x66] sm:$0xff]
        %v1714 = vld [vmem:[%s350 + $0x6e] sm:$0xff]
        %v1715 = vld [vmem:[%s350 + $0x76] sm:$0xff]
        %v1716 = vld [vmem:[%s350 + $0x7e] sm:$0xff]
        %v1717 = vld [vmem:[%s350 + $0x86] sm:$0xff]
        %v1718 = vld [vmem:[%s350 + $0x8e] sm:$0xff]
        %v1719 = vld [vmem:[%s350 + $0x96] sm:$0xff]
        %v1720 = vld [vmem:[%s350 + $0x9e] sm:$0xff]
        %v1721 = vld [vmem:[%s350 + $0xa6] sm:$0xff]
        %v1722 = vld [vmem:[%s350 + $0xae] sm:$0xff]
        %v1723 = vld [vmem:[%s350 + $0xb6] sm:$0xff]
        %v1724 = vld [vmem:[%s350 + $0xbe] sm:$0xff]
        %v1725 = vld [vmem:[%s350 + $0xc6] sm:$0xff]
        %v1726 = vld [vmem:[%s350 + $0xce] sm:$0xff]
        %v1727 = vld [vmem:[%s350 + $0xd6] sm:$0xff]
        %v1728 = vld [vmem:[%s350 + $0xde] sm:$0xff]
        %v1729 = vld [vmem:[%s350 + $0xe6] sm:$0xff]
        %v1730 = vld [vmem:[%s350 + $0xee] sm:$0xff]
        %v1731 = vld [vmem:[%s350 + $0xf6] sm:$0xff]
        %v1732 = vld [vmem:[%s350 + $0xfe] sm:$0xff]
        %v1733 = vld [vmem:[%s350 + $0x106] sm:$0xff]
        %v1734 = vld [vmem:[%s350 + $0x10e] sm:$0xff]
        %v1735 = vld [vmem:[%s350 + $0x116] sm:$0xff]
        %v1736 = vld [vmem:[%s350 + $0x11e] sm:$0xff]
        %v1737 = vld [vmem:[%s350 + $0x126] sm:$0xff]
        %v1738 = vld [vmem:[%s350 + $0x12e] sm:$0xff]
        %v1739 = vld [vmem:[%s350 + $0x136] sm:$0xff]
        %v1740 = vld [vmem:[%s350 + $0x13e] sm:$0xff]
        %v1741 = vld [vmem:[%s350 + $0x146] sm:$0xff]
        %v1742 = vld [vmem:[%s350 + $0x14e] sm:$0xff]
        %v1743 = vld [vmem:[%s350 + $0x156] sm:$0xff]
        %v1744 = vld [vmem:[%s350 + $0x15e] sm:$0xff]
        %v1745 = vld [vmem:[%s350 + $0x166] sm:$0xff]
        %v1746 = vld [vmem:[%s350 + $0x16e] sm:$0xff]
        %v1747 = vld [vmem:[%s350 + $0x176] sm:$0xff]
        %v1748 = vld [vmem:[%s350 + $0x17e] sm:$0xff]
        %v1749 = vld [vmem:[%s350 + $0x186] sm:$0xff]
        %v1750 = vld [vmem:[%s350 + $0x18e] sm:$0xff]
        %v1751 = vld [vmem:[%s350 + $0x196] sm:$0xff]
        %v1752 = vld [vmem:[%s350 + $0x19e] sm:$0xff]
        %v1753 = vld [vmem:[%s350 + $0x1a6] sm:$0xff]
        %v1754 = vld [vmem:[%s350 + $0x1ae] sm:$0xff]
        %v1755 = vld [vmem:[%s350 + $0x1b6] sm:$0xf]
        %s1756 = scalar_lea.vmem %s1, 12
        %v1757 = vld [vmem:[%s1756] sm:$0x7]
        %v1759 = vsel %vm579, %v1703, 0
        %v1762 = vsel %vm579, %v1704, 0
        %v1765 = vsel %vm579, %v1705, 0
        %v1768 = vsel %vm579, %v1706, 0
        %v1771 = vsel %vm579, %v1707, 0
        %v1774 = vsel %vm579, %v1708, 0
        %v1777 = vsel %vm579, %v1709, 0
        %v1780 = vsel %vm579, %v1710, 0
        %v1783 = vsel %vm579, %v1711, 0
        %v1786 = vsel %vm579, %v1712, 0
        %v1789 = vsel %vm579, %v1713, 0
        %v1792 = vsel %vm579, %v1714, 0
        %v1795 = vsel %vm579, %v1715, 0
        %v1798 = vsel %vm579, %v1716, 0
        %v1801 = vsel %vm579, %v1717, 0
        %v1804 = vsel %vm579, %v1718, 0
        %v1807 = vsel %vm579, %v1719, 0
        %v1810 = vsel %vm579, %v1720, 0
        %v1813 = vsel %vm579, %v1721, 0
        %v1816 = vsel %vm579, %v1722, 0
        %v1819 = vsel %vm579, %v1723, 0
        %v1822 = vsel %vm579, %v1724, 0
        %v1825 = vsel %vm579, %v1725, 0
        %v1828 = vsel %vm579, %v1726, 0
        %v1831 = vsel %vm579, %v1727, 0
        %v1834 = vsel %vm579, %v1728, 0
        %v1837 = vsel %vm579, %v1729, 0
        %v1840 = vsel %vm579, %v1730, 0
        %v1843 = vsel %vm579, %v1731, 0
        %v1846 = vsel %vm579, %v1732, 0
        %v1849 = vsel %vm579, %v1733, 0
        %v1852 = vsel %vm579, %v1734, 0
        %v1855 = vsel %vm579, %v1735, 0
        %v1858 = vsel %vm579, %v1736, 0
        %v1861 = vsel %vm579, %v1737, 0
        %v1864 = vsel %vm579, %v1738, 0
        %v1867 = vsel %vm579, %v1739, 0
        %v1870 = vsel %vm579, %v1740, 0
        %v1873 = vsel %vm579, %v1741, 0
        %v1876 = vsel %vm579, %v1742, 0
        %v1879 = vsel %vm579, %v1743, 0
        %v1882 = vsel %vm579, %v1744, 0
        %v1885 = vsel %vm579, %v1745, 0
        %v1888 = vsel %vm579, %v1746, 0
        %v1891 = vsel %vm579, %v1747, 0
        %v1894 = vsel %vm579, %v1748, 0
        %v1897 = vsel %vm579, %v1749, 0
        %v1900 = vsel %vm579, %v1750, 0
        %v1903 = vsel %vm579, %v1751, 0
        %v1906 = vsel %vm579, %v1752, 0
        %v1909 = vsel %vm579, %v1753, 0
        %v1912 = vsel %vm579, %v1754, 0
        %v1915 = vsel %vm579, %v1755, 0
        %v1918 = vsel %vm739, %v1757, 0
        %1920 = vmatpush.msra.mxu0 0.0
        %1921 = vmatpush.msra.mxu0 0.0
        %1922 = vmatpush.msra.mxu0 0.0
        %1923 = vmatpush.msra.mxu0 0.0
        %1924 = vmatpush.msra.mxu0 0.0
        %1925 = vmatpush.msra.mxu0 0.0
        %1926 = vmatpush.msra.mxu0 0.0
        %1927 = vmatpush.msra.mxu0 0.0
        %1928 = vmatpush.msra.mxu0 0.0
        %1929 = vmatpush.msra.mxu0 0.0
        %1930 = vmatpush.msra.mxu0 0.0
        %1931 = vmatpush.msra.mxu0 0.0
        %1932 = vmatpush.msra.mxu0 0.0
        %1933 = vmatpush.msra.mxu0 0.0
        %1934 = vmatpush.msra.mxu0 0.0
        %1935 = vmatpush.msra.mxu0 %v1918
        %1936 = vmatmul.f32.gmra.mxu0 %v1759
        %v1937 = vpop.f32.mrf.mxu0
        %v1938 = vadd.f32 0.0, %v1937
        %1939 = vmatmul.f32.gmra.mxu0 %v1762
        %v1940 = vpop.f32.mrf.mxu0
        %v1941 = vadd.f32 0.0, %v1940
        %1942 = vmatmul.f32.gmra.mxu0 %v1765
        %v1943 = vpop.f32.mrf.mxu0
        %v1944 = vadd.f32 0.0, %v1943
        %1945 = vmatmul.f32.gmra.mxu0 %v1768
        %v1946 = vpop.f32.mrf.mxu0
        %v1947 = vadd.f32 0.0, %v1946
        %1948 = vmatmul.f32.gmra.mxu0 %v1771
        %v1949 = vpop.f32.mrf.mxu0
        %v1950 = vadd.f32 0.0, %v1949
        %1951 = vmatmul.f32.gmra.mxu0 %v1774
        %v1952 = vpop.f32.mrf.mxu0
        %v1953 = vadd.f32 0.0, %v1952
        %1954 = vmatmul.f32.gmra.mxu0 %v1777
        %v1955 = vpop.f32.mrf.mxu0
        %v1956 = vadd.f32 0.0, %v1955
        %1957 = vmatmul.f32.gmra.mxu0 %v1780
        %v1958 = vpop.f32.mrf.mxu0
        %v1959 = vadd.f32 0.0, %v1958
        %1960 = vmatmul.f32.gmra.mxu0 %v1783
        %v1961 = vpop.f32.mrf.mxu0
        %v1962 = vadd.f32 0.0, %v1961
        %1963 = vmatmul.f32.gmra.mxu0 %v1786
        %v1964 = vpop.f32.mrf.mxu0
        %v1965 = vadd.f32 0.0, %v1964
        %1966 = vmatmul.f32.gmra.mxu0 %v1789
        %v1967 = vpop.f32.mrf.mxu0
        %v1968 = vadd.f32 0.0, %v1967
        %1969 = vmatmul.f32.gmra.mxu0 %v1792
        %v1970 = vpop.f32.mrf.mxu0
        %v1971 = vadd.f32 0.0, %v1970
        %1972 = vmatmul.f32.gmra.mxu0 %v1795
        %v1973 = vpop.f32.mrf.mxu0
        %v1974 = vadd.f32 0.0, %v1973
        %1975 = vmatmul.f32.gmra.mxu0 %v1798
        %v1976 = vpop.f32.mrf.mxu0
        %v1977 = vadd.f32 0.0, %v1976
        %1978 = vmatmul.f32.gmra.mxu0 %v1801
        %v1979 = vpop.f32.mrf.mxu0
        %v1980 = vadd.f32 0.0, %v1979
        %1981 = vmatmul.f32.gmra.mxu0 %v1804
        %v1982 = vpop.f32.mrf.mxu0
        %v1983 = vadd.f32 0.0, %v1982
        %1984 = vmatmul.f32.gmra.mxu0 %v1807
        %v1985 = vpop.f32.mrf.mxu0
        %v1986 = vadd.f32 0.0, %v1985
        %1987 = vmatmul.f32.gmra.mxu0 %v1810
        %v1988 = vpop.f32.mrf.mxu0
        %v1989 = vadd.f32 0.0, %v1988
        %1990 = vmatmul.f32.gmra.mxu0 %v1813
        %v1991 = vpop.f32.mrf.mxu0
        %v1992 = vadd.f32 0.0, %v1991
        %1993 = vmatmul.f32.gmra.mxu0 %v1816
        %v1994 = vpop.f32.mrf.mxu0
        %v1995 = vadd.f32 0.0, %v1994
        %1996 = vmatmul.f32.gmra.mxu0 %v1819
        %v1997 = vpop.f32.mrf.mxu0
        %v1998 = vadd.f32 0.0, %v1997
        %1999 = vmatmul.f32.gmra.mxu0 %v1822
        %v2000 = vpop.f32.mrf.mxu0
        %v2001 = vadd.f32 0.0, %v2000
        %2002 = vmatmul.f32.gmra.mxu0 %v1825
        %v2003 = vpop.f32.mrf.mxu0
        %v2004 = vadd.f32 0.0, %v2003
        %2005 = vmatmul.f32.gmra.mxu0 %v1828
        %v2006 = vpop.f32.mrf.mxu0
        %v2007 = vadd.f32 0.0, %v2006
        %2008 = vmatmul.f32.gmra.mxu0 %v1831
        %v2009 = vpop.f32.mrf.mxu0
        %v2010 = vadd.f32 0.0, %v2009
        %2011 = vmatmul.f32.gmra.mxu0 %v1834
        %v2012 = vpop.f32.mrf.mxu0
        %v2013 = vadd.f32 0.0, %v2012
        %2014 = vmatmul.f32.gmra.mxu0 %v1837
        %v2015 = vpop.f32.mrf.mxu0
        %v2016 = vadd.f32 0.0, %v2015
        %2017 = vmatmul.f32.gmra.mxu0 %v1840
        %v2018 = vpop.f32.mrf.mxu0
        %v2019 = vadd.f32 0.0, %v2018
        %2020 = vmatmul.f32.gmra.mxu0 %v1843
        %v2021 = vpop.f32.mrf.mxu0
        %v2022 = vadd.f32 0.0, %v2021
        %2023 = vmatmul.f32.gmra.mxu0 %v1846
        %v2024 = vpop.f32.mrf.mxu0
        %v2025 = vadd.f32 0.0, %v2024
        %2026 = vmatmul.f32.gmra.mxu0 %v1849
        %v2027 = vpop.f32.mrf.mxu0
        %v2028 = vadd.f32 0.0, %v2027
        %2029 = vmatmul.f32.gmra.mxu0 %v1852
        %v2030 = vpop.f32.mrf.mxu0
        %v2031 = vadd.f32 0.0, %v2030
        %2032 = vmatmul.f32.gmra.mxu0 %v1855
        %v2033 = vpop.f32.mrf.mxu0
        %v2034 = vadd.f32 0.0, %v2033
        %2035 = vmatmul.f32.gmra.mxu0 %v1858
        %v2036 = vpop.f32.mrf.mxu0
        %v2037 = vadd.f32 0.0, %v2036
        %2038 = vmatmul.f32.gmra.mxu0 %v1861
        %v2039 = vpop.f32.mrf.mxu0
        %v2040 = vadd.f32 0.0, %v2039
        %2041 = vmatmul.f32.gmra.mxu0 %v1864
        %v2042 = vpop.f32.mrf.mxu0
        %v2043 = vadd.f32 0.0, %v2042
        %2044 = vmatmul.f32.gmra.mxu0 %v1867
        %v2045 = vpop.f32.mrf.mxu0
        %v2046 = vadd.f32 0.0, %v2045
        %2047 = vmatmul.f32.gmra.mxu0 %v1870
        %v2048 = vpop.f32.mrf.mxu0
        %v2049 = vadd.f32 0.0, %v2048
        %2050 = vmatmul.f32.gmra.mxu0 %v1873
        %v2051 = vpop.f32.mrf.mxu0
        %v2052 = vadd.f32 0.0, %v2051
        %2053 = vmatmul.f32.gmra.mxu0 %v1876
        %v2054 = vpop.f32.mrf.mxu0
        %v2055 = vadd.f32 0.0, %v2054
        %2056 = vmatmul.f32.gmra.mxu0 %v1879
        %v2057 = vpop.f32.mrf.mxu0
        %v2058 = vadd.f32 0.0, %v2057
        %2059 = vmatmul.f32.gmra.mxu0 %v1882
        %v2060 = vpop.f32.mrf.mxu0
        %v2061 = vadd.f32 0.0, %v2060
        %2062 = vmatmul.f32.gmra.mxu0 %v1885
        %v2063 = vpop.f32.mrf.mxu0
        %v2064 = vadd.f32 0.0, %v2063
        %2065 = vmatmul.f32.gmra.mxu0 %v1888
        %v2066 = vpop.f32.mrf.mxu0
        %v2067 = vadd.f32 0.0, %v2066
        %2068 = vmatmul.f32.gmra.mxu0 %v1891
        %v2069 = vpop.f32.mrf.mxu0
        %v2070 = vadd.f32 0.0, %v2069
        %2071 = vmatmul.f32.gmra.mxu0 %v1894
        %v2072 = vpop.f32.mrf.mxu0
        %v2073 = vadd.f32 0.0, %v2072
        %2074 = vmatmul.f32.gmra.mxu0 %v1897
        %v2075 = vpop.f32.mrf.mxu0
        %v2076 = vadd.f32 0.0, %v2075
        %2077 = vmatmul.f32.gmra.mxu0 %v1900
        %v2078 = vpop.f32.mrf.mxu0
        %v2079 = vadd.f32 0.0, %v2078
        %2080 = vmatmul.f32.gmra.mxu0 %v1903
        %v2081 = vpop.f32.mrf.mxu0
        %v2082 = vadd.f32 0.0, %v2081
        %2083 = vmatmul.f32.gmra.mxu0 %v1906
        %v2084 = vpop.f32.mrf.mxu0
        %v2085 = vadd.f32 0.0, %v2084
        %2086 = vmatmul.f32.gmra.mxu0 %v1909
        %v2087 = vpop.f32.mrf.mxu0
        %v2088 = vadd.f32 0.0, %v2087
        %2089 = vmatmul.f32.gmra.mxu0 %v1912
        %v2090 = vpop.f32.mrf.mxu0
        %v2091 = vadd.f32 0.0, %v2090
        %2092 = vmatmul.f32.gmra.mxu0 %v1915
        %v2093 = vpop.f32.mrf.mxu0
        %v2094 = vadd.f32 0.0, %v2093
        %2095 = vdwg.mxu0
        %v2096 = vadd.f32 %v1650, %v1938
        %v2097 = vadd.f32 %v1651, %v1941
        %v2098 = vadd.f32 %v1652, %v1944
        %v2099 = vadd.f32 %v1653, %v1947
        %v2100 = vadd.f32 %v1654, %v1950
        %v2101 = vadd.f32 %v1655, %v1953
        %v2102 = vadd.f32 %v1656, %v1956
        %v2103 = vadd.f32 %v1657, %v1959
        %v2104 = vadd.f32 %v1658, %v1962
        %v2105 = vadd.f32 %v1659, %v1965
        %v2106 = vadd.f32 %v1660, %v1968
        %v2107 = vadd.f32 %v1661, %v1971
        %v2108 = vadd.f32 %v1662, %v1974
        %v2109 = vadd.f32 %v1663, %v1977
        %v2110 = vadd.f32 %v1664, %v1980
        %v2111 = vadd.f32 %v1665, %v1983
        %v2112 = vadd.f32 %v1666, %v1986
        %v2113 = vadd.f32 %v1667, %v1989
        %v2114 = vadd.f32 %v1668, %v1992
        %v2115 = vadd.f32 %v1669, %v1995
        %v2116 = vadd.f32 %v1670, %v1998
        %v2117 = vadd.f32 %v1671, %v2001
        %v2118 = vadd.f32 %v1672, %v2004
        %v2119 = vadd.f32 %v1673, %v2007
        %v2120 = vadd.f32 %v1674, %v2010
        %v2121 = vadd.f32 %v1675, %v2013
        %v2122 = vadd.f32 %v1676, %v2016
        %v2123 = vadd.f32 %v1677, %v2019
        %v2124 = vadd.f32 %v1678, %v2022
        %v2125 = vadd.f32 %v1679, %v2025
        %v2126 = vadd.f32 %v1680, %v2028
        %v2127 = vadd.f32 %v1681, %v2031
        %v2128 = vadd.f32 %v1682, %v2034
        %v2129 = vadd.f32 %v1683, %v2037
        %v2130 = vadd.f32 %v1684, %v2040
        %v2131 = vadd.f32 %v1685, %v2043
        %v2132 = vadd.f32 %v1686, %v2046
        %v2133 = vadd.f32 %v1687, %v2049
        %v2134 = vadd.f32 %v1688, %v2052
        %v2135 = vadd.f32 %v1689, %v2055
        %v2136 = vadd.f32 %v1690, %v2058
        %v2137 = vadd.f32 %v1691, %v2061
        %v2138 = vadd.f32 %v1692, %v2064
        %v2139 = vadd.f32 %v1693, %v2067
        %v2140 = vadd.f32 %v1694, %v2070
        %v2141 = vadd.f32 %v1695, %v2073
        %v2142 = vadd.f32 %v1696, %v2076
        %v2143 = vadd.f32 %v1697, %v2079
        %v2144 = vadd.f32 %v1698, %v2082
        %v2145 = vadd.f32 %v1699, %v2085
        %v2146 = vadd.f32 %v1700, %v2088
        %v2147 = vadd.f32 %v1701, %v2091
        %v2148 = vadd.f32 %v1702, %v2094
        %v2149 = vld [vmem:[#allocation4] sm:$0x1]
        %v2151 = vperm.slane %v2149, 0
        %v2153 = vadd.f32 %v2096, %v2151
        %v2154 = vadd.f32 %v2097, %v2151
        %v2155 = vadd.f32 %v2098, %v2151
        %v2156 = vadd.f32 %v2099, %v2151
        %v2157 = vadd.f32 %v2100, %v2151
        %v2158 = vadd.f32 %v2101, %v2151
        %v2159 = vadd.f32 %v2102, %v2151
        %v2160 = vadd.f32 %v2103, %v2151
        %v2161 = vadd.f32 %v2104, %v2151
        %v2162 = vadd.f32 %v2105, %v2151
        %v2163 = vadd.f32 %v2106, %v2151
        %v2164 = vadd.f32 %v2107, %v2151
        %v2165 = vadd.f32 %v2108, %v2151
        %v2166 = vadd.f32 %v2109, %v2151
        %v2167 = vadd.f32 %v2110, %v2151
        %v2168 = vadd.f32 %v2111, %v2151
        %v2169 = vadd.f32 %v2112, %v2151
        %v2170 = vadd.f32 %v2113, %v2151
        %v2171 = vadd.f32 %v2114, %v2151
        %v2172 = vadd.f32 %v2115, %v2151
        %v2173 = vadd.f32 %v2116, %v2151
        %v2174 = vadd.f32 %v2117, %v2151
        %v2175 = vadd.f32 %v2118, %v2151
        %v2176 = vadd.f32 %v2119, %v2151
        %v2177 = vadd.f32 %v2120, %v2151
        %v2178 = vadd.f32 %v2121, %v2151
        %v2179 = vadd.f32 %v2122, %v2151
        %v2180 = vadd.f32 %v2123, %v2151
        %v2181 = vadd.f32 %v2124, %v2151
        %v2182 = vadd.f32 %v2125, %v2151
        %v2183 = vadd.f32 %v2126, %v2151
        %v2184 = vadd.f32 %v2127, %v2151
        %v2185 = vadd.f32 %v2128, %v2151
        %v2186 = vadd.f32 %v2129, %v2151
        %v2187 = vadd.f32 %v2130, %v2151
        %v2188 = vadd.f32 %v2131, %v2151
        %v2189 = vadd.f32 %v2132, %v2151
        %v2190 = vadd.f32 %v2133, %v2151
        %v2191 = vadd.f32 %v2134, %v2151
        %v2192 = vadd.f32 %v2135, %v2151
        %v2193 = vadd.f32 %v2136, %v2151
        %v2194 = vadd.f32 %v2137, %v2151
        %v2195 = vadd.f32 %v2138, %v2151
        %v2196 = vadd.f32 %v2139, %v2151
        %v2197 = vadd.f32 %v2140, %v2151
        %v2198 = vadd.f32 %v2141, %v2151
        %v2199 = vadd.f32 %v2142, %v2151
        %v2200 = vadd.f32 %v2143, %v2151
        %v2201 = vadd.f32 %v2144, %v2151
        %v2202 = vadd.f32 %v2145, %v2151
        %v2203 = vadd.f32 %v2146, %v2151
        %v2204 = vadd.f32 %v2147, %v2151
        %v2205 = vadd.f32 %v2148, %v2151
        %v2206 = vmax.f32 %v2153, 0.0
        %v2207 = vmax.f32 %v2154, 0.0
        %v2208 = vmax.f32 %v2155, 0.0
        %v2209 = vmax.f32 %v2156, 0.0
        %v2210 = vmax.f32 %v2157, 0.0
        %v2211 = vmax.f32 %v2158, 0.0
        %v2212 = vmax.f32 %v2159, 0.0
        %v2213 = vmax.f32 %v2160, 0.0
        %v2214 = vmax.f32 %v2161, 0.0
        %v2215 = vmax.f32 %v2162, 0.0
        %v2216 = vmax.f32 %v2163, 0.0
        %v2217 = vmax.f32 %v2164, 0.0
        %v2218 = vmax.f32 %v2165, 0.0
        %v2219 = vmax.f32 %v2166, 0.0
        %v2220 = vmax.f32 %v2167, 0.0
        %v2221 = vmax.f32 %v2168, 0.0
        %v2222 = vmax.f32 %v2169, 0.0
        %v2223 = vmax.f32 %v2170, 0.0
        %v2224 = vmax.f32 %v2171, 0.0
        %v2225 = vmax.f32 %v2172, 0.0
        %v2226 = vmax.f32 %v2173, 0.0
        %v2227 = vmax.f32 %v2174, 0.0
        %v2228 = vmax.f32 %v2175, 0.0
        %v2229 = vmax.f32 %v2176, 0.0
        %v2230 = vmax.f32 %v2177, 0.0
        %v2231 = vmax.f32 %v2178, 0.0
        %v2232 = vmax.f32 %v2179, 0.0
        %v2233 = vmax.f32 %v2180, 0.0
        %v2234 = vmax.f32 %v2181, 0.0
        %v2235 = vmax.f32 %v2182, 0.0
        %v2236 = vmax.f32 %v2183, 0.0
        %v2237 = vmax.f32 %v2184, 0.0
        %v2238 = vmax.f32 %v2185, 0.0
        %v2239 = vmax.f32 %v2186, 0.0
        %v2240 = vmax.f32 %v2187, 0.0
        %v2241 = vmax.f32 %v2188, 0.0
        %v2242 = vmax.f32 %v2189, 0.0
        %v2243 = vmax.f32 %v2190, 0.0
        %v2244 = vmax.f32 %v2191, 0.0
        %v2245 = vmax.f32 %v2192, 0.0
        %v2246 = vmax.f32 %v2193, 0.0
        %v2247 = vmax.f32 %v2194, 0.0
        %v2248 = vmax.f32 %v2195, 0.0
        %v2249 = vmax.f32 %v2196, 0.0
        %v2250 = vmax.f32 %v2197, 0.0
        %v2251 = vmax.f32 %v2198, 0.0
        %v2252 = vmax.f32 %v2199, 0.0
        %v2253 = vmax.f32 %v2200, 0.0
        %v2254 = vmax.f32 %v2201, 0.0
        %v2255 = vmax.f32 %v2202, 0.0
        %v2256 = vmax.f32 %v2203, 0.0
        %v2257 = vmax.f32 %v2204, 0.0
        %v2258 = vmax.f32 %v2205, 0.0
        %2259 = vst.msk [vmem:[#allocation2] sm:$0xff] %vm356, %v2206
        %2260 = vst.msk [vmem:[#allocation2 + $0x8] sm:$0xff] %vm356, %v2207
        %2261 = vst.msk [vmem:[#allocation2 + $0x10] sm:$0xff] %vm356, %v2208
        %2262 = vst.msk [vmem:[#allocation2 + $0x18] sm:$0xff] %vm356, %v2209
        %2263 = vst.msk [vmem:[#allocation2 + $0x20] sm:$0xff] %vm356, %v2210
        %2264 = vst.msk [vmem:[#allocation2 + $0x28] sm:$0xff] %vm356, %v2211
        %2265 = vst.msk [vmem:[#allocation2 + $0x30] sm:$0xff] %vm356, %v2212
        %2266 = vst.msk [vmem:[#allocation2 + $0x38] sm:$0xff] %vm356, %v2213
        %2267 = vst.msk [vmem:[#allocation2 + $0x40] sm:$0xff] %vm356, %v2214
        %2268 = vst.msk [vmem:[#allocation2 + $0x48] sm:$0xff] %vm356, %v2215
        %2269 = vst.msk [vmem:[#allocation2 + $0x50] sm:$0xff] %vm356, %v2216
        %2270 = vst.msk [vmem:[#allocation2 + $0x58] sm:$0xff] %vm356, %v2217
        %2271 = vst.msk [vmem:[#allocation2 + $0x60] sm:$0xff] %vm356, %v2218
        %2272 = vst.msk [vmem:[#allocation2 + $0x68] sm:$0xff] %vm356, %v2219
        %2273 = vst.msk [vmem:[#allocation2 + $0x70] sm:$0xff] %vm356, %v2220
        %2274 = vst.msk [vmem:[#allocation2 + $0x78] sm:$0xff] %vm356, %v2221
        %2275 = vst.msk [vmem:[#allocation2 + $0x80] sm:$0xff] %vm356, %v2222
        %2276 = vst.msk [vmem:[#allocation2 + $0x88] sm:$0xff] %vm356, %v2223
        %2277 = vst.msk [vmem:[#allocation2 + $0x90] sm:$0xff] %vm356, %v2224
        %2278 = vst.msk [vmem:[#allocation2 + $0x98] sm:$0xff] %vm356, %v2225
        %2279 = vst.msk [vmem:[#allocation2 + $0xa0] sm:$0xff] %vm356, %v2226
        %2280 = vst.msk [vmem:[#allocation2 + $0xa8] sm:$0xff] %vm356, %v2227
        %2281 = vst.msk [vmem:[#allocation2 + $0xb0] sm:$0xff] %vm356, %v2228
        %2282 = vst.msk [vmem:[#allocation2 + $0xb8] sm:$0xff] %vm356, %v2229
        %2283 = vst.msk [vmem:[#allocation2 + $0xc0] sm:$0xff] %vm356, %v2230
        %2284 = vst.msk [vmem:[#allocation2 + $0xc8] sm:$0xff] %vm356, %v2231
        %2285 = vst.msk [vmem:[#allocation2 + $0xd0] sm:$0xff] %vm356, %v2232
        %2286 = vst.msk [vmem:[#allocation2 + $0xd8] sm:$0xff] %vm356, %v2233
        %2287 = vst.msk [vmem:[#allocation2 + $0xe0] sm:$0xff] %vm356, %v2234
        %2288 = vst.msk [vmem:[#allocation2 + $0xe8] sm:$0xff] %vm356, %v2235
        %2289 = vst.msk [vmem:[#allocation2 + $0xf0] sm:$0xff] %vm356, %v2236
        %2290 = vst.msk [vmem:[#allocation2 + $0xf8] sm:$0xff] %vm356, %v2237
        %2291 = vst.msk [vmem:[#allocation2 + $0x100] sm:$0xff] %vm356, %v2238
        %2292 = vst.msk [vmem:[#allocation2 + $0x108] sm:$0xff] %vm356, %v2239
        %2293 = vst.msk [vmem:[#allocation2 + $0x110] sm:$0xff] %vm356, %v2240
        %2294 = vst.msk [vmem:[#allocation2 + $0x118] sm:$0xff] %vm356, %v2241
        %2295 = vst.msk [vmem:[#allocation2 + $0x120] sm:$0xff] %vm356, %v2242
        %2296 = vst.msk [vmem:[#allocation2 + $0x128] sm:$0xff] %vm356, %v2243
        %2297 = vst.msk [vmem:[#allocation2 + $0x130] sm:$0xff] %vm356, %v2244
        %2298 = vst.msk [vmem:[#allocation2 + $0x138] sm:$0xff] %vm356, %v2245
        %2299 = vst.msk [vmem:[#allocation2 + $0x140] sm:$0xff] %vm356, %v2246
        %2300 = vst.msk [vmem:[#allocation2 + $0x148] sm:$0xff] %vm356, %v2247
        %2301 = vst.msk [vmem:[#allocation2 + $0x150] sm:$0xff] %vm356, %v2248
        %2302 = vst.msk [vmem:[#allocation2 + $0x158] sm:$0xff] %vm356, %v2249
        %2303 = vst.msk [vmem:[#allocation2 + $0x160] sm:$0xff] %vm356, %v2250
        %2304 = vst.msk [vmem:[#allocation2 + $0x168] sm:$0xff] %vm356, %v2251
        %2305 = vst.msk [vmem:[#allocation2 + $0x170] sm:$0xff] %vm356, %v2252
        %2306 = vst.msk [vmem:[#allocation2 + $0x178] sm:$0xff] %vm356, %v2253
        %2307 = vst.msk [vmem:[#allocation2 + $0x180] sm:$0xff] %vm356, %v2254
        %2308 = vst.msk [vmem:[#allocation2 + $0x188] sm:$0xff] %vm356, %v2255
        %2309 = vst.msk [vmem:[#allocation2 + $0x190] sm:$0xff] %vm356, %v2256
        %2310 = vst.msk [vmem:[#allocation2 + $0x198] sm:$0xff] %vm356, %v2257
        %vm2311 = vcmask 257024
        %2312 = vst.msk [vmem:[#allocation2 + $0x1a0] sm:$0xf] %vm2311, %v2258
        %v2313 = vld [vmem:[#allocation2] sm:$0xff]
        %v2314 = vld [vmem:[#allocation2 + $0x8] sm:$0xff]
        %v2315 = vld [vmem:[#allocation2 + $0x10] sm:$0xff]
        %v2316 = vld [vmem:[#allocation2 + $0x18] sm:$0xff]
        %v2317 = vld [vmem:[#allocation2 + $0x20] sm:$0xff]
        %v2318 = vld [vmem:[#allocation2 + $0x28] sm:$0xff]
        %v2319 = vld [vmem:[#allocation2 + $0x30] sm:$0xff]
        %v2320 = vld [vmem:[#allocation2 + $0x38] sm:$0xff]
        %v2321 = vld [vmem:[#allocation2 + $0x40] sm:$0xff]
        %v2322 = vld [vmem:[#allocation2 + $0x48] sm:$0xff]
        %v2323 = vld [vmem:[#allocation2 + $0x50] sm:$0xff]
        %v2324 = vld [vmem:[#allocation2 + $0x58] sm:$0xff]
        %v2325 = vld [vmem:[#allocation2 + $0x60] sm:$0xff]
        %v2326 = vld [vmem:[#allocation2 + $0x68] sm:$0xff]
        %v2327 = vld [vmem:[#allocation2 + $0x70] sm:$0xff]
        %v2328 = vld [vmem:[#allocation2 + $0x78] sm:$0xff]
        %v2329 = vld [vmem:[#allocation2 + $0x80] sm:$0xff]
        %v2330 = vld [vmem:[#allocation2 + $0x88] sm:$0xff]
        %v2331 = vld [vmem:[#allocation2 + $0x90] sm:$0xff]
        %v2332 = vld [vmem:[#allocation2 + $0x98] sm:$0xff]
        %v2333 = vld [vmem:[#allocation2 + $0xa0] sm:$0xff]
        %v2334 = vld [vmem:[#allocation2 + $0xa8] sm:$0xff]
        %v2335 = vld [vmem:[#allocation2 + $0xb0] sm:$0xff]
        %v2336 = vld [vmem:[#allocation2 + $0xb8] sm:$0xff]
        %v2337 = vld [vmem:[#allocation2 + $0xc0] sm:$0xff]
        %v2338 = vld [vmem:[#allocation2 + $0xc8] sm:$0xff]
        %v2339 = vld [vmem:[#allocation2 + $0xd0] sm:$0xff]
        %v2340 = vld [vmem:[#allocation2 + $0xd8] sm:$0xff]
        %v2341 = vld [vmem:[#allocation2 + $0xe0] sm:$0xff]
        %v2342 = vld [vmem:[#allocation2 + $0xe8] sm:$0xff]
        %v2343 = vld [vmem:[#allocation2 + $0xf0] sm:$0xff]
        %v2344 = vld [vmem:[#allocation2 + $0xf8] sm:$0xff]
        %v2345 = vld [vmem:[#allocation2 + $0x100] sm:$0xff]
        %v2346 = vld [vmem:[#allocation2 + $0x108] sm:$0xff]
        %v2347 = vld [vmem:[#allocation2 + $0x110] sm:$0xff]
        %v2348 = vld [vmem:[#allocation2 + $0x118] sm:$0xff]
        %v2349 = vld [vmem:[#allocation2 + $0x120] sm:$0xff]
        %v2350 = vld [vmem:[#allocation2 + $0x128] sm:$0xff]
        %v2351 = vld [vmem:[#allocation2 + $0x130] sm:$0xff]
        %v2352 = vld [vmem:[#allocation2 + $0x138] sm:$0xff]
        %v2353 = vld [vmem:[#allocation2 + $0x140] sm:$0xff]
        %v2354 = vld [vmem:[#allocation2 + $0x148] sm:$0xff]
        %v2355 = vld [vmem:[#allocation2 + $0x150] sm:$0xff]
        %v2356 = vld [vmem:[#allocation2 + $0x158] sm:$0xff]
        %v2357 = vld [vmem:[#allocation2 + $0x160] sm:$0xff]
        %v2358 = vld [vmem:[#allocation2 + $0x168] sm:$0xff]
        %v2359 = vld [vmem:[#allocation2 + $0x170] sm:$0xff]
        %v2360 = vld [vmem:[#allocation2 + $0x178] sm:$0xff]
        %v2361 = vld [vmem:[#allocation2 + $0x180] sm:$0xff]
        %v2362 = vld [vmem:[#allocation2 + $0x188] sm:$0x7f]
        %v2363 = vld [vmem:[#allocation6] sm:$0xff]
        %v2364 = vld [vmem:[#allocation6 + $0x8] sm:$0xff]
        %v2365 = vld [vmem:[#allocation6 + $0x10] sm:$0xff]
        %v2366 = vld [vmem:[#allocation6 + $0x18] sm:$0xff]
        %v2367 = vld [vmem:[#allocation2 + $0x1] sm:$0xff]
        %v2368 = vld [vmem:[#allocation2 + $0x9] sm:$0xff]
        %v2369 = vld [vmem:[#allocation2 + $0x11] sm:$0xff]
        %v2370 = vld [vmem:[#allocation2 + $0x19] sm:$0xff]
        %v2371 = vld [vmem:[#allocation2 + $0x21] sm:$0xff]
        %v2372 = vld [vmem:[#allocation2 + $0x29] sm:$0xff]
        %v2373 = vld [vmem:[#allocation2 + $0x31] sm:$0xff]
        %v2374 = vld [vmem:[#allocation2 + $0x39] sm:$0xff]
        %v2375 = vld [vmem:[#allocation2 + $0x41] sm:$0xff]
        %v2376 = vld [vmem:[#allocation2 + $0x49] sm:$0xff]
        %v2377 = vld [vmem:[#allocation2 + $0x51] sm:$0xff]
        %v2378 = vld [vmem:[#allocation2 + $0x59] sm:$0xff]
        %v2379 = vld [vmem:[#allocation2 + $0x61] sm:$0xff]
        %v2380 = vld [vmem:[#allocation2 + $0x69] sm:$0xff]
        %v2381 = vld [vmem:[#allocation2 + $0x71] sm:$0xff]
        %v2382 = vld [vmem:[#allocation2 + $0x79] sm:$0xff]
        %v2383 = vld [vmem:[#allocation2 + $0x81] sm:$0xff]
        %v2384 = vld [vmem:[#allocation2 + $0x89] sm:$0xff]
        %v2385 = vld [vmem:[#allocation2 + $0x91] sm:$0xff]
        %v2386 = vld [vmem:[#allocation2 + $0x99] sm:$0xff]
        %v2387 = vld [vmem:[#allocation2 + $0xa1] sm:$0xff]
        %v2388 = vld [vmem:[#allocation2 + $0xa9] sm:$0xff]
        %v2389 = vld [vmem:[#allocation2 + $0xb1] sm:$0xff]
        %v2390 = vld [vmem:[#allocation2 + $0xb9] sm:$0xff]
        %v2391 = vld [vmem:[#allocation2 + $0xc1] sm:$0xff]
        %v2392 = vld [vmem:[#allocation2 + $0xc9] sm:$0xff]
        %v2393 = vld [vmem:[#allocation2 + $0xd1] sm:$0xff]
        %v2394 = vld [vmem:[#allocation2 + $0xd9] sm:$0xff]
        %v2395 = vld [vmem:[#allocation2 + $0xe1] sm:$0xff]
        %v2396 = vld [vmem:[#allocation2 + $0xe9] sm:$0xff]
        %v2397 = vld [vmem:[#allocation2 + $0xf1] sm:$0xff]
        %v2398 = vld [vmem:[#allocation2 + $0xf9] sm:$0xff]
        %v2399 = vld [vmem:[#allocation2 + $0x101] sm:$0xff]
        %v2400 = vld [vmem:[#allocation2 + $0x109] sm:$0xff]
        %v2401 = vld [vmem:[#allocation2 + $0x111] sm:$0xff]
        %v2402 = vld [vmem:[#allocation2 + $0x119] sm:$0xff]
        %v2403 = vld [vmem:[#allocation2 + $0x121] sm:$0xff]
        %v2404 = vld [vmem:[#allocation2 + $0x129] sm:$0xff]
        %v2405 = vld [vmem:[#allocation2 + $0x131] sm:$0xff]
        %v2406 = vld [vmem:[#allocation2 + $0x139] sm:$0xff]
        %v2407 = vld [vmem:[#allocation2 + $0x141] sm:$0xff]
        %v2408 = vld [vmem:[#allocation2 + $0x149] sm:$0xff]
        %v2409 = vld [vmem:[#allocation2 + $0x151] sm:$0xff]
        %v2410 = vld [vmem:[#allocation2 + $0x159] sm:$0xff]
        %v2411 = vld [vmem:[#allocation2 + $0x161] sm:$0xff]
        %v2412 = vld [vmem:[#allocation2 + $0x169] sm:$0xff]
        %v2413 = vld [vmem:[#allocation2 + $0x171] sm:$0xff]
        %v2414 = vld [vmem:[#allocation2 + $0x179] sm:$0xff]
        %v2415 = vld [vmem:[#allocation2 + $0x181] sm:$0xff]
        %v2416 = vld [vmem:[#allocation2 + $0x189] sm:$0x7f]
        %s2417 = scalar_lea.vmem [#allocation6], 32
        %v2418 = vld [vmem:[%s2417] sm:$0xff]
        %v2419 = vld [vmem:[%s2417 + $0x8] sm:$0xff]
        %v2420 = vld [vmem:[%s2417 + $0x10] sm:$0xff]
        %v2421 = vld [vmem:[%s2417 + $0x18] sm:$0xff]
        %v2423 = vsel %vm356, %v2367, 0
        %v2426 = vsel %vm356, %v2368, 0
        %v2429 = vsel %vm356, %v2369, 0
        %v2432 = vsel %vm356, %v2370, 0
        %v2435 = vsel %vm356, %v2371, 0
        %v2438 = vsel %vm356, %v2372, 0
        %v2441 = vsel %vm356, %v2373, 0
        %v2444 = vsel %vm356, %v2374, 0
        %v2447 = vsel %vm356, %v2375, 0
        %v2450 = vsel %vm356, %v2376, 0
        %v2453 = vsel %vm356, %v2377, 0
        %v2456 = vsel %vm356, %v2378, 0
        %v2459 = vsel %vm356, %v2379, 0
        %v2462 = vsel %vm356, %v2380, 0
        %v2465 = vsel %vm356, %v2381, 0
        %v2468 = vsel %vm356, %v2382, 0
        %v2471 = vsel %vm356, %v2383, 0
        %v2474 = vsel %vm356, %v2384, 0
        %v2477 = vsel %vm356, %v2385, 0
        %v2480 = vsel %vm356, %v2386, 0
        %v2483 = vsel %vm356, %v2387, 0
        %v2486 = vsel %vm356, %v2388, 0
        %v2489 = vsel %vm356, %v2389, 0
        %v2492 = vsel %vm356, %v2390, 0
        %v2495 = vsel %vm356, %v2391, 0
        %v2498 = vsel %vm356, %v2392, 0
        %v2501 = vsel %vm356, %v2393, 0
        %v2504 = vsel %vm356, %v2394, 0
        %v2507 = vsel %vm356, %v2395, 0
        %v2510 = vsel %vm356, %v2396, 0
        %v2513 = vsel %vm356, %v2397, 0
        %v2516 = vsel %vm356, %v2398, 0
        %v2519 = vsel %vm356, %v2399, 0
        %v2522 = vsel %vm356, %v2400, 0
        %v2525 = vsel %vm356, %v2401, 0
        %v2528 = vsel %vm356, %v2402, 0
        %v2531 = vsel %vm356, %v2403, 0
        %v2534 = vsel %vm356, %v2404, 0
        %v2537 = vsel %vm356, %v2405, 0
        %v2540 = vsel %vm356, %v2406, 0
        %v2543 = vsel %vm356, %v2407, 0
        %v2546 = vsel %vm356, %v2408, 0
        %v2549 = vsel %vm356, %v2409, 0
        %v2552 = vsel %vm356, %v2410, 0
        %v2555 = vsel %vm356, %v2411, 0
        %v2558 = vsel %vm356, %v2412, 0
        %v2561 = vsel %vm356, %v2413, 0
        %v2564 = vsel %vm356, %v2414, 0
        %v2567 = vsel %vm356, %v2415, 0
        %v2570 = vsel %vm356, %v2416, 0
        %2572 = vmatpush.msra.mxu0 0.0
        %2573 = vmatpush.msra.mxu0 0.0
        %2574 = vmatpush.msra.mxu0 0.0
        %2575 = vmatpush.msra.mxu0 0.0
        %2576 = vmatpush.msra.mxu0 0.0
        %2577 = vmatpush.msra.mxu0 0.0
        %2578 = vmatpush.msra.mxu0 0.0
        %2579 = vmatpush.msra.mxu0 0.0
        %2580 = vmatpush.msra.mxu0 0.0
        %2581 = vmatpush.msra.mxu0 0.0
        %2582 = vmatpush.msra.mxu0 0.0
        %2583 = vmatpush.msra.mxu0 0.0
        %2584 = vmatpush.msra.mxu0 %v2421
        %2585 = vmatpush.msra.mxu0 %v2420
        %2586 = vmatpush.msra.mxu0 %v2419
        %2587 = vmatpush.msra.mxu0 %v2418
        %2588 = vmatmul.f32.gmra.mxu0 %v2423
        %v2589 = vpop.f32.mrf.mxu0
        %v2590 = vadd.f32 0.0, %v2589
        %2591 = vmatmul.f32.gmra.mxu0 %v2426
        %v2592 = vpop.f32.mrf.mxu0
        %v2593 = vadd.f32 0.0, %v2592
        %2594 = vmatmul.f32.gmra.mxu0 %v2429
        %v2595 = vpop.f32.mrf.mxu0
        %v2596 = vadd.f32 0.0, %v2595
        %2597 = vmatmul.f32.gmra.mxu0 %v2432
        %v2598 = vpop.f32.mrf.mxu0
        %v2599 = vadd.f32 0.0, %v2598
        %2600 = vmatmul.f32.gmra.mxu0 %v2435
        %v2601 = vpop.f32.mrf.mxu0
        %v2602 = vadd.f32 0.0, %v2601
        %2603 = vmatmul.f32.gmra.mxu0 %v2438
        %v2604 = vpop.f32.mrf.mxu0
        %v2605 = vadd.f32 0.0, %v2604
        %2606 = vmatmul.f32.gmra.mxu0 %v2441
        %v2607 = vpop.f32.mrf.mxu0
        %v2608 = vadd.f32 0.0, %v2607
        %2609 = vmatmul.f32.gmra.mxu0 %v2444
        %v2610 = vpop.f32.mrf.mxu0
        %v2611 = vadd.f32 0.0, %v2610
        %2612 = vmatmul.f32.gmra.mxu0 %v2447
        %v2613 = vpop.f32.mrf.mxu0
        %v2614 = vadd.f32 0.0, %v2613
        %2615 = vmatmul.f32.gmra.mxu0 %v2450
        %v2616 = vpop.f32.mrf.mxu0
        %v2617 = vadd.f32 0.0, %v2616
        %2618 = vmatmul.f32.gmra.mxu0 %v2453
        %v2619 = vpop.f32.mrf.mxu0
        %v2620 = vadd.f32 0.0, %v2619
        %2621 = vmatmul.f32.gmra.mxu0 %v2456
        %v2622 = vpop.f32.mrf.mxu0
        %v2623 = vadd.f32 0.0, %v2622
        %2624 = vmatmul.f32.gmra.mxu0 %v2459
        %v2625 = vpop.f32.mrf.mxu0
        %v2626 = vadd.f32 0.0, %v2625
        %2627 = vmatmul.f32.gmra.mxu0 %v2462
        %v2628 = vpop.f32.mrf.mxu0
        %v2629 = vadd.f32 0.0, %v2628
        %2630 = vmatmul.f32.gmra.mxu0 %v2465
        %v2631 = vpop.f32.mrf.mxu0
        %v2632 = vadd.f32 0.0, %v2631
        %2633 = vmatmul.f32.gmra.mxu0 %v2468
        %v2634 = vpop.f32.mrf.mxu0
        %v2635 = vadd.f32 0.0, %v2634
        %2636 = vmatmul.f32.gmra.mxu0 %v2471
        %v2637 = vpop.f32.mrf.mxu0
        %v2638 = vadd.f32 0.0, %v2637
        %2639 = vmatmul.f32.gmra.mxu0 %v2474
        %v2640 = vpop.f32.mrf.mxu0
        %v2641 = vadd.f32 0.0, %v2640
        %2642 = vmatmul.f32.gmra.mxu0 %v2477
        %v2643 = vpop.f32.mrf.mxu0
        %v2644 = vadd.f32 0.0, %v2643
        %2645 = vmatmul.f32.gmra.mxu0 %v2480
        %v2646 = vpop.f32.mrf.mxu0
        %v2647 = vadd.f32 0.0, %v2646
        %2648 = vmatmul.f32.gmra.mxu0 %v2483
        %v2649 = vpop.f32.mrf.mxu0
        %v2650 = vadd.f32 0.0, %v2649
        %2651 = vmatmul.f32.gmra.mxu0 %v2486
        %v2652 = vpop.f32.mrf.mxu0
        %v2653 = vadd.f32 0.0, %v2652
        %2654 = vmatmul.f32.gmra.mxu0 %v2489
        %v2655 = vpop.f32.mrf.mxu0
        %v2656 = vadd.f32 0.0, %v2655
        %2657 = vmatmul.f32.gmra.mxu0 %v2492
        %v2658 = vpop.f32.mrf.mxu0
        %v2659 = vadd.f32 0.0, %v2658
        %2660 = vmatmul.f32.gmra.mxu0 %v2495
        %v2661 = vpop.f32.mrf.mxu0
        %v2662 = vadd.f32 0.0, %v2661
        %2663 = vmatmul.f32.gmra.mxu0 %v2498
        %v2664 = vpop.f32.mrf.mxu0
        %v2665 = vadd.f32 0.0, %v2664
        %2666 = vmatmul.f32.gmra.mxu0 %v2501
        %v2667 = vpop.f32.mrf.mxu0
        %v2668 = vadd.f32 0.0, %v2667
        %2669 = vmatmul.f32.gmra.mxu0 %v2504
        %v2670 = vpop.f32.mrf.mxu0
        %v2671 = vadd.f32 0.0, %v2670
        %2672 = vmatmul.f32.gmra.mxu0 %v2507
        %v2673 = vpop.f32.mrf.mxu0
        %v2674 = vadd.f32 0.0, %v2673
        %2675 = vmatmul.f32.gmra.mxu0 %v2510
        %v2676 = vpop.f32.mrf.mxu0
        %v2677 = vadd.f32 0.0, %v2676
        %2678 = vmatmul.f32.gmra.mxu0 %v2513
        %v2679 = vpop.f32.mrf.mxu0
        %v2680 = vadd.f32 0.0, %v2679
        %2681 = vmatmul.f32.gmra.mxu0 %v2516
        %v2682 = vpop.f32.mrf.mxu0
        %v2683 = vadd.f32 0.0, %v2682
        %2684 = vmatmul.f32.gmra.mxu0 %v2519
        %v2685 = vpop.f32.mrf.mxu0
        %v2686 = vadd.f32 0.0, %v2685
        %2687 = vmatmul.f32.gmra.mxu0 %v2522
        %v2688 = vpop.f32.mrf.mxu0
        %v2689 = vadd.f32 0.0, %v2688
        %2690 = vmatmul.f32.gmra.mxu0 %v2525
        %v2691 = vpop.f32.mrf.mxu0
        %v2692 = vadd.f32 0.0, %v2691
        %2693 = vmatmul.f32.gmra.mxu0 %v2528
        %v2694 = vpop.f32.mrf.mxu0
        %v2695 = vadd.f32 0.0, %v2694
        %2696 = vmatmul.f32.gmra.mxu0 %v2531
        %v2697 = vpop.f32.mrf.mxu0
        %v2698 = vadd.f32 0.0, %v2697
        %2699 = vmatmul.f32.gmra.mxu0 %v2534
        %v2700 = vpop.f32.mrf.mxu0
        %v2701 = vadd.f32 0.0, %v2700
        %2702 = vmatmul.f32.gmra.mxu0 %v2537
        %v2703 = vpop.f32.mrf.mxu0
        %v2704 = vadd.f32 0.0, %v2703
        %2705 = vmatmul.f32.gmra.mxu0 %v2540
        %v2706 = vpop.f32.mrf.mxu0
        %v2707 = vadd.f32 0.0, %v2706
        %2708 = vmatmul.f32.gmra.mxu0 %v2543
        %v2709 = vpop.f32.mrf.mxu0
        %v2710 = vadd.f32 0.0, %v2709
        %2711 = vmatmul.f32.gmra.mxu0 %v2546
        %v2712 = vpop.f32.mrf.mxu0
        %v2713 = vadd.f32 0.0, %v2712
        %2714 = vmatmul.f32.gmra.mxu0 %v2549
        %v2715 = vpop.f32.mrf.mxu0
        %v2716 = vadd.f32 0.0, %v2715
        %2717 = vmatmul.f32.gmra.mxu0 %v2552
        %v2718 = vpop.f32.mrf.mxu0
        %v2719 = vadd.f32 0.0, %v2718
        %2720 = vmatmul.f32.gmra.mxu0 %v2555
        %v2721 = vpop.f32.mrf.mxu0
        %v2722 = vadd.f32 0.0, %v2721
        %2723 = vmatmul.f32.gmra.mxu0 %v2558
        %v2724 = vpop.f32.mrf.mxu0
        %v2725 = vadd.f32 0.0, %v2724
        %2726 = vmatmul.f32.gmra.mxu0 %v2561
        %v2727 = vpop.f32.mrf.mxu0
        %v2728 = vadd.f32 0.0, %v2727
        %2729 = vmatmul.f32.gmra.mxu0 %v2564
        %v2730 = vpop.f32.mrf.mxu0
        %v2731 = vadd.f32 0.0, %v2730
        %2732 = vmatmul.f32.gmra.mxu0 %v2567
        %v2733 = vpop.f32.mrf.mxu0
        %v2734 = vadd.f32 0.0, %v2733
        %2735 = vmatmul.f32.gmra.mxu0 %v2570
        %v2736 = vpop.f32.mrf.mxu0
        %v2737 = vadd.f32 0.0, %v2736
        %2738 = vdwg.mxu0
        %v2740 = vsel %vm356, %v2313, 0
        %v2743 = vsel %vm356, %v2314, 0
        %v2746 = vsel %vm356, %v2315, 0
        %v2749 = vsel %vm356, %v2316, 0
        %v2752 = vsel %vm356, %v2317, 0
        %v2755 = vsel %vm356, %v2318, 0
        %v2758 = vsel %vm356, %v2319, 0
        %v2761 = vsel %vm356, %v2320, 0
        %v2764 = vsel %vm356, %v2321, 0
        %v2767 = vsel %vm356, %v2322, 0
        %v2770 = vsel %vm356, %v2323, 0
        %v2773 = vsel %vm356, %v2324, 0
        %v2776 = vsel %vm356, %v2325, 0
        %v2779 = vsel %vm356, %v2326, 0
        %v2782 = vsel %vm356, %v2327, 0
        %v2785 = vsel %vm356, %v2328, 0
        %v2788 = vsel %vm356, %v2329, 0
        %v2791 = vsel %vm356, %v2330, 0
        %v2794 = vsel %vm356, %v2331, 0
        %v2797 = vsel %vm356, %v2332, 0
        %v2800 = vsel %vm356, %v2333, 0
        %v2803 = vsel %vm356, %v2334, 0
        %v2806 = vsel %vm356, %v2335, 0
        %v2809 = vsel %vm356, %v2336, 0
        %v2812 = vsel %vm356, %v2337, 0
        %v2815 = vsel %vm356, %v2338, 0
        %v2818 = vsel %vm356, %v2339, 0
        %v2821 = vsel %vm356, %v2340, 0
        %v2824 = vsel %vm356, %v2341, 0
        %v2827 = vsel %vm356, %v2342, 0
        %v2830 = vsel %vm356, %v2343, 0
        %v2833 = vsel %vm356, %v2344, 0
        %v2836 = vsel %vm356, %v2345, 0
        %v2839 = vsel %vm356, %v2346, 0
        %v2842 = vsel %vm356, %v2347, 0
        %v2845 = vsel %vm356, %v2348, 0
        %v2848 = vsel %vm356, %v2349, 0
        %v2851 = vsel %vm356, %v2350, 0
        %v2854 = vsel %vm356, %v2351, 0
        %v2857 = vsel %vm356, %v2352, 0
        %v2860 = vsel %vm356, %v2353, 0
        %v2863 = vsel %vm356, %v2354, 0
        %v2866 = vsel %vm356, %v2355, 0
        %v2869 = vsel %vm356, %v2356, 0
        %v2872 = vsel %vm356, %v2357, 0
        %v2875 = vsel %vm356, %v2358, 0
        %v2878 = vsel %vm356, %v2359, 0
        %v2881 = vsel %vm356, %v2360, 0
        %v2884 = vsel %vm356, %v2361, 0
        %v2887 = vsel %vm356, %v2362, 0
        %2889 = vmatpush.msra.mxu0 0.0
        %2890 = vmatpush.msra.mxu0 0.0
        %2891 = vmatpush.msra.mxu0 0.0
        %2892 = vmatpush.msra.mxu0 0.0
        %2893 = vmatpush.msra.mxu0 0.0
        %2894 = vmatpush.msra.mxu0 0.0
        %2895 = vmatpush.msra.mxu0 0.0
        %2896 = vmatpush.msra.mxu0 0.0
        %2897 = vmatpush.msra.mxu0 0.0
        %2898 = vmatpush.msra.mxu0 0.0
        %2899 = vmatpush.msra.mxu0 0.0
        %2900 = vmatpush.msra.mxu0 0.0
        %2901 = vmatpush.msra.mxu0 %v2366
        %2902 = vmatpush.msra.mxu0 %v2365
        %2903 = vmatpush.msra.mxu0 %v2364
        %2904 = vmatpush.msra.mxu0 %v2363
        %2905 = vmatmul.f32.gmra.mxu0 %v2740
        %v2906 = vpop.f32.mrf.mxu0
        %v2907 = vadd.f32 %v2590, %v2906
        %2908 = vmatmul.f32.gmra.mxu0 %v2743
        %v2909 = vpop.f32.mrf.mxu0
        %v2910 = vadd.f32 %v2593, %v2909
        %2911 = vmatmul.f32.gmra.mxu0 %v2746
        %v2912 = vpop.f32.mrf.mxu0
        %v2913 = vadd.f32 %v2596, %v2912
        %2914 = vmatmul.f32.gmra.mxu0 %v2749
        %v2915 = vpop.f32.mrf.mxu0
        %v2916 = vadd.f32 %v2599, %v2915
        %2917 = vmatmul.f32.gmra.mxu0 %v2752
        %v2918 = vpop.f32.mrf.mxu0
        %v2919 = vadd.f32 %v2602, %v2918
        %2920 = vmatmul.f32.gmra.mxu0 %v2755
        %v2921 = vpop.f32.mrf.mxu0
        %v2922 = vadd.f32 %v2605, %v2921
        %2923 = vmatmul.f32.gmra.mxu0 %v2758
        %v2924 = vpop.f32.mrf.mxu0
        %v2925 = vadd.f32 %v2608, %v2924
        %2926 = vmatmul.f32.gmra.mxu0 %v2761
        %v2927 = vpop.f32.mrf.mxu0
        %v2928 = vadd.f32 %v2611, %v2927
        %2929 = vmatmul.f32.gmra.mxu0 %v2764
        %v2930 = vpop.f32.mrf.mxu0
        %v2931 = vadd.f32 %v2614, %v2930
        %2932 = vmatmul.f32.gmra.mxu0 %v2767
        %v2933 = vpop.f32.mrf.mxu0
        %v2934 = vadd.f32 %v2617, %v2933
        %2935 = vmatmul.f32.gmra.mxu0 %v2770
        %v2936 = vpop.f32.mrf.mxu0
        %v2937 = vadd.f32 %v2620, %v2936
        %2938 = vmatmul.f32.gmra.mxu0 %v2773
        %v2939 = vpop.f32.mrf.mxu0
        %v2940 = vadd.f32 %v2623, %v2939
        %2941 = vmatmul.f32.gmra.mxu0 %v2776
        %v2942 = vpop.f32.mrf.mxu0
        %v2943 = vadd.f32 %v2626, %v2942
        %2944 = vmatmul.f32.gmra.mxu0 %v2779
        %v2945 = vpop.f32.mrf.mxu0
        %v2946 = vadd.f32 %v2629, %v2945
        %2947 = vmatmul.f32.gmra.mxu0 %v2782
        %v2948 = vpop.f32.mrf.mxu0
        %v2949 = vadd.f32 %v2632, %v2948
        %2950 = vmatmul.f32.gmra.mxu0 %v2785
        %v2951 = vpop.f32.mrf.mxu0
        %v2952 = vadd.f32 %v2635, %v2951
        %2953 = vmatmul.f32.gmra.mxu0 %v2788
        %v2954 = vpop.f32.mrf.mxu0
        %v2955 = vadd.f32 %v2638, %v2954
        %2956 = vmatmul.f32.gmra.mxu0 %v2791
        %v2957 = vpop.f32.mrf.mxu0
        %v2958 = vadd.f32 %v2641, %v2957
        %2959 = vmatmul.f32.gmra.mxu0 %v2794
        %v2960 = vpop.f32.mrf.mxu0
        %v2961 = vadd.f32 %v2644, %v2960
        %2962 = vmatmul.f32.gmra.mxu0 %v2797
        %v2963 = vpop.f32.mrf.mxu0
        %v2964 = vadd.f32 %v2647, %v2963
        %2965 = vmatmul.f32.gmra.mxu0 %v2800
        %v2966 = vpop.f32.mrf.mxu0
        %v2967 = vadd.f32 %v2650, %v2966
        %2968 = vmatmul.f32.gmra.mxu0 %v2803
        %v2969 = vpop.f32.mrf.mxu0
        %v2970 = vadd.f32 %v2653, %v2969
        %2971 = vmatmul.f32.gmra.mxu0 %v2806
        %v2972 = vpop.f32.mrf.mxu0
        %v2973 = vadd.f32 %v2656, %v2972
        %2974 = vmatmul.f32.gmra.mxu0 %v2809
        %v2975 = vpop.f32.mrf.mxu0
        %v2976 = vadd.f32 %v2659, %v2975
        %2977 = vmatmul.f32.gmra.mxu0 %v2812
        %v2978 = vpop.f32.mrf.mxu0
        %v2979 = vadd.f32 %v2662, %v2978
        %2980 = vmatmul.f32.gmra.mxu0 %v2815
        %v2981 = vpop.f32.mrf.mxu0
        %v2982 = vadd.f32 %v2665, %v2981
        %2983 = vmatmul.f32.gmra.mxu0 %v2818
        %v2984 = vpop.f32.mrf.mxu0
        %v2985 = vadd.f32 %v2668, %v2984
        %2986 = vmatmul.f32.gmra.mxu0 %v2821
        %v2987 = vpop.f32.mrf.mxu0
        %v2988 = vadd.f32 %v2671, %v2987
        %2989 = vmatmul.f32.gmra.mxu0 %v2824
        %v2990 = vpop.f32.mrf.mxu0
        %v2991 = vadd.f32 %v2674, %v2990
        %2992 = vmatmul.f32.gmra.mxu0 %v2827
        %v2993 = vpop.f32.mrf.mxu0
        %v2994 = vadd.f32 %v2677, %v2993
        %2995 = vmatmul.f32.gmra.mxu0 %v2830
        %v2996 = vpop.f32.mrf.mxu0
        %v2997 = vadd.f32 %v2680, %v2996
        %2998 = vmatmul.f32.gmra.mxu0 %v2833
        %v2999 = vpop.f32.mrf.mxu0
        %v3000 = vadd.f32 %v2683, %v2999
        %3001 = vmatmul.f32.gmra.mxu0 %v2836
        %v3002 = vpop.f32.mrf.mxu0
        %v3003 = vadd.f32 %v2686, %v3002
        %3004 = vmatmul.f32.gmra.mxu0 %v2839
        %v3005 = vpop.f32.mrf.mxu0
        %v3006 = vadd.f32 %v2689, %v3005
        %3007 = vmatmul.f32.gmra.mxu0 %v2842
        %v3008 = vpop.f32.mrf.mxu0
        %v3009 = vadd.f32 %v2692, %v3008
        %3010 = vmatmul.f32.gmra.mxu0 %v2845
        %v3011 = vpop.f32.mrf.mxu0
        %v3012 = vadd.f32 %v2695, %v3011
        %3013 = vmatmul.f32.gmra.mxu0 %v2848
        %v3014 = vpop.f32.mrf.mxu0
        %v3015 = vadd.f32 %v2698, %v3014
        %3016 = vmatmul.f32.gmra.mxu0 %v2851
        %v3017 = vpop.f32.mrf.mxu0
        %v3018 = vadd.f32 %v2701, %v3017
        %3019 = vmatmul.f32.gmra.mxu0 %v2854
        %v3020 = vpop.f32.mrf.mxu0
        %v3021 = vadd.f32 %v2704, %v3020
        %3022 = vmatmul.f32.gmra.mxu0 %v2857
        %v3023 = vpop.f32.mrf.mxu0
        %v3024 = vadd.f32 %v2707, %v3023
        %3025 = vmatmul.f32.gmra.mxu0 %v2860
        %v3026 = vpop.f32.mrf.mxu0
        %v3027 = vadd.f32 %v2710, %v3026
        %3028 = vmatmul.f32.gmra.mxu0 %v2863
        %v3029 = vpop.f32.mrf.mxu0
        %v3030 = vadd.f32 %v2713, %v3029
        %3031 = vmatmul.f32.gmra.mxu0 %v2866
        %v3032 = vpop.f32.mrf.mxu0
        %v3033 = vadd.f32 %v2716, %v3032
        %3034 = vmatmul.f32.gmra.mxu0 %v2869
        %v3035 = vpop.f32.mrf.mxu0
        %v3036 = vadd.f32 %v2719, %v3035
        %3037 = vmatmul.f32.gmra.mxu0 %v2872
        %v3038 = vpop.f32.mrf.mxu0
        %v3039 = vadd.f32 %v2722, %v3038
        %3040 = vmatmul.f32.gmra.mxu0 %v2875
        %v3041 = vpop.f32.mrf.mxu0
        %v3042 = vadd.f32 %v2725, %v3041
        %3043 = vmatmul.f32.gmra.mxu0 %v2878
        %v3044 = vpop.f32.mrf.mxu0
        %v3045 = vadd.f32 %v2728, %v3044
        %3046 = vmatmul.f32.gmra.mxu0 %v2881
        %v3047 = vpop.f32.mrf.mxu0
        %v3048 = vadd.f32 %v2731, %v3047
        %3049 = vmatmul.f32.gmra.mxu0 %v2884
        %v3050 = vpop.f32.mrf.mxu0
        %v3051 = vadd.f32 %v2734, %v3050
        %3052 = vmatmul.f32.gmra.mxu0 %v2887
        %v3053 = vpop.f32.mrf.mxu0
        %v3054 = vadd.f32 %v2737, %v3053
        %3055 = vdwg.mxu0
        %v3056 = vld [vmem:[#allocation2 + $0x15] sm:$0xff]
        %v3057 = vld [vmem:[#allocation2 + $0x1d] sm:$0xff]
        %v3058 = vld [vmem:[#allocation2 + $0x25] sm:$0xff]
        %v3059 = vld [vmem:[#allocation2 + $0x2d] sm:$0xff]
        %v3060 = vld [vmem:[#allocation2 + $0x35] sm:$0xff]
        %v3061 = vld [vmem:[#allocation2 + $0x3d] sm:$0xff]
        %v3062 = vld [vmem:[#allocation2 + $0x45] sm:$0xff]
        %v3063 = vld [vmem:[#allocation2 + $0x4d] sm:$0xff]
        %v3064 = vld [vmem:[#allocation2 + $0x55] sm:$0xff]
        %v3065 = vld [vmem:[#allocation2 + $0x5d] sm:$0xff]
        %v3066 = vld [vmem:[#allocation2 + $0x65] sm:$0xff]
        %v3067 = vld [vmem:[#allocation2 + $0x6d] sm:$0xff]
        %v3068 = vld [vmem:[#allocation2 + $0x75] sm:$0xff]
        %v3069 = vld [vmem:[#allocation2 + $0x7d] sm:$0xff]
        %v3070 = vld [vmem:[#allocation2 + $0x85] sm:$0xff]
        %v3071 = vld [vmem:[#allocation2 + $0x8d] sm:$0xff]
        %v3072 = vld [vmem:[#allocation2 + $0x95] sm:$0xff]
        %v3073 = vld [vmem:[#allocation2 + $0x9d] sm:$0xff]
        %v3074 = vld [vmem:[#allocation2 + $0xa5] sm:$0xff]
        %v3075 = vld [vmem:[#allocation2 + $0xad] sm:$0xff]
        %v3076 = vld [vmem:[#allocation2 + $0xb5] sm:$0xff]
        %v3077 = vld [vmem:[#allocation2 + $0xbd] sm:$0xff]
        %v3078 = vld [vmem:[#allocation2 + $0xc5] sm:$0xff]
        %v3079 = vld [vmem:[#allocation2 + $0xcd] sm:$0xff]
        %v3080 = vld [vmem:[#allocation2 + $0xd5] sm:$0xff]
        %v3081 = vld [vmem:[#allocation2 + $0xdd] sm:$0xff]
        %v3082 = vld [vmem:[#allocation2 + $0xe5] sm:$0xff]
        %v3083 = vld [vmem:[#allocation2 + $0xed] sm:$0xff]
        %v3084 = vld [vmem:[#allocation2 + $0xf5] sm:$0xff]
        %v3085 = vld [vmem:[#allocation2 + $0xfd] sm:$0xff]
        %v3086 = vld [vmem:[#allocation2 + $0x105] sm:$0xff]
        %v3087 = vld [vmem:[#allocation2 + $0x10d] sm:$0xff]
        %v3088 = vld [vmem:[#allocation2 + $0x115] sm:$0xff]
        %v3089 = vld [vmem:[#allocation2 + $0x11d] sm:$0xff]
        %v3090 = vld [vmem:[#allocation2 + $0x125] sm:$0xff]
        %v3091 = vld [vmem:[#allocation2 + $0x12d] sm:$0xff]
        %v3092 = vld [vmem:[#allocation2 + $0x135] sm:$0xff]
        %v3093 = vld [vmem:[#allocation2 + $0x13d] sm:$0xff]
        %v3094 = vld [vmem:[#allocation2 + $0x145] sm:$0xff]
        %v3095 = vld [vmem:[#allocation2 + $0x14d] sm:$0xff]
        %v3096 = vld [vmem:[#allocation2 + $0x155] sm:$0xff]
        %v3097 = vld [vmem:[#allocation2 + $0x15d] sm:$0xff]
        %v3098 = vld [vmem:[#allocation2 + $0x165] sm:$0xff]
        %v3099 = vld [vmem:[#allocation2 + $0x16d] sm:$0xff]
        %v3100 = vld [vmem:[#allocation2 + $0x175] sm:$0xff]
        %v3101 = vld [vmem:[#allocation2 + $0x17d] sm:$0xff]
        %v3102 = vld [vmem:[#allocation2 + $0x185] sm:$0xff]
        %v3103 = vld [vmem:[#allocation2 + $0x18d] sm:$0xff]
        %v3104 = vld [vmem:[#allocation2 + $0x195] sm:$0xff]
        %v3105 = vld [vmem:[#allocation2 + $0x19d] sm:$0x7f]
        %s3106 = scalar_lea.vmem [#allocation6], 64
        %v3107 = vld [vmem:[%s3106] sm:$0xff]
        %v3108 = vld [vmem:[%s3106 + $0x8] sm:$0xff]
        %v3109 = vld [vmem:[%s3106 + $0x10] sm:$0xff]
        %v3110 = vld [vmem:[%s3106 + $0x18] sm:$0xff]
        %v3112 = vsel %vm356, %v3056, 0
        %v3115 = vsel %vm356, %v3057, 0
        %v3118 = vsel %vm356, %v3058, 0
        %v3121 = vsel %vm356, %v3059, 0
        %v3124 = vsel %vm356, %v3060, 0
        %v3127 = vsel %vm356, %v3061, 0
        %v3130 = vsel %vm356, %v3062, 0
        %v3133 = vsel %vm356, %v3063, 0
        %v3136 = vsel %vm356, %v3064, 0
        %v3139 = vsel %vm356, %v3065, 0
        %v3142 = vsel %vm356, %v3066, 0
        %v3145 = vsel %vm356, %v3067, 0
        %v3148 = vsel %vm356, %v3068, 0
        %v3151 = vsel %vm356, %v3069, 0
        %v3154 = vsel %vm356, %v3070, 0
        %v3157 = vsel %vm356, %v3071, 0
        %v3160 = vsel %vm356, %v3072, 0
        %v3163 = vsel %vm356, %v3073, 0
        %v3166 = vsel %vm356, %v3074, 0
        %v3169 = vsel %vm356, %v3075, 0
        %v3172 = vsel %vm356, %v3076, 0
        %v3175 = vsel %vm356, %v3077, 0
        %v3178 = vsel %vm356, %v3078, 0
        %v3181 = vsel %vm356, %v3079, 0
        %v3184 = vsel %vm356, %v3080, 0
        %v3187 = vsel %vm356, %v3081, 0
        %v3190 = vsel %vm356, %v3082, 0
        %v3193 = vsel %vm356, %v3083, 0
        %v3196 = vsel %vm356, %v3084, 0
        %v3199 = vsel %vm356, %v3085, 0
        %v3202 = vsel %vm356, %v3086, 0
        %v3205 = vsel %vm356, %v3087, 0
        %v3208 = vsel %vm356, %v3088, 0
        %v3211 = vsel %vm356, %v3089, 0
        %v3214 = vsel %vm356, %v3090, 0
        %v3217 = vsel %vm356, %v3091, 0
        %v3220 = vsel %vm356, %v3092, 0
        %v3223 = vsel %vm356, %v3093, 0
        %v3226 = vsel %vm356, %v3094, 0
        %v3229 = vsel %vm356, %v3095, 0
        %v3232 = vsel %vm356, %v3096, 0
        %v3235 = vsel %vm356, %v3097, 0
        %v3238 = vsel %vm356, %v3098, 0
        %v3241 = vsel %vm356, %v3099, 0
        %v3244 = vsel %vm356, %v3100, 0
        %v3247 = vsel %vm356, %v3101, 0
        %v3250 = vsel %vm356, %v3102, 0
        %v3253 = vsel %vm356, %v3103, 0
        %v3256 = vsel %vm356, %v3104, 0
        %v3259 = vsel %vm356, %v3105, 0
        %3261 = vmatpush.msra.mxu0 0.0
        %3262 = vmatpush.msra.mxu0 0.0
        %3263 = vmatpush.msra.mxu0 0.0
        %3264 = vmatpush.msra.mxu0 0.0
        %3265 = vmatpush.msra.mxu0 0.0
        %3266 = vmatpush.msra.mxu0 0.0
        %3267 = vmatpush.msra.mxu0 0.0
        %3268 = vmatpush.msra.mxu0 0.0
        %3269 = vmatpush.msra.mxu0 0.0
        %3270 = vmatpush.msra.mxu0 0.0
        %3271 = vmatpush.msra.mxu0 0.0
        %3272 = vmatpush.msra.mxu0 0.0
        %3273 = vmatpush.msra.mxu0 %v3110
        %3274 = vmatpush.msra.mxu0 %v3109
        %3275 = vmatpush.msra.mxu0 %v3108
        %3276 = vmatpush.msra.mxu0 %v3107
        %3277 = vmatmul.f32.gmra.mxu0 %v3112
        %v3278 = vpop.f32.mrf.mxu0
        %v3279 = vadd.f32 0.0, %v3278
        %3280 = vmatmul.f32.gmra.mxu0 %v3115
        %v3281 = vpop.f32.mrf.mxu0
        %v3282 = vadd.f32 0.0, %v3281
        %3283 = vmatmul.f32.gmra.mxu0 %v3118
        %v3284 = vpop.f32.mrf.mxu0
        %v3285 = vadd.f32 0.0, %v3284
        %3286 = vmatmul.f32.gmra.mxu0 %v3121
        %v3287 = vpop.f32.mrf.mxu0
        %v3288 = vadd.f32 0.0, %v3287
        %3289 = vmatmul.f32.gmra.mxu0 %v3124
        %v3290 = vpop.f32.mrf.mxu0
        %v3291 = vadd.f32 0.0, %v3290
        %3292 = vmatmul.f32.gmra.mxu0 %v3127
        %v3293 = vpop.f32.mrf.mxu0
        %v3294 = vadd.f32 0.0, %v3293
        %3295 = vmatmul.f32.gmra.mxu0 %v3130
        %v3296 = vpop.f32.mrf.mxu0
        %v3297 = vadd.f32 0.0, %v3296
        %3298 = vmatmul.f32.gmra.mxu0 %v3133
        %v3299 = vpop.f32.mrf.mxu0
        %v3300 = vadd.f32 0.0, %v3299
        %3301 = vmatmul.f32.gmra.mxu0 %v3136
        %v3302 = vpop.f32.mrf.mxu0
        %v3303 = vadd.f32 0.0, %v3302
        %3304 = vmatmul.f32.gmra.mxu0 %v3139
        %v3305 = vpop.f32.mrf.mxu0
        %v3306 = vadd.f32 0.0, %v3305
        %3307 = vmatmul.f32.gmra.mxu0 %v3142
        %v3308 = vpop.f32.mrf.mxu0
        %v3309 = vadd.f32 0.0, %v3308
        %3310 = vmatmul.f32.gmra.mxu0 %v3145
        %v3311 = vpop.f32.mrf.mxu0
        %v3312 = vadd.f32 0.0, %v3311
        %3313 = vmatmul.f32.gmra.mxu0 %v3148
        %v3314 = vpop.f32.mrf.mxu0
        %v3315 = vadd.f32 0.0, %v3314
        %3316 = vmatmul.f32.gmra.mxu0 %v3151
        %v3317 = vpop.f32.mrf.mxu0
        %v3318 = vadd.f32 0.0, %v3317
        %3319 = vmatmul.f32.gmra.mxu0 %v3154
        %v3320 = vpop.f32.mrf.mxu0
        %v3321 = vadd.f32 0.0, %v3320
        %3322 = vmatmul.f32.gmra.mxu0 %v3157
        %v3323 = vpop.f32.mrf.mxu0
        %v3324 = vadd.f32 0.0, %v3323
        %3325 = vmatmul.f32.gmra.mxu0 %v3160
        %v3326 = vpop.f32.mrf.mxu0
        %v3327 = vadd.f32 0.0, %v3326
        %3328 = vmatmul.f32.gmra.mxu0 %v3163
        %v3329 = vpop.f32.mrf.mxu0
        %v3330 = vadd.f32 0.0, %v3329
        %3331 = vmatmul.f32.gmra.mxu0 %v3166
        %v3332 = vpop.f32.mrf.mxu0
        %v3333 = vadd.f32 0.0, %v3332
        %3334 = vmatmul.f32.gmra.mxu0 %v3169
        %v3335 = vpop.f32.mrf.mxu0
        %v3336 = vadd.f32 0.0, %v3335
        %3337 = vmatmul.f32.gmra.mxu0 %v3172
        %v3338 = vpop.f32.mrf.mxu0
        %v3339 = vadd.f32 0.0, %v3338
        %3340 = vmatmul.f32.gmra.mxu0 %v3175
        %v3341 = vpop.f32.mrf.mxu0
        %v3342 = vadd.f32 0.0, %v3341
        %3343 = vmatmul.f32.gmra.mxu0 %v3178
        %v3344 = vpop.f32.mrf.mxu0
        %v3345 = vadd.f32 0.0, %v3344
        %3346 = vmatmul.f32.gmra.mxu0 %v3181
        %v3347 = vpop.f32.mrf.mxu0
        %v3348 = vadd.f32 0.0, %v3347
        %3349 = vmatmul.f32.gmra.mxu0 %v3184
        %v3350 = vpop.f32.mrf.mxu0
        %v3351 = vadd.f32 0.0, %v3350
        %3352 = vmatmul.f32.gmra.mxu0 %v3187
        %v3353 = vpop.f32.mrf.mxu0
        %v3354 = vadd.f32 0.0, %v3353
        %3355 = vmatmul.f32.gmra.mxu0 %v3190
        %v3356 = vpop.f32.mrf.mxu0
        %v3357 = vadd.f32 0.0, %v3356
        %3358 = vmatmul.f32.gmra.mxu0 %v3193
        %v3359 = vpop.f32.mrf.mxu0
        %v3360 = vadd.f32 0.0, %v3359
        %3361 = vmatmul.f32.gmra.mxu0 %v3196
        %v3362 = vpop.f32.mrf.mxu0
        %v3363 = vadd.f32 0.0, %v3362
        %3364 = vmatmul.f32.gmra.mxu0 %v3199
        %v3365 = vpop.f32.mrf.mxu0
        %v3366 = vadd.f32 0.0, %v3365
        %3367 = vmatmul.f32.gmra.mxu0 %v3202
        %v3368 = vpop.f32.mrf.mxu0
        %v3369 = vadd.f32 0.0, %v3368
        %3370 = vmatmul.f32.gmra.mxu0 %v3205
        %v3371 = vpop.f32.mrf.mxu0
        %v3372 = vadd.f32 0.0, %v3371
        %3373 = vmatmul.f32.gmra.mxu0 %v3208
        %v3374 = vpop.f32.mrf.mxu0
        %v3375 = vadd.f32 0.0, %v3374
        %3376 = vmatmul.f32.gmra.mxu0 %v3211
        %v3377 = vpop.f32.mrf.mxu0
        %v3378 = vadd.f32 0.0, %v3377
        %3379 = vmatmul.f32.gmra.mxu0 %v3214
        %v3380 = vpop.f32.mrf.mxu0
        %v3381 = vadd.f32 0.0, %v3380
        %3382 = vmatmul.f32.gmra.mxu0 %v3217
        %v3383 = vpop.f32.mrf.mxu0
        %v3384 = vadd.f32 0.0, %v3383
        %3385 = vmatmul.f32.gmra.mxu0 %v3220
        %v3386 = vpop.f32.mrf.mxu0
        %v3387 = vadd.f32 0.0, %v3386
        %3388 = vmatmul.f32.gmra.mxu0 %v3223
        %v3389 = vpop.f32.mrf.mxu0
        %v3390 = vadd.f32 0.0, %v3389
        %3391 = vmatmul.f32.gmra.mxu0 %v3226
        %v3392 = vpop.f32.mrf.mxu0
        %v3393 = vadd.f32 0.0, %v3392
        %3394 = vmatmul.f32.gmra.mxu0 %v3229
        %v3395 = vpop.f32.mrf.mxu0
        %v3396 = vadd.f32 0.0, %v3395
        %3397 = vmatmul.f32.gmra.mxu0 %v3232
        %v3398 = vpop.f32.mrf.mxu0
        %v3399 = vadd.f32 0.0, %v3398
        %3400 = vmatmul.f32.gmra.mxu0 %v3235
        %v3401 = vpop.f32.mrf.mxu0
        %v3402 = vadd.f32 0.0, %v3401
        %3403 = vmatmul.f32.gmra.mxu0 %v3238
        %v3404 = vpop.f32.mrf.mxu0
        %v3405 = vadd.f32 0.0, %v3404
        %3406 = vmatmul.f32.gmra.mxu0 %v3241
        %v3407 = vpop.f32.mrf.mxu0
        %v3408 = vadd.f32 0.0, %v3407
        %3409 = vmatmul.f32.gmra.mxu0 %v3244
        %v3410 = vpop.f32.mrf.mxu0
        %v3411 = vadd.f32 0.0, %v3410
        %3412 = vmatmul.f32.gmra.mxu0 %v3247
        %v3413 = vpop.f32.mrf.mxu0
        %v3414 = vadd.f32 0.0, %v3413
        %3415 = vmatmul.f32.gmra.mxu0 %v3250
        %v3416 = vpop.f32.mrf.mxu0
        %v3417 = vadd.f32 0.0, %v3416
        %3418 = vmatmul.f32.gmra.mxu0 %v3253
        %v3419 = vpop.f32.mrf.mxu0
        %v3420 = vadd.f32 0.0, %v3419
        %3421 = vmatmul.f32.gmra.mxu0 %v3256
        %v3422 = vpop.f32.mrf.mxu0
        %v3423 = vadd.f32 0.0, %v3422
        %3424 = vmatmul.f32.gmra.mxu0 %v3259
        %v3425 = vpop.f32.mrf.mxu0
        %v3426 = vadd.f32 0.0, %v3425
        %3427 = vdwg.mxu0
        %v3428 = vadd.f32 %v2907, %v3279
        %v3429 = vadd.f32 %v2910, %v3282
        %v3430 = vadd.f32 %v2913, %v3285
        %v3431 = vadd.f32 %v2916, %v3288
        %v3432 = vadd.f32 %v2919, %v3291
        %v3433 = vadd.f32 %v2922, %v3294
        %v3434 = vadd.f32 %v2925, %v3297
        %v3435 = vadd.f32 %v2928, %v3300
        %v3436 = vadd.f32 %v2931, %v3303
        %v3437 = vadd.f32 %v2934, %v3306
        %v3438 = vadd.f32 %v2937, %v3309
        %v3439 = vadd.f32 %v2940, %v3312
        %v3440 = vadd.f32 %v2943, %v3315
        %v3441 = vadd.f32 %v2946, %v3318
        %v3442 = vadd.f32 %v2949, %v3321
        %v3443 = vadd.f32 %v2952, %v3324
        %v3444 = vadd.f32 %v2955, %v3327
        %v3445 = vadd.f32 %v2958, %v3330
        %v3446 = vadd.f32 %v2961, %v3333
        %v3447 = vadd.f32 %v2964, %v3336
        %v3448 = vadd.f32 %v2967, %v3339
        %v3449 = vadd.f32 %v2970, %v3342
        %v3450 = vadd.f32 %v2973, %v3345
        %v3451 = vadd.f32 %v2976, %v3348
        %v3452 = vadd.f32 %v2979, %v3351
        %v3453 = vadd.f32 %v2982, %v3354
        %v3454 = vadd.f32 %v2985, %v3357
        %v3455 = vadd.f32 %v2988, %v3360
        %v3456 = vadd.f32 %v2991, %v3363
        %v3457 = vadd.f32 %v2994, %v3366
        %v3458 = vadd.f32 %v2997, %v3369
        %v3459 = vadd.f32 %v3000, %v3372
        %v3460 = vadd.f32 %v3003, %v3375
        %v3461 = vadd.f32 %v3006, %v3378
        %v3462 = vadd.f32 %v3009, %v3381
        %v3463 = vadd.f32 %v3012, %v3384
        %v3464 = vadd.f32 %v3015, %v3387
        %v3465 = vadd.f32 %v3018, %v3390
        %v3466 = vadd.f32 %v3021, %v3393
        %v3467 = vadd.f32 %v3024, %v3396
        %v3468 = vadd.f32 %v3027, %v3399
        %v3469 = vadd.f32 %v3030, %v3402
        %v3470 = vadd.f32 %v3033, %v3405
        %v3471 = vadd.f32 %v3036, %v3408
        %v3472 = vadd.f32 %v3039, %v3411
        %v3473 = vadd.f32 %v3042, %v3414
        %v3474 = vadd.f32 %v3045, %v3417
        %v3475 = vadd.f32 %v3048, %v3420
        %v3476 = vadd.f32 %v3051, %v3423
        %v3477 = vadd.f32 %v3054, %v3426
        %v3478 = vld [vmem:[#allocation2 + $0x16] sm:$0xff]
        %v3479 = vld [vmem:[#allocation2 + $0x1e] sm:$0xff]
        %v3480 = vld [vmem:[#allocation2 + $0x26] sm:$0xff]
        %v3481 = vld [vmem:[#allocation2 + $0x2e] sm:$0xff]
        %v3482 = vld [vmem:[#allocation2 + $0x36] sm:$0xff]
        %v3483 = vld [vmem:[#allocation2 + $0x3e] sm:$0xff]
        %v3484 = vld [vmem:[#allocation2 + $0x46] sm:$0xff]
        %v3485 = vld [vmem:[#allocation2 + $0x4e] sm:$0xff]
        %v3486 = vld [vmem:[#allocation2 + $0x56] sm:$0xff]
        %v3487 = vld [vmem:[#allocation2 + $0x5e] sm:$0xff]
        %v3488 = vld [vmem:[#allocation2 + $0x66] sm:$0xff]
        %v3489 = vld [vmem:[#allocation2 + $0x6e] sm:$0xff]
        %v3490 = vld [vmem:[#allocation2 + $0x76] sm:$0xff]
        %v3491 = vld [vmem:[#allocation2 + $0x7e] sm:$0xff]
        %v3492 = vld [vmem:[#allocation2 + $0x86] sm:$0xff]
        %v3493 = vld [vmem:[#allocation2 + $0x8e] sm:$0xff]
        %v3494 = vld [vmem:[#allocation2 + $0x96] sm:$0xff]
        %v3495 = vld [vmem:[#allocation2 + $0x9e] sm:$0xff]
        %v3496 = vld [vmem:[#allocation2 + $0xa6] sm:$0xff]
        %v3497 = vld [vmem:[#allocation2 + $0xae] sm:$0xff]
        %v3498 = vld [vmem:[#allocation2 + $0xb6] sm:$0xff]
        %v3499 = vld [vmem:[#allocation2 + $0xbe] sm:$0xff]
        %v3500 = vld [vmem:[#allocation2 + $0xc6] sm:$0xff]
        %v3501 = vld [vmem:[#allocation2 + $0xce] sm:$0xff]
        %v3502 = vld [vmem:[#allocation2 + $0xd6] sm:$0xff]
        %v3503 = vld [vmem:[#allocation2 + $0xde] sm:$0xff]
        %v3504 = vld [vmem:[#allocation2 + $0xe6] sm:$0xff]
        %v3505 = vld [vmem:[#allocation2 + $0xee] sm:$0xff]
        %v3506 = vld [vmem:[#allocation2 + $0xf6] sm:$0xff]
        %v3507 = vld [vmem:[#allocation2 + $0xfe] sm:$0xff]
        %v3508 = vld [vmem:[#allocation2 + $0x106] sm:$0xff]
        %v3509 = vld [vmem:[#allocation2 + $0x10e] sm:$0xff]
        %v3510 = vld [vmem:[#allocation2 + $0x116] sm:$0xff]
        %v3511 = vld [vmem:[#allocation2 + $0x11e] sm:$0xff]
        %v3512 = vld [vmem:[#allocation2 + $0x126] sm:$0xff]
        %v3513 = vld [vmem:[#allocation2 + $0x12e] sm:$0xff]
        %v3514 = vld [vmem:[#allocation2 + $0x136] sm:$0xff]
        %v3515 = vld [vmem:[#allocation2 + $0x13e] sm:$0xff]
        %v3516 = vld [vmem:[#allocation2 + $0x146] sm:$0xff]
        %v3517 = vld [vmem:[#allocation2 + $0x14e] sm:$0xff]
        %v3518 = vld [vmem:[#allocation2 + $0x156] sm:$0xff]
        %v3519 = vld [vmem:[#allocation2 + $0x15e] sm:$0xff]
        %v3520 = vld [vmem:[#allocation2 + $0x166] sm:$0xff]
        %v3521 = vld [vmem:[#allocation2 + $0x16e] sm:$0xff]
        %v3522 = vld [vmem:[#allocation2 + $0x176] sm:$0xff]
        %v3523 = vld [vmem:[#allocation2 + $0x17e] sm:$0xff]
        %v3524 = vld [vmem:[#allocation2 + $0x186] sm:$0xff]
        %v3525 = vld [vmem:[#allocation2 + $0x18e] sm:$0xff]
        %v3526 = vld [vmem:[#allocation2 + $0x196] sm:$0xff]
        %v3527 = vld [vmem:[#allocation2 + $0x19e] sm:$0x7f]
        %s3528 = scalar_lea.vmem [#allocation6], 96
        %v3529 = vld [vmem:[%s3528] sm:$0xff]
        %v3530 = vld [vmem:[%s3528 + $0x8] sm:$0xff]
        %v3531 = vld [vmem:[%s3528 + $0x10] sm:$0xff]
        %v3532 = vld [vmem:[%s3528 + $0x18] sm:$0xff]
        %v3534 = vsel %vm356, %v3478, 0
        %v3537 = vsel %vm356, %v3479, 0
        %v3540 = vsel %vm356, %v3480, 0
        %v3543 = vsel %vm356, %v3481, 0
        %v3546 = vsel %vm356, %v3482, 0
        %v3549 = vsel %vm356, %v3483, 0
        %v3552 = vsel %vm356, %v3484, 0
        %v3555 = vsel %vm356, %v3485, 0
        %v3558 = vsel %vm356, %v3486, 0
        %v3561 = vsel %vm356, %v3487, 0
        %v3564 = vsel %vm356, %v3488, 0
        %v3567 = vsel %vm356, %v3489, 0
        %v3570 = vsel %vm356, %v3490, 0
        %v3573 = vsel %vm356, %v3491, 0
        %v3576 = vsel %vm356, %v3492, 0
        %v3579 = vsel %vm356, %v3493, 0
        %v3582 = vsel %vm356, %v3494, 0
        %v3585 = vsel %vm356, %v3495, 0
        %v3588 = vsel %vm356, %v3496, 0
        %v3591 = vsel %vm356, %v3497, 0
        %v3594 = vsel %vm356, %v3498, 0
        %v3597 = vsel %vm356, %v3499, 0
        %v3600 = vsel %vm356, %v3500, 0
        %v3603 = vsel %vm356, %v3501, 0
        %v3606 = vsel %vm356, %v3502, 0
        %v3609 = vsel %vm356, %v3503, 0
        %v3612 = vsel %vm356, %v3504, 0
        %v3615 = vsel %vm356, %v3505, 0
        %v3618 = vsel %vm356, %v3506, 0
        %v3621 = vsel %vm356, %v3507, 0
        %v3624 = vsel %vm356, %v3508, 0
        %v3627 = vsel %vm356, %v3509, 0
        %v3630 = vsel %vm356, %v3510, 0
        %v3633 = vsel %vm356, %v3511, 0
        %v3636 = vsel %vm356, %v3512, 0
        %v3639 = vsel %vm356, %v3513, 0
        %v3642 = vsel %vm356, %v3514, 0
        %v3645 = vsel %vm356, %v3515, 0
        %v3648 = vsel %vm356, %v3516, 0
        %v3651 = vsel %vm356, %v3517, 0
        %v3654 = vsel %vm356, %v3518, 0
        %v3657 = vsel %vm356, %v3519, 0
        %v3660 = vsel %vm356, %v3520, 0
        %v3663 = vsel %vm356, %v3521, 0
        %v3666 = vsel %vm356, %v3522, 0
        %v3669 = vsel %vm356, %v3523, 0
        %v3672 = vsel %vm356, %v3524, 0
        %v3675 = vsel %vm356, %v3525, 0
        %v3678 = vsel %vm356, %v3526, 0
        %v3681 = vsel %vm356, %v3527, 0
        %3683 = vmatpush.msra.mxu0 0.0
        %3684 = vmatpush.msra.mxu0 0.0
        %3685 = vmatpush.msra.mxu0 0.0
        %3686 = vmatpush.msra.mxu0 0.0
        %3687 = vmatpush.msra.mxu0 0.0
        %3688 = vmatpush.msra.mxu0 0.0
        %3689 = vmatpush.msra.mxu0 0.0
        %3690 = vmatpush.msra.mxu0 0.0
        %3691 = vmatpush.msra.mxu0 0.0
        %3692 = vmatpush.msra.mxu0 0.0
        %3693 = vmatpush.msra.mxu0 0.0
        %3694 = vmatpush.msra.mxu0 0.0
        %3695 = vmatpush.msra.mxu0 %v3532
        %3696 = vmatpush.msra.mxu0 %v3531
        %3697 = vmatpush.msra.mxu0 %v3530
        %3698 = vmatpush.msra.mxu0 %v3529
        %3699 = vmatmul.f32.gmra.mxu0 %v3534
        %v3700 = vpop.f32.mrf.mxu0
        %v3701 = vadd.f32 0.0, %v3700
        %3702 = vmatmul.f32.gmra.mxu0 %v3537
        %v3703 = vpop.f32.mrf.mxu0
        %v3704 = vadd.f32 0.0, %v3703
        %3705 = vmatmul.f32.gmra.mxu0 %v3540
        %v3706 = vpop.f32.mrf.mxu0
        %v3707 = vadd.f32 0.0, %v3706
        %3708 = vmatmul.f32.gmra.mxu0 %v3543
        %v3709 = vpop.f32.mrf.mxu0
        %v3710 = vadd.f32 0.0, %v3709
        %3711 = vmatmul.f32.gmra.mxu0 %v3546
        %v3712 = vpop.f32.mrf.mxu0
        %v3713 = vadd.f32 0.0, %v3712
        %3714 = vmatmul.f32.gmra.mxu0 %v3549
        %v3715 = vpop.f32.mrf.mxu0
        %v3716 = vadd.f32 0.0, %v3715
        %3717 = vmatmul.f32.gmra.mxu0 %v3552
        %v3718 = vpop.f32.mrf.mxu0
        %v3719 = vadd.f32 0.0, %v3718
        %3720 = vmatmul.f32.gmra.mxu0 %v3555
        %v3721 = vpop.f32.mrf.mxu0
        %v3722 = vadd.f32 0.0, %v3721
        %3723 = vmatmul.f32.gmra.mxu0 %v3558
        %v3724 = vpop.f32.mrf.mxu0
        %v3725 = vadd.f32 0.0, %v3724
        %3726 = vmatmul.f32.gmra.mxu0 %v3561
        %v3727 = vpop.f32.mrf.mxu0
        %v3728 = vadd.f32 0.0, %v3727
        %3729 = vmatmul.f32.gmra.mxu0 %v3564
        %v3730 = vpop.f32.mrf.mxu0
        %v3731 = vadd.f32 0.0, %v3730
        %3732 = vmatmul.f32.gmra.mxu0 %v3567
        %v3733 = vpop.f32.mrf.mxu0
        %v3734 = vadd.f32 0.0, %v3733
        %3735 = vmatmul.f32.gmra.mxu0 %v3570
        %v3736 = vpop.f32.mrf.mxu0
        %v3737 = vadd.f32 0.0, %v3736
        %3738 = vmatmul.f32.gmra.mxu0 %v3573
        %v3739 = vpop.f32.mrf.mxu0
        %v3740 = vadd.f32 0.0, %v3739
        %3741 = vmatmul.f32.gmra.mxu0 %v3576
        %v3742 = vpop.f32.mrf.mxu0
        %v3743 = vadd.f32 0.0, %v3742
        %3744 = vmatmul.f32.gmra.mxu0 %v3579
        %v3745 = vpop.f32.mrf.mxu0
        %v3746 = vadd.f32 0.0, %v3745
        %3747 = vmatmul.f32.gmra.mxu0 %v3582
        %v3748 = vpop.f32.mrf.mxu0
        %v3749 = vadd.f32 0.0, %v3748
        %3750 = vmatmul.f32.gmra.mxu0 %v3585
        %v3751 = vpop.f32.mrf.mxu0
        %v3752 = vadd.f32 0.0, %v3751
        %3753 = vmatmul.f32.gmra.mxu0 %v3588
        %v3754 = vpop.f32.mrf.mxu0
        %v3755 = vadd.f32 0.0, %v3754
        %3756 = vmatmul.f32.gmra.mxu0 %v3591
        %v3757 = vpop.f32.mrf.mxu0
        %v3758 = vadd.f32 0.0, %v3757
        %3759 = vmatmul.f32.gmra.mxu0 %v3594
        %v3760 = vpop.f32.mrf.mxu0
        %v3761 = vadd.f32 0.0, %v3760
        %3762 = vmatmul.f32.gmra.mxu0 %v3597
        %v3763 = vpop.f32.mrf.mxu0
        %v3764 = vadd.f32 0.0, %v3763
        %3765 = vmatmul.f32.gmra.mxu0 %v3600
        %v3766 = vpop.f32.mrf.mxu0
        %v3767 = vadd.f32 0.0, %v3766
        %3768 = vmatmul.f32.gmra.mxu0 %v3603
        %v3769 = vpop.f32.mrf.mxu0
        %v3770 = vadd.f32 0.0, %v3769
        %3771 = vmatmul.f32.gmra.mxu0 %v3606
        %v3772 = vpop.f32.mrf.mxu0
        %v3773 = vadd.f32 0.0, %v3772
        %3774 = vmatmul.f32.gmra.mxu0 %v3609
        %v3775 = vpop.f32.mrf.mxu0
        %v3776 = vadd.f32 0.0, %v3775
        %3777 = vmatmul.f32.gmra.mxu0 %v3612
        %v3778 = vpop.f32.mrf.mxu0
        %v3779 = vadd.f32 0.0, %v3778
        %3780 = vmatmul.f32.gmra.mxu0 %v3615
        %v3781 = vpop.f32.mrf.mxu0
        %v3782 = vadd.f32 0.0, %v3781
        %3783 = vmatmul.f32.gmra.mxu0 %v3618
        %v3784 = vpop.f32.mrf.mxu0
        %v3785 = vadd.f32 0.0, %v3784
        %3786 = vmatmul.f32.gmra.mxu0 %v3621
        %v3787 = vpop.f32.mrf.mxu0
        %v3788 = vadd.f32 0.0, %v3787
        %3789 = vmatmul.f32.gmra.mxu0 %v3624
        %v3790 = vpop.f32.mrf.mxu0
        %v3791 = vadd.f32 0.0, %v3790
        %3792 = vmatmul.f32.gmra.mxu0 %v3627
        %v3793 = vpop.f32.mrf.mxu0
        %v3794 = vadd.f32 0.0, %v3793
        %3795 = vmatmul.f32.gmra.mxu0 %v3630
        %v3796 = vpop.f32.mrf.mxu0
        %v3797 = vadd.f32 0.0, %v3796
        %3798 = vmatmul.f32.gmra.mxu0 %v3633
        %v3799 = vpop.f32.mrf.mxu0
        %v3800 = vadd.f32 0.0, %v3799
        %3801 = vmatmul.f32.gmra.mxu0 %v3636
        %v3802 = vpop.f32.mrf.mxu0
        %v3803 = vadd.f32 0.0, %v3802
        %3804 = vmatmul.f32.gmra.mxu0 %v3639
        %v3805 = vpop.f32.mrf.mxu0
        %v3806 = vadd.f32 0.0, %v3805
        %3807 = vmatmul.f32.gmra.mxu0 %v3642
        %v3808 = vpop.f32.mrf.mxu0
        %v3809 = vadd.f32 0.0, %v3808
        %3810 = vmatmul.f32.gmra.mxu0 %v3645
        %v3811 = vpop.f32.mrf.mxu0
        %v3812 = vadd.f32 0.0, %v3811
        %3813 = vmatmul.f32.gmra.mxu0 %v3648
        %v3814 = vpop.f32.mrf.mxu0
        %v3815 = vadd.f32 0.0, %v3814
        %3816 = vmatmul.f32.gmra.mxu0 %v3651
        %v3817 = vpop.f32.mrf.mxu0
        %v3818 = vadd.f32 0.0, %v3817
        %3819 = vmatmul.f32.gmra.mxu0 %v3654
        %v3820 = vpop.f32.mrf.mxu0
        %v3821 = vadd.f32 0.0, %v3820
        %3822 = vmatmul.f32.gmra.mxu0 %v3657
        %v3823 = vpop.f32.mrf.mxu0
        %v3824 = vadd.f32 0.0, %v3823
        %3825 = vmatmul.f32.gmra.mxu0 %v3660
        %v3826 = vpop.f32.mrf.mxu0
        %v3827 = vadd.f32 0.0, %v3826
        %3828 = vmatmul.f32.gmra.mxu0 %v3663
        %v3829 = vpop.f32.mrf.mxu0
        %v3830 = vadd.f32 0.0, %v3829
        %3831 = vmatmul.f32.gmra.mxu0 %v3666
        %v3832 = vpop.f32.mrf.mxu0
        %v3833 = vadd.f32 0.0, %v3832
        %3834 = vmatmul.f32.gmra.mxu0 %v3669
        %v3835 = vpop.f32.mrf.mxu0
        %v3836 = vadd.f32 0.0, %v3835
        %3837 = vmatmul.f32.gmra.mxu0 %v3672
        %v3838 = vpop.f32.mrf.mxu0
        %v3839 = vadd.f32 0.0, %v3838
        %3840 = vmatmul.f32.gmra.mxu0 %v3675
        %v3841 = vpop.f32.mrf.mxu0
        %v3842 = vadd.f32 0.0, %v3841
        %3843 = vmatmul.f32.gmra.mxu0 %v3678
        %v3844 = vpop.f32.mrf.mxu0
        %v3845 = vadd.f32 0.0, %v3844
        %3846 = vmatmul.f32.gmra.mxu0 %v3681
        %v3847 = vpop.f32.mrf.mxu0
        %v3848 = vadd.f32 0.0, %v3847
        %3849 = vdwg.mxu0
        %v3850 = vadd.f32 %v3428, %v3701
        %v3851 = vadd.f32 %v3429, %v3704
        %v3852 = vadd.f32 %v3430, %v3707
        %v3853 = vadd.f32 %v3431, %v3710
        %v3854 = vadd.f32 %v3432, %v3713
        %v3855 = vadd.f32 %v3433, %v3716
        %v3856 = vadd.f32 %v3434, %v3719
        %v3857 = vadd.f32 %v3435, %v3722
        %v3858 = vadd.f32 %v3436, %v3725
        %v3859 = vadd.f32 %v3437, %v3728
        %v3860 = vadd.f32 %v3438, %v3731
        %v3861 = vadd.f32 %v3439, %v3734
        %v3862 = vadd.f32 %v3440, %v3737
        %v3863 = vadd.f32 %v3441, %v3740
        %v3864 = vadd.f32 %v3442, %v3743
        %v3865 = vadd.f32 %v3443, %v3746
        %v3866 = vadd.f32 %v3444, %v3749
        %v3867 = vadd.f32 %v3445, %v3752
        %v3868 = vadd.f32 %v3446, %v3755
        %v3869 = vadd.f32 %v3447, %v3758
        %v3870 = vadd.f32 %v3448, %v3761
        %v3871 = vadd.f32 %v3449, %v3764
        %v3872 = vadd.f32 %v3450, %v3767
        %v3873 = vadd.f32 %v3451, %v3770
        %v3874 = vadd.f32 %v3452, %v3773
        %v3875 = vadd.f32 %v3453, %v3776
        %v3876 = vadd.f32 %v3454, %v3779
        %v3877 = vadd.f32 %v3455, %v3782
        %v3878 = vadd.f32 %v3456, %v3785
        %v3879 = vadd.f32 %v3457, %v3788
        %v3880 = vadd.f32 %v3458, %v3791
        %v3881 = vadd.f32 %v3459, %v3794
        %v3882 = vadd.f32 %v3460, %v3797
        %v3883 = vadd.f32 %v3461, %v3800
        %v3884 = vadd.f32 %v3462, %v3803
        %v3885 = vadd.f32 %v3463, %v3806
        %v3886 = vadd.f32 %v3464, %v3809
        %v3887 = vadd.f32 %v3465, %v3812
        %v3888 = vadd.f32 %v3466, %v3815
        %v3889 = vadd.f32 %v3467, %v3818
        %v3890 = vadd.f32 %v3468, %v3821
        %v3891 = vadd.f32 %v3469, %v3824
        %v3892 = vadd.f32 %v3470, %v3827
        %v3893 = vadd.f32 %v3471, %v3830
        %v3894 = vadd.f32 %v3472, %v3833
        %v3895 = vadd.f32 %v3473, %v3836
        %v3896 = vadd.f32 %v3474, %v3839
        %v3897 = vadd.f32 %v3475, %v3842
        %v3898 = vadd.f32 %v3476, %v3845
        %v3899 = vadd.f32 %v3477, %v3848
        %v3900 = vld [vmem:[#allocation8] sm:$0x1]
        %v3902 = vperm.slane %v3900, 0
        %v3904 = vadd.f32 %v3850, %v3902
        %v3905 = vadd.f32 %v3851, %v3902
        %v3906 = vadd.f32 %v3852, %v3902
        %v3907 = vadd.f32 %v3853, %v3902
        %v3908 = vadd.f32 %v3854, %v3902
        %v3909 = vadd.f32 %v3855, %v3902
        %v3910 = vadd.f32 %v3856, %v3902
        %v3911 = vadd.f32 %v3857, %v3902
        %v3912 = vadd.f32 %v3858, %v3902
        %v3913 = vadd.f32 %v3859, %v3902
        %v3914 = vadd.f32 %v3860, %v3902
        %v3915 = vadd.f32 %v3861, %v3902
        %v3916 = vadd.f32 %v3862, %v3902
        %v3917 = vadd.f32 %v3863, %v3902
        %v3918 = vadd.f32 %v3864, %v3902
        %v3919 = vadd.f32 %v3865, %v3902
        %v3920 = vadd.f32 %v3866, %v3902
        %v3921 = vadd.f32 %v3867, %v3902
        %v3922 = vadd.f32 %v3868, %v3902
        %v3923 = vadd.f32 %v3869, %v3902
        %v3924 = vadd.f32 %v3870, %v3902
        %v3925 = vadd.f32 %v3871, %v3902
        %v3926 = vadd.f32 %v3872, %v3902
        %v3927 = vadd.f32 %v3873, %v3902
        %v3928 = vadd.f32 %v3874, %v3902
        %v3929 = vadd.f32 %v3875, %v3902
        %v3930 = vadd.f32 %v3876, %v3902
        %v3931 = vadd.f32 %v3877, %v3902
        %v3932 = vadd.f32 %v3878, %v3902
        %v3933 = vadd.f32 %v3879, %v3902
        %v3934 = vadd.f32 %v3880, %v3902
        %v3935 = vadd.f32 %v3881, %v3902
        %v3936 = vadd.f32 %v3882, %v3902
        %v3937 = vadd.f32 %v3883, %v3902
        %v3938 = vadd.f32 %v3884, %v3902
        %v3939 = vadd.f32 %v3885, %v3902
        %v3940 = vadd.f32 %v3886, %v3902
        %v3941 = vadd.f32 %v3887, %v3902
        %v3942 = vadd.f32 %v3888, %v3902
        %v3943 = vadd.f32 %v3889, %v3902
        %v3944 = vadd.f32 %v3890, %v3902
        %v3945 = vadd.f32 %v3891, %v3902
        %v3946 = vadd.f32 %v3892, %v3902
        %v3947 = vadd.f32 %v3893, %v3902
        %v3948 = vadd.f32 %v3894, %v3902
        %v3949 = vadd.f32 %v3895, %v3902
        %v3950 = vadd.f32 %v3896, %v3902
        %v3951 = vadd.f32 %v3897, %v3902
        %v3952 = vadd.f32 %v3898, %v3902
        %v3953 = vadd.f32 %v3899, %v3902
        %v3954 = vmax.f32 %v3904, 0.0
        %v3955 = vmax.f32 %v3905, 0.0
        %v3956 = vmax.f32 %v3906, 0.0
        %v3957 = vmax.f32 %v3907, 0.0
        %v3958 = vmax.f32 %v3908, 0.0
        %v3959 = vmax.f32 %v3909, 0.0
        %v3960 = vmax.f32 %v3910, 0.0
        %v3961 = vmax.f32 %v3911, 0.0
        %v3962 = vmax.f32 %v3912, 0.0
        %v3963 = vmax.f32 %v3913, 0.0
        %v3964 = vmax.f32 %v3914, 0.0
        %v3965 = vmax.f32 %v3915, 0.0
        %v3966 = vmax.f32 %v3916, 0.0
        %v3967 = vmax.f32 %v3917, 0.0
        %v3968 = vmax.f32 %v3918, 0.0
        %v3969 = vmax.f32 %v3919, 0.0
        %v3970 = vmax.f32 %v3920, 0.0
        %v3971 = vmax.f32 %v3921, 0.0
        %v3972 = vmax.f32 %v3922, 0.0
        %v3973 = vmax.f32 %v3923, 0.0
        %v3974 = vmax.f32 %v3924, 0.0
        %v3975 = vmax.f32 %v3925, 0.0
        %v3976 = vmax.f32 %v3926, 0.0
        %v3977 = vmax.f32 %v3927, 0.0
        %v3978 = vmax.f32 %v3928, 0.0
        %v3979 = vmax.f32 %v3929, 0.0
        %v3980 = vmax.f32 %v3930, 0.0
        %v3981 = vmax.f32 %v3931, 0.0
        %v3982 = vmax.f32 %v3932, 0.0
        %v3983 = vmax.f32 %v3933, 0.0
        %v3984 = vmax.f32 %v3934, 0.0
        %v3985 = vmax.f32 %v3935, 0.0
        %v3986 = vmax.f32 %v3936, 0.0
        %v3987 = vmax.f32 %v3937, 0.0
        %v3988 = vmax.f32 %v3938, 0.0
        %v3989 = vmax.f32 %v3939, 0.0
        %v3990 = vmax.f32 %v3940, 0.0
        %v3991 = vmax.f32 %v3941, 0.0
        %v3992 = vmax.f32 %v3942, 0.0
        %v3993 = vmax.f32 %v3943, 0.0
        %v3994 = vmax.f32 %v3944, 0.0
        %v3995 = vmax.f32 %v3945, 0.0
        %v3996 = vmax.f32 %v3946, 0.0
        %v3997 = vmax.f32 %v3947, 0.0
        %v3998 = vmax.f32 %v3948, 0.0
        %v3999 = vmax.f32 %v3949, 0.0
        %v4000 = vmax.f32 %v3950, 0.0
        %v4001 = vmax.f32 %v3951, 0.0
        %v4002 = vmax.f32 %v3952, 0.0
        %v4003 = vmax.f32 %v3953, 0.0
        %4004 = vst.msk [vmem:[#allocation3] sm:$0xff] %vm413, %v3954
        %4005 = vst.msk [vmem:[#allocation3 + $0x8] sm:$0xff] %vm413, %v3955
        %4006 = vst.msk [vmem:[#allocation3 + $0x10] sm:$0xff] %vm413, %v3956
        %4007 = vst.msk [vmem:[#allocation3 + $0x18] sm:$0xff] %vm413, %v3957
        %4008 = vst.msk [vmem:[#allocation3 + $0x20] sm:$0xff] %vm413, %v3958
        %4009 = vst.msk [vmem:[#allocation3 + $0x28] sm:$0xff] %vm413, %v3959
        %4010 = vst.msk [vmem:[#allocation3 + $0x30] sm:$0xff] %vm413, %v3960
        %4011 = vst.msk [vmem:[#allocation3 + $0x38] sm:$0xff] %vm413, %v3961
        %4012 = vst.msk [vmem:[#allocation3 + $0x40] sm:$0xff] %vm413, %v3962
        %4013 = vst.msk [vmem:[#allocation3 + $0x48] sm:$0xff] %vm413, %v3963
        %4014 = vst.msk [vmem:[#allocation3 + $0x50] sm:$0xff] %vm413, %v3964
        %4015 = vst.msk [vmem:[#allocation3 + $0x58] sm:$0xff] %vm413, %v3965
        %4016 = vst.msk [vmem:[#allocation3 + $0x60] sm:$0xff] %vm413, %v3966
        %4017 = vst.msk [vmem:[#allocation3 + $0x68] sm:$0xff] %vm413, %v3967
        %4018 = vst.msk [vmem:[#allocation3 + $0x70] sm:$0xff] %vm413, %v3968
        %4019 = vst.msk [vmem:[#allocation3 + $0x78] sm:$0xff] %vm413, %v3969
        %4020 = vst.msk [vmem:[#allocation3 + $0x80] sm:$0xff] %vm413, %v3970
        %4021 = vst.msk [vmem:[#allocation3 + $0x88] sm:$0xff] %vm413, %v3971
        %4022 = vst.msk [vmem:[#allocation3 + $0x90] sm:$0xff] %vm413, %v3972
        %4023 = vst.msk [vmem:[#allocation3 + $0x98] sm:$0xff] %vm413, %v3973
        %4024 = vst.msk [vmem:[#allocation3 + $0xa0] sm:$0xff] %vm413, %v3974
        %4025 = vst.msk [vmem:[#allocation3 + $0xa8] sm:$0xff] %vm413, %v3975
        %4026 = vst.msk [vmem:[#allocation3 + $0xb0] sm:$0xff] %vm413, %v3976
        %4027 = vst.msk [vmem:[#allocation3 + $0xb8] sm:$0xff] %vm413, %v3977
        %4028 = vst.msk [vmem:[#allocation3 + $0xc0] sm:$0xff] %vm413, %v3978
        %4029 = vst.msk [vmem:[#allocation3 + $0xc8] sm:$0xff] %vm413, %v3979
        %4030 = vst.msk [vmem:[#allocation3 + $0xd0] sm:$0xff] %vm413, %v3980
        %4031 = vst.msk [vmem:[#allocation3 + $0xd8] sm:$0xff] %vm413, %v3981
        %4032 = vst.msk [vmem:[#allocation3 + $0xe0] sm:$0xff] %vm413, %v3982
        %4033 = vst.msk [vmem:[#allocation3 + $0xe8] sm:$0xff] %vm413, %v3983
        %4034 = vst.msk [vmem:[#allocation3 + $0xf0] sm:$0xff] %vm413, %v3984
        %4035 = vst.msk [vmem:[#allocation3 + $0xf8] sm:$0xff] %vm413, %v3985
        %4036 = vst.msk [vmem:[#allocation3 + $0x100] sm:$0xff] %vm413, %v3986
        %4037 = vst.msk [vmem:[#allocation3 + $0x108] sm:$0xff] %vm413, %v3987
        %4038 = vst.msk [vmem:[#allocation3 + $0x110] sm:$0xff] %vm413, %v3988
        %4039 = vst.msk [vmem:[#allocation3 + $0x118] sm:$0xff] %vm413, %v3989
        %4040 = vst.msk [vmem:[#allocation3 + $0x120] sm:$0xff] %vm413, %v3990
        %4041 = vst.msk [vmem:[#allocation3 + $0x128] sm:$0xff] %vm413, %v3991
        %4042 = vst.msk [vmem:[#allocation3 + $0x130] sm:$0xff] %vm413, %v3992
        %4043 = vst.msk [vmem:[#allocation3 + $0x138] sm:$0xff] %vm413, %v3993
        %4044 = vst.msk [vmem:[#allocation3 + $0x140] sm:$0xff] %vm413, %v3994
        %4045 = vst.msk [vmem:[#allocation3 + $0x148] sm:$0xff] %vm413, %v3995
        %4046 = vst.msk [vmem:[#allocation3 + $0x150] sm:$0xff] %vm413, %v3996
        %4047 = vst.msk [vmem:[#allocation3 + $0x158] sm:$0xff] %vm413, %v3997
        %4048 = vst.msk [vmem:[#allocation3 + $0x160] sm:$0xff] %vm413, %v3998
        %4049 = vst.msk [vmem:[#allocation3 + $0x168] sm:$0xff] %vm413, %v3999
        %4050 = vst.msk [vmem:[#allocation3 + $0x170] sm:$0xff] %vm413, %v4000
        %4051 = vst.msk [vmem:[#allocation3 + $0x178] sm:$0xff] %vm413, %v4001
        %4052 = vst.msk [vmem:[#allocation3 + $0x180] sm:$0xff] %vm413, %v4002
        %vm4053 = vcmask 522240
        %4054 = vst.msk [vmem:[#allocation3 + $0x188] sm:$0x7f] %vm4053, %v4003
        %v4055 = vld [vmem:[#allocation3] sm:$0xff]
        %v4056 = vld [vmem:[#allocation3 + $0x8] sm:$0xff]
        %v4057 = vld [vmem:[#allocation3 + $0x10] sm:$0xff]
        %v4058 = vld [vmem:[#allocation3 + $0x18] sm:$0xff]
        %v4059 = vld [vmem:[#allocation3 + $0x20] sm:$0xff]
        %v4060 = vld [vmem:[#allocation3 + $0x28] sm:$0xff]
        %v4061 = vld [vmem:[#allocation3 + $0x30] sm:$0xff]
        %v4062 = vld [vmem:[#allocation3 + $0x38] sm:$0xff]
        %v4063 = vld [vmem:[#allocation3 + $0x40] sm:$0xff]
        %v4064 = vld [vmem:[#allocation3 + $0x48] sm:$0xff]
        %v4065 = vld [vmem:[#allocation3 + $0x50] sm:$0xff]
        %v4066 = vld [vmem:[#allocation3 + $0x58] sm:$0xff]
        %v4067 = vld [vmem:[#allocation3 + $0x60] sm:$0xff]
        %v4068 = vld [vmem:[#allocation3 + $0x68] sm:$0xff]
        %v4069 = vld [vmem:[#allocation3 + $0x70] sm:$0xff]
        %v4070 = vld [vmem:[#allocation3 + $0x78] sm:$0xff]
        %v4071 = vld [vmem:[#allocation3 + $0x80] sm:$0xff]
        %v4072 = vld [vmem:[#allocation3 + $0x88] sm:$0xff]
        %v4073 = vld [vmem:[#allocation3 + $0x90] sm:$0xff]
        %v4074 = vld [vmem:[#allocation3 + $0x98] sm:$0xff]
        %v4075 = vld [vmem:[#allocation3 + $0xa0] sm:$0xff]
        %v4076 = vld [vmem:[#allocation3 + $0xa8] sm:$0xff]
        %v4077 = vld [vmem:[#allocation3 + $0xb0] sm:$0xff]
        %v4078 = vld [vmem:[#allocation3 + $0xb8] sm:$0xff]
        %v4079 = vld [vmem:[#allocation3 + $0xc0] sm:$0xff]
        %v4080 = vld [vmem:[#allocation3 + $0xc8] sm:$0xff]
        %v4081 = vld [vmem:[#allocation3 + $0xd0] sm:$0xff]
        %v4082 = vld [vmem:[#allocation3 + $0xd8] sm:$0xff]
        %v4083 = vld [vmem:[#allocation3 + $0xe0] sm:$0xff]
        %v4084 = vld [vmem:[#allocation3 + $0xe8] sm:$0xff]
        %v4085 = vld [vmem:[#allocation3 + $0xf0] sm:$0xff]
        %v4086 = vld [vmem:[#allocation3 + $0xf8] sm:$0xff]
        %v4087 = vld [vmem:[#allocation3 + $0x100] sm:$0xff]
        %v4088 = vld [vmem:[#allocation3 + $0x108] sm:$0xff]
        %v4089 = vld [vmem:[#allocation3 + $0x110] sm:$0xff]
        %v4090 = vld [vmem:[#allocation3 + $0x118] sm:$0xff]
        %v4091 = vld [vmem:[#allocation3 + $0x120] sm:$0xff]
        %v4092 = vld [vmem:[#allocation3 + $0x128] sm:$0xff]
        %v4093 = vld [vmem:[#allocation3 + $0x130] sm:$0xff]
        %v4094 = vld [vmem:[#allocation3 + $0x138] sm:$0xff]
        %v4095 = vld [vmem:[#allocation3 + $0x140] sm:$0xff]
        %v4096 = vld [vmem:[#allocation3 + $0x148] sm:$0xff]
        %v4097 = vld [vmem:[#allocation3 + $0x150] sm:$0xff]
        %v4098 = vld [vmem:[#allocation3 + $0x158] sm:$0xff]
        %v4099 = vld [vmem:[#allocation3 + $0x160] sm:$0xff]
        %v4100 = vld [vmem:[#allocation3 + $0x168] sm:$0xff]
        %v4101 = vld [vmem:[#allocation3 + $0x170] sm:$0xff]
        %v4102 = vld [vmem:[#allocation3 + $0x178] sm:$0x3]
        %v4103 = vld [vmem:[#allocation9] sm:$0xff]
        %v4104 = vld [vmem:[#allocation9 + $0x8] sm:$0xff]
        %v4105 = vld [vmem:[#allocation9 + $0x10] sm:$0xff]
        %v4106 = vld [vmem:[#allocation9 + $0x18] sm:$0xff]
        %v4107 = vld [vmem:[#allocation9 + $0x20] sm:$0xff]
        %v4108 = vld [vmem:[#allocation9 + $0x28] sm:$0xff]
        %v4109 = vld [vmem:[#allocation9 + $0x30] sm:$0xff]
        %v4110 = vld [vmem:[#allocation9 + $0x38] sm:$0xff]
        %v4111 = vld [vmem:[#allocation3 + $0x1] sm:$0xff]
        %v4112 = vld [vmem:[#allocation3 + $0x9] sm:$0xff]
        %v4113 = vld [vmem:[#allocation3 + $0x11] sm:$0xff]
        %v4114 = vld [vmem:[#allocation3 + $0x19] sm:$0xff]
        %v4115 = vld [vmem:[#allocation3 + $0x21] sm:$0xff]
        %v4116 = vld [vmem:[#allocation3 + $0x29] sm:$0xff]
        %v4117 = vld [vmem:[#allocation3 + $0x31] sm:$0xff]
        %v4118 = vld [vmem:[#allocation3 + $0x39] sm:$0xff]
        %v4119 = vld [vmem:[#allocation3 + $0x41] sm:$0xff]
        %v4120 = vld [vmem:[#allocation3 + $0x49] sm:$0xff]
        %v4121 = vld [vmem:[#allocation3 + $0x51] sm:$0xff]
        %v4122 = vld [vmem:[#allocation3 + $0x59] sm:$0xff]
        %v4123 = vld [vmem:[#allocation3 + $0x61] sm:$0xff]
        %v4124 = vld [vmem:[#allocation3 + $0x69] sm:$0xff]
        %v4125 = vld [vmem:[#allocation3 + $0x71] sm:$0xff]
        %v4126 = vld [vmem:[#allocation3 + $0x79] sm:$0xff]
        %v4127 = vld [vmem:[#allocation3 + $0x81] sm:$0xff]
        %v4128 = vld [vmem:[#allocation3 + $0x89] sm:$0xff]
        %v4129 = vld [vmem:[#allocation3 + $0x91] sm:$0xff]
        %v4130 = vld [vmem:[#allocation3 + $0x99] sm:$0xff]
        %v4131 = vld [vmem:[#allocation3 + $0xa1] sm:$0xff]
        %v4132 = vld [vmem:[#allocation3 + $0xa9] sm:$0xff]
        %v4133 = vld [vmem:[#allocation3 + $0xb1] sm:$0xff]
        %v4134 = vld [vmem:[#allocation3 + $0xb9] sm:$0xff]
        %v4135 = vld [vmem:[#allocation3 + $0xc1] sm:$0xff]
        %v4136 = vld [vmem:[#allocation3 + $0xc9] sm:$0xff]
        %v4137 = vld [vmem:[#allocation3 + $0xd1] sm:$0xff]
        %v4138 = vld [vmem:[#allocation3 + $0xd9] sm:$0xff]
        %v4139 = vld [vmem:[#allocation3 + $0xe1] sm:$0xff]
        %v4140 = vld [vmem:[#allocation3 + $0xe9] sm:$0xff]
        %v4141 = vld [vmem:[#allocation3 + $0xf1] sm:$0xff]
        %v4142 = vld [vmem:[#allocation3 + $0xf9] sm:$0xff]
        %v4143 = vld [vmem:[#allocation3 + $0x101] sm:$0xff]
        %v4144 = vld [vmem:[#allocation3 + $0x109] sm:$0xff]
        %v4145 = vld [vmem:[#allocation3 + $0x111] sm:$0xff]
        %v4146 = vld [vmem:[#allocation3 + $0x119] sm:$0xff]
        %v4147 = vld [vmem:[#allocation3 + $0x121] sm:$0xff]
        %v4148 = vld [vmem:[#allocation3 + $0x129] sm:$0xff]
        %v4149 = vld [vmem:[#allocation3 + $0x131] sm:$0xff]
        %v4150 = vld [vmem:[#allocation3 + $0x139] sm:$0xff]
        %v4151 = vld [vmem:[#allocation3 + $0x141] sm:$0xff]
        %v4152 = vld [vmem:[#allocation3 + $0x149] sm:$0xff]
        %v4153 = vld [vmem:[#allocation3 + $0x151] sm:$0xff]
        %v4154 = vld [vmem:[#allocation3 + $0x159] sm:$0xff]
        %v4155 = vld [vmem:[#allocation3 + $0x161] sm:$0xff]
        %v4156 = vld [vmem:[#allocation3 + $0x169] sm:$0xff]
        %v4157 = vld [vmem:[#allocation3 + $0x171] sm:$0xff]
        %v4158 = vld [vmem:[#allocation3 + $0x179] sm:$0x3]
        %s4159 = scalar_lea.vmem [#allocation9], 64
        %v4160 = vld [vmem:[%s4159] sm:$0xff]
        %v4161 = vld [vmem:[%s4159 + $0x8] sm:$0xff]
        %v4162 = vld [vmem:[%s4159 + $0x10] sm:$0xff]
        %v4163 = vld [vmem:[%s4159 + $0x18] sm:$0xff]
        %v4164 = vld [vmem:[%s4159 + $0x20] sm:$0xff]
        %v4165 = vld [vmem:[%s4159 + $0x28] sm:$0xff]
        %v4166 = vld [vmem:[%s4159 + $0x30] sm:$0xff]
        %v4167 = vld [vmem:[%s4159 + $0x38] sm:$0xff]
        %v4169 = vsel %vm413, %v4111, 0
        %v4172 = vsel %vm413, %v4112, 0
        %v4175 = vsel %vm413, %v4113, 0
        %v4178 = vsel %vm413, %v4114, 0
        %v4181 = vsel %vm413, %v4115, 0
        %v4184 = vsel %vm413, %v4116, 0
        %v4187 = vsel %vm413, %v4117, 0
        %v4190 = vsel %vm413, %v4118, 0
        %v4193 = vsel %vm413, %v4119, 0
        %v4196 = vsel %vm413, %v4120, 0
        %v4199 = vsel %vm413, %v4121, 0
        %v4202 = vsel %vm413, %v4122, 0
        %v4205 = vsel %vm413, %v4123, 0
        %v4208 = vsel %vm413, %v4124, 0
        %v4211 = vsel %vm413, %v4125, 0
        %v4214 = vsel %vm413, %v4126, 0
        %v4217 = vsel %vm413, %v4127, 0
        %v4220 = vsel %vm413, %v4128, 0
        %v4223 = vsel %vm413, %v4129, 0
        %v4226 = vsel %vm413, %v4130, 0
        %v4229 = vsel %vm413, %v4131, 0
        %v4232 = vsel %vm413, %v4132, 0
        %v4235 = vsel %vm413, %v4133, 0
        %v4238 = vsel %vm413, %v4134, 0
        %v4241 = vsel %vm413, %v4135, 0
        %v4244 = vsel %vm413, %v4136, 0
        %v4247 = vsel %vm413, %v4137, 0
        %v4250 = vsel %vm413, %v4138, 0
        %v4253 = vsel %vm413, %v4139, 0
        %v4256 = vsel %vm413, %v4140, 0
        %v4259 = vsel %vm413, %v4141, 0
        %v4262 = vsel %vm413, %v4142, 0
        %v4265 = vsel %vm413, %v4143, 0
        %v4268 = vsel %vm413, %v4144, 0
        %v4271 = vsel %vm413, %v4145, 0
        %v4274 = vsel %vm413, %v4146, 0
        %v4277 = vsel %vm413, %v4147, 0
        %v4280 = vsel %vm413, %v4148, 0
        %v4283 = vsel %vm413, %v4149, 0
        %v4286 = vsel %vm413, %v4150, 0
        %v4289 = vsel %vm413, %v4151, 0
        %v4292 = vsel %vm413, %v4152, 0
        %v4295 = vsel %vm413, %v4153, 0
        %v4298 = vsel %vm413, %v4154, 0
        %v4301 = vsel %vm413, %v4155, 0
        %v4304 = vsel %vm413, %v4156, 0
        %v4307 = vsel %vm413, %v4157, 0
        %v4310 = vsel %vm413, %v4158, 0
        %4312 = vmatpush.msra.mxu0 0.0
        %4313 = vmatpush.msra.mxu0 0.0
        %4314 = vmatpush.msra.mxu0 0.0
        %4315 = vmatpush.msra.mxu0 0.0
        %4316 = vmatpush.msra.mxu0 0.0
        %4317 = vmatpush.msra.mxu0 0.0
        %4318 = vmatpush.msra.mxu0 0.0
        %4319 = vmatpush.msra.mxu0 0.0
        %4320 = vmatpush.msra.mxu0 %v4167
        %4321 = vmatpush.msra.mxu0 %v4166
        %4322 = vmatpush.msra.mxu0 %v4165
        %4323 = vmatpush.msra.mxu0 %v4164
        %4324 = vmatpush.msra.mxu0 %v4163
        %4325 = vmatpush.msra.mxu0 %v4162
        %4326 = vmatpush.msra.mxu0 %v4161
        %4327 = vmatpush.msra.mxu0 %v4160
        %4328 = vmatmul.f32.gmra.mxu0 %v4169
        %v4329 = vpop.f32.mrf.mxu0
        %v4330 = vadd.f32 0.0, %v4329
        %4331 = vmatmul.f32.gmra.mxu0 %v4172
        %v4332 = vpop.f32.mrf.mxu0
        %v4333 = vadd.f32 0.0, %v4332
        %4334 = vmatmul.f32.gmra.mxu0 %v4175
        %v4335 = vpop.f32.mrf.mxu0
        %v4336 = vadd.f32 0.0, %v4335
        %4337 = vmatmul.f32.gmra.mxu0 %v4178
        %v4338 = vpop.f32.mrf.mxu0
        %v4339 = vadd.f32 0.0, %v4338
        %4340 = vmatmul.f32.gmra.mxu0 %v4181
        %v4341 = vpop.f32.mrf.mxu0
        %v4342 = vadd.f32 0.0, %v4341
        %4343 = vmatmul.f32.gmra.mxu0 %v4184
        %v4344 = vpop.f32.mrf.mxu0
        %v4345 = vadd.f32 0.0, %v4344
        %4346 = vmatmul.f32.gmra.mxu0 %v4187
        %v4347 = vpop.f32.mrf.mxu0
        %v4348 = vadd.f32 0.0, %v4347
        %4349 = vmatmul.f32.gmra.mxu0 %v4190
        %v4350 = vpop.f32.mrf.mxu0
        %v4351 = vadd.f32 0.0, %v4350
        %4352 = vmatmul.f32.gmra.mxu0 %v4193
        %v4353 = vpop.f32.mrf.mxu0
        %v4354 = vadd.f32 0.0, %v4353
        %4355 = vmatmul.f32.gmra.mxu0 %v4196
        %v4356 = vpop.f32.mrf.mxu0
        %v4357 = vadd.f32 0.0, %v4356
        %4358 = vmatmul.f32.gmra.mxu0 %v4199
        %v4359 = vpop.f32.mrf.mxu0
        %v4360 = vadd.f32 0.0, %v4359
        %4361 = vmatmul.f32.gmra.mxu0 %v4202
        %v4362 = vpop.f32.mrf.mxu0
        %v4363 = vadd.f32 0.0, %v4362
        %4364 = vmatmul.f32.gmra.mxu0 %v4205
        %v4365 = vpop.f32.mrf.mxu0
        %v4366 = vadd.f32 0.0, %v4365
        %4367 = vmatmul.f32.gmra.mxu0 %v4208
        %v4368 = vpop.f32.mrf.mxu0
        %v4369 = vadd.f32 0.0, %v4368
        %4370 = vmatmul.f32.gmra.mxu0 %v4211
        %v4371 = vpop.f32.mrf.mxu0
        %v4372 = vadd.f32 0.0, %v4371
        %4373 = vmatmul.f32.gmra.mxu0 %v4214
        %v4374 = vpop.f32.mrf.mxu0
        %v4375 = vadd.f32 0.0, %v4374
        %4376 = vmatmul.f32.gmra.mxu0 %v4217
        %v4377 = vpop.f32.mrf.mxu0
        %v4378 = vadd.f32 0.0, %v4377
        %4379 = vmatmul.f32.gmra.mxu0 %v4220
        %v4380 = vpop.f32.mrf.mxu0
        %v4381 = vadd.f32 0.0, %v4380
        %4382 = vmatmul.f32.gmra.mxu0 %v4223
        %v4383 = vpop.f32.mrf.mxu0
        %v4384 = vadd.f32 0.0, %v4383
        %4385 = vmatmul.f32.gmra.mxu0 %v4226
        %v4386 = vpop.f32.mrf.mxu0
        %v4387 = vadd.f32 0.0, %v4386
        %4388 = vmatmul.f32.gmra.mxu0 %v4229
        %v4389 = vpop.f32.mrf.mxu0
        %v4390 = vadd.f32 0.0, %v4389
        %4391 = vmatmul.f32.gmra.mxu0 %v4232
        %v4392 = vpop.f32.mrf.mxu0
        %v4393 = vadd.f32 0.0, %v4392
        %4394 = vmatmul.f32.gmra.mxu0 %v4235
        %v4395 = vpop.f32.mrf.mxu0
        %v4396 = vadd.f32 0.0, %v4395
        %4397 = vmatmul.f32.gmra.mxu0 %v4238
        %v4398 = vpop.f32.mrf.mxu0
        %v4399 = vadd.f32 0.0, %v4398
        %4400 = vmatmul.f32.gmra.mxu0 %v4241
        %v4401 = vpop.f32.mrf.mxu0
        %v4402 = vadd.f32 0.0, %v4401
        %4403 = vmatmul.f32.gmra.mxu0 %v4244
        %v4404 = vpop.f32.mrf.mxu0
        %v4405 = vadd.f32 0.0, %v4404
        %4406 = vmatmul.f32.gmra.mxu0 %v4247
        %v4407 = vpop.f32.mrf.mxu0
        %v4408 = vadd.f32 0.0, %v4407
        %4409 = vmatmul.f32.gmra.mxu0 %v4250
        %v4410 = vpop.f32.mrf.mxu0
        %v4411 = vadd.f32 0.0, %v4410
        %4412 = vmatmul.f32.gmra.mxu0 %v4253
        %v4413 = vpop.f32.mrf.mxu0
        %v4414 = vadd.f32 0.0, %v4413
        %4415 = vmatmul.f32.gmra.mxu0 %v4256
        %v4416 = vpop.f32.mrf.mxu0
        %v4417 = vadd.f32 0.0, %v4416
        %4418 = vmatmul.f32.gmra.mxu0 %v4259
        %v4419 = vpop.f32.mrf.mxu0
        %v4420 = vadd.f32 0.0, %v4419
        %4421 = vmatmul.f32.gmra.mxu0 %v4262
        %v4422 = vpop.f32.mrf.mxu0
        %v4423 = vadd.f32 0.0, %v4422
        %4424 = vmatmul.f32.gmra.mxu0 %v4265
        %v4425 = vpop.f32.mrf.mxu0
        %v4426 = vadd.f32 0.0, %v4425
        %4427 = vmatmul.f32.gmra.mxu0 %v4268
        %v4428 = vpop.f32.mrf.mxu0
        %v4429 = vadd.f32 0.0, %v4428
        %4430 = vmatmul.f32.gmra.mxu0 %v4271
        %v4431 = vpop.f32.mrf.mxu0
        %v4432 = vadd.f32 0.0, %v4431
        %4433 = vmatmul.f32.gmra.mxu0 %v4274
        %v4434 = vpop.f32.mrf.mxu0
        %v4435 = vadd.f32 0.0, %v4434
        %4436 = vmatmul.f32.gmra.mxu0 %v4277
        %v4437 = vpop.f32.mrf.mxu0
        %v4438 = vadd.f32 0.0, %v4437
        %4439 = vmatmul.f32.gmra.mxu0 %v4280
        %v4440 = vpop.f32.mrf.mxu0
        %v4441 = vadd.f32 0.0, %v4440
        %4442 = vmatmul.f32.gmra.mxu0 %v4283
        %v4443 = vpop.f32.mrf.mxu0
        %v4444 = vadd.f32 0.0, %v4443
        %4445 = vmatmul.f32.gmra.mxu0 %v4286
        %v4446 = vpop.f32.mrf.mxu0
        %v4447 = vadd.f32 0.0, %v4446
        %4448 = vmatmul.f32.gmra.mxu0 %v4289
        %v4449 = vpop.f32.mrf.mxu0
        %v4450 = vadd.f32 0.0, %v4449
        %4451 = vmatmul.f32.gmra.mxu0 %v4292
        %v4452 = vpop.f32.mrf.mxu0
        %v4453 = vadd.f32 0.0, %v4452
        %4454 = vmatmul.f32.gmra.mxu0 %v4295
        %v4455 = vpop.f32.mrf.mxu0
        %v4456 = vadd.f32 0.0, %v4455
        %4457 = vmatmul.f32.gmra.mxu0 %v4298
        %v4458 = vpop.f32.mrf.mxu0
        %v4459 = vadd.f32 0.0, %v4458
        %4460 = vmatmul.f32.gmra.mxu0 %v4301
        %v4461 = vpop.f32.mrf.mxu0
        %v4462 = vadd.f32 0.0, %v4461
        %4463 = vmatmul.f32.gmra.mxu0 %v4304
        %v4464 = vpop.f32.mrf.mxu0
        %v4465 = vadd.f32 0.0, %v4464
        %4466 = vmatmul.f32.gmra.mxu0 %v4307
        %v4467 = vpop.f32.mrf.mxu0
        %v4468 = vadd.f32 0.0, %v4467
        %4469 = vmatmul.f32.gmra.mxu0 %v4310
        %v4470 = vpop.f32.mrf.mxu0
        %v4471 = vadd.f32 0.0, %v4470
        %4472 = vdwg.mxu0
        %v4474 = vsel %vm413, %v4055, 0
        %v4477 = vsel %vm413, %v4056, 0
        %v4480 = vsel %vm413, %v4057, 0
        %v4483 = vsel %vm413, %v4058, 0
        %v4486 = vsel %vm413, %v4059, 0
        %v4489 = vsel %vm413, %v4060, 0
        %v4492 = vsel %vm413, %v4061, 0
        %v4495 = vsel %vm413, %v4062, 0
        %v4498 = vsel %vm413, %v4063, 0
        %v4501 = vsel %vm413, %v4064, 0
        %v4504 = vsel %vm413, %v4065, 0
        %v4507 = vsel %vm413, %v4066, 0
        %v4510 = vsel %vm413, %v4067, 0
        %v4513 = vsel %vm413, %v4068, 0
        %v4516 = vsel %vm413, %v4069, 0
        %v4519 = vsel %vm413, %v4070, 0
        %v4522 = vsel %vm413, %v4071, 0
        %v4525 = vsel %vm413, %v4072, 0
        %v4528 = vsel %vm413, %v4073, 0
        %v4531 = vsel %vm413, %v4074, 0
        %v4534 = vsel %vm413, %v4075, 0
        %v4537 = vsel %vm413, %v4076, 0
        %v4540 = vsel %vm413, %v4077, 0
        %v4543 = vsel %vm413, %v4078, 0
        %v4546 = vsel %vm413, %v4079, 0
        %v4549 = vsel %vm413, %v4080, 0
        %v4552 = vsel %vm413, %v4081, 0
        %v4555 = vsel %vm413, %v4082, 0
        %v4558 = vsel %vm413, %v4083, 0
        %v4561 = vsel %vm413, %v4084, 0
        %v4564 = vsel %vm413, %v4085, 0
        %v4567 = vsel %vm413, %v4086, 0
        %v4570 = vsel %vm413, %v4087, 0
        %v4573 = vsel %vm413, %v4088, 0
        %v4576 = vsel %vm413, %v4089, 0
        %v4579 = vsel %vm413, %v4090, 0
        %v4582 = vsel %vm413, %v4091, 0
        %v4585 = vsel %vm413, %v4092, 0
        %v4588 = vsel %vm413, %v4093, 0
        %v4591 = vsel %vm413, %v4094, 0
        %v4594 = vsel %vm413, %v4095, 0
        %v4597 = vsel %vm413, %v4096, 0
        %v4600 = vsel %vm413, %v4097, 0
        %v4603 = vsel %vm413, %v4098, 0
        %v4606 = vsel %vm413, %v4099, 0
        %v4609 = vsel %vm413, %v4100, 0
        %v4612 = vsel %vm413, %v4101, 0
        %v4615 = vsel %vm413, %v4102, 0
        %4617 = vmatpush.msra.mxu0 0.0
        %4618 = vmatpush.msra.mxu0 0.0
        %4619 = vmatpush.msra.mxu0 0.0
        %4620 = vmatpush.msra.mxu0 0.0
        %4621 = vmatpush.msra.mxu0 0.0
        %4622 = vmatpush.msra.mxu0 0.0
        %4623 = vmatpush.msra.mxu0 0.0
        %4624 = vmatpush.msra.mxu0 0.0
        %4625 = vmatpush.msra.mxu0 %v4110
        %4626 = vmatpush.msra.mxu0 %v4109
        %4627 = vmatpush.msra.mxu0 %v4108
        %4628 = vmatpush.msra.mxu0 %v4107
        %4629 = vmatpush.msra.mxu0 %v4106
        %4630 = vmatpush.msra.mxu0 %v4105
        %4631 = vmatpush.msra.mxu0 %v4104
        %4632 = vmatpush.msra.mxu0 %v4103
        %4633 = vmatmul.f32.gmra.mxu0 %v4474
        %v4634 = vpop.f32.mrf.mxu0
        %v4635 = vadd.f32 %v4330, %v4634
        %4636 = vmatmul.f32.gmra.mxu0 %v4477
        %v4637 = vpop.f32.mrf.mxu0
        %v4638 = vadd.f32 %v4333, %v4637
        %4639 = vmatmul.f32.gmra.mxu0 %v4480
        %v4640 = vpop.f32.mrf.mxu0
        %v4641 = vadd.f32 %v4336, %v4640
        %4642 = vmatmul.f32.gmra.mxu0 %v4483
        %v4643 = vpop.f32.mrf.mxu0
        %v4644 = vadd.f32 %v4339, %v4643
        %4645 = vmatmul.f32.gmra.mxu0 %v4486
        %v4646 = vpop.f32.mrf.mxu0
        %v4647 = vadd.f32 %v4342, %v4646
        %4648 = vmatmul.f32.gmra.mxu0 %v4489
        %v4649 = vpop.f32.mrf.mxu0
        %v4650 = vadd.f32 %v4345, %v4649
        %4651 = vmatmul.f32.gmra.mxu0 %v4492
        %v4652 = vpop.f32.mrf.mxu0
        %v4653 = vadd.f32 %v4348, %v4652
        %4654 = vmatmul.f32.gmra.mxu0 %v4495
        %v4655 = vpop.f32.mrf.mxu0
        %v4656 = vadd.f32 %v4351, %v4655
        %4657 = vmatmul.f32.gmra.mxu0 %v4498
        %v4658 = vpop.f32.mrf.mxu0
        %v4659 = vadd.f32 %v4354, %v4658
        %4660 = vmatmul.f32.gmra.mxu0 %v4501
        %v4661 = vpop.f32.mrf.mxu0
        %v4662 = vadd.f32 %v4357, %v4661
        %4663 = vmatmul.f32.gmra.mxu0 %v4504
        %v4664 = vpop.f32.mrf.mxu0
        %v4665 = vadd.f32 %v4360, %v4664
        %4666 = vmatmul.f32.gmra.mxu0 %v4507
        %v4667 = vpop.f32.mrf.mxu0
        %v4668 = vadd.f32 %v4363, %v4667
        %4669 = vmatmul.f32.gmra.mxu0 %v4510
        %v4670 = vpop.f32.mrf.mxu0
        %v4671 = vadd.f32 %v4366, %v4670
        %4672 = vmatmul.f32.gmra.mxu0 %v4513
        %v4673 = vpop.f32.mrf.mxu0
        %v4674 = vadd.f32 %v4369, %v4673
        %4675 = vmatmul.f32.gmra.mxu0 %v4516
        %v4676 = vpop.f32.mrf.mxu0
        %v4677 = vadd.f32 %v4372, %v4676
        %4678 = vmatmul.f32.gmra.mxu0 %v4519
        %v4679 = vpop.f32.mrf.mxu0
        %v4680 = vadd.f32 %v4375, %v4679
        %4681 = vmatmul.f32.gmra.mxu0 %v4522
        %v4682 = vpop.f32.mrf.mxu0
        %v4683 = vadd.f32 %v4378, %v4682
        %4684 = vmatmul.f32.gmra.mxu0 %v4525
        %v4685 = vpop.f32.mrf.mxu0
        %v4686 = vadd.f32 %v4381, %v4685
        %4687 = vmatmul.f32.gmra.mxu0 %v4528
        %v4688 = vpop.f32.mrf.mxu0
        %v4689 = vadd.f32 %v4384, %v4688
        %4690 = vmatmul.f32.gmra.mxu0 %v4531
        %v4691 = vpop.f32.mrf.mxu0
        %v4692 = vadd.f32 %v4387, %v4691
        %4693 = vmatmul.f32.gmra.mxu0 %v4534
        %v4694 = vpop.f32.mrf.mxu0
        %v4695 = vadd.f32 %v4390, %v4694
        %4696 = vmatmul.f32.gmra.mxu0 %v4537
        %v4697 = vpop.f32.mrf.mxu0
        %v4698 = vadd.f32 %v4393, %v4697
        %4699 = vmatmul.f32.gmra.mxu0 %v4540
        %v4700 = vpop.f32.mrf.mxu0
        %v4701 = vadd.f32 %v4396, %v4700
        %4702 = vmatmul.f32.gmra.mxu0 %v4543
        %v4703 = vpop.f32.mrf.mxu0
        %v4704 = vadd.f32 %v4399, %v4703
        %4705 = vmatmul.f32.gmra.mxu0 %v4546
        %v4706 = vpop.f32.mrf.mxu0
        %v4707 = vadd.f32 %v4402, %v4706
        %4708 = vmatmul.f32.gmra.mxu0 %v4549
        %v4709 = vpop.f32.mrf.mxu0
        %v4710 = vadd.f32 %v4405, %v4709
        %4711 = vmatmul.f32.gmra.mxu0 %v4552
        %v4712 = vpop.f32.mrf.mxu0
        %v4713 = vadd.f32 %v4408, %v4712
        %4714 = vmatmul.f32.gmra.mxu0 %v4555
        %v4715 = vpop.f32.mrf.mxu0
        %v4716 = vadd.f32 %v4411, %v4715
        %4717 = vmatmul.f32.gmra.mxu0 %v4558
        %v4718 = vpop.f32.mrf.mxu0
        %v4719 = vadd.f32 %v4414, %v4718
        %4720 = vmatmul.f32.gmra.mxu0 %v4561
        %v4721 = vpop.f32.mrf.mxu0
        %v4722 = vadd.f32 %v4417, %v4721
        %4723 = vmatmul.f32.gmra.mxu0 %v4564
        %v4724 = vpop.f32.mrf.mxu0
        %v4725 = vadd.f32 %v4420, %v4724
        %4726 = vmatmul.f32.gmra.mxu0 %v4567
        %v4727 = vpop.f32.mrf.mxu0
        %v4728 = vadd.f32 %v4423, %v4727
        %4729 = vmatmul.f32.gmra.mxu0 %v4570
        %v4730 = vpop.f32.mrf.mxu0
        %v4731 = vadd.f32 %v4426, %v4730
        %4732 = vmatmul.f32.gmra.mxu0 %v4573
        %v4733 = vpop.f32.mrf.mxu0
        %v4734 = vadd.f32 %v4429, %v4733
        %4735 = vmatmul.f32.gmra.mxu0 %v4576
        %v4736 = vpop.f32.mrf.mxu0
        %v4737 = vadd.f32 %v4432, %v4736
        %4738 = vmatmul.f32.gmra.mxu0 %v4579
        %v4739 = vpop.f32.mrf.mxu0
        %v4740 = vadd.f32 %v4435, %v4739
        %4741 = vmatmul.f32.gmra.mxu0 %v4582
        %v4742 = vpop.f32.mrf.mxu0
        %v4743 = vadd.f32 %v4438, %v4742
        %4744 = vmatmul.f32.gmra.mxu0 %v4585
        %v4745 = vpop.f32.mrf.mxu0
        %v4746 = vadd.f32 %v4441, %v4745
        %4747 = vmatmul.f32.gmra.mxu0 %v4588
        %v4748 = vpop.f32.mrf.mxu0
        %v4749 = vadd.f32 %v4444, %v4748
        %4750 = vmatmul.f32.gmra.mxu0 %v4591
        %v4751 = vpop.f32.mrf.mxu0
        %v4752 = vadd.f32 %v4447, %v4751
        %4753 = vmatmul.f32.gmra.mxu0 %v4594
        %v4754 = vpop.f32.mrf.mxu0
        %v4755 = vadd.f32 %v4450, %v4754
        %4756 = vmatmul.f32.gmra.mxu0 %v4597
        %v4757 = vpop.f32.mrf.mxu0
        %v4758 = vadd.f32 %v4453, %v4757
        %4759 = vmatmul.f32.gmra.mxu0 %v4600
        %v4760 = vpop.f32.mrf.mxu0
        %v4761 = vadd.f32 %v4456, %v4760
        %4762 = vmatmul.f32.gmra.mxu0 %v4603
        %v4763 = vpop.f32.mrf.mxu0
        %v4764 = vadd.f32 %v4459, %v4763
        %4765 = vmatmul.f32.gmra.mxu0 %v4606
        %v4766 = vpop.f32.mrf.mxu0
        %v4767 = vadd.f32 %v4462, %v4766
        %4768 = vmatmul.f32.gmra.mxu0 %v4609
        %v4769 = vpop.f32.mrf.mxu0
        %v4770 = vadd.f32 %v4465, %v4769
        %4771 = vmatmul.f32.gmra.mxu0 %v4612
        %v4772 = vpop.f32.mrf.mxu0
        %v4773 = vadd.f32 %v4468, %v4772
        %4774 = vmatmul.f32.gmra.mxu0 %v4615
        %v4775 = vpop.f32.mrf.mxu0
        %v4776 = vadd.f32 %v4471, %v4775
        %4777 = vdwg.mxu0
        %v4778 = vld [vmem:[#allocation3 + $0x15] sm:$0xff]
        %v4779 = vld [vmem:[#allocation3 + $0x1d] sm:$0xff]
        %v4780 = vld [vmem:[#allocation3 + $0x25] sm:$0xff]
        %v4781 = vld [vmem:[#allocation3 + $0x2d] sm:$0xff]
        %v4782 = vld [vmem:[#allocation3 + $0x35] sm:$0xff]
        %v4783 = vld [vmem:[#allocation3 + $0x3d] sm:$0xff]
        %v4784 = vld [vmem:[#allocation3 + $0x45] sm:$0xff]
        %v4785 = vld [vmem:[#allocation3 + $0x4d] sm:$0xff]
        %v4786 = vld [vmem:[#allocation3 + $0x55] sm:$0xff]
        %v4787 = vld [vmem:[#allocation3 + $0x5d] sm:$0xff]
        %v4788 = vld [vmem:[#allocation3 + $0x65] sm:$0xff]
        %v4789 = vld [vmem:[#allocation3 + $0x6d] sm:$0xff]
        %v4790 = vld [vmem:[#allocation3 + $0x75] sm:$0xff]
        %v4791 = vld [vmem:[#allocation3 + $0x7d] sm:$0xff]
        %v4792 = vld [vmem:[#allocation3 + $0x85] sm:$0xff]
        %v4793 = vld [vmem:[#allocation3 + $0x8d] sm:$0xff]
        %v4794 = vld [vmem:[#allocation3 + $0x95] sm:$0xff]
        %v4795 = vld [vmem:[#allocation3 + $0x9d] sm:$0xff]
        %v4796 = vld [vmem:[#allocation3 + $0xa5] sm:$0xff]
        %v4797 = vld [vmem:[#allocation3 + $0xad] sm:$0xff]
        %v4798 = vld [vmem:[#allocation3 + $0xb5] sm:$0xff]
        %v4799 = vld [vmem:[#allocation3 + $0xbd] sm:$0xff]
        %v4800 = vld [vmem:[#allocation3 + $0xc5] sm:$0xff]
        %v4801 = vld [vmem:[#allocation3 + $0xcd] sm:$0xff]
        %v4802 = vld [vmem:[#allocation3 + $0xd5] sm:$0xff]
        %v4803 = vld [vmem:[#allocation3 + $0xdd] sm:$0xff]
        %v4804 = vld [vmem:[#allocation3 + $0xe5] sm:$0xff]
        %v4805 = vld [vmem:[#allocation3 + $0xed] sm:$0xff]
        %v4806 = vld [vmem:[#allocation3 + $0xf5] sm:$0xff]
        %v4807 = vld [vmem:[#allocation3 + $0xfd] sm:$0xff]
        %v4808 = vld [vmem:[#allocation3 + $0x105] sm:$0xff]
        %v4809 = vld [vmem:[#allocation3 + $0x10d] sm:$0xff]
        %v4810 = vld [vmem:[#allocation3 + $0x115] sm:$0xff]
        %v4811 = vld [vmem:[#allocation3 + $0x11d] sm:$0xff]
        %v4812 = vld [vmem:[#allocation3 + $0x125] sm:$0xff]
        %v4813 = vld [vmem:[#allocation3 + $0x12d] sm:$0xff]
        %v4814 = vld [vmem:[#allocation3 + $0x135] sm:$0xff]
        %v4815 = vld [vmem:[#allocation3 + $0x13d] sm:$0xff]
        %v4816 = vld [vmem:[#allocation3 + $0x145] sm:$0xff]
        %v4817 = vld [vmem:[#allocation3 + $0x14d] sm:$0xff]
        %v4818 = vld [vmem:[#allocation3 + $0x155] sm:$0xff]
        %v4819 = vld [vmem:[#allocation3 + $0x15d] sm:$0xff]
        %v4820 = vld [vmem:[#allocation3 + $0x165] sm:$0xff]
        %v4821 = vld [vmem:[#allocation3 + $0x16d] sm:$0xff]
        %v4822 = vld [vmem:[#allocation3 + $0x175] sm:$0xff]
        %v4823 = vld [vmem:[#allocation3 + $0x17d] sm:$0xff]
        %v4824 = vld [vmem:[#allocation3 + $0x185] sm:$0xff]
        %v4825 = vld [vmem:[#allocation3 + $0x18d] sm:$0x3]
        %s4826 = scalar_lea.vmem [#allocation9], 128
        %v4827 = vld [vmem:[%s4826] sm:$0xff]
        %v4828 = vld [vmem:[%s4826 + $0x8] sm:$0xff]
        %v4829 = vld [vmem:[%s4826 + $0x10] sm:$0xff]
        %v4830 = vld [vmem:[%s4826 + $0x18] sm:$0xff]
        %v4831 = vld [vmem:[%s4826 + $0x20] sm:$0xff]
        %v4832 = vld [vmem:[%s4826 + $0x28] sm:$0xff]
        %v4833 = vld [vmem:[%s4826 + $0x30] sm:$0xff]
        %v4834 = vld [vmem:[%s4826 + $0x38] sm:$0xff]
        %v4836 = vsel %vm413, %v4778, 0
        %v4839 = vsel %vm413, %v4779, 0
        %v4842 = vsel %vm413, %v4780, 0
        %v4845 = vsel %vm413, %v4781, 0
        %v4848 = vsel %vm413, %v4782, 0
        %v4851 = vsel %vm413, %v4783, 0
        %v4854 = vsel %vm413, %v4784, 0
        %v4857 = vsel %vm413, %v4785, 0
        %v4860 = vsel %vm413, %v4786, 0
        %v4863 = vsel %vm413, %v4787, 0
        %v4866 = vsel %vm413, %v4788, 0
        %v4869 = vsel %vm413, %v4789, 0
        %v4872 = vsel %vm413, %v4790, 0
        %v4875 = vsel %vm413, %v4791, 0
        %v4878 = vsel %vm413, %v4792, 0
        %v4881 = vsel %vm413, %v4793, 0
        %v4884 = vsel %vm413, %v4794, 0
        %v4887 = vsel %vm413, %v4795, 0
        %v4890 = vsel %vm413, %v4796, 0
        %v4893 = vsel %vm413, %v4797, 0
        %v4896 = vsel %vm413, %v4798, 0
        %v4899 = vsel %vm413, %v4799, 0
        %v4902 = vsel %vm413, %v4800, 0
        %v4905 = vsel %vm413, %v4801, 0
        %v4908 = vsel %vm413, %v4802, 0
        %v4911 = vsel %vm413, %v4803, 0
        %v4914 = vsel %vm413, %v4804, 0
        %v4917 = vsel %vm413, %v4805, 0
        %v4920 = vsel %vm413, %v4806, 0
        %v4923 = vsel %vm413, %v4807, 0
        %v4926 = vsel %vm413, %v4808, 0
        %v4929 = vsel %vm413, %v4809, 0
        %v4932 = vsel %vm413, %v4810, 0
        %v4935 = vsel %vm413, %v4811, 0
        %v4938 = vsel %vm413, %v4812, 0
        %v4941 = vsel %vm413, %v4813, 0
        %v4944 = vsel %vm413, %v4814, 0
        %v4947 = vsel %vm413, %v4815, 0
        %v4950 = vsel %vm413, %v4816, 0
        %v4953 = vsel %vm413, %v4817, 0
        %v4956 = vsel %vm413, %v4818, 0
        %v4959 = vsel %vm413, %v4819, 0
        %v4962 = vsel %vm413, %v4820, 0
        %v4965 = vsel %vm413, %v4821, 0
        %v4968 = vsel %vm413, %v4822, 0
        %v4971 = vsel %vm413, %v4823, 0
        %v4974 = vsel %vm413, %v4824, 0
        %v4977 = vsel %vm413, %v4825, 0
        %4979 = vmatpush.msra.mxu0 0.0
        %4980 = vmatpush.msra.mxu0 0.0
        %4981 = vmatpush.msra.mxu0 0.0
        %4982 = vmatpush.msra.mxu0 0.0
        %4983 = vmatpush.msra.mxu0 0.0
        %4984 = vmatpush.msra.mxu0 0.0
        %4985 = vmatpush.msra.mxu0 0.0
        %4986 = vmatpush.msra.mxu0 0.0
        %4987 = vmatpush.msra.mxu0 %v4834
        %4988 = vmatpush.msra.mxu0 %v4833
        %4989 = vmatpush.msra.mxu0 %v4832
        %4990 = vmatpush.msra.mxu0 %v4831
        %4991 = vmatpush.msra.mxu0 %v4830
        %4992 = vmatpush.msra.mxu0 %v4829
        %4993 = vmatpush.msra.mxu0 %v4828
        %4994 = vmatpush.msra.mxu0 %v4827
        %4995 = vmatmul.f32.gmra.mxu0 %v4836
        %v4996 = vpop.f32.mrf.mxu0
        %v4997 = vadd.f32 0.0, %v4996
        %4998 = vmatmul.f32.gmra.mxu0 %v4839
        %v4999 = vpop.f32.mrf.mxu0
        %v5000 = vadd.f32 0.0, %v4999
        %5001 = vmatmul.f32.gmra.mxu0 %v4842
        %v5002 = vpop.f32.mrf.mxu0
        %v5003 = vadd.f32 0.0, %v5002
        %5004 = vmatmul.f32.gmra.mxu0 %v4845
        %v5005 = vpop.f32.mrf.mxu0
        %v5006 = vadd.f32 0.0, %v5005
        %5007 = vmatmul.f32.gmra.mxu0 %v4848
        %v5008 = vpop.f32.mrf.mxu0
        %v5009 = vadd.f32 0.0, %v5008
        %5010 = vmatmul.f32.gmra.mxu0 %v4851
        %v5011 = vpop.f32.mrf.mxu0
        %v5012 = vadd.f32 0.0, %v5011
        %5013 = vmatmul.f32.gmra.mxu0 %v4854
        %v5014 = vpop.f32.mrf.mxu0
        %v5015 = vadd.f32 0.0, %v5014
        %5016 = vmatmul.f32.gmra.mxu0 %v4857
        %v5017 = vpop.f32.mrf.mxu0
        %v5018 = vadd.f32 0.0, %v5017
        %5019 = vmatmul.f32.gmra.mxu0 %v4860
        %v5020 = vpop.f32.mrf.mxu0
        %v5021 = vadd.f32 0.0, %v5020
        %5022 = vmatmul.f32.gmra.mxu0 %v4863
        %v5023 = vpop.f32.mrf.mxu0
        %v5024 = vadd.f32 0.0, %v5023
        %5025 = vmatmul.f32.gmra.mxu0 %v4866
        %v5026 = vpop.f32.mrf.mxu0
        %v5027 = vadd.f32 0.0, %v5026
        %5028 = vmatmul.f32.gmra.mxu0 %v4869
        %v5029 = vpop.f32.mrf.mxu0
        %v5030 = vadd.f32 0.0, %v5029
        %5031 = vmatmul.f32.gmra.mxu0 %v4872
        %v5032 = vpop.f32.mrf.mxu0
        %v5033 = vadd.f32 0.0, %v5032
        %5034 = vmatmul.f32.gmra.mxu0 %v4875
        %v5035 = vpop.f32.mrf.mxu0
        %v5036 = vadd.f32 0.0, %v5035
        %5037 = vmatmul.f32.gmra.mxu0 %v4878
        %v5038 = vpop.f32.mrf.mxu0
        %v5039 = vadd.f32 0.0, %v5038
        %5040 = vmatmul.f32.gmra.mxu0 %v4881
        %v5041 = vpop.f32.mrf.mxu0
        %v5042 = vadd.f32 0.0, %v5041
        %5043 = vmatmul.f32.gmra.mxu0 %v4884
        %v5044 = vpop.f32.mrf.mxu0
        %v5045 = vadd.f32 0.0, %v5044
        %5046 = vmatmul.f32.gmra.mxu0 %v4887
        %v5047 = vpop.f32.mrf.mxu0
        %v5048 = vadd.f32 0.0, %v5047
        %5049 = vmatmul.f32.gmra.mxu0 %v4890
        %v5050 = vpop.f32.mrf.mxu0
        %v5051 = vadd.f32 0.0, %v5050
        %5052 = vmatmul.f32.gmra.mxu0 %v4893
        %v5053 = vpop.f32.mrf.mxu0
        %v5054 = vadd.f32 0.0, %v5053
        %5055 = vmatmul.f32.gmra.mxu0 %v4896
        %v5056 = vpop.f32.mrf.mxu0
        %v5057 = vadd.f32 0.0, %v5056
        %5058 = vmatmul.f32.gmra.mxu0 %v4899
        %v5059 = vpop.f32.mrf.mxu0
        %v5060 = vadd.f32 0.0, %v5059
        %5061 = vmatmul.f32.gmra.mxu0 %v4902
        %v5062 = vpop.f32.mrf.mxu0
        %v5063 = vadd.f32 0.0, %v5062
        %5064 = vmatmul.f32.gmra.mxu0 %v4905
        %v5065 = vpop.f32.mrf.mxu0
        %v5066 = vadd.f32 0.0, %v5065
        %5067 = vmatmul.f32.gmra.mxu0 %v4908
        %v5068 = vpop.f32.mrf.mxu0
        %v5069 = vadd.f32 0.0, %v5068
        %5070 = vmatmul.f32.gmra.mxu0 %v4911
        %v5071 = vpop.f32.mrf.mxu0
        %v5072 = vadd.f32 0.0, %v5071
        %5073 = vmatmul.f32.gmra.mxu0 %v4914
        %v5074 = vpop.f32.mrf.mxu0
        %v5075 = vadd.f32 0.0, %v5074
        %5076 = vmatmul.f32.gmra.mxu0 %v4917
        %v5077 = vpop.f32.mrf.mxu0
        %v5078 = vadd.f32 0.0, %v5077
        %5079 = vmatmul.f32.gmra.mxu0 %v4920
        %v5080 = vpop.f32.mrf.mxu0
        %v5081 = vadd.f32 0.0, %v5080
        %5082 = vmatmul.f32.gmra.mxu0 %v4923
        %v5083 = vpop.f32.mrf.mxu0
        %v5084 = vadd.f32 0.0, %v5083
        %5085 = vmatmul.f32.gmra.mxu0 %v4926
        %v5086 = vpop.f32.mrf.mxu0
        %v5087 = vadd.f32 0.0, %v5086
        %5088 = vmatmul.f32.gmra.mxu0 %v4929
        %v5089 = vpop.f32.mrf.mxu0
        %v5090 = vadd.f32 0.0, %v5089
        %5091 = vmatmul.f32.gmra.mxu0 %v4932
        %v5092 = vpop.f32.mrf.mxu0
        %v5093 = vadd.f32 0.0, %v5092
        %5094 = vmatmul.f32.gmra.mxu0 %v4935
        %v5095 = vpop.f32.mrf.mxu0
        %v5096 = vadd.f32 0.0, %v5095
        %5097 = vmatmul.f32.gmra.mxu0 %v4938
        %v5098 = vpop.f32.mrf.mxu0
        %v5099 = vadd.f32 0.0, %v5098
        %5100 = vmatmul.f32.gmra.mxu0 %v4941
        %v5101 = vpop.f32.mrf.mxu0
        %v5102 = vadd.f32 0.0, %v5101
        %5103 = vmatmul.f32.gmra.mxu0 %v4944
        %v5104 = vpop.f32.mrf.mxu0
        %v5105 = vadd.f32 0.0, %v5104
        %5106 = vmatmul.f32.gmra.mxu0 %v4947
        %v5107 = vpop.f32.mrf.mxu0
        %v5108 = vadd.f32 0.0, %v5107
        %5109 = vmatmul.f32.gmra.mxu0 %v4950
        %v5110 = vpop.f32.mrf.mxu0
        %v5111 = vadd.f32 0.0, %v5110
        %5112 = vmatmul.f32.gmra.mxu0 %v4953
        %v5113 = vpop.f32.mrf.mxu0
        %v5114 = vadd.f32 0.0, %v5113
        %5115 = vmatmul.f32.gmra.mxu0 %v4956
        %v5116 = vpop.f32.mrf.mxu0
        %v5117 = vadd.f32 0.0, %v5116
        %5118 = vmatmul.f32.gmra.mxu0 %v4959
        %v5119 = vpop.f32.mrf.mxu0
        %v5120 = vadd.f32 0.0, %v5119
        %5121 = vmatmul.f32.gmra.mxu0 %v4962
        %v5122 = vpop.f32.mrf.mxu0
        %v5123 = vadd.f32 0.0, %v5122
        %5124 = vmatmul.f32.gmra.mxu0 %v4965
        %v5125 = vpop.f32.mrf.mxu0
        %v5126 = vadd.f32 0.0, %v5125
        %5127 = vmatmul.f32.gmra.mxu0 %v4968
        %v5128 = vpop.f32.mrf.mxu0
        %v5129 = vadd.f32 0.0, %v5128
        %5130 = vmatmul.f32.gmra.mxu0 %v4971
        %v5131 = vpop.f32.mrf.mxu0
        %v5132 = vadd.f32 0.0, %v5131
        %5133 = vmatmul.f32.gmra.mxu0 %v4974
        %v5134 = vpop.f32.mrf.mxu0
        %v5135 = vadd.f32 0.0, %v5134
        %5136 = vmatmul.f32.gmra.mxu0 %v4977
        %v5137 = vpop.f32.mrf.mxu0
        %v5138 = vadd.f32 0.0, %v5137
        %5139 = vdwg.mxu0
        %v5140 = vadd.f32 %v4635, %v4997
        %v5141 = vadd.f32 %v4638, %v5000
        %v5142 = vadd.f32 %v4641, %v5003
        %v5143 = vadd.f32 %v4644, %v5006
        %v5144 = vadd.f32 %v4647, %v5009
        %v5145 = vadd.f32 %v4650, %v5012
        %v5146 = vadd.f32 %v4653, %v5015
        %v5147 = vadd.f32 %v4656, %v5018
        %v5148 = vadd.f32 %v4659, %v5021
        %v5149 = vadd.f32 %v4662, %v5024
        %v5150 = vadd.f32 %v4665, %v5027
        %v5151 = vadd.f32 %v4668, %v5030
        %v5152 = vadd.f32 %v4671, %v5033
        %v5153 = vadd.f32 %v4674, %v5036
        %v5154 = vadd.f32 %v4677, %v5039
        %v5155 = vadd.f32 %v4680, %v5042
        %v5156 = vadd.f32 %v4683, %v5045
        %v5157 = vadd.f32 %v4686, %v5048
        %v5158 = vadd.f32 %v4689, %v5051
        %v5159 = vadd.f32 %v4692, %v5054
        %v5160 = vadd.f32 %v4695, %v5057
        %v5161 = vadd.f32 %v4698, %v5060
        %v5162 = vadd.f32 %v4701, %v5063
        %v5163 = vadd.f32 %v4704, %v5066
        %v5164 = vadd.f32 %v4707, %v5069
        %v5165 = vadd.f32 %v4710, %v5072
        %v5166 = vadd.f32 %v4713, %v5075
        %v5167 = vadd.f32 %v4716, %v5078
        %v5168 = vadd.f32 %v4719, %v5081
        %v5169 = vadd.f32 %v4722, %v5084
        %v5170 = vadd.f32 %v4725, %v5087
        %v5171 = vadd.f32 %v4728, %v5090
        %v5172 = vadd.f32 %v4731, %v5093
        %v5173 = vadd.f32 %v4734, %v5096
        %v5174 = vadd.f32 %v4737, %v5099
        %v5175 = vadd.f32 %v4740, %v5102
        %v5176 = vadd.f32 %v4743, %v5105
        %v5177 = vadd.f32 %v4746, %v5108
        %v5178 = vadd.f32 %v4749, %v5111
        %v5179 = vadd.f32 %v4752, %v5114
        %v5180 = vadd.f32 %v4755, %v5117
        %v5181 = vadd.f32 %v4758, %v5120
        %v5182 = vadd.f32 %v4761, %v5123
        %v5183 = vadd.f32 %v4764, %v5126
        %v5184 = vadd.f32 %v4767, %v5129
        %v5185 = vadd.f32 %v4770, %v5132
        %v5186 = vadd.f32 %v4773, %v5135
        %v5187 = vadd.f32 %v4776, %v5138
        %v5188 = vld [vmem:[#allocation3 + $0x16] sm:$0xff]
        %v5189 = vld [vmem:[#allocation3 + $0x1e] sm:$0xff]
        %v5190 = vld [vmem:[#allocation3 + $0x26] sm:$0xff]
        %v5191 = vld [vmem:[#allocation3 + $0x2e] sm:$0xff]
        %v5192 = vld [vmem:[#allocation3 + $0x36] sm:$0xff]
        %v5193 = vld [vmem:[#allocation3 + $0x3e] sm:$0xff]
        %v5194 = vld [vmem:[#allocation3 + $0x46] sm:$0xff]
        %v5195 = vld [vmem:[#allocation3 + $0x4e] sm:$0xff]
        %v5196 = vld [vmem:[#allocation3 + $0x56] sm:$0xff]
        %v5197 = vld [vmem:[#allocation3 + $0x5e] sm:$0xff]
        %v5198 = vld [vmem:[#allocation3 + $0x66] sm:$0xff]
        %v5199 = vld [vmem:[#allocation3 + $0x6e] sm:$0xff]
        %v5200 = vld [vmem:[#allocation3 + $0x76] sm:$0xff]
        %v5201 = vld [vmem:[#allocation3 + $0x7e] sm:$0xff]
        %v5202 = vld [vmem:[#allocation3 + $0x86] sm:$0xff]
        %v5203 = vld [vmem:[#allocation3 + $0x8e] sm:$0xff]
        %v5204 = vld [vmem:[#allocation3 + $0x96] sm:$0xff]
        %v5205 = vld [vmem:[#allocation3 + $0x9e] sm:$0xff]
        %v5206 = vld [vmem:[#allocation3 + $0xa6] sm:$0xff]
        %v5207 = vld [vmem:[#allocation3 + $0xae] sm:$0xff]
        %v5208 = vld [vmem:[#allocation3 + $0xb6] sm:$0xff]
        %v5209 = vld [vmem:[#allocation3 + $0xbe] sm:$0xff]
        %v5210 = vld [vmem:[#allocation3 + $0xc6] sm:$0xff]
        %v5211 = vld [vmem:[#allocation3 + $0xce] sm:$0xff]
        %v5212 = vld [vmem:[#allocation3 + $0xd6] sm:$0xff]
        %v5213 = vld [vmem:[#allocation3 + $0xde] sm:$0xff]
        %v5214 = vld [vmem:[#allocation3 + $0xe6] sm:$0xff]
        %v5215 = vld [vmem:[#allocation3 + $0xee] sm:$0xff]
        %v5216 = vld [vmem:[#allocation3 + $0xf6] sm:$0xff]
        %v5217 = vld [vmem:[#allocation3 + $0xfe] sm:$0xff]
        %v5218 = vld [vmem:[#allocation3 + $0x106] sm:$0xff]
        %v5219 = vld [vmem:[#allocation3 + $0x10e] sm:$0xff]
        %v5220 = vld [vmem:[#allocation3 + $0x116] sm:$0xff]
        %v5221 = vld [vmem:[#allocation3 + $0x11e] sm:$0xff]
        %v5222 = vld [vmem:[#allocation3 + $0x126] sm:$0xff]
        %v5223 = vld [vmem:[#allocation3 + $0x12e] sm:$0xff]
        %v5224 = vld [vmem:[#allocation3 + $0x136] sm:$0xff]
        %v5225 = vld [vmem:[#allocation3 + $0x13e] sm:$0xff]
        %v5226 = vld [vmem:[#allocation3 + $0x146] sm:$0xff]
        %v5227 = vld [vmem:[#allocation3 + $0x14e] sm:$0xff]
        %v5228 = vld [vmem:[#allocation3 + $0x156] sm:$0xff]
        %v5229 = vld [vmem:[#allocation3 + $0x15e] sm:$0xff]
        %v5230 = vld [vmem:[#allocation3 + $0x166] sm:$0xff]
        %v5231 = vld [vmem:[#allocation3 + $0x16e] sm:$0xff]
        %v5232 = vld [vmem:[#allocation3 + $0x176] sm:$0xff]
        %v5233 = vld [vmem:[#allocation3 + $0x17e] sm:$0xff]
        %v5234 = vld [vmem:[#allocation3 + $0x186] sm:$0xff]
        %v5235 = vld [vmem:[#allocation3 + $0x18e] sm:$0x3]
        %s5236 = scalar_lea.vmem [#allocation9], 192
        %v5237 = vld [vmem:[%s5236] sm:$0xff]
        %v5238 = vld [vmem:[%s5236 + $0x8] sm:$0xff]
        %v5239 = vld [vmem:[%s5236 + $0x10] sm:$0xff]
        %v5240 = vld [vmem:[%s5236 + $0x18] sm:$0xff]
        %v5241 = vld [vmem:[%s5236 + $0x20] sm:$0xff]
        %v5242 = vld [vmem:[%s5236 + $0x28] sm:$0xff]
        %v5243 = vld [vmem:[%s5236 + $0x30] sm:$0xff]
        %v5244 = vld [vmem:[%s5236 + $0x38] sm:$0xff]
        %v5246 = vsel %vm413, %v5188, 0
        %v5249 = vsel %vm413, %v5189, 0
        %v5252 = vsel %vm413, %v5190, 0
        %v5255 = vsel %vm413, %v5191, 0
        %v5258 = vsel %vm413, %v5192, 0
        %v5261 = vsel %vm413, %v5193, 0
        %v5264 = vsel %vm413, %v5194, 0
        %v5267 = vsel %vm413, %v5195, 0
        %v5270 = vsel %vm413, %v5196, 0
        %v5273 = vsel %vm413, %v5197, 0
        %v5276 = vsel %vm413, %v5198, 0
        %v5279 = vsel %vm413, %v5199, 0
        %v5282 = vsel %vm413, %v5200, 0
        %v5285 = vsel %vm413, %v5201, 0
        %v5288 = vsel %vm413, %v5202, 0
        %v5291 = vsel %vm413, %v5203, 0
        %v5294 = vsel %vm413, %v5204, 0
        %v5297 = vsel %vm413, %v5205, 0
        %v5300 = vsel %vm413, %v5206, 0
        %v5303 = vsel %vm413, %v5207, 0
        %v5306 = vsel %vm413, %v5208, 0
        %v5309 = vsel %vm413, %v5209, 0
        %v5312 = vsel %vm413, %v5210, 0
        %v5315 = vsel %vm413, %v5211, 0
        %v5318 = vsel %vm413, %v5212, 0
        %v5321 = vsel %vm413, %v5213, 0
        %v5324 = vsel %vm413, %v5214, 0
        %v5327 = vsel %vm413, %v5215, 0
        %v5330 = vsel %vm413, %v5216, 0
        %v5333 = vsel %vm413, %v5217, 0
        %v5336 = vsel %vm413, %v5218, 0
        %v5339 = vsel %vm413, %v5219, 0
        %v5342 = vsel %vm413, %v5220, 0
        %v5345 = vsel %vm413, %v5221, 0
        %v5348 = vsel %vm413, %v5222, 0
        %v5351 = vsel %vm413, %v5223, 0
        %v5354 = vsel %vm413, %v5224, 0
        %v5357 = vsel %vm413, %v5225, 0
        %v5360 = vsel %vm413, %v5226, 0
        %v5363 = vsel %vm413, %v5227, 0
        %v5366 = vsel %vm413, %v5228, 0
        %v5369 = vsel %vm413, %v5229, 0
        %v5372 = vsel %vm413, %v5230, 0
        %v5375 = vsel %vm413, %v5231, 0
        %v5378 = vsel %vm413, %v5232, 0
        %v5381 = vsel %vm413, %v5233, 0
        %v5384 = vsel %vm413, %v5234, 0
        %v5387 = vsel %vm413, %v5235, 0
        %5389 = vmatpush.msra.mxu0 0.0
        %5390 = vmatpush.msra.mxu0 0.0
        %5391 = vmatpush.msra.mxu0 0.0
        %5392 = vmatpush.msra.mxu0 0.0
        %5393 = vmatpush.msra.mxu0 0.0
        %5394 = vmatpush.msra.mxu0 0.0
        %5395 = vmatpush.msra.mxu0 0.0
        %5396 = vmatpush.msra.mxu0 0.0
        %5397 = vmatpush.msra.mxu0 %v5244
        %5398 = vmatpush.msra.mxu0 %v5243
        %5399 = vmatpush.msra.mxu0 %v5242
        %5400 = vmatpush.msra.mxu0 %v5241
        %5401 = vmatpush.msra.mxu0 %v5240
        %5402 = vmatpush.msra.mxu0 %v5239
        %5403 = vmatpush.msra.mxu0 %v5238
        %5404 = vmatpush.msra.mxu0 %v5237
        %5405 = vmatmul.f32.gmra.mxu0 %v5246
        %v5406 = vpop.f32.mrf.mxu0
        %v5407 = vadd.f32 0.0, %v5406
        %5408 = vmatmul.f32.gmra.mxu0 %v5249
        %v5409 = vpop.f32.mrf.mxu0
        %v5410 = vadd.f32 0.0, %v5409
        %5411 = vmatmul.f32.gmra.mxu0 %v5252
        %v5412 = vpop.f32.mrf.mxu0
        %v5413 = vadd.f32 0.0, %v5412
        %5414 = vmatmul.f32.gmra.mxu0 %v5255
        %v5415 = vpop.f32.mrf.mxu0
        %v5416 = vadd.f32 0.0, %v5415
        %5417 = vmatmul.f32.gmra.mxu0 %v5258
        %v5418 = vpop.f32.mrf.mxu0
        %v5419 = vadd.f32 0.0, %v5418
        %5420 = vmatmul.f32.gmra.mxu0 %v5261
        %v5421 = vpop.f32.mrf.mxu0
        %v5422 = vadd.f32 0.0, %v5421
        %5423 = vmatmul.f32.gmra.mxu0 %v5264
        %v5424 = vpop.f32.mrf.mxu0
        %v5425 = vadd.f32 0.0, %v5424
        %5426 = vmatmul.f32.gmra.mxu0 %v5267
        %v5427 = vpop.f32.mrf.mxu0
        %v5428 = vadd.f32 0.0, %v5427
        %5429 = vmatmul.f32.gmra.mxu0 %v5270
        %v5430 = vpop.f32.mrf.mxu0
        %v5431 = vadd.f32 0.0, %v5430
        %5432 = vmatmul.f32.gmra.mxu0 %v5273
        %v5433 = vpop.f32.mrf.mxu0
        %v5434 = vadd.f32 0.0, %v5433
        %5435 = vmatmul.f32.gmra.mxu0 %v5276
        %v5436 = vpop.f32.mrf.mxu0
        %v5437 = vadd.f32 0.0, %v5436
        %5438 = vmatmul.f32.gmra.mxu0 %v5279
        %v5439 = vpop.f32.mrf.mxu0
        %v5440 = vadd.f32 0.0, %v5439
        %5441 = vmatmul.f32.gmra.mxu0 %v5282
        %v5442 = vpop.f32.mrf.mxu0
        %v5443 = vadd.f32 0.0, %v5442
        %5444 = vmatmul.f32.gmra.mxu0 %v5285
        %v5445 = vpop.f32.mrf.mxu0
        %v5446 = vadd.f32 0.0, %v5445
        %5447 = vmatmul.f32.gmra.mxu0 %v5288
        %v5448 = vpop.f32.mrf.mxu0
        %v5449 = vadd.f32 0.0, %v5448
        %5450 = vmatmul.f32.gmra.mxu0 %v5291
        %v5451 = vpop.f32.mrf.mxu0
        %v5452 = vadd.f32 0.0, %v5451
        %5453 = vmatmul.f32.gmra.mxu0 %v5294
        %v5454 = vpop.f32.mrf.mxu0
        %v5455 = vadd.f32 0.0, %v5454
        %5456 = vmatmul.f32.gmra.mxu0 %v5297
        %v5457 = vpop.f32.mrf.mxu0
        %v5458 = vadd.f32 0.0, %v5457
        %5459 = vmatmul.f32.gmra.mxu0 %v5300
        %v5460 = vpop.f32.mrf.mxu0
        %v5461 = vadd.f32 0.0, %v5460
        %5462 = vmatmul.f32.gmra.mxu0 %v5303
        %v5463 = vpop.f32.mrf.mxu0
        %v5464 = vadd.f32 0.0, %v5463
        %5465 = vmatmul.f32.gmra.mxu0 %v5306
        %v5466 = vpop.f32.mrf.mxu0
        %v5467 = vadd.f32 0.0, %v5466
        %5468 = vmatmul.f32.gmra.mxu0 %v5309
        %v5469 = vpop.f32.mrf.mxu0
        %v5470 = vadd.f32 0.0, %v5469
        %5471 = vmatmul.f32.gmra.mxu0 %v5312
        %v5472 = vpop.f32.mrf.mxu0
        %v5473 = vadd.f32 0.0, %v5472
        %5474 = vmatmul.f32.gmra.mxu0 %v5315
        %v5475 = vpop.f32.mrf.mxu0
        %v5476 = vadd.f32 0.0, %v5475
        %5477 = vmatmul.f32.gmra.mxu0 %v5318
        %v5478 = vpop.f32.mrf.mxu0
        %v5479 = vadd.f32 0.0, %v5478
        %5480 = vmatmul.f32.gmra.mxu0 %v5321
        %v5481 = vpop.f32.mrf.mxu0
        %v5482 = vadd.f32 0.0, %v5481
        %5483 = vmatmul.f32.gmra.mxu0 %v5324
        %v5484 = vpop.f32.mrf.mxu0
        %v5485 = vadd.f32 0.0, %v5484
        %5486 = vmatmul.f32.gmra.mxu0 %v5327
        %v5487 = vpop.f32.mrf.mxu0
        %v5488 = vadd.f32 0.0, %v5487
        %5489 = vmatmul.f32.gmra.mxu0 %v5330
        %v5490 = vpop.f32.mrf.mxu0
        %v5491 = vadd.f32 0.0, %v5490
        %5492 = vmatmul.f32.gmra.mxu0 %v5333
        %v5493 = vpop.f32.mrf.mxu0
        %v5494 = vadd.f32 0.0, %v5493
        %5495 = vmatmul.f32.gmra.mxu0 %v5336
        %v5496 = vpop.f32.mrf.mxu0
        %v5497 = vadd.f32 0.0, %v5496
        %5498 = vmatmul.f32.gmra.mxu0 %v5339
        %v5499 = vpop.f32.mrf.mxu0
        %v5500 = vadd.f32 0.0, %v5499
        %5501 = vmatmul.f32.gmra.mxu0 %v5342
        %v5502 = vpop.f32.mrf.mxu0
        %v5503 = vadd.f32 0.0, %v5502
        %5504 = vmatmul.f32.gmra.mxu0 %v5345
        %v5505 = vpop.f32.mrf.mxu0
        %v5506 = vadd.f32 0.0, %v5505
        %5507 = vmatmul.f32.gmra.mxu0 %v5348
        %v5508 = vpop.f32.mrf.mxu0
        %v5509 = vadd.f32 0.0, %v5508
        %5510 = vmatmul.f32.gmra.mxu0 %v5351
        %v5511 = vpop.f32.mrf.mxu0
        %v5512 = vadd.f32 0.0, %v5511
        %5513 = vmatmul.f32.gmra.mxu0 %v5354
        %v5514 = vpop.f32.mrf.mxu0
        %v5515 = vadd.f32 0.0, %v5514
        %5516 = vmatmul.f32.gmra.mxu0 %v5357
        %v5517 = vpop.f32.mrf.mxu0
        %v5518 = vadd.f32 0.0, %v5517
        %5519 = vmatmul.f32.gmra.mxu0 %v5360
        %v5520 = vpop.f32.mrf.mxu0
        %v5521 = vadd.f32 0.0, %v5520
        %5522 = vmatmul.f32.gmra.mxu0 %v5363
        %v5523 = vpop.f32.mrf.mxu0
        %v5524 = vadd.f32 0.0, %v5523
        %5525 = vmatmul.f32.gmra.mxu0 %v5366
        %v5526 = vpop.f32.mrf.mxu0
        %v5527 = vadd.f32 0.0, %v5526
        %5528 = vmatmul.f32.gmra.mxu0 %v5369
        %v5529 = vpop.f32.mrf.mxu0
        %v5530 = vadd.f32 0.0, %v5529
        %5531 = vmatmul.f32.gmra.mxu0 %v5372
        %v5532 = vpop.f32.mrf.mxu0
        %v5533 = vadd.f32 0.0, %v5532
        %5534 = vmatmul.f32.gmra.mxu0 %v5375
        %v5535 = vpop.f32.mrf.mxu0
        %v5536 = vadd.f32 0.0, %v5535
        %5537 = vmatmul.f32.gmra.mxu0 %v5378
        %v5538 = vpop.f32.mrf.mxu0
        %v5539 = vadd.f32 0.0, %v5538
        %5540 = vmatmul.f32.gmra.mxu0 %v5381
        %v5541 = vpop.f32.mrf.mxu0
        %v5542 = vadd.f32 0.0, %v5541
        %5543 = vmatmul.f32.gmra.mxu0 %v5384
        %v5544 = vpop.f32.mrf.mxu0
        %v5545 = vadd.f32 0.0, %v5544
        %5546 = vmatmul.f32.gmra.mxu0 %v5387
        %v5547 = vpop.f32.mrf.mxu0
        %v5548 = vadd.f32 0.0, %v5547
        %5549 = vdwg.mxu0
        %v5550 = vadd.f32 %v5140, %v5407
        %v5551 = vadd.f32 %v5141, %v5410
        %v5552 = vadd.f32 %v5142, %v5413
        %v5553 = vadd.f32 %v5143, %v5416
        %v5554 = vadd.f32 %v5144, %v5419
        %v5555 = vadd.f32 %v5145, %v5422
        %v5556 = vadd.f32 %v5146, %v5425
        %v5557 = vadd.f32 %v5147, %v5428
        %v5558 = vadd.f32 %v5148, %v5431
        %v5559 = vadd.f32 %v5149, %v5434
        %v5560 = vadd.f32 %v5150, %v5437
        %v5561 = vadd.f32 %v5151, %v5440
        %v5562 = vadd.f32 %v5152, %v5443
        %v5563 = vadd.f32 %v5153, %v5446
        %v5564 = vadd.f32 %v5154, %v5449
        %v5565 = vadd.f32 %v5155, %v5452
        %v5566 = vadd.f32 %v5156, %v5455
        %v5567 = vadd.f32 %v5157, %v5458
        %v5568 = vadd.f32 %v5158, %v5461
        %v5569 = vadd.f32 %v5159, %v5464
        %v5570 = vadd.f32 %v5160, %v5467
        %v5571 = vadd.f32 %v5161, %v5470
        %v5572 = vadd.f32 %v5162, %v5473
        %v5573 = vadd.f32 %v5163, %v5476
        %v5574 = vadd.f32 %v5164, %v5479
        %v5575 = vadd.f32 %v5165, %v5482
        %v5576 = vadd.f32 %v5166, %v5485
        %v5577 = vadd.f32 %v5167, %v5488
        %v5578 = vadd.f32 %v5168, %v5491
        %v5579 = vadd.f32 %v5169, %v5494
        %v5580 = vadd.f32 %v5170, %v5497
        %v5581 = vadd.f32 %v5171, %v5500
        %v5582 = vadd.f32 %v5172, %v5503
        %v5583 = vadd.f32 %v5173, %v5506
        %v5584 = vadd.f32 %v5174, %v5509
        %v5585 = vadd.f32 %v5175, %v5512
        %v5586 = vadd.f32 %v5176, %v5515
        %v5587 = vadd.f32 %v5177, %v5518
        %v5588 = vadd.f32 %v5178, %v5521
        %v5589 = vadd.f32 %v5179, %v5524
        %v5590 = vadd.f32 %v5180, %v5527
        %v5591 = vadd.f32 %v5181, %v5530
        %v5592 = vadd.f32 %v5182, %v5533
        %v5593 = vadd.f32 %v5183, %v5536
        %v5594 = vadd.f32 %v5184, %v5539
        %v5595 = vadd.f32 %v5185, %v5542
        %v5596 = vadd.f32 %v5186, %v5545
        %v5597 = vadd.f32 %v5187, %v5548
        %v5598 = vld [vmem:[#allocation11] sm:$0x1]
        %v5600 = vperm.slane %v5598, 0
        %v5602 = vadd.f32 %v5550, %v5600
        %v5603 = vadd.f32 %v5551, %v5600
        %v5604 = vadd.f32 %v5552, %v5600
        %v5605 = vadd.f32 %v5553, %v5600
        %v5606 = vadd.f32 %v5554, %v5600
        %v5607 = vadd.f32 %v5555, %v5600
        %v5608 = vadd.f32 %v5556, %v5600
        %v5609 = vadd.f32 %v5557, %v5600
        %v5610 = vadd.f32 %v5558, %v5600
        %v5611 = vadd.f32 %v5559, %v5600
        %v5612 = vadd.f32 %v5560, %v5600
        %v5613 = vadd.f32 %v5561, %v5600
        %v5614 = vadd.f32 %v5562, %v5600
        %v5615 = vadd.f32 %v5563, %v5600
        %v5616 = vadd.f32 %v5564, %v5600
        %v5617 = vadd.f32 %v5565, %v5600
        %v5618 = vadd.f32 %v5566, %v5600
        %v5619 = vadd.f32 %v5567, %v5600
        %v5620 = vadd.f32 %v5568, %v5600
        %v5621 = vadd.f32 %v5569, %v5600
        %v5622 = vadd.f32 %v5570, %v5600
        %v5623 = vadd.f32 %v5571, %v5600
        %v5624 = vadd.f32 %v5572, %v5600
        %v5625 = vadd.f32 %v5573, %v5600
        %v5626 = vadd.f32 %v5574, %v5600
        %v5627 = vadd.f32 %v5575, %v5600
        %v5628 = vadd.f32 %v5576, %v5600
        %v5629 = vadd.f32 %v5577, %v5600
        %v5630 = vadd.f32 %v5578, %v5600
        %v5631 = vadd.f32 %v5579, %v5600
        %v5632 = vadd.f32 %v5580, %v5600
        %v5633 = vadd.f32 %v5581, %v5600
        %v5634 = vadd.f32 %v5582, %v5600
        %v5635 = vadd.f32 %v5583, %v5600
        %v5636 = vadd.f32 %v5584, %v5600
        %v5637 = vadd.f32 %v5585, %v5600
        %v5638 = vadd.f32 %v5586, %v5600
        %v5639 = vadd.f32 %v5587, %v5600
        %v5640 = vadd.f32 %v5588, %v5600
        %v5641 = vadd.f32 %v5589, %v5600
        %v5642 = vadd.f32 %v5590, %v5600
        %v5643 = vadd.f32 %v5591, %v5600
        %v5644 = vadd.f32 %v5592, %v5600
        %v5645 = vadd.f32 %v5593, %v5600
        %v5646 = vadd.f32 %v5594, %v5600
        %v5647 = vadd.f32 %v5595, %v5600
        %v5648 = vadd.f32 %v5596, %v5600
        %v5649 = vadd.f32 %v5597, %v5600
        %v5650 = vmax.f32 %v5602, 0.0
        %v5651 = vmax.f32 %v5603, 0.0
        %v5652 = vmax.f32 %v5604, 0.0
        %v5653 = vmax.f32 %v5605, 0.0
        %v5654 = vmax.f32 %v5606, 0.0
        %v5655 = vmax.f32 %v5607, 0.0
        %v5656 = vmax.f32 %v5608, 0.0
        %v5657 = vmax.f32 %v5609, 0.0
        %v5658 = vmax.f32 %v5610, 0.0
        %v5659 = vmax.f32 %v5611, 0.0
        %v5660 = vmax.f32 %v5612, 0.0
        %v5661 = vmax.f32 %v5613, 0.0
        %v5662 = vmax.f32 %v5614, 0.0
        %v5663 = vmax.f32 %v5615, 0.0
        %v5664 = vmax.f32 %v5616, 0.0
        %v5665 = vmax.f32 %v5617, 0.0
        %v5666 = vmax.f32 %v5618, 0.0
        %v5667 = vmax.f32 %v5619, 0.0
        %v5668 = vmax.f32 %v5620, 0.0
        %v5669 = vmax.f32 %v5621, 0.0
        %v5670 = vmax.f32 %v5622, 0.0
        %v5671 = vmax.f32 %v5623, 0.0
        %v5672 = vmax.f32 %v5624, 0.0
        %v5673 = vmax.f32 %v5625, 0.0
        %v5674 = vmax.f32 %v5626, 0.0
        %v5675 = vmax.f32 %v5627, 0.0
        %v5676 = vmax.f32 %v5628, 0.0
        %v5677 = vmax.f32 %v5629, 0.0
        %v5678 = vmax.f32 %v5630, 0.0
        %v5679 = vmax.f32 %v5631, 0.0
        %v5680 = vmax.f32 %v5632, 0.0
        %v5681 = vmax.f32 %v5633, 0.0
        %v5682 = vmax.f32 %v5634, 0.0
        %v5683 = vmax.f32 %v5635, 0.0
        %v5684 = vmax.f32 %v5636, 0.0
        %v5685 = vmax.f32 %v5637, 0.0
        %v5686 = vmax.f32 %v5638, 0.0
        %v5687 = vmax.f32 %v5639, 0.0
        %v5688 = vmax.f32 %v5640, 0.0
        %v5689 = vmax.f32 %v5641, 0.0
        %v5690 = vmax.f32 %v5642, 0.0
        %v5691 = vmax.f32 %v5643, 0.0
        %v5692 = vmax.f32 %v5644, 0.0
        %v5693 = vmax.f32 %v5645, 0.0
        %v5694 = vmax.f32 %v5646, 0.0
        %v5695 = vmax.f32 %v5647, 0.0
        %v5696 = vmax.f32 %v5648, 0.0
        %v5697 = vmax.f32 %v5649, 0.0
        %v5698 = vpack.c.bf16 %v5650, %v5650
        %v5699 = vpack.c.bf16 %v5651, %v5651
        %v5700 = vpack.c.bf16 %v5652, %v5652
        %v5701 = vpack.c.bf16 %v5653, %v5653
        %v5702 = vpack.c.bf16 %v5654, %v5654
        %v5703 = vpack.c.bf16 %v5655, %v5655
        %v5704 = vpack.c.bf16 %v5656, %v5656
        %v5705 = vpack.c.bf16 %v5657, %v5657
        %v5706 = vpack.c.bf16 %v5658, %v5658
        %v5707 = vpack.c.bf16 %v5659, %v5659
        %v5708 = vpack.c.bf16 %v5660, %v5660
        %v5709 = vpack.c.bf16 %v5661, %v5661
        %v5710 = vpack.c.bf16 %v5662, %v5662
        %v5711 = vpack.c.bf16 %v5663, %v5663
        %v5712 = vpack.c.bf16 %v5664, %v5664
        %v5713 = vpack.c.bf16 %v5665, %v5665
        %v5714 = vpack.c.bf16 %v5666, %v5666
        %v5715 = vpack.c.bf16 %v5667, %v5667
        %v5716 = vpack.c.bf16 %v5668, %v5668
        %v5717 = vpack.c.bf16 %v5669, %v5669
        %v5718 = vpack.c.bf16 %v5670, %v5670
        %v5719 = vpack.c.bf16 %v5671, %v5671
        %v5720 = vpack.c.bf16 %v5672, %v5672
        %v5721 = vpack.c.bf16 %v5673, %v5673
        %v5722 = vpack.c.bf16 %v5674, %v5674
        %v5723 = vpack.c.bf16 %v5675, %v5675
        %v5724 = vpack.c.bf16 %v5676, %v5676
        %v5725 = vpack.c.bf16 %v5677, %v5677
        %v5726 = vpack.c.bf16 %v5678, %v5678
        %v5727 = vpack.c.bf16 %v5679, %v5679
        %v5728 = vpack.c.bf16 %v5680, %v5680
        %v5729 = vpack.c.bf16 %v5681, %v5681
        %v5730 = vpack.c.bf16 %v5682, %v5682
        %v5731 = vpack.c.bf16 %v5683, %v5683
        %v5732 = vpack.c.bf16 %v5684, %v5684
        %v5733 = vpack.c.bf16 %v5685, %v5685
        %v5734 = vpack.c.bf16 %v5686, %v5686
        %v5735 = vpack.c.bf16 %v5687, %v5687
        %v5736 = vpack.c.bf16 %v5688, %v5688
        %v5737 = vpack.c.bf16 %v5689, %v5689
        %v5738 = vpack.c.bf16 %v5690, %v5690
        %v5739 = vpack.c.bf16 %v5691, %v5691
        %v5740 = vpack.c.bf16 %v5692, %v5692
        %v5741 = vpack.c.bf16 %v5693, %v5693
        %v5742 = vpack.c.bf16 %v5694, %v5694
        %v5743 = vpack.c.bf16 %v5695, %v5695
        %v5744 = vpack.c.bf16 %v5696, %v5696
        %v5745 = vpack.c.bf16 %v5697, %v5697
        %vm5746 = vcmask 519168
        %5747 = vst.msk [vmem:[%s355] sm:$0xf] %vm5746, %v5698
        %5748 = vst.msk [vmem:[%s355 + $0x4] sm:$0xf] %vm5746, %v5699
        %5749 = vst.msk [vmem:[%s355 + $0x8] sm:$0xf] %vm5746, %v5700
        %5750 = vst.msk [vmem:[%s355 + $0xc] sm:$0xf] %vm5746, %v5701
        %5751 = vst.msk [vmem:[%s355 + $0x10] sm:$0xf] %vm5746, %v5702
        %5752 = vst.msk [vmem:[%s355 + $0x14] sm:$0xf] %vm5746, %v5703
        %5753 = vst.msk [vmem:[%s355 + $0x18] sm:$0xf] %vm5746, %v5704
        %5754 = vst.msk [vmem:[%s355 + $0x1c] sm:$0xf] %vm5746, %v5705
        %5755 = vst.msk [vmem:[%s355 + $0x20] sm:$0xf] %vm5746, %v5706
        %5756 = vst.msk [vmem:[%s355 + $0x24] sm:$0xf] %vm5746, %v5707
        %5757 = vst.msk [vmem:[%s355 + $0x28] sm:$0xf] %vm5746, %v5708
        %5758 = vst.msk [vmem:[%s355 + $0x2c] sm:$0xf] %vm5746, %v5709
        %5759 = vst.msk [vmem:[%s355 + $0x30] sm:$0xf] %vm5746, %v5710
        %5760 = vst.msk [vmem:[%s355 + $0x34] sm:$0xf] %vm5746, %v5711
        %5761 = vst.msk [vmem:[%s355 + $0x38] sm:$0xf] %vm5746, %v5712
        %5762 = vst.msk [vmem:[%s355 + $0x3c] sm:$0xf] %vm5746, %v5713
        %5763 = vst.msk [vmem:[%s355 + $0x40] sm:$0xf] %vm5746, %v5714
        %5764 = vst.msk [vmem:[%s355 + $0x44] sm:$0xf] %vm5746, %v5715
        %5765 = vst.msk [vmem:[%s355 + $0x48] sm:$0xf] %vm5746, %v5716
        %5766 = vst.msk [vmem:[%s355 + $0x4c] sm:$0xf] %vm5746, %v5717
        %5767 = vst.msk [vmem:[%s355 + $0x50] sm:$0xf] %vm5746, %v5718
        %5768 = vst.msk [vmem:[%s355 + $0x54] sm:$0xf] %vm5746, %v5719
        %5769 = vst.msk [vmem:[%s355 + $0x58] sm:$0xf] %vm5746, %v5720
        %5770 = vst.msk [vmem:[%s355 + $0x5c] sm:$0xf] %vm5746, %v5721
        %5771 = vst.msk [vmem:[%s355 + $0x60] sm:$0xf] %vm5746, %v5722
        %5772 = vst.msk [vmem:[%s355 + $0x64] sm:$0xf] %vm5746, %v5723
        %5773 = vst.msk [vmem:[%s355 + $0x68] sm:$0xf] %vm5746, %v5724
        %5774 = vst.msk [vmem:[%s355 + $0x6c] sm:$0xf] %vm5746, %v5725
        %5775 = vst.msk [vmem:[%s355 + $0x70] sm:$0xf] %vm5746, %v5726
        %5776 = vst.msk [vmem:[%s355 + $0x74] sm:$0xf] %vm5746, %v5727
        %5777 = vst.msk [vmem:[%s355 + $0x78] sm:$0xf] %vm5746, %v5728
        %5778 = vst.msk [vmem:[%s355 + $0x7c] sm:$0xf] %vm5746, %v5729
        %5779 = vst.msk [vmem:[%s355 + $0x80] sm:$0xf] %vm5746, %v5730
        %5780 = vst.msk [vmem:[%s355 + $0x84] sm:$0xf] %vm5746, %v5731
        %5781 = vst.msk [vmem:[%s355 + $0x88] sm:$0xf] %vm5746, %v5732
        %5782 = vst.msk [vmem:[%s355 + $0x8c] sm:$0xf] %vm5746, %v5733
        %5783 = vst.msk [vmem:[%s355 + $0x90] sm:$0xf] %vm5746, %v5734
        %5784 = vst.msk [vmem:[%s355 + $0x94] sm:$0xf] %vm5746, %v5735
        %5785 = vst.msk [vmem:[%s355 + $0x98] sm:$0xf] %vm5746, %v5736
        %5786 = vst.msk [vmem:[%s355 + $0x9c] sm:$0xf] %vm5746, %v5737
        %5787 = vst.msk [vmem:[%s355 + $0xa0] sm:$0xf] %vm5746, %v5738
        %5788 = vst.msk [vmem:[%s355 + $0xa4] sm:$0xf] %vm5746, %v5739
        %5789 = vst.msk [vmem:[%s355 + $0xa8] sm:$0xf] %vm5746, %v5740
        %5790 = vst.msk [vmem:[%s355 + $0xac] sm:$0xf] %vm5746, %v5741
        %5791 = vst.msk [vmem:[%s355 + $0xb0] sm:$0xf] %vm5746, %v5742
        %5792 = vst.msk [vmem:[%s355 + $0xb4] sm:$0xf] %vm5746, %v5743
        %5793 = vst.msk [vmem:[%s355 + $0xb8] sm:$0xf] %vm5746, %v5744
        %vm5794 = vcmask 516096
        %5795 = vst.msk [vmem:[%s355 + $0xbc] sm:$0x1] %vm5794, %v5745
        %p5796 = scmp.lt.s32.totalorder %s21, 1
        %s5797 = scalar_select %p5796, %s21, 1
        %s5798 = smul.addr %s5797, 48
        %s5799 = smul.addr %s5798, 4
        %s5800 = scalar_lea.vmem %s7, %s5799
        // Predicated region
        $region69: #{custom_policy_forward.2} parent=47 // pred_check
          %p5801 = pneg %p191
        $region70: #{custom_policy_forward.2} parent=47 // pred_check_branch
          %5803 = sbr.rel (%p5801) target = $region72
        $region71: #{custom_policy_forward.2} parent=47 // pred_region
          _
        $region72: #{custom_policy_forward.2} parent=47 // pred_fallthru
          _
      $region48: #{custom_policy_forward.2} parent=5 // pred_fallthru
        _
      %p5804 = scmp.le.s32.totalorder 2, %s16
      // Predicated region
      $region73: #{custom_policy_forward.2} parent=5 // pred_check
        %p5805 = pneg %p5804
      $region74: #{custom_policy_forward.2} parent=5 // pred_check_branch
        %5807 = sbr.rel (%p5805) target = $region76
      $region75: #{custom_policy_forward.2} parent=5 // pred_region
        %s5808 = ssub.s32 %s16, 2
        // Predicated region
        $region77: #{custom_policy_forward.2} parent=75 // pred_check
          %p5809 = pneg %p197
        $region78: #{custom_policy_forward.2} parent=75 // pred_check_branch
          %5811 = sbr.rel (%p5809) target = $region80
        $region79: #{custom_policy_forward.2} parent=75 // pred_region
          %p5812 = scmp.lt.s32.totalorder %s22, 1
          %s5813 = scalar_select %p5812, %s22, 1
          %s5814 = smul.addr %s5813, 48
          %s5815 = smul.addr %s5814, 4
          %s5816 = scalar_lea.vmem %s7, %s5815
        $region80: #{custom_policy_forward.2} parent=75 // pred_fallthru
          _
      $region76: #{custom_policy_forward.2} parent=5 // pred_fallthru
        _
    $region6: #{custom_policy_forward.2} parent=1 // loop_footer
      %s20 = sadd.s32 1, %s16
    $region7: #{custom_policy_forward.2} parent=1 // loop_footer_branch
      %15 = sbr.rel target = $region3
    $region8: #{custom_policy_forward.2} parent=1 // loop_exit
      _
    %5817 = vsyncpa [#allocation5], 1
    %s5818 = scalar_lea.sflag [#allocation5], 1
    %5819 = vsyncpa %s5818, 1
    %5820 = vsyncpa [#allocation7], 1
    %5821 = vsyncpa [#allocation10], 1

// kernel: custom_policy_forward.3
$region0: #{custom_policy_forward.3}
  #allocation0 [shape = 'u32[]', space=smem, size = 0x4, offset = 0x4, fixed_abs, tag = 'smem constant byte address 0x4 - core index']
  #allocation1 [shape = 'u32[72,128]{1,0:T(1,128)}', space=vmem, size = 0x9000, scoped, tag = 'internal scratch']
  #allocation2 [shape = 'f32[2,256]{1,0:T(2,128)}', space=vmem, size = 0x800, scoped, tag = 'scratch operand']
  %s0 = inlined_call_operand.vmem [shape: bf16[2,20736], index: 0, kind: input, shape index: {}]
  %s1 = inlined_call_operand.hbm [shape: bf16[20736,512], index: 1, kind: input, shape index: {}]
  %s2 = inlined_call_operand.hbm [shape: f32[1,512], index: 2, kind: input, shape index: {}]
  %s3 = inlined_call_operand.hbm [shape: f32[2,512], index: 3, kind: output, shape index: {}]
  %s4 = sld [smem:[#allocation0]]
  $region61: #{custom_policy_forward.3} parent=0
    _
  %s6 = ssub.s32 1, %s4
  %s7 = scalar_select 0, %s6, %s4
  $region1: #{custom_policy_forward.3} parent=0
    #allocation3 [shape = 'u8[7077888]{0}', space=vmem, size = 0x6c0000, scoped, tag = 'input window, operand 1']
    #allocation4 [shape = 's32[2]{0}', space=sflag, size = 0x8, scoped, tag = 'scoped memory for custom_policy_forward.3']
    #allocation5 [shape = 's32[2]{0}', space=sflag, size = 0x8, scoped, tag = 'scoped memory for custom_policy_forward.3']
    #allocation6 [shape = 'u8[2048]{0}', space=vmem, size = 0x800, scoped, tag = 'input window, operand 2']
    #allocation7 [shape = 's32[2]{0}', space=sflag, size = 0x8, scoped, tag = 'scoped memory for custom_policy_forward.3']
    #allocation8 [shape = 'u8[4096]{0}', space=vmem, size = 0x1000, scoped, tag = 'output window, operand 0']
    %8 = vsyncpa [#allocation4], 0
    %s9 = scalar_lea.sflag [#allocation4], 1
    %10 = vsyncpa %s9, 0
    %11 = vsyncpa [#allocation7], 0
    %s12 = scalar_lea.sflag [#allocation7], 1
    %13 = vsyncpa %s12, 0
    %14 = vsyncpa [#allocation5], 0
    %s15 = scalar_lea.sflag [#allocation5], 1
    %16 = vsyncpa %s15, 0
    loop: start=0, step=1, limit=8
    $region2: #{custom_policy_forward.3} parent=1 // loop_pre_header
      _
    $region3: #{custom_policy_forward.3} parent=1 // loop_header
      %s18 = sphi 0, %s22
      %p19 = scmp.ge.s32.totalorder %s18, 8
      %s25 = sphi 0, %s37
      %s26 = sphi 0, %s33
      %s27 = sphi 0, %s25
      %s28 = sphi 0, %s26
      %s29 = sphi 0, %s27
      %s30 = sphi 0, %s28
      %s40 = sphi 0, %s42
      %s43 = sphi 0, %s40
      %s44 = sphi 0, %s43
      %s60 = sphi 0, %s44
      %s68 = sphi 0, %s70
      %s71 = sphi 0, %s68
      %s72 = sphi 0, %s71
      %s88 = sphi 0, %s72
      %s94 = sphi 0, %s96
      %s97 = sphi 0, %s94
      %s98 = sphi 0, %s97
      %s114 = sphi 0, %s98
      %s120 = sphi 0, %s122
      %s123 = sphi 0, %s120
      %s124 = sphi 0, %s123
      %s140 = sphi 0, %s124
    $region4: #{custom_policy_forward.3} parent=1 // loop_header_branch
      %21 = sbr.rel (%p19) target = $region8
    $region5: #{custom_policy_forward.3} parent=1 // loop_body
      %s23 = ssub.s32 %s18, 1
      %s24 = ssub.s32 %s18, 2
      %s31 = sadd.s32 1, %s26
      %p32 = scmp.ge.s32.totalorder %s31, 3
      %s33 = scalar_select %p32, 0, %s31
      %s34 = sadd.s32 1, %s25
      %s35 = scalar_select %p32, %s34, %s25
      %p36 = scmp.ge.s32.totalorder %s35, 2
      %s37 = scalar_select %p36, 0, %s35
      %s38 = ssub.s32 %s26, %s33
      %p39 = scmp.eq.s32.totalorder %s38, 0
      %s41 = sadd.s32 %s40, 1
      %s42 = scalar_select %p39, %s40, %s41
      %p45 = pneg %p39
      %p46 = scmp.eq.s32.totalorder %s18, 5
      %p47 = por %p45, %p46
      %p48 = scmp.ne.s32.totalorder %s40, %s43
      %p49 = scmp.eq.s32.totalorder %s18, 0
      %p50 = por %p48, %p49
      %p51 = scmp.ne.s32.totalorder %s40, %s43
      %p52 = scmp.eq.s32.totalorder %s23, 5
      %p53 = por %p51, %p52
      %p54 = scmp.ne.s32.totalorder %s43, %s44
      %p55 = scmp.eq.s32.totalorder %s23, 0
      %p56 = por %p54, %p55
      %p57 = scmp.ne.s32.totalorder %s43, %s44
      %p58 = scmp.eq.s32.totalorder %s24, 5
      %p59 = por %p57, %p58
      %p61 = scmp.ne.s32.totalorder %s44, %s60
      %p62 = scmp.eq.s32.totalorder %s24, 0
      %p63 = por %p61, %p62
      %s64 = ssub.s32 %s26, %s33
      %s65 = ssub.s32 %s25, %s37
      %s66 = sor.u32 %s64, %s65
      %p67 = scmp.eq.s32.totalorder %s66, 0
      %s69 = sadd.s32 %s68, 1
      %s70 = scalar_select %p67, %s68, %s69
      %p73 = pneg %p67
      %p74 = scmp.eq.s32.totalorder %s18, 5
      %p75 = por %p73, %p74
      %p76 = scmp.ne.s32.totalorder %s68, %s71
      %p77 = scmp.eq.s32.totalorder %s18, 0
      %p78 = por %p76, %p77
      %p79 = scmp.ne.s32.totalorder %s68, %s71
      %p80 = scmp.eq.s32.totalorder %s23, 5
      %p81 = por %p79, %p80
      %p82 = scmp.ne.s32.totalorder %s71, %s72
      %p83 = scmp.eq.s32.totalorder %s23, 0
      %p84 = por %p82, %p83
      %p85 = scmp.ne.s32.totalorder %s71, %s72
      %p86 = scmp.eq.s32.totalorder %s24, 5
      %p87 = por %p85, %p86
      %p89 = scmp.ne.s32.totalorder %s72, %s88
      %p90 = scmp.eq.s32.totalorder %s24, 0
      %p91 = por %p89, %p90
      %s92 = ssub.s32 %s25, %s37
      %p93 = scmp.eq.s32.totalorder %s92, 0
      %s95 = sadd.s32 %s94, 1
      %s96 = scalar_select %p93, %s94, %s95
      %p99 = pneg %p93
      %p100 = scmp.eq.s32.totalorder %s18, 5
      %p101 = por %p99, %p100
      %p102 = scmp.ne.s32.totalorder %s94, %s97
      %p103 = scmp.eq.s32.totalorder %s18, 0
      %p104 = por %p102, %p103
      %p105 = scmp.ne.s32.totalorder %s94, %s97
      %p106 = scmp.eq.s32.totalorder %s23, 5
      %p107 = por %p105, %p106
      %p108 = scmp.ne.s32.totalorder %s97, %s98
      %p109 = scmp.eq.s32.totalorder %s23, 0
      %p110 = por %p108, %p109
      %p111 = scmp.ne.s32.totalorder %s97, %s98
      %p112 = scmp.eq.s32.totalorder %s24, 5
      %p113 = por %p111, %p112
      %p115 = scmp.ne.s32.totalorder %s98, %s114
      %p116 = scmp.eq.s32.totalorder %s24, 0
      %p117 = por %p115, %p116
      %s118 = ssub.s32 %s25, %s37
      %p119 = scmp.eq.s32.totalorder %s118, 0
      %s121 = sadd.s32 %s120, 1
      %s122 = scalar_select %p119, %s120, %s121
      %p125 = pneg %p119
      %p126 = scmp.eq.s32.totalorder %s18, 5
      %p127 = por %p125, %p126
      %p128 = scmp.ne.s32.totalorder %s120, %s123
      %p129 = scmp.eq.s32.totalorder %s18, 0
      %p130 = por %p128, %p129
      %p131 = scmp.ne.s32.totalorder %s120, %s123
      %p132 = scmp.eq.s32.totalorder %s23, 5
      %p133 = por %p131, %p132
      %p134 = scmp.ne.s32.totalorder %s123, %s124
      %p135 = scmp.eq.s32.totalorder %s23, 0
      %p136 = por %p134, %p135
      %p137 = scmp.ne.s32.totalorder %s123, %s124
      %p138 = scmp.eq.s32.totalorder %s24, 5
      %p139 = por %p137, %p138
      %p141 = scmp.ne.s32.totalorder %s124, %s140
      %p142 = scmp.eq.s32.totalorder %s24, 0
      %p143 = por %p141, %p142
      %p144 = scmp.le.s32.totalorder 1, %s18
      %p145 = scmp.lt.s32.totalorder %s18, 7
      %p146 = pnand %p144, %p145
      %p147 = pneg %p146
      // Predicated region
      $region9: #{custom_policy_forward.3} parent=5 // pred_check
        _
      $region10: #{custom_policy_forward.3} parent=5 // pred_check_branch
        %149 = sbr.rel (%p146) target = $region12
      $region11: #{custom_policy_forward.3} parent=5 // pred_region
        %s150 = ssub.s32 %s18, 1
      $region12: #{custom_policy_forward.3} parent=5 // pred_fallthru
        _
      %p151 = scmp.lt.s32.totalorder %s18, 6
      // Predicated region
      $region13: #{custom_policy_forward.3} parent=5 // pred_check
        %p152 = pneg %p151
      $region14: #{custom_policy_forward.3} parent=5 // pred_check_branch
        %154 = sbr.rel (%p152) target = $region16
      $region15: #{custom_policy_forward.3} parent=5 // pred_region
        // Predicated region
        $region17: #{custom_policy_forward.3} parent=15 // pred_check
          %p155 = pneg %p50
        $region18: #{custom_policy_forward.3} parent=15 // pred_check_branch
          %157 = sbr.rel (%p155) target = $region20
        $region19: #{custom_policy_forward.3} parent=15 // pred_region
          %s158 = smul.u32 54, %s26
          %p159 = scmp.lt.s32.totalorder %s158, 161
          %s160 = scalar_select %p159, %s158, 161
          %s161 = scalar_lea.vmem %s0, %s160
          %s162 = smul.u32 54, %s26
        $region20: #{custom_policy_forward.3} parent=15 // pred_fallthru
          _
        // Predicated region
        $region21: #{custom_policy_forward.3} parent=15 // pred_check
          %p163 = pneg %p78
        $region22: #{custom_policy_forward.3} parent=15 // pred_check_branch
          %165 = sbr.rel (%p163) target = $region24
        $region23: #{custom_policy_forward.3} parent=15 // pred_region
          %s166 = sand.u32 %s68, 1
          %s167 = scalar_lea.sflag [#allocation4], %s166
          %s168 = sand.u32 %s68, 1
          %s169 = smul.addr %s168, 6912
          %s170 = scalar_lea.vmem [#allocation3], %s169
          %s171 = smul.u32 864, %s26
          %s172 = smul.u32 2, %s25
          %174 = vsyncadd %s167, 0
          %s175 = smul.addr %s171, 4
          %s176 = sadd.s32 %s172, %s175
          %s177 = smul.addr %s176, 4
          %s178 = scalar_lea.hbm %s1, %s177
          %s179 = sshll.u32 %s178, 4
          %s180 = int_to_ptr.hbm [resolvable:$true] %s179
          %s181 = sshll.u32 %s170, 4
          %s182 = int_to_ptr.vmem [resolvable:$true] %s181
          %187 = dma.hbm_to_vmem [thread:$0]  %s180, 110592, %s182, %s167, 256, 128, 8
        $region24: #{custom_policy_forward.3} parent=15 // pred_fallthru
          _
        // Predicated region
        $region25: #{custom_policy_forward.3} parent=15 // pred_check
          %p188 = pneg %p104
        $region26: #{custom_policy_forward.3} parent=15 // pred_check_branch
          %190 = sbr.rel (%p188) target = $region28
        $region27: #{custom_policy_forward.3} parent=15 // pred_region
          %s191 = sand.u32 %s94, 1
          %s192 = scalar_lea.sflag [#allocation7], %s191
          %s193 = sand.u32 %s94, 1
          %s194 = smul.addr %s193, 2
          %s195 = scalar_lea.vmem [#allocation6], %s194
          %s196 = smul.u32 2, %s25
          %198 = vsyncadd %s192, 0
          %s199 = scalar_lea.hbm %s2, %s196
          %s201 = sshll.u32 %s199, 4
          %s202 = int_to_ptr.hbm [resolvable:$true] %s201
          %s203 = sshll.u32 %s195, 4
          %s204 = int_to_ptr.vmem [resolvable:$true] %s203
          %206 = dma.hbm_to_vmem [thread:$0]  %s202, 32, %s204, %s192
        $region28: #{custom_policy_forward.3} parent=15 // pred_fallthru
          _
      $region16: #{custom_policy_forward.3} parent=5 // pred_fallthru
        _
      %p207 = scmp.le.s32.totalorder 1, %s18
      %p208 = scmp.lt.s32.totalorder %s18, 7
      %p209 = pnand %p207, %p208
      %p210 = pneg %p209
      // Predicated region
      $region29: #{custom_policy_forward.3} parent=5 // pred_check
        _
      $region30: #{custom_policy_forward.3} parent=5 // pred_check_branch
        %212 = sbr.rel (%p209) target = $region32
      $region31: #{custom_policy_forward.3} parent=5 // pred_region
        %s213 = ssub.s32 %s18, 1
        %s214 = sand.u32 %s71, 1
        %s215 = scalar_lea.sflag [#allocation4], %s214
        %s216 = sand.u32 %s71, 1
        %s217 = smul.addr %s216, 6912
        %s218 = scalar_lea.vmem [#allocation3], %s217
        // Predicated region
        $region33: #{custom_policy_forward.3} parent=31 // pred_check
          %p219 = pneg %p84
        $region34: #{custom_policy_forward.3} parent=31 // pred_check_branch
          %221 = sbr.rel (%p219) target = $region36
        $region35: #{custom_policy_forward.3} parent=31 // pred_region
          %223 = dma.done %s215, 110592
        $region36: #{custom_policy_forward.3} parent=31 // pred_fallthru
          _
        %s224 = sand.u32 %s97, 1
        %s225 = scalar_lea.sflag [#allocation7], %s224
        %s226 = sand.u32 %s97, 1
        %s227 = smul.addr %s226, 2
        %s228 = scalar_lea.vmem [#allocation6], %s227
        // Predicated region
        $region37: #{custom_policy_forward.3} parent=31 // pred_check
          %p229 = pneg %p110
        $region38: #{custom_policy_forward.3} parent=31 // pred_check_branch
          %231 = sbr.rel (%p229) target = $region40
        $region39: #{custom_policy_forward.3} parent=31 // pred_region
          %233 = dma.done %s225, 32
        $region40: #{custom_policy_forward.3} parent=31 // pred_fallthru
          _
        %s234 = smul.u32 54, %s28
        %p235 = scmp.lt.s32.totalorder %s234, 161
        %s236 = scalar_select %p235, %s234, 161
        %s237 = scalar_lea.vmem %s0, %s236
        %p238 = pneg %p56
        %p239 = pneg %p53
        %s240 = sand.u32 %s71, 1
        %s241 = scalar_lea.sflag [#allocation4], %s240
        %s242 = sand.u32 %s71, 1
        %s243 = smul.addr %s242, 6912
        %s244 = scalar_lea.vmem [#allocation3], %s243
        %p245 = pneg %p84
        %p246 = pneg %p81
        %s247 = sand.u32 %s97, 1
        %s248 = scalar_lea.sflag [#allocation7], %s247
        %s249 = sand.u32 %s97, 1
        %s250 = smul.addr %s249, 2
        %s251 = scalar_lea.vmem [#allocation6], %s250
        %p252 = pneg %p110
        %p253 = pneg %p107
        %p254 = pneg %p136
        %p255 = pneg %p133
        %s256 = sand.u32 %s123, 1
        %s257 = scalar_lea.sflag [#allocation5], %s256
        %s258 = sand.u32 %s123, 1
        %s259 = smul.addr %s258, 4
        %s260 = scalar_lea.vmem [#allocation8], %s259
        %s261 = smul.u32 54, %s28
        %p262 = scmp.lt.s32.totalorder %s261, 161
        %s263 = scalar_select %p262, %s261, 161
        %s264 = scalar_lea.vmem %s0, %s263
        %s265 = smul.u32 54, %s28
        %s266 = smul.u32 864, %s28
        %s267 = smul.u32 2, %s27
        %s268 = smul.u32 2, %s27
        %s269 = smul.u32 2, %s27
        %p270 = scmp.eq.s32.totalorder %s28, 0
        // Predicated region
        $region41: #{custom_policy_forward.3} parent=31 // pred_check
          %p271 = pneg %p270
        $region42: #{custom_policy_forward.3} parent=31 // pred_check_branch
          %273 = sbr.rel (%p271) target = $region44
        $region43: #{custom_policy_forward.3} parent=31 // pred_region
          %274 = vst [vmem:[#allocation2] sm:$0xf] 0.0
        $region44: #{custom_policy_forward.3} parent=31 // pred_fallthru
          _
        %v275 = vld [vmem:[#allocation2] sm:$0xf]
        %v276 = vld [vmem:[%s264] sm:$0xff]
        %v277 = vld [vmem:[%s264 + $0x8] sm:$0xff]
        %v278 = vld [vmem:[%s264 + $0x10] sm:$0xff]
        %v279 = vld [vmem:[%s264 + $0x18] sm:$0xff]
        %v280 = vld [vmem:[%s264 + $0x20] sm:$0xff]
        %v281 = vld [vmem:[%s264 + $0x28] sm:$0xff]
        %v282 = vld [vmem:[%s264 + $0x30] sm:$0x3f]
        %v283 = vld [vmem:[%s218] sm:$0xff]
        %v284 = vld [vmem:[%s218 + $0x8] sm:$0xff]
        %v285 = vld [vmem:[%s218 + $0x10] sm:$0xff]
        %v286 = vld [vmem:[%s218 + $0x18] sm:$0xff]
        %v287 = vld [vmem:[%s218 + $0x20] sm:$0xff]
        %v288 = vld [vmem:[%s218 + $0x28] sm:$0xff]
        %v289 = vld [vmem:[%s218 + $0x30] sm:$0xff]
        %v290 = vld [vmem:[%s218 + $0x38] sm:$0xff]
        %v291 = vld [vmem:[%s218 + $0x40] sm:$0xff]
        %v292 = vld [vmem:[%s218 + $0x48] sm:$0xff]
        %v293 = vld [vmem:[%s218 + $0x50] sm:$0xff]
        %v294 = vld [vmem:[%s218 + $0x58] sm:$0xff]
        %v295 = vld [vmem:[%s218 + $0x60] sm:$0xff]
        %v296 = vld [vmem:[%s218 + $0x68] sm:$0xff]
        %v297 = vld [vmem:[%s218 + $0x70] sm:$0xff]
        %v298 = vld [vmem:[%s218 + $0x78] sm:$0xff]
        %v299 = vld [vmem:[%s218 + $0x80] sm:$0xff]
        %v300 = vld [vmem:[%s218 + $0x88] sm:$0xff]
        %v301 = vld [vmem:[%s218 + $0x90] sm:$0xff]
        %v302 = vld [vmem:[%s218 + $0x98] sm:$0xff]
        %v303 = vld [vmem:[%s218 + $0xa0] sm:$0xff]
        %v304 = vld [vmem:[%s218 + $0xa8] sm:$0xff]
        %v305 = vld [vmem:[%s218 + $0xb0] sm:$0xff]
        %v306 = vld [vmem:[%s218 + $0xb8] sm:$0xff]
        %v307 = vld [vmem:[%s218 + $0xc0] sm:$0xff]
        %v308 = vld [vmem:[%s218 + $0xc8] sm:$0xff]
        %v309 = vld [vmem:[%s218 + $0xd0] sm:$0xff]
        %v310 = vld [vmem:[%s218 + $0xd8] sm:$0xff]
        %v311 = vld [vmem:[%s218 + $0xe0] sm:$0xff]
        %v312 = vld [vmem:[%s218 + $0xe8] sm:$0xff]
        %v313 = vld [vmem:[%s218 + $0xf0] sm:$0xff]
        %v314 = vld [vmem:[%s218 + $0xf8] sm:$0xff]
        %v315 = vld [vmem:[%s218 + $0x100] sm:$0xff]
        %v316 = vld [vmem:[%s218 + $0x108] sm:$0xff]
        %v317 = vld [vmem:[%s218 + $0x110] sm:$0xff]
        %v318 = vld [vmem:[%s218 + $0x118] sm:$0xff]
        %v319 = vld [vmem:[%s218 + $0x120] sm:$0xff]
        %v320 = vld [vmem:[%s218 + $0x128] sm:$0xff]
        %v321 = vld [vmem:[%s218 + $0x130] sm:$0xff]
        %v322 = vld [vmem:[%s218 + $0x138] sm:$0xff]
        %v323 = vld [vmem:[%s218 + $0x140] sm:$0xff]
        %v324 = vld [vmem:[%s218 + $0x148] sm:$0xff]
        %v325 = vld [vmem:[%s218 + $0x150] sm:$0xff]
        %v326 = vld [vmem:[%s218 + $0x158] sm:$0xff]
        %v327 = vld [vmem:[%s218 + $0x160] sm:$0xff]
        %v328 = vld [vmem:[%s218 + $0x168] sm:$0xff]
        %v329 = vld [vmem:[%s218 + $0x170] sm:$0xff]
        %v330 = vld [vmem:[%s218 + $0x178] sm:$0xff]
        %v331 = vld [vmem:[%s218 + $0x180] sm:$0xff]
        %v332 = vld [vmem:[%s218 + $0x188] sm:$0xff]
        %v333 = vld [vmem:[%s218 + $0x190] sm:$0xff]
        %v334 = vld [vmem:[%s218 + $0x198] sm:$0xff]
        %v335 = vld [vmem:[%s218 + $0x1a0] sm:$0xff]
        %v336 = vld [vmem:[%s218 + $0x1a8] sm:$0xff]
        %v337 = vld [vmem:[%s218 + $0x1b0] sm:$0xff]
        %v338 = vld [vmem:[%s218 + $0x1b8] sm:$0xff]
        %v339 = vld [vmem:[%s218 + $0x1c0] sm:$0xff]
        %v340 = vld [vmem:[%s218 + $0x1c8] sm:$0xff]
        %v341 = vld [vmem:[%s218 + $0x1d0] sm:$0xff]
        %v342 = vld [vmem:[%s218 + $0x1d8] sm:$0xff]
        %v343 = vld [vmem:[%s218 + $0x1e0] sm:$0xff]
        %v344 = vld [vmem:[%s218 + $0x1e8] sm:$0xff]
        %v345 = vld [vmem:[%s218 + $0x1f0] sm:$0xff]
        %v346 = vld [vmem:[%s218 + $0x1f8] sm:$0xff]
        %v347 = vld [vmem:[%s218 + $0x200] sm:$0xff]
        %v348 = vld [vmem:[%s218 + $0x208] sm:$0xff]
        %v349 = vld [vmem:[%s218 + $0x210] sm:$0xff]
        %v350 = vld [vmem:[%s218 + $0x218] sm:$0xff]
        %v351 = vld [vmem:[%s218 + $0x220] sm:$0xff]
        %v352 = vld [vmem:[%s218 + $0x228] sm:$0xff]
        %v353 = vld [vmem:[%s218 + $0x230] sm:$0xff]
        %v354 = vld [vmem:[%s218 + $0x238] sm:$0xff]
        %v355 = vld [vmem:[%s218 + $0x240] sm:$0xff]
        %v356 = vld [vmem:[%s218 + $0x248] sm:$0xff]
        %v357 = vld [vmem:[%s218 + $0x250] sm:$0xff]
        %v358 = vld [vmem:[%s218 + $0x258] sm:$0xff]
        %v359 = vld [vmem:[%s218 + $0x260] sm:$0xff]
        %v360 = vld [vmem:[%s218 + $0x268] sm:$0xff]
        %v361 = vld [vmem:[%s218 + $0x270] sm:$0xff]
        %v362 = vld [vmem:[%s218 + $0x278] sm:$0xff]
        %v363 = vld [vmem:[%s218 + $0x280] sm:$0xff]
        %v364 = vld [vmem:[%s218 + $0x288] sm:$0xff]
        %v365 = vld [vmem:[%s218 + $0x290] sm:$0xff]
        %v366 = vld [vmem:[%s218 + $0x298] sm:$0xff]
        %v367 = vld [vmem:[%s218 + $0x2a0] sm:$0xff]
        %v368 = vld [vmem:[%s218 + $0x2a8] sm:$0xff]
        %v369 = vld [vmem:[%s218 + $0x2b0] sm:$0xff]
        %v370 = vld [vmem:[%s218 + $0x2b8] sm:$0xff]
        %v371 = vld [vmem:[%s218 + $0x2c0] sm:$0xff]
        %v372 = vld [vmem:[%s218 + $0x2c8] sm:$0xff]
        %v373 = vld [vmem:[%s218 + $0x2d0] sm:$0xff]
        %v374 = vld [vmem:[%s218 + $0x2d8] sm:$0xff]
        %v375 = vld [vmem:[%s218 + $0x2e0] sm:$0xff]
        %v376 = vld [vmem:[%s218 + $0x2e8] sm:$0xff]
        %v377 = vld [vmem:[%s218 + $0x2f0] sm:$0xff]
        %v378 = vld [vmem:[%s218 + $0x2f8] sm:$0xff]
        %v379 = vld [vmem:[%s218 + $0x300] sm:$0xff]
        %v380 = vld [vmem:[%s218 + $0x308] sm:$0xff]
        %v381 = vld [vmem:[%s218 + $0x310] sm:$0xff]
        %v382 = vld [vmem:[%s218 + $0x318] sm:$0xff]
        %v383 = vld [vmem:[%s218 + $0x320] sm:$0xff]
        %v384 = vld [vmem:[%s218 + $0x328] sm:$0xff]
        %v385 = vld [vmem:[%s218 + $0x330] sm:$0xff]
        %v386 = vld [vmem:[%s218 + $0x338] sm:$0xff]
        %v387 = vld [vmem:[%s218 + $0x340] sm:$0xff]
        %v388 = vld [vmem:[%s218 + $0x348] sm:$0xff]
        %v389 = vld [vmem:[%s218 + $0x350] sm:$0xff]
        %v390 = vld [vmem:[%s218 + $0x358] sm:$0xff]
        %v391 = vld [vmem:[%s218 + $0x360] sm:$0xff]
        %v392 = vld [vmem:[%s218 + $0x368] sm:$0xff]
        %v393 = vld [vmem:[%s218 + $0x370] sm:$0xff]
        %v394 = vld [vmem:[%s218 + $0x378] sm:$0xff]
        %v395 = vld [vmem:[%s218 + $0x380] sm:$0xff]
        %v396 = vld [vmem:[%s218 + $0x388] sm:$0xff]
        %v397 = vld [vmem:[%s218 + $0x390] sm:$0xff]
        %v398 = vld [vmem:[%s218 + $0x398] sm:$0xff]
        %v399 = vld [vmem:[%s218 + $0x3a0] sm:$0xff]
        %v400 = vld [vmem:[%s218 + $0x3a8] sm:$0xff]
        %v401 = vld [vmem:[%s218 + $0x3b0] sm:$0xff]
        %v402 = vld [vmem:[%s218 + $0x3b8] sm:$0xff]
        %v403 = vld [vmem:[%s218 + $0x3c0] sm:$0xff]
        %v404 = vld [vmem:[%s218 + $0x3c8] sm:$0xff]
        %v405 = vld [vmem:[%s218 + $0x3d0] sm:$0xff]
        %v406 = vld [vmem:[%s218 + $0x3d8] sm:$0xff]
        %v407 = vld [vmem:[%s218 + $0x3e0] sm:$0xff]
        %v408 = vld [vmem:[%s218 + $0x3e8] sm:$0xff]
        %v409 = vld [vmem:[%s218 + $0x3f0] sm:$0xff]
        %v410 = vld [vmem:[%s218 + $0x3f8] sm:$0xff]
        %v411 = vld [vmem:[%s218 + $0x400] sm:$0xff]
        %v412 = vld [vmem:[%s218 + $0x408] sm:$0xff]
        %v413 = vld [vmem:[%s218 + $0x410] sm:$0xff]
        %v414 = vld [vmem:[%s218 + $0x418] sm:$0xff]
        %v415 = vld [vmem:[%s218 + $0x420] sm:$0xff]
        %v416 = vld [vmem:[%s218 + $0x428] sm:$0xff]
        %v417 = vld [vmem:[%s218 + $0x430] sm:$0xff]
        %v418 = vld [vmem:[%s218 + $0x438] sm:$0xff]
        %v419 = vld [vmem:[%s218 + $0x440] sm:$0xff]
        %v420 = vld [vmem:[%s218 + $0x448] sm:$0xff]
        %v421 = vld [vmem:[%s218 + $0x450] sm:$0xff]
        %v422 = vld [vmem:[%s218 + $0x458] sm:$0xff]
        %v423 = vld [vmem:[%s218 + $0x460] sm:$0xff]
        %v424 = vld [vmem:[%s218 + $0x468] sm:$0xff]
        %v425 = vld [vmem:[%s218 + $0x470] sm:$0xff]
        %v426 = vld [vmem:[%s218 + $0x478] sm:$0xff]
        %v427 = vld [vmem:[%s218 + $0x480] sm:$0xff]
        %v428 = vld [vmem:[%s218 + $0x488] sm:$0xff]
        %v429 = vld [vmem:[%s218 + $0x490] sm:$0xff]
        %v430 = vld [vmem:[%s218 + $0x498] sm:$0xff]
        %v431 = vld [vmem:[%s218 + $0x4a0] sm:$0xff]
        %v432 = vld [vmem:[%s218 + $0x4a8] sm:$0xff]
        %v433 = vld [vmem:[%s218 + $0x4b0] sm:$0xff]
        %v434 = vld [vmem:[%s218 + $0x4b8] sm:$0xff]
        %v435 = vld [vmem:[%s218 + $0x4c0] sm:$0xff]
        %v436 = vld [vmem:[%s218 + $0x4c8] sm:$0xff]
        %v437 = vld [vmem:[%s218 + $0x4d0] sm:$0xff]
        %v438 = vld [vmem:[%s218 + $0x4d8] sm:$0xff]
        %v439 = vld [vmem:[%s218 + $0x4e0] sm:$0xff]
        %v440 = vld [vmem:[%s218 + $0x4e8] sm:$0xff]
        %v441 = vld [vmem:[%s218 + $0x4f0] sm:$0xff]
        %v442 = vld [vmem:[%s218 + $0x4f8] sm:$0xff]
        %v443 = vld [vmem:[%s218 + $0x500] sm:$0xff]
        %v444 = vld [vmem:[%s218 + $0x508] sm:$0xff]
        %v445 = vld [vmem:[%s218 + $0x510] sm:$0xff]
        %v446 = vld [vmem:[%s218 + $0x518] sm:$0xff]
        %v447 = vld [vmem:[%s218 + $0x520] sm:$0xff]
        %v448 = vld [vmem:[%s218 + $0x528] sm:$0xff]
        %v449 = vld [vmem:[%s218 + $0x530] sm:$0xff]
        %v450 = vld [vmem:[%s218 + $0x538] sm:$0xff]
        %v451 = vld [vmem:[%s218 + $0x540] sm:$0xff]
        %v452 = vld [vmem:[%s218 + $0x548] sm:$0xff]
        %v453 = vld [vmem:[%s218 + $0x550] sm:$0xff]
        %v454 = vld [vmem:[%s218 + $0x558] sm:$0xff]
        %v455 = vld [vmem:[%s218 + $0x560] sm:$0xff]
        %v456 = vld [vmem:[%s218 + $0x568] sm:$0xff]
        %v457 = vld [vmem:[%s218 + $0x570] sm:$0xff]
        %v458 = vld [vmem:[%s218 + $0x578] sm:$0xff]
        %v459 = vld [vmem:[%s218 + $0x580] sm:$0xff]
        %v460 = vld [vmem:[%s218 + $0x588] sm:$0xff]
        %v461 = vld [vmem:[%s218 + $0x590] sm:$0xff]
        %v462 = vld [vmem:[%s218 + $0x598] sm:$0xff]
        %v463 = vld [vmem:[%s218 + $0x5a0] sm:$0xff]
        %v464 = vld [vmem:[%s218 + $0x5a8] sm:$0xff]
        %v465 = vld [vmem:[%s218 + $0x5b0] sm:$0xff]
        %v466 = vld [vmem:[%s218 + $0x5b8] sm:$0xff]
        %v467 = vld [vmem:[%s218 + $0x5c0] sm:$0xff]
        %v468 = vld [vmem:[%s218 + $0x5c8] sm:$0xff]
        %v469 = vld [vmem:[%s218 + $0x5d0] sm:$0xff]
        %v470 = vld [vmem:[%s218 + $0x5d8] sm:$0xff]
        %v471 = vld [vmem:[%s218 + $0x5e0] sm:$0xff]
        %v472 = vld [vmem:[%s218 + $0x5e8] sm:$0xff]
        %v473 = vld [vmem:[%s218 + $0x5f0] sm:$0xff]
        %v474 = vld [vmem:[%s218 + $0x5f8] sm:$0xff]
        %v475 = vld [vmem:[%s218 + $0x600] sm:$0xff]
        %v476 = vld [vmem:[%s218 + $0x608] sm:$0xff]
        %v477 = vld [vmem:[%s218 + $0x610] sm:$0xff]
        %v478 = vld [vmem:[%s218 + $0x618] sm:$0xff]
        %v479 = vld [vmem:[%s218 + $0x620] sm:$0xff]
        %v480 = vld [vmem:[%s218 + $0x628] sm:$0xff]
        %v481 = vld [vmem:[%s218 + $0x630] sm:$0xff]
        %v482 = vld [vmem:[%s218 + $0x638] sm:$0xff]
        %v483 = vld [vmem:[%s218 + $0x640] sm:$0xff]
        %v484 = vld [vmem:[%s218 + $0x648] sm:$0xff]
        %v485 = vld [vmem:[%s218 + $0x650] sm:$0xff]
        %v486 = vld [vmem:[%s218 + $0x658] sm:$0xff]
        %v487 = vld [vmem:[%s218 + $0x660] sm:$0xff]
        %v488 = vld [vmem:[%s218 + $0x668] sm:$0xff]
        %v489 = vld [vmem:[%s218 + $0x670] sm:$0xff]
        %v490 = vld [vmem:[%s218 + $0x678] sm:$0xff]
        %v491 = vld [vmem:[%s218 + $0x680] sm:$0xff]
        %v492 = vld [vmem:[%s218 + $0x688] sm:$0xff]
        %v493 = vld [vmem:[%s218 + $0x690] sm:$0xff]
        %v494 = vld [vmem:[%s218 + $0x698] sm:$0xff]
        %v495 = vld [vmem:[%s218 + $0x6a0] sm:$0xff]
        %v496 = vld [vmem:[%s218 + $0x6a8] sm:$0xff]
        %v497 = vld [vmem:[%s218 + $0x6b0] sm:$0xff]
        %v498 = vld [vmem:[%s218 + $0x6b8] sm:$0xff]
        %v499 = vld [vmem:[%s218 + $0x6c0] sm:$0xff]
        %v500 = vld [vmem:[%s218 + $0x6c8] sm:$0xff]
        %v501 = vld [vmem:[%s218 + $0x6d0] sm:$0xff]
        %v502 = vld [vmem:[%s218 + $0x6d8] sm:$0xff]
        %v503 = vld [vmem:[%s218 + $0x6e0] sm:$0xff]
        %v504 = vld [vmem:[%s218 + $0x6e8] sm:$0xff]
        %v505 = vld [vmem:[%s218 + $0x6f0] sm:$0xff]
        %v506 = vld [vmem:[%s218 + $0x6f8] sm:$0xff]
        %v507 = vld [vmem:[%s218 + $0x700] sm:$0xff]
        %v508 = vld [vmem:[%s218 + $0x708] sm:$0xff]
        %v509 = vld [vmem:[%s218 + $0x710] sm:$0xff]
        %v510 = vld [vmem:[%s218 + $0x718] sm:$0xff]
        %v511 = vld [vmem:[%s218 + $0x720] sm:$0xff]
        %v512 = vld [vmem:[%s218 + $0x728] sm:$0xff]
        %v513 = vld [vmem:[%s218 + $0x730] sm:$0xff]
        %v514 = vld [vmem:[%s218 + $0x738] sm:$0xff]
        %v515 = vld [vmem:[%s218 + $0x740] sm:$0xff]
        %v516 = vld [vmem:[%s218 + $0x748] sm:$0xff]
        %v517 = vld [vmem:[%s218 + $0x750] sm:$0xff]
        %v518 = vld [vmem:[%s218 + $0x758] sm:$0xff]
        %v519 = vld [vmem:[%s218 + $0x760] sm:$0xff]
        %v520 = vld [vmem:[%s218 + $0x768] sm:$0xff]
        %v521 = vld [vmem:[%s218 + $0x770] sm:$0xff]
        %v522 = vld [vmem:[%s218 + $0x778] sm:$0xff]
        %v523 = vld [vmem:[%s218 + $0x780] sm:$0xff]
        %v524 = vld [vmem:[%s218 + $0x788] sm:$0xff]
        %v525 = vld [vmem:[%s218 + $0x790] sm:$0xff]
        %v526 = vld [vmem:[%s218 + $0x798] sm:$0xff]
        %v527 = vld [vmem:[%s218 + $0x7a0] sm:$0xff]
        %v528 = vld [vmem:[%s218 + $0x7a8] sm:$0xff]
        %v529 = vld [vmem:[%s218 + $0x7b0] sm:$0xff]
        %v530 = vld [vmem:[%s218 + $0x7b8] sm:$0xff]
        %v531 = vld [vmem:[%s218 + $0x7c0] sm:$0xff]
        %v532 = vld [vmem:[%s218 + $0x7c8] sm:$0xff]
        %v533 = vld [vmem:[%s218 + $0x7d0] sm:$0xff]
        %v534 = vld [vmem:[%s218 + $0x7d8] sm:$0xff]
        %v535 = vld [vmem:[%s218 + $0x7e0] sm:$0xff]
        %v536 = vld [vmem:[%s218 + $0x7e8] sm:$0xff]
        %v537 = vld [vmem:[%s218 + $0x7f0] sm:$0xff]
        %v538 = vld [vmem:[%s218 + $0x7f8] sm:$0xff]
        %v539 = vld [vmem:[%s218 + $0x800] sm:$0xff]
        %v540 = vld [vmem:[%s218 + $0x808] sm:$0xff]
        %v541 = vld [vmem:[%s218 + $0x810] sm:$0xff]
        %v542 = vld [vmem:[%s218 + $0x818] sm:$0xff]
        %v543 = vld [vmem:[%s218 + $0x820] sm:$0xff]
        %v544 = vld [vmem:[%s218 + $0x828] sm:$0xff]
        %v545 = vld [vmem:[%s218 + $0x830] sm:$0xff]
        %v546 = vld [vmem:[%s218 + $0x838] sm:$0xff]
        %v547 = vld [vmem:[%s218 + $0x840] sm:$0xff]
        %v548 = vld [vmem:[%s218 + $0x848] sm:$0xff]
        %v549 = vld [vmem:[%s218 + $0x850] sm:$0xff]
        %v550 = vld [vmem:[%s218 + $0x858] sm:$0xff]
        %v551 = vld [vmem:[%s218 + $0x860] sm:$0xff]
        %v552 = vld [vmem:[%s218 + $0x868] sm:$0xff]
        %v553 = vld [vmem:[%s218 + $0x870] sm:$0xff]
        %v554 = vld [vmem:[%s218 + $0x878] sm:$0xff]
        %v555 = vld [vmem:[%s218 + $0x880] sm:$0xff]
        %v556 = vld [vmem:[%s218 + $0x888] sm:$0xff]
        %v557 = vld [vmem:[%s218 + $0x890] sm:$0xff]
        %v558 = vld [vmem:[%s218 + $0x898] sm:$0xff]
        %v559 = vld [vmem:[%s218 + $0x8a0] sm:$0xff]
        %v560 = vld [vmem:[%s218 + $0x8a8] sm:$0xff]
        %v561 = vld [vmem:[%s218 + $0x8b0] sm:$0xff]
        %v562 = vld [vmem:[%s218 + $0x8b8] sm:$0xff]
        %v563 = vld [vmem:[%s218 + $0x8c0] sm:$0xff]
        %v564 = vld [vmem:[%s218 + $0x8c8] sm:$0xff]
        %v565 = vld [vmem:[%s218 + $0x8d0] sm:$0xff]
        %v566 = vld [vmem:[%s218 + $0x8d8] sm:$0xff]
        %v567 = vld [vmem:[%s218 + $0x8e0] sm:$0xff]
        %v568 = vld [vmem:[%s218 + $0x8e8] sm:$0xff]
        %v569 = vld [vmem:[%s218 + $0x8f0] sm:$0xff]
        %v570 = vld [vmem:[%s218 + $0x8f8] sm:$0xff]
        %v571 = vld [vmem:[%s218 + $0x900] sm:$0xff]
        %v572 = vld [vmem:[%s218 + $0x908] sm:$0xff]
        %v573 = vld [vmem:[%s218 + $0x910] sm:$0xff]
        %v574 = vld [vmem:[%s218 + $0x918] sm:$0xff]
        %v575 = vld [vmem:[%s218 + $0x920] sm:$0xff]
        %v576 = vld [vmem:[%s218 + $0x928] sm:$0xff]
        %v577 = vld [vmem:[%s218 + $0x930] sm:$0xff]
        %v578 = vld [vmem:[%s218 + $0x938] sm:$0xff]
        %v579 = vld [vmem:[%s218 + $0x940] sm:$0xff]
        %v580 = vld [vmem:[%s218 + $0x948] sm:$0xff]
        %v581 = vld [vmem:[%s218 + $0x950] sm:$0xff]
        %v582 = vld [vmem:[%s218 + $0x958] sm:$0xff]
        %v583 = vld [vmem:[%s218 + $0x960] sm:$0xff]
        %v584 = vld [vmem:[%s218 + $0x968] sm:$0xff]
        %v585 = vld [vmem:[%s218 + $0x970] sm:$0xff]
        %v586 = vld [vmem:[%s218 + $0x978] sm:$0xff]
        %v587 = vld [vmem:[%s218 + $0x980] sm:$0xff]
        %v588 = vld [vmem:[%s218 + $0x988] sm:$0xff]
        %v589 = vld [vmem:[%s218 + $0x990] sm:$0xff]
        %v590 = vld [vmem:[%s218 + $0x998] sm:$0xff]
        %v591 = vld [vmem:[%s218 + $0x9a0] sm:$0xff]
        %v592 = vld [vmem:[%s218 + $0x9a8] sm:$0xff]
        %v593 = vld [vmem:[%s218 + $0x9b0] sm:$0xff]
        %v594 = vld [vmem:[%s218 + $0x9b8] sm:$0xff]
        %v595 = vld [vmem:[%s218 + $0x9c0] sm:$0xff]
        %v596 = vld [vmem:[%s218 + $0x9c8] sm:$0xff]
        %v597 = vld [vmem:[%s218 + $0x9d0] sm:$0xff]
        %v598 = vld [vmem:[%s218 + $0x9d8] sm:$0xff]
        %v599 = vld [vmem:[%s218 + $0x9e0] sm:$0xff]
        %v600 = vld [vmem:[%s218 + $0x9e8] sm:$0xff]
        %v601 = vld [vmem:[%s218 + $0x9f0] sm:$0xff]
        %v602 = vld [vmem:[%s218 + $0x9f8] sm:$0xff]
        %v603 = vld [vmem:[%s218 + $0xa00] sm:$0xff]
        %v604 = vld [vmem:[%s218 + $0xa08] sm:$0xff]
        %v605 = vld [vmem:[%s218 + $0xa10] sm:$0xff]
        %v606 = vld [vmem:[%s218 + $0xa18] sm:$0xff]
        %v607 = vld [vmem:[%s218 + $0xa20] sm:$0xff]
        %v608 = vld [vmem:[%s218 + $0xa28] sm:$0xff]
        %v609 = vld [vmem:[%s218 + $0xa30] sm:$0xff]
        %v610 = vld [vmem:[%s218 + $0xa38] sm:$0xff]
        %v611 = vld [vmem:[%s218 + $0xa40] sm:$0xff]
        %v612 = vld [vmem:[%s218 + $0xa48] sm:$0xff]
        %v613 = vld [vmem:[%s218 + $0xa50] sm:$0xff]
        %v614 = vld [vmem:[%s218 + $0xa58] sm:$0xff]
        %v615 = vld [vmem:[%s218 + $0xa60] sm:$0xff]
        %v616 = vld [vmem:[%s218 + $0xa68] sm:$0xff]
        %v617 = vld [vmem:[%s218 + $0xa70] sm:$0xff]
        %v618 = vld [vmem:[%s218 + $0xa78] sm:$0xff]
        %v619 = vld [vmem:[%s218 + $0xa80] sm:$0xff]
        %v620 = vld [vmem:[%s218 + $0xa88] sm:$0xff]
        %v621 = vld [vmem:[%s218 + $0xa90] sm:$0xff]
        %v622 = vld [vmem:[%s218 + $0xa98] sm:$0xff]
        %v623 = vld [vmem:[%s218 + $0xaa0] sm:$0xff]
        %v624 = vld [vmem:[%s218 + $0xaa8] sm:$0xff]
        %v625 = vld [vmem:[%s218 + $0xab0] sm:$0xff]
        %v626 = vld [vmem:[%s218 + $0xab8] sm:$0xff]
        %v627 = vld [vmem:[%s218 + $0xac0] sm:$0xff]
        %v628 = vld [vmem:[%s218 + $0xac8] sm:$0xff]
        %v629 = vld [vmem:[%s218 + $0xad0] sm:$0xff]
        %v630 = vld [vmem:[%s218 + $0xad8] sm:$0xff]
        %v631 = vld [vmem:[%s218 + $0xae0] sm:$0xff]
        %v632 = vld [vmem:[%s218 + $0xae8] sm:$0xff]
        %v633 = vld [vmem:[%s218 + $0xaf0] sm:$0xff]
        %v634 = vld [vmem:[%s218 + $0xaf8] sm:$0xff]
        %v635 = vld [vmem:[%s218 + $0xb00] sm:$0xff]
        %v636 = vld [vmem:[%s218 + $0xb08] sm:$0xff]
        %v637 = vld [vmem:[%s218 + $0xb10] sm:$0xff]
        %v638 = vld [vmem:[%s218 + $0xb18] sm:$0xff]
        %v639 = vld [vmem:[%s218 + $0xb20] sm:$0xff]
        %v640 = vld [vmem:[%s218 + $0xb28] sm:$0xff]
        %v641 = vld [vmem:[%s218 + $0xb30] sm:$0xff]
        %v642 = vld [vmem:[%s218 + $0xb38] sm:$0xff]
        %v643 = vld [vmem:[%s218 + $0xb40] sm:$0xff]
        %v644 = vld [vmem:[%s218 + $0xb48] sm:$0xff]
        %v645 = vld [vmem:[%s218 + $0xb50] sm:$0xff]
        %v646 = vld [vmem:[%s218 + $0xb58] sm:$0xff]
        %v647 = vld [vmem:[%s218 + $0xb60] sm:$0xff]
        %v648 = vld [vmem:[%s218 + $0xb68] sm:$0xff]
        %v649 = vld [vmem:[%s218 + $0xb70] sm:$0xff]
        %v650 = vld [vmem:[%s218 + $0xb78] sm:$0xff]
        %v651 = vld [vmem:[%s218 + $0xb80] sm:$0xff]
        %v652 = vld [vmem:[%s218 + $0xb88] sm:$0xff]
        %v653 = vld [vmem:[%s218 + $0xb90] sm:$0xff]
        %v654 = vld [vmem:[%s218 + $0xb98] sm:$0xff]
        %v655 = vld [vmem:[%s218 + $0xba0] sm:$0xff]
        %v656 = vld [vmem:[%s218 + $0xba8] sm:$0xff]
        %v657 = vld [vmem:[%s218 + $0xbb0] sm:$0xff]
        %v658 = vld [vmem:[%s218 + $0xbb8] sm:$0xff]
        %v659 = vld [vmem:[%s218 + $0xbc0] sm:$0xff]
        %v660 = vld [vmem:[%s218 + $0xbc8] sm:$0xff]
        %v661 = vld [vmem:[%s218 + $0xbd0] sm:$0xff]
        %v662 = vld [vmem:[%s218 + $0xbd8] sm:$0xff]
        %v663 = vld [vmem:[%s218 + $0xbe0] sm:$0xff]
        %v664 = vld [vmem:[%s218 + $0xbe8] sm:$0xff]
        %v665 = vld [vmem:[%s218 + $0xbf0] sm:$0xff]
        %v666 = vld [vmem:[%s218 + $0xbf8] sm:$0xff]
        %v667 = vld [vmem:[%s218 + $0xc00] sm:$0xff]
        %v668 = vld [vmem:[%s218 + $0xc08] sm:$0xff]
        %v669 = vld [vmem:[%s218 + $0xc10] sm:$0xff]
        %v670 = vld [vmem:[%s218 + $0xc18] sm:$0xff]
        %v671 = vld [vmem:[%s218 + $0xc20] sm:$0xff]
        %v672 = vld [vmem:[%s218 + $0xc28] sm:$0xff]
        %v673 = vld [vmem:[%s218 + $0xc30] sm:$0xff]
        %v674 = vld [vmem:[%s218 + $0xc38] sm:$0xff]
        %v675 = vld [vmem:[%s218 + $0xc40] sm:$0xff]
        %v676 = vld [vmem:[%s218 + $0xc48] sm:$0xff]
        %v677 = vld [vmem:[%s218 + $0xc50] sm:$0xff]
        %v678 = vld [vmem:[%s218 + $0xc58] sm:$0xff]
        %v679 = vld [vmem:[%s218 + $0xc60] sm:$0xff]
        %v680 = vld [vmem:[%s218 + $0xc68] sm:$0xff]
        %v681 = vld [vmem:[%s218 + $0xc70] sm:$0xff]
        %v682 = vld [vmem:[%s218 + $0xc78] sm:$0xff]
        %v683 = vld [vmem:[%s218 + $0xc80] sm:$0xff]
        %v684 = vld [vmem:[%s218 + $0xc88] sm:$0xff]
        %v685 = vld [vmem:[%s218 + $0xc90] sm:$0xff]
        %v686 = vld [vmem:[%s218 + $0xc98] sm:$0xff]
        %v687 = vld [vmem:[%s218 + $0xca0] sm:$0xff]
        %v688 = vld [vmem:[%s218 + $0xca8] sm:$0xff]
        %v689 = vld [vmem:[%s218 + $0xcb0] sm:$0xff]
        %v690 = vld [vmem:[%s218 + $0xcb8] sm:$0xff]
        %v691 = vld [vmem:[%s218 + $0xcc0] sm:$0xff]
        %v692 = vld [vmem:[%s218 + $0xcc8] sm:$0xff]
        %v693 = vld [vmem:[%s218 + $0xcd0] sm:$0xff]
        %v694 = vld [vmem:[%s218 + $0xcd8] sm:$0xff]
        %v695 = vld [vmem:[%s218 + $0xce0] sm:$0xff]
        %v696 = vld [vmem:[%s218 + $0xce8] sm:$0xff]
        %v697 = vld [vmem:[%s218 + $0xcf0] sm:$0xff]
        %v698 = vld [vmem:[%s218 + $0xcf8] sm:$0xff]
        %v699 = vld [vmem:[%s218 + $0xd00] sm:$0xff]
        %v700 = vld [vmem:[%s218 + $0xd08] sm:$0xff]
        %v701 = vld [vmem:[%s218 + $0xd10] sm:$0xff]
        %v702 = vld [vmem:[%s218 + $0xd18] sm:$0xff]
        %v703 = vld [vmem:[%s218 + $0xd20] sm:$0xff]
        %v704 = vld [vmem:[%s218 + $0xd28] sm:$0xff]
        %v705 = vld [vmem:[%s218 + $0xd30] sm:$0xff]
        %v706 = vld [vmem:[%s218 + $0xd38] sm:$0xff]
        %v707 = vld [vmem:[%s218 + $0xd40] sm:$0xff]
        %v708 = vld [vmem:[%s218 + $0xd48] sm:$0xff]
        %v709 = vld [vmem:[%s218 + $0xd50] sm:$0xff]
        %v710 = vld [vmem:[%s218 + $0xd58] sm:$0xff]
        %v711 = vld [vmem:[%s218 + $0xd60] sm:$0xff]
        %v712 = vld [vmem:[%s218 + $0xd68] sm:$0xff]
        %v713 = vld [vmem:[%s218 + $0xd70] sm:$0xff]
        %v714 = vld [vmem:[%s218 + $0xd78] sm:$0xff]
        %v715 = vld [vmem:[%s218 + $0xd80] sm:$0xff]
        %v716 = vld [vmem:[%s218 + $0xd88] sm:$0xff]
        %v717 = vld [vmem:[%s218 + $0xd90] sm:$0xff]
        %v718 = vld [vmem:[%s218 + $0xd98] sm:$0xff]
        %v719 = vld [vmem:[%s218 + $0xda0] sm:$0xff]
        %v720 = vld [vmem:[%s218 + $0xda8] sm:$0xff]
        %v721 = vld [vmem:[%s218 + $0xdb0] sm:$0xff]
        %v722 = vld [vmem:[%s218 + $0xdb8] sm:$0xff]
        %v723 = vld [vmem:[%s218 + $0xdc0] sm:$0xff]
        %v724 = vld [vmem:[%s218 + $0xdc8] sm:$0xff]
        %v725 = vld [vmem:[%s218 + $0xdd0] sm:$0xff]
        %v726 = vld [vmem:[%s218 + $0xdd8] sm:$0xff]
        %v727 = vld [vmem:[%s218 + $0xde0] sm:$0xff]
        %v728 = vld [vmem:[%s218 + $0xde8] sm:$0xff]
        %v729 = vld [vmem:[%s218 + $0xdf0] sm:$0xff]
        %v730 = vld [vmem:[%s218 + $0xdf8] sm:$0xff]
        %v731 = vld [vmem:[%s218 + $0xe00] sm:$0xff]
        %v732 = vld [vmem:[%s218 + $0xe08] sm:$0xff]
        %v733 = vld [vmem:[%s218 + $0xe10] sm:$0xff]
        %v734 = vld [vmem:[%s218 + $0xe18] sm:$0xff]
        %v735 = vld [vmem:[%s218 + $0xe20] sm:$0xff]
        %v736 = vld [vmem:[%s218 + $0xe28] sm:$0xff]
        %v737 = vld [vmem:[%s218 + $0xe30] sm:$0xff]
        %v738 = vld [vmem:[%s218 + $0xe38] sm:$0xff]
        %v739 = vld [vmem:[%s218 + $0xe40] sm:$0xff]
        %v740 = vld [vmem:[%s218 + $0xe48] sm:$0xff]
        %v741 = vld [vmem:[%s218 + $0xe50] sm:$0xff]
        %v742 = vld [vmem:[%s218 + $0xe58] sm:$0xff]
        %v743 = vld [vmem:[%s218 + $0xe60] sm:$0xff]
        %v744 = vld [vmem:[%s218 + $0xe68] sm:$0xff]
        %v745 = vld [vmem:[%s218 + $0xe70] sm:$0xff]
        %v746 = vld [vmem:[%s218 + $0xe78] sm:$0xff]
        %v747 = vld [vmem:[%s218 + $0xe80] sm:$0xff]
        %v748 = vld [vmem:[%s218 + $0xe88] sm:$0xff]
        %v749 = vld [vmem:[%s218 + $0xe90] sm:$0xff]
        %v750 = vld [vmem:[%s218 + $0xe98] sm:$0xff]
        %v751 = vld [vmem:[%s218 + $0xea0] sm:$0xff]
        %v752 = vld [vmem:[%s218 + $0xea8] sm:$0xff]
        %v753 = vld [vmem:[%s218 + $0xeb0] sm:$0xff]
        %v754 = vld [vmem:[%s218 + $0xeb8] sm:$0xff]
        %v755 = vld [vmem:[%s218 + $0xec0] sm:$0xff]
        %v756 = vld [vmem:[%s218 + $0xec8] sm:$0xff]
        %v757 = vld [vmem:[%s218 + $0xed0] sm:$0xff]
        %v758 = vld [vmem:[%s218 + $0xed8] sm:$0xff]
        %v759 = vld [vmem:[%s218 + $0xee0] sm:$0xff]
        %v760 = vld [vmem:[%s218 + $0xee8] sm:$0xff]
        %v761 = vld [vmem:[%s218 + $0xef0] sm:$0xff]
        %v762 = vld [vmem:[%s218 + $0xef8] sm:$0xff]
        %v763 = vld [vmem:[%s218 + $0xf00] sm:$0xff]
        %v764 = vld [vmem:[%s218 + $0xf08] sm:$0xff]
        %v765 = vld [vmem:[%s218 + $0xf10] sm:$0xff]
        %v766 = vld [vmem:[%s218 + $0xf18] sm:$0xff]
        %v767 = vld [vmem:[%s218 + $0xf20] sm:$0xff]
        %v768 = vld [vmem:[%s218 + $0xf28] sm:$0xff]
        %v769 = vld [vmem:[%s218 + $0xf30] sm:$0xff]
        %v770 = vld [vmem:[%s218 + $0xf38] sm:$0xff]
        %v771 = vld [vmem:[%s218 + $0xf40] sm:$0xff]
        %v772 = vld [vmem:[%s218 + $0xf48] sm:$0xff]
        %v773 = vld [vmem:[%s218 + $0xf50] sm:$0xff]
        %v774 = vld [vmem:[%s218 + $0xf58] sm:$0xff]
        %v775 = vld [vmem:[%s218 + $0xf60] sm:$0xff]
        %v776 = vld [vmem:[%s218 + $0xf68] sm:$0xff]
        %v777 = vld [vmem:[%s218 + $0xf70] sm:$0xff]
        %v778 = vld [vmem:[%s218 + $0xf78] sm:$0xff]
        %v779 = vld [vmem:[%s218 + $0xf80] sm:$0xff]
        %v780 = vld [vmem:[%s218 + $0xf88] sm:$0xff]
        %v781 = vld [vmem:[%s218 + $0xf90] sm:$0xff]
        %v782 = vld [vmem:[%s218 + $0xf98] sm:$0xff]
        %v783 = vld [vmem:[%s218 + $0xfa0] sm:$0xff]
        %v784 = vld [vmem:[%s218 + $0xfa8] sm:$0xff]
        %v785 = vld [vmem:[%s218 + $0xfb0] sm:$0xff]
        %v786 = vld [vmem:[%s218 + $0xfb8] sm:$0xff]
        %v787 = vld [vmem:[%s218 + $0xfc0] sm:$0xff]
        %v788 = vld [vmem:[%s218 + $0xfc8] sm:$0xff]
        %v789 = vld [vmem:[%s218 + $0xfd0] sm:$0xff]
        %v790 = vld [vmem:[%s218 + $0xfd8] sm:$0xff]
        %v791 = vld [vmem:[%s218 + $0xfe0] sm:$0xff]
        %v792 = vld [vmem:[%s218 + $0xfe8] sm:$0xff]
        %v793 = vld [vmem:[%s218 + $0xff0] sm:$0xff]
        %v794 = vld [vmem:[%s218 + $0xff8] sm:$0xff]
        %v795 = vld [vmem:[%s218 + $0x1000] sm:$0xff]
        %v796 = vld [vmem:[%s218 + $0x1008] sm:$0xff]
        %v797 = vld [vmem:[%s218 + $0x1010] sm:$0xff]
        %v798 = vld [vmem:[%s218 + $0x1018] sm:$0xff]
        %v799 = vld [vmem:[%s218 + $0x1020] sm:$0xff]
        %v800 = vld [vmem:[%s218 + $0x1028] sm:$0xff]
        %v801 = vld [vmem:[%s218 + $0x1030] sm:$0xff]
        %v802 = vld [vmem:[%s218 + $0x1038] sm:$0xff]
        %v803 = vld [vmem:[%s218 + $0x1040] sm:$0xff]
        %v804 = vld [vmem:[%s218 + $0x1048] sm:$0xff]
        %v805 = vld [vmem:[%s218 + $0x1050] sm:$0xff]
        %v806 = vld [vmem:[%s218 + $0x1058] sm:$0xff]
        %v807 = vld [vmem:[%s218 + $0x1060] sm:$0xff]
        %v808 = vld [vmem:[%s218 + $0x1068] sm:$0xff]
        %v809 = vld [vmem:[%s218 + $0x1070] sm:$0xff]
        %v810 = vld [vmem:[%s218 + $0x1078] sm:$0xff]
        %v811 = vld [vmem:[%s218 + $0x1080] sm:$0xff]
        %v812 = vld [vmem:[%s218 + $0x1088] sm:$0xff]
        %v813 = vld [vmem:[%s218 + $0x1090] sm:$0xff]
        %v814 = vld [vmem:[%s218 + $0x1098] sm:$0xff]
        %v815 = vld [vmem:[%s218 + $0x10a0] sm:$0xff]
        %v816 = vld [vmem:[%s218 + $0x10a8] sm:$0xff]
        %v817 = vld [vmem:[%s218 + $0x10b0] sm:$0xff]
        %v818 = vld [vmem:[%s218 + $0x10b8] sm:$0xff]
        %v819 = vld [vmem:[%s218 + $0x10c0] sm:$0xff]
        %v820 = vld [vmem:[%s218 + $0x10c8] sm:$0xff]
        %v821 = vld [vmem:[%s218 + $0x10d0] sm:$0xff]
        %v822 = vld [vmem:[%s218 + $0x10d8] sm:$0xff]
        %v823 = vld [vmem:[%s218 + $0x10e0] sm:$0xff]
        %v824 = vld [vmem:[%s218 + $0x10e8] sm:$0xff]
        %v825 = vld [vmem:[%s218 + $0x10f0] sm:$0xff]
        %v826 = vld [vmem:[%s218 + $0x10f8] sm:$0xff]
        %v827 = vld [vmem:[%s218 + $0x1100] sm:$0xff]
        %v828 = vld [vmem:[%s218 + $0x1108] sm:$0xff]
        %v829 = vld [vmem:[%s218 + $0x1110] sm:$0xff]
        %v830 = vld [vmem:[%s218 + $0x1118] sm:$0xff]
        %v831 = vld [vmem:[%s218 + $0x1120] sm:$0xff]
        %v832 = vld [vmem:[%s218 + $0x1128] sm:$0xff]
        %v833 = vld [vmem:[%s218 + $0x1130] sm:$0xff]
        %v834 = vld [vmem:[%s218 + $0x1138] sm:$0xff]
        %v835 = vld [vmem:[%s218 + $0x1140] sm:$0xff]
        %v836 = vld [vmem:[%s218 + $0x1148] sm:$0xff]
        %v837 = vld [vmem:[%s218 + $0x1150] sm:$0xff]
        %v838 = vld [vmem:[%s218 + $0x1158] sm:$0xff]
        %v839 = vld [vmem:[%s218 + $0x1160] sm:$0xff]
        %v840 = vld [vmem:[%s218 + $0x1168] sm:$0xff]
        %v841 = vld [vmem:[%s218 + $0x1170] sm:$0xff]
        %v842 = vld [vmem:[%s218 + $0x1178] sm:$0xff]
        %v843 = vld [vmem:[%s218 + $0x1180] sm:$0xff]
        %v844 = vld [vmem:[%s218 + $0x1188] sm:$0xff]
        %v845 = vld [vmem:[%s218 + $0x1190] sm:$0xff]
        %v846 = vld [vmem:[%s218 + $0x1198] sm:$0xff]
        %v847 = vld [vmem:[%s218 + $0x11a0] sm:$0xff]
        %v848 = vld [vmem:[%s218 + $0x11a8] sm:$0xff]
        %v849 = vld [vmem:[%s218 + $0x11b0] sm:$0xff]
        %v850 = vld [vmem:[%s218 + $0x11b8] sm:$0xff]
        %v851 = vld [vmem:[%s218 + $0x11c0] sm:$0xff]
        %v852 = vld [vmem:[%s218 + $0x11c8] sm:$0xff]
        %v853 = vld [vmem:[%s218 + $0x11d0] sm:$0xff]
        %v854 = vld [vmem:[%s218 + $0x11d8] sm:$0xff]
        %v855 = vld [vmem:[%s218 + $0x11e0] sm:$0xff]
        %v856 = vld [vmem:[%s218 + $0x11e8] sm:$0xff]
        %v857 = vld [vmem:[%s218 + $0x11f0] sm:$0xff]
        %v858 = vld [vmem:[%s218 + $0x11f8] sm:$0xff]
        %v859 = vld [vmem:[%s218 + $0x1200] sm:$0xff]
        %v860 = vld [vmem:[%s218 + $0x1208] sm:$0xff]
        %v861 = vld [vmem:[%s218 + $0x1210] sm:$0xff]
        %v862 = vld [vmem:[%s218 + $0x1218] sm:$0xff]
        %v863 = vld [vmem:[%s218 + $0x1220] sm:$0xff]
        %v864 = vld [vmem:[%s218 + $0x1228] sm:$0xff]
        %v865 = vld [vmem:[%s218 + $0x1230] sm:$0xff]
        %v866 = vld [vmem:[%s218 + $0x1238] sm:$0xff]
        %v867 = vld [vmem:[%s218 + $0x1240] sm:$0xff]
        %v868 = vld [vmem:[%s218 + $0x1248] sm:$0xff]
        %v869 = vld [vmem:[%s218 + $0x1250] sm:$0xff]
        %v870 = vld [vmem:[%s218 + $0x1258] sm:$0xff]
        %v871 = vld [vmem:[%s218 + $0x1260] sm:$0xff]
        %v872 = vld [vmem:[%s218 + $0x1268] sm:$0xff]
        %v873 = vld [vmem:[%s218 + $0x1270] sm:$0xff]
        %v874 = vld [vmem:[%s218 + $0x1278] sm:$0xff]
        %v875 = vld [vmem:[%s218 + $0x1280] sm:$0xff]
        %v876 = vld [vmem:[%s218 + $0x1288] sm:$0xff]
        %v877 = vld [vmem:[%s218 + $0x1290] sm:$0xff]
        %v878 = vld [vmem:[%s218 + $0x1298] sm:$0xff]
        %v879 = vld [vmem:[%s218 + $0x12a0] sm:$0xff]
        %v880 = vld [vmem:[%s218 + $0x12a8] sm:$0xff]
        %v881 = vld [vmem:[%s218 + $0x12b0] sm:$0xff]
        %v882 = vld [vmem:[%s218 + $0x12b8] sm:$0xff]
        %v883 = vld [vmem:[%s218 + $0x12c0] sm:$0xff]
        %v884 = vld [vmem:[%s218 + $0x12c8] sm:$0xff]
        %v885 = vld [vmem:[%s218 + $0x12d0] sm:$0xff]
        %v886 = vld [vmem:[%s218 + $0x12d8] sm:$0xff]
        %v887 = vld [vmem:[%s218 + $0x12e0] sm:$0xff]
        %v888 = vld [vmem:[%s218 + $0x12e8] sm:$0xff]
        %v889 = vld [vmem:[%s218 + $0x12f0] sm:$0xff]
        %v890 = vld [vmem:[%s218 + $0x12f8] sm:$0xff]
        %v891 = vld [vmem:[%s218 + $0x1300] sm:$0xff]
        %v892 = vld [vmem:[%s218 + $0x1308] sm:$0xff]
        %v893 = vld [vmem:[%s218 + $0x1310] sm:$0xff]
        %v894 = vld [vmem:[%s218 + $0x1318] sm:$0xff]
        %v895 = vld [vmem:[%s218 + $0x1320] sm:$0xff]
        %v896 = vld [vmem:[%s218 + $0x1328] sm:$0xff]
        %v897 = vld [vmem:[%s218 + $0x1330] sm:$0xff]
        %v898 = vld [vmem:[%s218 + $0x1338] sm:$0xff]
        %v899 = vld [vmem:[%s218 + $0x1340] sm:$0xff]
        %v900 = vld [vmem:[%s218 + $0x1348] sm:$0xff]
        %v901 = vld [vmem:[%s218 + $0x1350] sm:$0xff]
        %v902 = vld [vmem:[%s218 + $0x1358] sm:$0xff]
        %v903 = vld [vmem:[%s218 + $0x1360] sm:$0xff]
        %v904 = vld [vmem:[%s218 + $0x1368] sm:$0xff]
        %v905 = vld [vmem:[%s218 + $0x1370] sm:$0xff]
        %v906 = vld [vmem:[%s218 + $0x1378] sm:$0xff]
        %v907 = vld [vmem:[%s218 + $0x1380] sm:$0xff]
        %v908 = vld [vmem:[%s218 + $0x1388] sm:$0xff]
        %v909 = vld [vmem:[%s218 + $0x1390] sm:$0xff]
        %v910 = vld [vmem:[%s218 + $0x1398] sm:$0xff]
        %v911 = vld [vmem:[%s218 + $0x13a0] sm:$0xff]
        %v912 = vld [vmem:[%s218 + $0x13a8] sm:$0xff]
        %v913 = vld [vmem:[%s218 + $0x13b0] sm:$0xff]
        %v914 = vld [vmem:[%s218 + $0x13b8] sm:$0xff]
        %v915 = vld [vmem:[%s218 + $0x13c0] sm:$0xff]
        %v916 = vld [vmem:[%s218 + $0x13c8] sm:$0xff]
        %v917 = vld [vmem:[%s218 + $0x13d0] sm:$0xff]
        %v918 = vld [vmem:[%s218 + $0x13d8] sm:$0xff]
        %v919 = vld [vmem:[%s218 + $0x13e0] sm:$0xff]
        %v920 = vld [vmem:[%s218 + $0x13e8] sm:$0xff]
        %v921 = vld [vmem:[%s218 + $0x13f0] sm:$0xff]
        %v922 = vld [vmem:[%s218 + $0x13f8] sm:$0xff]
        %v923 = vld [vmem:[%s218 + $0x1400] sm:$0xff]
        %v924 = vld [vmem:[%s218 + $0x1408] sm:$0xff]
        %v925 = vld [vmem:[%s218 + $0x1410] sm:$0xff]
        %v926 = vld [vmem:[%s218 + $0x1418] sm:$0xff]
        %v927 = vld [vmem:[%s218 + $0x1420] sm:$0xff]
        %v928 = vld [vmem:[%s218 + $0x1428] sm:$0xff]
        %v929 = vld [vmem:[%s218 + $0x1430] sm:$0xff]
        %v930 = vld [vmem:[%s218 + $0x1438] sm:$0xff]
        %v931 = vld [vmem:[%s218 + $0x1440] sm:$0xff]
        %v932 = vld [vmem:[%s218 + $0x1448] sm:$0xff]
        %v933 = vld [vmem:[%s218 + $0x1450] sm:$0xff]
        %v934 = vld [vmem:[%s218 + $0x1458] sm:$0xff]
        %v935 = vld [vmem:[%s218 + $0x1460] sm:$0xff]
        %v936 = vld [vmem:[%s218 + $0x1468] sm:$0xff]
        %v937 = vld [vmem:[%s218 + $0x1470] sm:$0xff]
        %v938 = vld [vmem:[%s218 + $0x1478] sm:$0xff]
        %v939 = vld [vmem:[%s218 + $0x1480] sm:$0xff]
        %v940 = vld [vmem:[%s218 + $0x1488] sm:$0xff]
        %v941 = vld [vmem:[%s218 + $0x1490] sm:$0xff]
        %v942 = vld [vmem:[%s218 + $0x1498] sm:$0xff]
        %v943 = vld [vmem:[%s218 + $0x14a0] sm:$0xff]
        %v944 = vld [vmem:[%s218 + $0x14a8] sm:$0xff]
        %v945 = vld [vmem:[%s218 + $0x14b0] sm:$0xff]
        %v946 = vld [vmem:[%s218 + $0x14b8] sm:$0xff]
        %v947 = vld [vmem:[%s218 + $0x14c0] sm:$0xff]
        %v948 = vld [vmem:[%s218 + $0x14c8] sm:$0xff]
        %v949 = vld [vmem:[%s218 + $0x14d0] sm:$0xff]
        %v950 = vld [vmem:[%s218 + $0x14d8] sm:$0xff]
        %v951 = vld [vmem:[%s218 + $0x14e0] sm:$0xff]
        %v952 = vld [vmem:[%s218 + $0x14e8] sm:$0xff]
        %v953 = vld [vmem:[%s218 + $0x14f0] sm:$0xff]
        %v954 = vld [vmem:[%s218 + $0x14f8] sm:$0xff]
        %v955 = vld [vmem:[%s218 + $0x1500] sm:$0xff]
        %v956 = vld [vmem:[%s218 + $0x1508] sm:$0xff]
        %v957 = vld [vmem:[%s218 + $0x1510] sm:$0xff]
        %v958 = vld [vmem:[%s218 + $0x1518] sm:$0xff]
        %v959 = vld [vmem:[%s218 + $0x1520] sm:$0xff]
        %v960 = vld [vmem:[%s218 + $0x1528] sm:$0xff]
        %v961 = vld [vmem:[%s218 + $0x1530] sm:$0xff]
        %v962 = vld [vmem:[%s218 + $0x1538] sm:$0xff]
        %v963 = vld [vmem:[%s218 + $0x1540] sm:$0xff]
        %v964 = vld [vmem:[%s218 + $0x1548] sm:$0xff]
        %v965 = vld [vmem:[%s218 + $0x1550] sm:$0xff]
        %v966 = vld [vmem:[%s218 + $0x1558] sm:$0xff]
        %v967 = vld [vmem:[%s218 + $0x1560] sm:$0xff]
        %v968 = vld [vmem:[%s218 + $0x1568] sm:$0xff]
        %v969 = vld [vmem:[%s218 + $0x1570] sm:$0xff]
        %v970 = vld [vmem:[%s218 + $0x1578] sm:$0xff]
        %v971 = vld [vmem:[%s218 + $0x1580] sm:$0xff]
        %v972 = vld [vmem:[%s218 + $0x1588] sm:$0xff]
        %v973 = vld [vmem:[%s218 + $0x1590] sm:$0xff]
        %v974 = vld [vmem:[%s218 + $0x1598] sm:$0xff]
        %v975 = vld [vmem:[%s218 + $0x15a0] sm:$0xff]
        %v976 = vld [vmem:[%s218 + $0x15a8] sm:$0xff]
        %v977 = vld [vmem:[%s218 + $0x15b0] sm:$0xff]
        %v978 = vld [vmem:[%s218 + $0x15b8] sm:$0xff]
        %v979 = vld [vmem:[%s218 + $0x15c0] sm:$0xff]
        %v980 = vld [vmem:[%s218 + $0x15c8] sm:$0xff]
        %v981 = vld [vmem:[%s218 + $0x15d0] sm:$0xff]
        %v982 = vld [vmem:[%s218 + $0x15d8] sm:$0xff]
        %v983 = vld [vmem:[%s218 + $0x15e0] sm:$0xff]
        %v984 = vld [vmem:[%s218 + $0x15e8] sm:$0xff]
        %v985 = vld [vmem:[%s218 + $0x15f0] sm:$0xff]
        %v986 = vld [vmem:[%s218 + $0x15f8] sm:$0xff]
        %v987 = vld [vmem:[%s218 + $0x1600] sm:$0xff]
        %v988 = vld [vmem:[%s218 + $0x1608] sm:$0xff]
        %v989 = vld [vmem:[%s218 + $0x1610] sm:$0xff]
        %v990 = vld [vmem:[%s218 + $0x1618] sm:$0xff]
        %v991 = vld [vmem:[%s218 + $0x1620] sm:$0xff]
        %v992 = vld [vmem:[%s218 + $0x1628] sm:$0xff]
        %v993 = vld [vmem:[%s218 + $0x1630] sm:$0xff]
        %v994 = vld [vmem:[%s218 + $0x1638] sm:$0xff]
        %v995 = vld [vmem:[%s218 + $0x1640] sm:$0xff]
        %v996 = vld [vmem:[%s218 + $0x1648] sm:$0xff]
        %v997 = vld [vmem:[%s218 + $0x1650] sm:$0xff]
        %v998 = vld [vmem:[%s218 + $0x1658] sm:$0xff]
        %v999 = vld [vmem:[%s218 + $0x1660] sm:$0xff]
        %v1000 = vld [vmem:[%s218 + $0x1668] sm:$0xff]
        %v1001 = vld [vmem:[%s218 + $0x1670] sm:$0xff]
        %v1002 = vld [vmem:[%s218 + $0x1678] sm:$0xff]
        %v1003 = vld [vmem:[%s218 + $0x1680] sm:$0xff]
        %v1004 = vld [vmem:[%s218 + $0x1688] sm:$0xff]
        %v1005 = vld [vmem:[%s218 + $0x1690] sm:$0xff]
        %v1006 = vld [vmem:[%s218 + $0x1698] sm:$0xff]
        %v1007 = vld [vmem:[%s218 + $0x16a0] sm:$0xff]
        %v1008 = vld [vmem:[%s218 + $0x16a8] sm:$0xff]
        %v1009 = vld [vmem:[%s218 + $0x16b0] sm:$0xff]
        %v1010 = vld [vmem:[%s218 + $0x16b8] sm:$0xff]
        %v1011 = vld [vmem:[%s218 + $0x16c0] sm:$0xff]
        %v1012 = vld [vmem:[%s218 + $0x16c8] sm:$0xff]
        %v1013 = vld [vmem:[%s218 + $0x16d0] sm:$0xff]
        %v1014 = vld [vmem:[%s218 + $0x16d8] sm:$0xff]
        %v1015 = vld [vmem:[%s218 + $0x16e0] sm:$0xff]
        %v1016 = vld [vmem:[%s218 + $0x16e8] sm:$0xff]
        %v1017 = vld [vmem:[%s218 + $0x16f0] sm:$0xff]
        %v1018 = vld [vmem:[%s218 + $0x16f8] sm:$0xff]
        %v1019 = vld [vmem:[%s218 + $0x1700] sm:$0xff]
        %v1020 = vld [vmem:[%s218 + $0x1708] sm:$0xff]
        %v1021 = vld [vmem:[%s218 + $0x1710] sm:$0xff]
        %v1022 = vld [vmem:[%s218 + $0x1718] sm:$0xff]
        %v1023 = vld [vmem:[%s218 + $0x1720] sm:$0xff]
        %v1024 = vld [vmem:[%s218 + $0x1728] sm:$0xff]
        %v1025 = vld [vmem:[%s218 + $0x1730] sm:$0xff]
        %v1026 = vld [vmem:[%s218 + $0x1738] sm:$0xff]
        %v1027 = vld [vmem:[%s218 + $0x1740] sm:$0xff]
        %v1028 = vld [vmem:[%s218 + $0x1748] sm:$0xff]
        %v1029 = vld [vmem:[%s218 + $0x1750] sm:$0xff]
        %v1030 = vld [vmem:[%s218 + $0x1758] sm:$0xff]
        %v1031 = vld [vmem:[%s218 + $0x1760] sm:$0xff]
        %v1032 = vld [vmem:[%s218 + $0x1768] sm:$0xff]
        %v1033 = vld [vmem:[%s218 + $0x1770] sm:$0xff]
        %v1034 = vld [vmem:[%s218 + $0x1778] sm:$0xff]
        %v1035 = vld [vmem:[%s218 + $0x1780] sm:$0xff]
        %v1036 = vld [vmem:[%s218 + $0x1788] sm:$0xff]
        %v1037 = vld [vmem:[%s218 + $0x1790] sm:$0xff]
        %v1038 = vld [vmem:[%s218 + $0x1798] sm:$0xff]
        %v1039 = vld [vmem:[%s218 + $0x17a0] sm:$0xff]
        %v1040 = vld [vmem:[%s218 + $0x17a8] sm:$0xff]
        %v1041 = vld [vmem:[%s218 + $0x17b0] sm:$0xff]
        %v1042 = vld [vmem:[%s218 + $0x17b8] sm:$0xff]
        %v1043 = vld [vmem:[%s218 + $0x17c0] sm:$0xff]
        %v1044 = vld [vmem:[%s218 + $0x17c8] sm:$0xff]
        %v1045 = vld [vmem:[%s218 + $0x17d0] sm:$0xff]
        %v1046 = vld [vmem:[%s218 + $0x17d8] sm:$0xff]
        %v1047 = vld [vmem:[%s218 + $0x17e0] sm:$0xff]
        %v1048 = vld [vmem:[%s218 + $0x17e8] sm:$0xff]
        %v1049 = vld [vmem:[%s218 + $0x17f0] sm:$0xff]
        %v1050 = vld [vmem:[%s218 + $0x17f8] sm:$0xff]
        %v1051 = vld [vmem:[%s218 + $0x1800] sm:$0xff]
        %v1052 = vld [vmem:[%s218 + $0x1808] sm:$0xff]
        %v1053 = vld [vmem:[%s218 + $0x1810] sm:$0xff]
        %v1054 = vld [vmem:[%s218 + $0x1818] sm:$0xff]
        %v1055 = vld [vmem:[%s218 + $0x1820] sm:$0xff]
        %v1056 = vld [vmem:[%s218 + $0x1828] sm:$0xff]
        %v1057 = vld [vmem:[%s218 + $0x1830] sm:$0xff]
        %v1058 = vld [vmem:[%s218 + $0x1838] sm:$0xff]
        %v1059 = vld [vmem:[%s218 + $0x1840] sm:$0xff]
        %v1060 = vld [vmem:[%s218 + $0x1848] sm:$0xff]
        %v1061 = vld [vmem:[%s218 + $0x1850] sm:$0xff]
        %v1062 = vld [vmem:[%s218 + $0x1858] sm:$0xff]
        %v1063 = vld [vmem:[%s218 + $0x1860] sm:$0xff]
        %v1064 = vld [vmem:[%s218 + $0x1868] sm:$0xff]
        %v1065 = vld [vmem:[%s218 + $0x1870] sm:$0xff]
        %v1066 = vld [vmem:[%s218 + $0x1878] sm:$0xff]
        %v1067 = vld [vmem:[%s218 + $0x1880] sm:$0xff]
        %v1068 = vld [vmem:[%s218 + $0x1888] sm:$0xff]
        %v1069 = vld [vmem:[%s218 + $0x1890] sm:$0xff]
        %v1070 = vld [vmem:[%s218 + $0x1898] sm:$0xff]
        %v1071 = vld [vmem:[%s218 + $0x18a0] sm:$0xff]
        %v1072 = vld [vmem:[%s218 + $0x18a8] sm:$0xff]
        %v1073 = vld [vmem:[%s218 + $0x18b0] sm:$0xff]
        %v1074 = vld [vmem:[%s218 + $0x18b8] sm:$0xff]
        %v1075 = vld [vmem:[%s218 + $0x18c0] sm:$0xff]
        %v1076 = vld [vmem:[%s218 + $0x18c8] sm:$0xff]
        %v1077 = vld [vmem:[%s218 + $0x18d0] sm:$0xff]
        %v1078 = vld [vmem:[%s218 + $0x18d8] sm:$0xff]
        %v1079 = vld [vmem:[%s218 + $0x18e0] sm:$0xff]
        %v1080 = vld [vmem:[%s218 + $0x18e8] sm:$0xff]
        %v1081 = vld [vmem:[%s218 + $0x18f0] sm:$0xff]
        %v1082 = vld [vmem:[%s218 + $0x18f8] sm:$0xff]
        %v1083 = vld [vmem:[%s218 + $0x1900] sm:$0xff]
        %v1084 = vld [vmem:[%s218 + $0x1908] sm:$0xff]
        %v1085 = vld [vmem:[%s218 + $0x1910] sm:$0xff]
        %v1086 = vld [vmem:[%s218 + $0x1918] sm:$0xff]
        %v1087 = vld [vmem:[%s218 + $0x1920] sm:$0xff]
        %v1088 = vld [vmem:[%s218 + $0x1928] sm:$0xff]
        %v1089 = vld [vmem:[%s218 + $0x1930] sm:$0xff]
        %v1090 = vld [vmem:[%s218 + $0x1938] sm:$0xff]
        %v1091 = vld [vmem:[%s218 + $0x1940] sm:$0xff]
        %v1092 = vld [vmem:[%s218 + $0x1948] sm:$0xff]
        %v1093 = vld [vmem:[%s218 + $0x1950] sm:$0xff]
        %v1094 = vld [vmem:[%s218 + $0x1958] sm:$0xff]
        %v1095 = vld [vmem:[%s218 + $0x1960] sm:$0xff]
        %v1096 = vld [vmem:[%s218 + $0x1968] sm:$0xff]
        %v1097 = vld [vmem:[%s218 + $0x1970] sm:$0xff]
        %v1098 = vld [vmem:[%s218 + $0x1978] sm:$0xff]
        %v1099 = vld [vmem:[%s218 + $0x1980] sm:$0xff]
        %v1100 = vld [vmem:[%s218 + $0x1988] sm:$0xff]
        %v1101 = vld [vmem:[%s218 + $0x1990] sm:$0xff]
        %v1102 = vld [vmem:[%s218 + $0x1998] sm:$0xff]
        %v1103 = vld [vmem:[%s218 + $0x19a0] sm:$0xff]
        %v1104 = vld [vmem:[%s218 + $0x19a8] sm:$0xff]
        %v1105 = vld [vmem:[%s218 + $0x19b0] sm:$0xff]
        %v1106 = vld [vmem:[%s218 + $0x19b8] sm:$0xff]
        %v1107 = vld [vmem:[%s218 + $0x19c0] sm:$0xff]
        %v1108 = vld [vmem:[%s218 + $0x19c8] sm:$0xff]
        %v1109 = vld [vmem:[%s218 + $0x19d0] sm:$0xff]
        %v1110 = vld [vmem:[%s218 + $0x19d8] sm:$0xff]
        %v1111 = vld [vmem:[%s218 + $0x19e0] sm:$0xff]
        %v1112 = vld [vmem:[%s218 + $0x19e8] sm:$0xff]
        %v1113 = vld [vmem:[%s218 + $0x19f0] sm:$0xff]
        %v1114 = vld [vmem:[%s218 + $0x19f8] sm:$0xff]
        %v1115 = vld [vmem:[%s218 + $0x1a00] sm:$0xff]
        %v1116 = vld [vmem:[%s218 + $0x1a08] sm:$0xff]
        %v1117 = vld [vmem:[%s218 + $0x1a10] sm:$0xff]
        %v1118 = vld [vmem:[%s218 + $0x1a18] sm:$0xff]
        %v1119 = vld [vmem:[%s218 + $0x1a20] sm:$0xff]
        %v1120 = vld [vmem:[%s218 + $0x1a28] sm:$0xff]
        %v1121 = vld [vmem:[%s218 + $0x1a30] sm:$0xff]
        %v1122 = vld [vmem:[%s218 + $0x1a38] sm:$0xff]
        %v1123 = vld [vmem:[%s218 + $0x1a40] sm:$0xff]
        %v1124 = vld [vmem:[%s218 + $0x1a48] sm:$0xff]
        %v1125 = vld [vmem:[%s218 + $0x1a50] sm:$0xff]
        %v1126 = vld [vmem:[%s218 + $0x1a58] sm:$0xff]
        %v1127 = vld [vmem:[%s218 + $0x1a60] sm:$0xff]
        %v1128 = vld [vmem:[%s218 + $0x1a68] sm:$0xff]
        %v1129 = vld [vmem:[%s218 + $0x1a70] sm:$0xff]
        %v1130 = vld [vmem:[%s218 + $0x1a78] sm:$0xff]
        %v1131 = vld [vmem:[%s218 + $0x1a80] sm:$0xff]
        %v1132 = vld [vmem:[%s218 + $0x1a88] sm:$0xff]
        %v1133 = vld [vmem:[%s218 + $0x1a90] sm:$0xff]
        %v1134 = vld [vmem:[%s218 + $0x1a98] sm:$0xff]
        %v1135 = vld [vmem:[%s218 + $0x1aa0] sm:$0xff]
        %v1136 = vld [vmem:[%s218 + $0x1aa8] sm:$0xff]
        %v1137 = vld [vmem:[%s218 + $0x1ab0] sm:$0xff]
        %v1138 = vld [vmem:[%s218 + $0x1ab8] sm:$0xff]
        %v1139 = vld [vmem:[%s218 + $0x1ac0] sm:$0xff]
        %v1140 = vld [vmem:[%s218 + $0x1ac8] sm:$0xff]
        %v1141 = vld [vmem:[%s218 + $0x1ad0] sm:$0xff]
        %v1142 = vld [vmem:[%s218 + $0x1ad8] sm:$0xff]
        %v1143 = vld [vmem:[%s218 + $0x1ae0] sm:$0xff]
        %v1144 = vld [vmem:[%s218 + $0x1ae8] sm:$0xff]
        %v1145 = vld [vmem:[%s218 + $0x1af0] sm:$0xff]
        %v1146 = vld [vmem:[%s218 + $0x1af8] sm:$0xff]
        %1148 = vst [vmem:[#allocation1] ss:$9 sm:$0xff] %v276
        %v1149 = vld [vmem:[#allocation1] sm:$0xff]
        %v1150 = vld [vmem:[#allocation1 + $0x9] sm:$0xff]
        %v1151 = vld [vmem:[#allocation1 + $0x12] sm:$0xff]
        %v1152 = vld [vmem:[#allocation1 + $0x1b] sm:$0xff]
        %v1153 = vld [vmem:[#allocation1 + $0x24] sm:$0xff]
        %v1154 = vld [vmem:[#allocation1 + $0x2d] sm:$0xff]
        %v1155 = vld [vmem:[#allocation1 + $0x36] sm:$0xff]
        %v1156 = vld [vmem:[#allocation1 + $0x3f] sm:$0xff]
        %1158 = vst [vmem:[#allocation1] ss:$9 sm:$0xff] %v277
        %v1159 = vld [vmem:[#allocation1] sm:$0xff]
        %v1160 = vld [vmem:[#allocation1 + $0x9] sm:$0xff]
        %v1161 = vld [vmem:[#allocation1 + $0x12] sm:$0xff]
        %v1162 = vld [vmem:[#allocation1 + $0x1b] sm:$0xff]
        %v1163 = vld [vmem:[#allocation1 + $0x24] sm:$0xff]
        %v1164 = vld [vmem:[#allocation1 + $0x2d] sm:$0xff]
        %v1165 = vld [vmem:[#allocation1 + $0x36] sm:$0xff]
        %v1166 = vld [vmem:[#allocation1 + $0x3f] sm:$0xff]
        %1168 = vst [vmem:[#allocation1] ss:$9 sm:$0xff] %v278
        %v1169 = vld [vmem:[#allocation1] sm:$0xff]
        %v1170 = vld [vmem:[#allocation1 + $0x9] sm:$0xff]
        %v1171 = vld [vmem:[#allocation1 + $0x12] sm:$0xff]
        %v1172 = vld [vmem:[#allocation1 + $0x1b] sm:$0xff]
        %v1173 = vld [vmem:[#allocation1 + $0x24] sm:$0xff]
        %v1174 = vld [vmem:[#allocation1 + $0x2d] sm:$0xff]
        %v1175 = vld [vmem:[#allocation1 + $0x36] sm:$0xff]
        %v1176 = vld [vmem:[#allocation1 + $0x3f] sm:$0xff]
        %1178 = vst [vmem:[#allocation1] ss:$9 sm:$0xff] %v279
        %v1179 = vld [vmem:[#allocation1] sm:$0xff]
        %v1180 = vld [vmem:[#allocation1 + $0x9] sm:$0xff]
        %v1181 = vld [vmem:[#allocation1 + $0x12] sm:$0xff]
        %v1182 = vld [vmem:[#allocation1 + $0x1b] sm:$0xff]
        %v1183 = vld [vmem:[#allocation1 + $0x24] sm:$0xff]
        %v1184 = vld [vmem:[#allocation1 + $0x2d] sm:$0xff]
        %v1185 = vld [vmem:[#allocation1 + $0x36] sm:$0xff]
        %v1186 = vld [vmem:[#allocation1 + $0x3f] sm:$0xff]
        %1188 = vst [vmem:[#allocation1] ss:$9 sm:$0xff] %v280
        %v1189 = vld [vmem:[#allocation1] sm:$0xff]
        %v1190 = vld [vmem:[#allocation1 + $0x9] sm:$0xff]
        %v1191 = vld [vmem:[#allocation1 + $0x12] sm:$0xff]
        %v1192 = vld [vmem:[#allocation1 + $0x1b] sm:$0xff]
        %v1193 = vld [vmem:[#allocation1 + $0x24] sm:$0xff]
        %v1194 = vld [vmem:[#allocation1 + $0x2d] sm:$0xff]
        %v1195 = vld [vmem:[#allocation1 + $0x36] sm:$0xff]
        %v1196 = vld [vmem:[#allocation1 + $0x3f] sm:$0xff]
        %1198 = vst [vmem:[#allocation1] ss:$9 sm:$0xff] %v281
        %v1199 = vld [vmem:[#allocation1] sm:$0xff]
        %v1200 = vld [vmem:[#allocation1 + $0x9] sm:$0xff]
        %v1201 = vld [vmem:[#allocation1 + $0x12] sm:$0xff]
        %v1202 = vld [vmem:[#allocation1 + $0x1b] sm:$0xff]
        %v1203 = vld [vmem:[#allocation1 + $0x24] sm:$0xff]
        %v1204 = vld [vmem:[#allocation1 + $0x2d] sm:$0xff]
        %v1205 = vld [vmem:[#allocation1 + $0x36] sm:$0xff]
        %v1206 = vld [vmem:[#allocation1 + $0x3f] sm:$0xff]
        %1208 = vst [vmem:[#allocation1] ss:$9 sm:$0xff] %v282
        %v1209 = vld [vmem:[#allocation1] sm:$0xff]
        %v1210 = vld [vmem:[#allocation1 + $0x9] sm:$0xff]
        %v1211 = vld [vmem:[#allocation1 + $0x12] sm:$0xff]
        %v1212 = vld [vmem:[#allocation1 + $0x1b] sm:$0xff]
        %v1213 = vld [vmem:[#allocation1 + $0x24] sm:$0xff]
        %v1214 = vld [vmem:[#allocation1 + $0x2d] sm:$0xff]
        %v2133 = vunpack.c.l.b16 %v283
        %v2134 = vunpack.c.h.b16 %v283
        %v2135 = vunpack.c.l.b16 %v284
        %v2136 = vunpack.c.h.b16 %v284
        %v2137 = vunpack.c.l.b16 %v285
        %v2138 = vunpack.c.h.b16 %v285
        %v2139 = vunpack.c.l.b16 %v286
        %v2140 = vunpack.c.h.b16 %v286
        %v2141 = vunpack.c.l.b16 %v287
        %v2142 = vunpack.c.h.b16 %v287
        %v2143 = vunpack.c.l.b16 %v288
        %v2144 = vunpack.c.h.b16 %v288
        %v2145 = vunpack.c.l.b16 %v289
        %v2146 = vunpack.c.h.b16 %v289
        %v2147 = vunpack.c.l.b16 %v290
        %v2148 = vunpack.c.h.b16 %v290
        %v2149 = vunpack.c.l.b16 %v291
        %v2150 = vunpack.c.h.b16 %v291
        %v2151 = vunpack.c.l.b16 %v292
        %v2152 = vunpack.c.h.b16 %v292
        %v2153 = vunpack.c.l.b16 %v293
        %v2154 = vunpack.c.h.b16 %v293
        %v2155 = vunpack.c.l.b16 %v294
        %v2156 = vunpack.c.h.b16 %v294
        %v2157 = vunpack.c.l.b16 %v295
        %v2158 = vunpack.c.h.b16 %v295
        %v2159 = vunpack.c.l.b16 %v296
        %v2160 = vunpack.c.h.b16 %v296
        %v2161 = vunpack.c.l.b16 %v297
        %v2162 = vunpack.c.h.b16 %v297
        %v2163 = vunpack.c.l.b16 %v298
        %v2164 = vunpack.c.h.b16 %v298
        %v2165 = vunpack.c.l.b16 %v299
        %v2166 = vunpack.c.h.b16 %v299
        %v2167 = vunpack.c.l.b16 %v300
        %v2168 = vunpack.c.h.b16 %v300
        %v2169 = vunpack.c.l.b16 %v301
        %v2170 = vunpack.c.h.b16 %v301
        %v2171 = vunpack.c.l.b16 %v302
        %v2172 = vunpack.c.h.b16 %v302
        %v2173 = vunpack.c.l.b16 %v303
        %v2174 = vunpack.c.h.b16 %v303
        %v2175 = vunpack.c.l.b16 %v304
        %v2176 = vunpack.c.h.b16 %v304
        %v2177 = vunpack.c.l.b16 %v305
        %v2178 = vunpack.c.h.b16 %v305
        %v2179 = vunpack.c.l.b16 %v306
        %v2180 = vunpack.c.h.b16 %v306
        %v2181 = vunpack.c.l.b16 %v307
        %v2182 = vunpack.c.h.b16 %v307
        %v2183 = vunpack.c.l.b16 %v308
        %v2184 = vunpack.c.h.b16 %v308
        %v2185 = vunpack.c.l.b16 %v309
        %v2186 = vunpack.c.h.b16 %v309
        %v2187 = vunpack.c.l.b16 %v310
        %v2188 = vunpack.c.h.b16 %v310
        %v2189 = vunpack.c.l.b16 %v311
        %v2190 = vunpack.c.h.b16 %v311
        %v2191 = vunpack.c.l.b16 %v312
        %v2192 = vunpack.c.h.b16 %v312
        %v2193 = vunpack.c.l.b16 %v313
        %v2194 = vunpack.c.h.b16 %v313
        %v2195 = vunpack.c.l.b16 %v314
        %v2196 = vunpack.c.h.b16 %v314
        %v2197 = vunpack.c.l.b16 %v315
        %v2198 = vunpack.c.h.b16 %v315
        %v2199 = vunpack.c.l.b16 %v316
        %v2200 = vunpack.c.h.b16 %v316
        %v2201 = vunpack.c.l.b16 %v317
        %v2202 = vunpack.c.h.b16 %v317
        %v2203 = vunpack.c.l.b16 %v318
        %v2204 = vunpack.c.h.b16 %v318
        %v2205 = vunpack.c.l.b16 %v319
        %v2206 = vunpack.c.h.b16 %v319
        %v2207 = vunpack.c.l.b16 %v320
        %v2208 = vunpack.c.h.b16 %v320
        %v2209 = vunpack.c.l.b16 %v321
        %v2210 = vunpack.c.h.b16 %v321
        %v2211 = vunpack.c.l.b16 %v322
        %v2212 = vunpack.c.h.b16 %v322
        %v2213 = vunpack.c.l.b16 %v323
        %v2214 = vunpack.c.h.b16 %v323
        %v2215 = vunpack.c.l.b16 %v324
        %v2216 = vunpack.c.h.b16 %v324
        %v2217 = vunpack.c.l.b16 %v325
        %v2218 = vunpack.c.h.b16 %v325
        %v2219 = vunpack.c.l.b16 %v326
        %v2220 = vunpack.c.h.b16 %v326
        %v2221 = vunpack.c.l.b16 %v327
        %v2222 = vunpack.c.h.b16 %v327
        %v2223 = vunpack.c.l.b16 %v328
        %v2224 = vunpack.c.h.b16 %v328
        %v2225 = vunpack.c.l.b16 %v329
        %v2226 = vunpack.c.h.b16 %v329
        %v2227 = vunpack.c.l.b16 %v330
        %v2228 = vunpack.c.h.b16 %v330
        %v2229 = vunpack.c.l.b16 %v331
        %v2230 = vunpack.c.h.b16 %v331
        %v2231 = vunpack.c.l.b16 %v332
        %v2232 = vunpack.c.h.b16 %v332
        %v2233 = vunpack.c.l.b16 %v333
        %v2234 = vunpack.c.h.b16 %v333
        %v2235 = vunpack.c.l.b16 %v334
        %v2236 = vunpack.c.h.b16 %v334
        %v2237 = vunpack.c.l.b16 %v335
        %v2238 = vunpack.c.h.b16 %v335
        %v2239 = vunpack.c.l.b16 %v336
        %v2240 = vunpack.c.h.b16 %v336
        %v2241 = vunpack.c.l.b16 %v337
        %v2242 = vunpack.c.h.b16 %v337
        %v2243 = vunpack.c.l.b16 %v338
        %v2244 = vunpack.c.h.b16 %v338
        %v2245 = vunpack.c.l.b16 %v339
        %v2246 = vunpack.c.h.b16 %v339
        %v2247 = vunpack.c.l.b16 %v340
        %v2248 = vunpack.c.h.b16 %v340
        %v2249 = vunpack.c.l.b16 %v341
        %v2250 = vunpack.c.h.b16 %v341
        %v2251 = vunpack.c.l.b16 %v342
        %v2252 = vunpack.c.h.b16 %v342
        %v2253 = vunpack.c.l.b16 %v343
        %v2254 = vunpack.c.h.b16 %v343
        %v2255 = vunpack.c.l.b16 %v344
        %v2256 = vunpack.c.h.b16 %v344
        %v2257 = vunpack.c.l.b16 %v345
        %v2258 = vunpack.c.h.b16 %v345
        %v2259 = vunpack.c.l.b16 %v346
        %v2260 = vunpack.c.h.b16 %v346
        %v2261 = vunpack.c.l.b16 %v347
        %v2262 = vunpack.c.h.b16 %v347
        %v2263 = vunpack.c.l.b16 %v348
        %v2264 = vunpack.c.h.b16 %v348
        %v2265 = vunpack.c.l.b16 %v349
        %v2266 = vunpack.c.h.b16 %v349
        %v2267 = vunpack.c.l.b16 %v350
        %v2268 = vunpack.c.h.b16 %v350
        %v2269 = vunpack.c.l.b16 %v351
        %v2270 = vunpack.c.h.b16 %v351
        %v2271 = vunpack.c.l.b16 %v352
        %v2272 = vunpack.c.h.b16 %v352
        %v2273 = vunpack.c.l.b16 %v353
        %v2274 = vunpack.c.h.b16 %v353
        %v2275 = vunpack.c.l.b16 %v354
        %v2276 = vunpack.c.h.b16 %v354
        %v2277 = vunpack.c.l.b16 %v355
        %v2278 = vunpack.c.h.b16 %v355
        %v2279 = vunpack.c.l.b16 %v356
        %v2280 = vunpack.c.h.b16 %v356
        %v2281 = vunpack.c.l.b16 %v357
        %v2282 = vunpack.c.h.b16 %v357
        %v2283 = vunpack.c.l.b16 %v358
        %v2284 = vunpack.c.h.b16 %v358
        %v2285 = vunpack.c.l.b16 %v359
        %v2286 = vunpack.c.h.b16 %v359
        %v2287 = vunpack.c.l.b16 %v360
        %v2288 = vunpack.c.h.b16 %v360
        %v2289 = vunpack.c.l.b16 %v361
        %v2290 = vunpack.c.h.b16 %v361
        %v2291 = vunpack.c.l.b16 %v362
        %v2292 = vunpack.c.h.b16 %v362
        %v2293 = vunpack.c.l.b16 %v363
        %v2294 = vunpack.c.h.b16 %v363
        %v2295 = vunpack.c.l.b16 %v364
        %v2296 = vunpack.c.h.b16 %v364
        %v2297 = vunpack.c.l.b16 %v365
        %v2298 = vunpack.c.h.b16 %v365
        %v2299 = vunpack.c.l.b16 %v366
        %v2300 = vunpack.c.h.b16 %v366
        %v2301 = vunpack.c.l.b16 %v367
        %v2302 = vunpack.c.h.b16 %v367
        %v2303 = vunpack.c.l.b16 %v368
        %v2304 = vunpack.c.h.b16 %v368
        %v2305 = vunpack.c.l.b16 %v369
        %v2306 = vunpack.c.h.b16 %v369
        %v2307 = vunpack.c.l.b16 %v370
        %v2308 = vunpack.c.h.b16 %v370
        %v2309 = vunpack.c.l.b16 %v371
        %v2310 = vunpack.c.h.b16 %v371
        %v2311 = vunpack.c.l.b16 %v372
        %v2312 = vunpack.c.h.b16 %v372
        %v2313 = vunpack.c.l.b16 %v373
        %v2314 = vunpack.c.h.b16 %v373
        %v2315 = vunpack.c.l.b16 %v374
        %v2316 = vunpack.c.h.b16 %v374
        %v2317 = vunpack.c.l.b16 %v375
        %v2318 = vunpack.c.h.b16 %v375
        %v2319 = vunpack.c.l.b16 %v376
        %v2320 = vunpack.c.h.b16 %v376
        %v2321 = vunpack.c.l.b16 %v377
        %v2322 = vunpack.c.h.b16 %v377
        %v2323 = vunpack.c.l.b16 %v378
        %v2324 = vunpack.c.h.b16 %v378
        %v2325 = vunpack.c.l.b16 %v379
        %v2326 = vunpack.c.h.b16 %v379
        %v2327 = vunpack.c.l.b16 %v380
        %v2328 = vunpack.c.h.b16 %v380
        %v2329 = vunpack.c.l.b16 %v381
        %v2330 = vunpack.c.h.b16 %v381
        %v2331 = vunpack.c.l.b16 %v382
        %v2332 = vunpack.c.h.b16 %v382
        %v2333 = vunpack.c.l.b16 %v383
        %v2334 = vunpack.c.h.b16 %v383
        %v2335 = vunpack.c.l.b16 %v384
        %v2336 = vunpack.c.h.b16 %v384
        %v2337 = vunpack.c.l.b16 %v385
        %v2338 = vunpack.c.h.b16 %v385
        %v2339 = vunpack.c.l.b16 %v386
        %v2340 = vunpack.c.h.b16 %v386
        %v2341 = vunpack.c.l.b16 %v387
        %v2342 = vunpack.c.h.b16 %v387
        %v2343 = vunpack.c.l.b16 %v388
        %v2344 = vunpack.c.h.b16 %v388
        %v2345 = vunpack.c.l.b16 %v389
        %v2346 = vunpack.c.h.b16 %v389
        %v2347 = vunpack.c.l.b16 %v390
        %v2348 = vunpack.c.h.b16 %v390
        %v2349 = vunpack.c.l.b16 %v391
        %v2350 = vunpack.c.h.b16 %v391
        %v2351 = vunpack.c.l.b16 %v392
        %v2352 = vunpack.c.h.b16 %v392
        %v2353 = vunpack.c.l.b16 %v393
        %v2354 = vunpack.c.h.b16 %v393
        %v2355 = vunpack.c.l.b16 %v394
        %v2356 = vunpack.c.h.b16 %v394
        %v2357 = vunpack.c.l.b16 %v395
        %v2358 = vunpack.c.h.b16 %v395
        %v2359 = vunpack.c.l.b16 %v396
        %v2360 = vunpack.c.h.b16 %v396
        %v2361 = vunpack.c.l.b16 %v397
        %v2362 = vunpack.c.h.b16 %v397
        %v2363 = vunpack.c.l.b16 %v398
        %v2364 = vunpack.c.h.b16 %v398
        %v2365 = vunpack.c.l.b16 %v399
        %v2366 = vunpack.c.h.b16 %v399
        %v2367 = vunpack.c.l.b16 %v400
        %v2368 = vunpack.c.h.b16 %v400
        %v2369 = vunpack.c.l.b16 %v401
        %v2370 = vunpack.c.h.b16 %v401
        %v2371 = vunpack.c.l.b16 %v402
        %v2372 = vunpack.c.h.b16 %v402
        %v2373 = vunpack.c.l.b16 %v403
        %v2374 = vunpack.c.h.b16 %v403
        %v2375 = vunpack.c.l.b16 %v404
        %v2376 = vunpack.c.h.b16 %v404
        %v2377 = vunpack.c.l.b16 %v405
        %v2378 = vunpack.c.h.b16 %v405
        %v2379 = vunpack.c.l.b16 %v406
        %v2380 = vunpack.c.h.b16 %v406
        %v2381 = vunpack.c.l.b16 %v407
        %v2382 = vunpack.c.h.b16 %v407
        %v2383 = vunpack.c.l.b16 %v408
        %v2384 = vunpack.c.h.b16 %v408
        %v2385 = vunpack.c.l.b16 %v409
        %v2386 = vunpack.c.h.b16 %v409
        %v2387 = vunpack.c.l.b16 %v410
        %v2388 = vunpack.c.h.b16 %v410
        %v2389 = vunpack.c.l.b16 %v411
        %v2390 = vunpack.c.h.b16 %v411
        %v2391 = vunpack.c.l.b16 %v412
        %v2392 = vunpack.c.h.b16 %v412
        %v2393 = vunpack.c.l.b16 %v413
        %v2394 = vunpack.c.h.b16 %v413
        %v2395 = vunpack.c.l.b16 %v414
        %v2396 = vunpack.c.h.b16 %v414
        %v2397 = vunpack.c.l.b16 %v415
        %v2398 = vunpack.c.h.b16 %v415
        %v2399 = vunpack.c.l.b16 %v416
        %v2400 = vunpack.c.h.b16 %v416
        %v2401 = vunpack.c.l.b16 %v417
        %v2402 = vunpack.c.h.b16 %v417
        %v2403 = vunpack.c.l.b16 %v418
        %v2404 = vunpack.c.h.b16 %v418
        %v2405 = vunpack.c.l.b16 %v419
        %v2406 = vunpack.c.h.b16 %v419
        %v2407 = vunpack.c.l.b16 %v420
        %v2408 = vunpack.c.h.b16 %v420
        %v2409 = vunpack.c.l.b16 %v421
        %v2410 = vunpack.c.h.b16 %v421
        %v2411 = vunpack.c.l.b16 %v422
        %v2412 = vunpack.c.h.b16 %v422
        %v2413 = vunpack.c.l.b16 %v423
        %v2414 = vunpack.c.h.b16 %v423
        %v2415 = vunpack.c.l.b16 %v424
        %v2416 = vunpack.c.h.b16 %v424
        %v2417 = vunpack.c.l.b16 %v425
        %v2418 = vunpack.c.h.b16 %v425
        %v2419 = vunpack.c.l.b16 %v426
        %v2420 = vunpack.c.h.b16 %v426
        %v2421 = vunpack.c.l.b16 %v427
        %v2422 = vunpack.c.h.b16 %v427
        %v2423 = vunpack.c.l.b16 %v428
        %v2424 = vunpack.c.h.b16 %v428
        %v2425 = vunpack.c.l.b16 %v429
        %v2426 = vunpack.c.h.b16 %v429
        %v2427 = vunpack.c.l.b16 %v430
        %v2428 = vunpack.c.h.b16 %v430
        %v2429 = vunpack.c.l.b16 %v431
        %v2430 = vunpack.c.h.b16 %v431
        %v2431 = vunpack.c.l.b16 %v432
        %v2432 = vunpack.c.h.b16 %v432
        %v2433 = vunpack.c.l.b16 %v433
        %v2434 = vunpack.c.h.b16 %v433
        %v2435 = vunpack.c.l.b16 %v434
        %v2436 = vunpack.c.h.b16 %v434
        %v2437 = vunpack.c.l.b16 %v435
        %v2438 = vunpack.c.h.b16 %v435
        %v2439 = vunpack.c.l.b16 %v436
        %v2440 = vunpack.c.h.b16 %v436
        %v2441 = vunpack.c.l.b16 %v437
        %v2442 = vunpack.c.h.b16 %v437
        %v2443 = vunpack.c.l.b16 %v438
        %v2444 = vunpack.c.h.b16 %v438
        %v2445 = vunpack.c.l.b16 %v439
        %v2446 = vunpack.c.h.b16 %v439
        %v2447 = vunpack.c.l.b16 %v440
        %v2448 = vunpack.c.h.b16 %v440
        %v2449 = vunpack.c.l.b16 %v441
        %v2450 = vunpack.c.h.b16 %v441
        %v2451 = vunpack.c.l.b16 %v442
        %v2452 = vunpack.c.h.b16 %v442
        %v2453 = vunpack.c.l.b16 %v443
        %v2454 = vunpack.c.h.b16 %v443
        %v2455 = vunpack.c.l.b16 %v444
        %v2456 = vunpack.c.h.b16 %v444
        %v2457 = vunpack.c.l.b16 %v445
        %v2458 = vunpack.c.h.b16 %v445
        %v2459 = vunpack.c.l.b16 %v446
        %v2460 = vunpack.c.h.b16 %v446
        %v2461 = vunpack.c.l.b16 %v447
        %v2462 = vunpack.c.h.b16 %v447
        %v2463 = vunpack.c.l.b16 %v448
        %v2464 = vunpack.c.h.b16 %v448
        %v2465 = vunpack.c.l.b16 %v449
        %v2466 = vunpack.c.h.b16 %v449
        %v2467 = vunpack.c.l.b16 %v450
        %v2468 = vunpack.c.h.b16 %v450
        %v2469 = vunpack.c.l.b16 %v451
        %v2470 = vunpack.c.h.b16 %v451
        %v2471 = vunpack.c.l.b16 %v452
        %v2472 = vunpack.c.h.b16 %v452
        %v2473 = vunpack.c.l.b16 %v453
        %v2474 = vunpack.c.h.b16 %v453
        %v2475 = vunpack.c.l.b16 %v454
        %v2476 = vunpack.c.h.b16 %v454
        %v2477 = vunpack.c.l.b16 %v455
        %v2478 = vunpack.c.h.b16 %v455
        %v2479 = vunpack.c.l.b16 %v456
        %v2480 = vunpack.c.h.b16 %v456
        %v2481 = vunpack.c.l.b16 %v457
        %v2482 = vunpack.c.h.b16 %v457
        %v2483 = vunpack.c.l.b16 %v458
        %v2484 = vunpack.c.h.b16 %v458
        %v2485 = vunpack.c.l.b16 %v459
        %v2486 = vunpack.c.h.b16 %v459
        %v2487 = vunpack.c.l.b16 %v460
        %v2488 = vunpack.c.h.b16 %v460
        %v2489 = vunpack.c.l.b16 %v461
        %v2490 = vunpack.c.h.b16 %v461
        %v2491 = vunpack.c.l.b16 %v462
        %v2492 = vunpack.c.h.b16 %v462
        %v2493 = vunpack.c.l.b16 %v463
        %v2494 = vunpack.c.h.b16 %v463
        %v2495 = vunpack.c.l.b16 %v464
        %v2496 = vunpack.c.h.b16 %v464
        %v2497 = vunpack.c.l.b16 %v465
        %v2498 = vunpack.c.h.b16 %v465
        %v2499 = vunpack.c.l.b16 %v466
        %v2500 = vunpack.c.h.b16 %v466
        %v2501 = vunpack.c.l.b16 %v467
        %v2502 = vunpack.c.h.b16 %v467
        %v2503 = vunpack.c.l.b16 %v468
        %v2504 = vunpack.c.h.b16 %v468
        %v2505 = vunpack.c.l.b16 %v469
        %v2506 = vunpack.c.h.b16 %v469
        %v2507 = vunpack.c.l.b16 %v470
        %v2508 = vunpack.c.h.b16 %v470
        %v2509 = vunpack.c.l.b16 %v471
        %v2510 = vunpack.c.h.b16 %v471
        %v2511 = vunpack.c.l.b16 %v472
        %v2512 = vunpack.c.h.b16 %v472
        %v2513 = vunpack.c.l.b16 %v473
        %v2514 = vunpack.c.h.b16 %v473
        %v2515 = vunpack.c.l.b16 %v474
        %v2516 = vunpack.c.h.b16 %v474
        %v2517 = vunpack.c.l.b16 %v475
        %v2518 = vunpack.c.h.b16 %v475
        %v2519 = vunpack.c.l.b16 %v476
        %v2520 = vunpack.c.h.b16 %v476
        %v2521 = vunpack.c.l.b16 %v477
        %v2522 = vunpack.c.h.b16 %v477
        %v2523 = vunpack.c.l.b16 %v478
        %v2524 = vunpack.c.h.b16 %v478
        %v2525 = vunpack.c.l.b16 %v479
        %v2526 = vunpack.c.h.b16 %v479
        %v2527 = vunpack.c.l.b16 %v480
        %v2528 = vunpack.c.h.b16 %v480
        %v2529 = vunpack.c.l.b16 %v481
        %v2530 = vunpack.c.h.b16 %v481
        %v2531 = vunpack.c.l.b16 %v482
        %v2532 = vunpack.c.h.b16 %v482
        %v2533 = vunpack.c.l.b16 %v483
        %v2534 = vunpack.c.h.b16 %v483
        %v2535 = vunpack.c.l.b16 %v484
        %v2536 = vunpack.c.h.b16 %v484
        %v2537 = vunpack.c.l.b16 %v485
        %v2538 = vunpack.c.h.b16 %v485
        %v2539 = vunpack.c.l.b16 %v486
        %v2540 = vunpack.c.h.b16 %v486
        %v2541 = vunpack.c.l.b16 %v487
        %v2542 = vunpack.c.h.b16 %v487
        %v2543 = vunpack.c.l.b16 %v488
        %v2544 = vunpack.c.h.b16 %v488
        %v2545 = vunpack.c.l.b16 %v489
        %v2546 = vunpack.c.h.b16 %v489
        %v2547 = vunpack.c.l.b16 %v490
        %v2548 = vunpack.c.h.b16 %v490
        %v2549 = vunpack.c.l.b16 %v491
        %v2550 = vunpack.c.h.b16 %v491
        %v2551 = vunpack.c.l.b16 %v492
        %v2552 = vunpack.c.h.b16 %v492
        %v2553 = vunpack.c.l.b16 %v493
        %v2554 = vunpack.c.h.b16 %v493
        %v2555 = vunpack.c.l.b16 %v494
        %v2556 = vunpack.c.h.b16 %v494
        %v2557 = vunpack.c.l.b16 %v495
        %v2558 = vunpack.c.h.b16 %v495
        %v2559 = vunpack.c.l.b16 %v496
        %v2560 = vunpack.c.h.b16 %v496
        %v2561 = vunpack.c.l.b16 %v497
        %v2562 = vunpack.c.h.b16 %v497
        %v2563 = vunpack.c.l.b16 %v498
        %v2564 = vunpack.c.h.b16 %v498
        %v2565 = vunpack.c.l.b16 %v499
        %v2566 = vunpack.c.h.b16 %v499
        %v2567 = vunpack.c.l.b16 %v500
        %v2568 = vunpack.c.h.b16 %v500
        %v2569 = vunpack.c.l.b16 %v501
        %v2570 = vunpack.c.h.b16 %v501
        %v2571 = vunpack.c.l.b16 %v502
        %v2572 = vunpack.c.h.b16 %v502
        %v2573 = vunpack.c.l.b16 %v503
        %v2574 = vunpack.c.h.b16 %v503
        %v2575 = vunpack.c.l.b16 %v504
        %v2576 = vunpack.c.h.b16 %v504
        %v2577 = vunpack.c.l.b16 %v505
        %v2578 = vunpack.c.h.b16 %v505
        %v2579 = vunpack.c.l.b16 %v506
        %v2580 = vunpack.c.h.b16 %v506
        %v2581 = vunpack.c.l.b16 %v507
        %v2582 = vunpack.c.h.b16 %v507
        %v2583 = vunpack.c.l.b16 %v508
        %v2584 = vunpack.c.h.b16 %v508
        %v2585 = vunpack.c.l.b16 %v509
        %v2586 = vunpack.c.h.b16 %v509
        %v2587 = vunpack.c.l.b16 %v510
        %v2588 = vunpack.c.h.b16 %v510
        %v2589 = vunpack.c.l.b16 %v511
        %v2590 = vunpack.c.h.b16 %v511
        %v2591 = vunpack.c.l.b16 %v512
        %v2592 = vunpack.c.h.b16 %v512
        %v2593 = vunpack.c.l.b16 %v513
        %v2594 = vunpack.c.h.b16 %v513
        %v2595 = vunpack.c.l.b16 %v514
        %v2596 = vunpack.c.h.b16 %v514
        %v2597 = vunpack.c.l.b16 %v515
        %v2598 = vunpack.c.h.b16 %v515
        %v2599 = vunpack.c.l.b16 %v516
        %v2600 = vunpack.c.h.b16 %v516
        %v2601 = vunpack.c.l.b16 %v517
        %v2602 = vunpack.c.h.b16 %v517
        %v2603 = vunpack.c.l.b16 %v518
        %v2604 = vunpack.c.h.b16 %v518
        %v2605 = vunpack.c.l.b16 %v519
        %v2606 = vunpack.c.h.b16 %v519
        %v2607 = vunpack.c.l.b16 %v520
        %v2608 = vunpack.c.h.b16 %v520
        %v2609 = vunpack.c.l.b16 %v521
        %v2610 = vunpack.c.h.b16 %v521
        %v2611 = vunpack.c.l.b16 %v522
        %v2612 = vunpack.c.h.b16 %v522
        %v2613 = vunpack.c.l.b16 %v523
        %v2614 = vunpack.c.h.b16 %v523
        %v2615 = vunpack.c.l.b16 %v524
        %v2616 = vunpack.c.h.b16 %v524
        %v2617 = vunpack.c.l.b16 %v525
        %v2618 = vunpack.c.h.b16 %v525
        %v2619 = vunpack.c.l.b16 %v526
        %v2620 = vunpack.c.h.b16 %v526
        %v2621 = vunpack.c.l.b16 %v527
        %v2622 = vunpack.c.h.b16 %v527
        %v2623 = vunpack.c.l.b16 %v528
        %v2624 = vunpack.c.h.b16 %v528
        %v2625 = vunpack.c.l.b16 %v529
        %v2626 = vunpack.c.h.b16 %v529
        %v2627 = vunpack.c.l.b16 %v530
        %v2628 = vunpack.c.h.b16 %v530
        %v2629 = vunpack.c.l.b16 %v531
        %v2630 = vunpack.c.h.b16 %v531
        %v2631 = vunpack.c.l.b16 %v532
        %v2632 = vunpack.c.h.b16 %v532
        %v2633 = vunpack.c.l.b16 %v533
        %v2634 = vunpack.c.h.b16 %v533
        %v2635 = vunpack.c.l.b16 %v534
        %v2636 = vunpack.c.h.b16 %v534
        %v2637 = vunpack.c.l.b16 %v535
        %v2638 = vunpack.c.h.b16 %v535
        %v2639 = vunpack.c.l.b16 %v536
        %v2640 = vunpack.c.h.b16 %v536
        %v2641 = vunpack.c.l.b16 %v537
        %v2642 = vunpack.c.h.b16 %v537
        %v2643 = vunpack.c.l.b16 %v538
        %v2644 = vunpack.c.h.b16 %v538
        %v2645 = vunpack.c.l.b16 %v539
        %v2646 = vunpack.c.h.b16 %v539
        %v2647 = vunpack.c.l.b16 %v540
        %v2648 = vunpack.c.h.b16 %v540
        %v2649 = vunpack.c.l.b16 %v541
        %v2650 = vunpack.c.h.b16 %v541
        %v2651 = vunpack.c.l.b16 %v542
        %v2652 = vunpack.c.h.b16 %v542
        %v2653 = vunpack.c.l.b16 %v543
        %v2654 = vunpack.c.h.b16 %v543
        %v2655 = vunpack.c.l.b16 %v544
        %v2656 = vunpack.c.h.b16 %v544
        %v2657 = vunpack.c.l.b16 %v545
        %v2658 = vunpack.c.h.b16 %v545
        %v2659 = vunpack.c.l.b16 %v546
        %v2660 = vunpack.c.h.b16 %v546
        %v2661 = vunpack.c.l.b16 %v547
        %v2662 = vunpack.c.h.b16 %v547
        %v2663 = vunpack.c.l.b16 %v548
        %v2664 = vunpack.c.h.b16 %v548
        %v2665 = vunpack.c.l.b16 %v549
        %v2666 = vunpack.c.h.b16 %v549
        %v2667 = vunpack.c.l.b16 %v550
        %v2668 = vunpack.c.h.b16 %v550
        %v2669 = vunpack.c.l.b16 %v551
        %v2670 = vunpack.c.h.b16 %v551
        %v2671 = vunpack.c.l.b16 %v552
        %v2672 = vunpack.c.h.b16 %v552
        %v2673 = vunpack.c.l.b16 %v553
        %v2674 = vunpack.c.h.b16 %v553
        %v2675 = vunpack.c.l.b16 %v554
        %v2676 = vunpack.c.h.b16 %v554
        %v2677 = vunpack.c.l.b16 %v555
        %v2678 = vunpack.c.h.b16 %v555
        %v2679 = vunpack.c.l.b16 %v556
        %v2680 = vunpack.c.h.b16 %v556
        %v2681 = vunpack.c.l.b16 %v557
        %v2682 = vunpack.c.h.b16 %v557
        %v2683 = vunpack.c.l.b16 %v558
        %v2684 = vunpack.c.h.b16 %v558
        %v2685 = vunpack.c.l.b16 %v559
        %v2686 = vunpack.c.h.b16 %v559
        %v2687 = vunpack.c.l.b16 %v560
        %v2688 = vunpack.c.h.b16 %v560
        %v2689 = vunpack.c.l.b16 %v561
        %v2690 = vunpack.c.h.b16 %v561
        %v2691 = vunpack.c.l.b16 %v562
        %v2692 = vunpack.c.h.b16 %v562
        %v2693 = vunpack.c.l.b16 %v563
        %v2694 = vunpack.c.h.b16 %v563
        %v2695 = vunpack.c.l.b16 %v564
        %v2696 = vunpack.c.h.b16 %v564
        %v2697 = vunpack.c.l.b16 %v565
        %v2698 = vunpack.c.h.b16 %v565
        %v2699 = vunpack.c.l.b16 %v566
        %v2700 = vunpack.c.h.b16 %v566
        %v2701 = vunpack.c.l.b16 %v567
        %v2702 = vunpack.c.h.b16 %v567
        %v2703 = vunpack.c.l.b16 %v568
        %v2704 = vunpack.c.h.b16 %v568
        %v2705 = vunpack.c.l.b16 %v569
        %v2706 = vunpack.c.h.b16 %v569
        %v2707 = vunpack.c.l.b16 %v570
        %v2708 = vunpack.c.h.b16 %v570
        %v2709 = vunpack.c.l.b16 %v571
        %v2710 = vunpack.c.h.b16 %v571
        %v2711 = vunpack.c.l.b16 %v572
        %v2712 = vunpack.c.h.b16 %v572
        %v2713 = vunpack.c.l.b16 %v573
        %v2714 = vunpack.c.h.b16 %v573
        %v2715 = vunpack.c.l.b16 %v574
        %v2716 = vunpack.c.h.b16 %v574
        %v2717 = vunpack.c.l.b16 %v575
        %v2718 = vunpack.c.h.b16 %v575
        %v2719 = vunpack.c.l.b16 %v576
        %v2720 = vunpack.c.h.b16 %v576
        %v2721 = vunpack.c.l.b16 %v577
        %v2722 = vunpack.c.h.b16 %v577
        %v2723 = vunpack.c.l.b16 %v578
        %v2724 = vunpack.c.h.b16 %v578
        %v2725 = vunpack.c.l.b16 %v579
        %v2726 = vunpack.c.h.b16 %v579
        %v2727 = vunpack.c.l.b16 %v580
        %v2728 = vunpack.c.h.b16 %v580
        %v2729 = vunpack.c.l.b16 %v581
        %v2730 = vunpack.c.h.b16 %v581
        %v2731 = vunpack.c.l.b16 %v582
        %v2732 = vunpack.c.h.b16 %v582
        %v2733 = vunpack.c.l.b16 %v583
        %v2734 = vunpack.c.h.b16 %v583
        %v2735 = vunpack.c.l.b16 %v584
        %v2736 = vunpack.c.h.b16 %v584
        %v2737 = vunpack.c.l.b16 %v585
        %v2738 = vunpack.c.h.b16 %v585
        %v2739 = vunpack.c.l.b16 %v586
        %v2740 = vunpack.c.h.b16 %v586
        %v2741 = vunpack.c.l.b16 %v587
        %v2742 = vunpack.c.h.b16 %v587
        %v2743 = vunpack.c.l.b16 %v588
        %v2744 = vunpack.c.h.b16 %v588
        %v2745 = vunpack.c.l.b16 %v589
        %v2746 = vunpack.c.h.b16 %v589
        %v2747 = vunpack.c.l.b16 %v590
        %v2748 = vunpack.c.h.b16 %v590
        %v2749 = vunpack.c.l.b16 %v591
        %v2750 = vunpack.c.h.b16 %v591
        %v2751 = vunpack.c.l.b16 %v592
        %v2752 = vunpack.c.h.b16 %v592
        %v2753 = vunpack.c.l.b16 %v593
        %v2754 = vunpack.c.h.b16 %v593
        %v2755 = vunpack.c.l.b16 %v594
        %v2756 = vunpack.c.h.b16 %v594
        %v2757 = vunpack.c.l.b16 %v595
        %v2758 = vunpack.c.h.b16 %v595
        %v2759 = vunpack.c.l.b16 %v596
        %v2760 = vunpack.c.h.b16 %v596
        %v2761 = vunpack.c.l.b16 %v597
        %v2762 = vunpack.c.h.b16 %v597
        %v2763 = vunpack.c.l.b16 %v598
        %v2764 = vunpack.c.h.b16 %v598
        %v2765 = vunpack.c.l.b16 %v599
        %v2766 = vunpack.c.h.b16 %v599
        %v2767 = vunpack.c.l.b16 %v600
        %v2768 = vunpack.c.h.b16 %v600
        %v2769 = vunpack.c.l.b16 %v601
        %v2770 = vunpack.c.h.b16 %v601
        %v2771 = vunpack.c.l.b16 %v602
        %v2772 = vunpack.c.h.b16 %v602
        %v2773 = vunpack.c.l.b16 %v603
        %v2774 = vunpack.c.h.b16 %v603
        %v2775 = vunpack.c.l.b16 %v604
        %v2776 = vunpack.c.h.b16 %v604
        %v2777 = vunpack.c.l.b16 %v605
        %v2778 = vunpack.c.h.b16 %v605
        %v2779 = vunpack.c.l.b16 %v606
        %v2780 = vunpack.c.h.b16 %v606
        %v2781 = vunpack.c.l.b16 %v607
        %v2782 = vunpack.c.h.b16 %v607
        %v2783 = vunpack.c.l.b16 %v608
        %v2784 = vunpack.c.h.b16 %v608
        %v2785 = vunpack.c.l.b16 %v609
        %v2786 = vunpack.c.h.b16 %v609
        %v2787 = vunpack.c.l.b16 %v610
        %v2788 = vunpack.c.h.b16 %v610
        %v2789 = vunpack.c.l.b16 %v611
        %v2790 = vunpack.c.h.b16 %v611
        %v2791 = vunpack.c.l.b16 %v612
        %v2792 = vunpack.c.h.b16 %v612
        %v2793 = vunpack.c.l.b16 %v613
        %v2794 = vunpack.c.h.b16 %v613
        %v2795 = vunpack.c.l.b16 %v614
        %v2796 = vunpack.c.h.b16 %v614
        %v2797 = vunpack.c.l.b16 %v615
        %v2798 = vunpack.c.h.b16 %v615
        %v2799 = vunpack.c.l.b16 %v616
        %v2800 = vunpack.c.h.b16 %v616
        %v2801 = vunpack.c.l.b16 %v617
        %v2802 = vunpack.c.h.b16 %v617
        %v2803 = vunpack.c.l.b16 %v618
        %v2804 = vunpack.c.h.b16 %v618
        %v2805 = vunpack.c.l.b16 %v619
        %v2806 = vunpack.c.h.b16 %v619
        %v2807 = vunpack.c.l.b16 %v620
        %v2808 = vunpack.c.h.b16 %v620
        %v2809 = vunpack.c.l.b16 %v621
        %v2810 = vunpack.c.h.b16 %v621
        %v2811 = vunpack.c.l.b16 %v622
        %v2812 = vunpack.c.h.b16 %v622
        %v2813 = vunpack.c.l.b16 %v623
        %v2814 = vunpack.c.h.b16 %v623
        %v2815 = vunpack.c.l.b16 %v624
        %v2816 = vunpack.c.h.b16 %v624
        %v2817 = vunpack.c.l.b16 %v625
        %v2818 = vunpack.c.h.b16 %v625
        %v2819 = vunpack.c.l.b16 %v626
        %v2820 = vunpack.c.h.b16 %v626
        %v2821 = vunpack.c.l.b16 %v627
        %v2822 = vunpack.c.h.b16 %v627
        %v2823 = vunpack.c.l.b16 %v628
        %v2824 = vunpack.c.h.b16 %v628
        %v2825 = vunpack.c.l.b16 %v629
        %v2826 = vunpack.c.h.b16 %v629
        %v2827 = vunpack.c.l.b16 %v630
        %v2828 = vunpack.c.h.b16 %v630
        %v2829 = vunpack.c.l.b16 %v631
        %v2830 = vunpack.c.h.b16 %v631
        %v2831 = vunpack.c.l.b16 %v632
        %v2832 = vunpack.c.h.b16 %v632
        %v2833 = vunpack.c.l.b16 %v633
        %v2834 = vunpack.c.h.b16 %v633
        %v2835 = vunpack.c.l.b16 %v634
        %v2836 = vunpack.c.h.b16 %v634
        %v2837 = vunpack.c.l.b16 %v635
        %v2838 = vunpack.c.h.b16 %v635
        %v2839 = vunpack.c.l.b16 %v636
        %v2840 = vunpack.c.h.b16 %v636
        %v2841 = vunpack.c.l.b16 %v637
        %v2842 = vunpack.c.h.b16 %v637
        %v2843 = vunpack.c.l.b16 %v638
        %v2844 = vunpack.c.h.b16 %v638
        %v2845 = vunpack.c.l.b16 %v639
        %v2846 = vunpack.c.h.b16 %v639
        %v2847 = vunpack.c.l.b16 %v640
        %v2848 = vunpack.c.h.b16 %v640
        %v2849 = vunpack.c.l.b16 %v641
        %v2850 = vunpack.c.h.b16 %v641
        %v2851 = vunpack.c.l.b16 %v642
        %v2852 = vunpack.c.h.b16 %v642
        %v2853 = vunpack.c.l.b16 %v643
        %v2854 = vunpack.c.h.b16 %v643
        %v2855 = vunpack.c.l.b16 %v644
        %v2856 = vunpack.c.h.b16 %v644
        %v2857 = vunpack.c.l.b16 %v645
        %v2858 = vunpack.c.h.b16 %v645
        %v2859 = vunpack.c.l.b16 %v646
        %v2860 = vunpack.c.h.b16 %v646
        %v2861 = vunpack.c.l.b16 %v647
        %v2862 = vunpack.c.h.b16 %v647
        %v2863 = vunpack.c.l.b16 %v648
        %v2864 = vunpack.c.h.b16 %v648
        %v2865 = vunpack.c.l.b16 %v649
        %v2866 = vunpack.c.h.b16 %v649
        %v2867 = vunpack.c.l.b16 %v650
        %v2868 = vunpack.c.h.b16 %v650
        %v2869 = vunpack.c.l.b16 %v651
        %v2870 = vunpack.c.h.b16 %v651
        %v2871 = vunpack.c.l.b16 %v652
        %v2872 = vunpack.c.h.b16 %v652
        %v2873 = vunpack.c.l.b16 %v653
        %v2874 = vunpack.c.h.b16 %v653
        %v2875 = vunpack.c.l.b16 %v654
        %v2876 = vunpack.c.h.b16 %v654
        %v2877 = vunpack.c.l.b16 %v655
        %v2878 = vunpack.c.h.b16 %v655
        %v2879 = vunpack.c.l.b16 %v656
        %v2880 = vunpack.c.h.b16 %v656
        %v2881 = vunpack.c.l.b16 %v657
        %v2882 = vunpack.c.h.b16 %v657
        %v2883 = vunpack.c.l.b16 %v658
        %v2884 = vunpack.c.h.b16 %v658
        %v2885 = vunpack.c.l.b16 %v659
        %v2886 = vunpack.c.h.b16 %v659
        %v2887 = vunpack.c.l.b16 %v660
        %v2888 = vunpack.c.h.b16 %v660
        %v2889 = vunpack.c.l.b16 %v661
        %v2890 = vunpack.c.h.b16 %v661
        %v2891 = vunpack.c.l.b16 %v662
        %v2892 = vunpack.c.h.b16 %v662
        %v2893 = vunpack.c.l.b16 %v663
        %v2894 = vunpack.c.h.b16 %v663
        %v2895 = vunpack.c.l.b16 %v664
        %v2896 = vunpack.c.h.b16 %v664
        %v2897 = vunpack.c.l.b16 %v665
        %v2898 = vunpack.c.h.b16 %v665
        %v2899 = vunpack.c.l.b16 %v666
        %v2900 = vunpack.c.h.b16 %v666
        %v2901 = vunpack.c.l.b16 %v667
        %v2902 = vunpack.c.h.b16 %v667
        %v2903 = vunpack.c.l.b16 %v668
        %v2904 = vunpack.c.h.b16 %v668
        %v2905 = vunpack.c.l.b16 %v669
        %v2906 = vunpack.c.h.b16 %v669
        %v2907 = vunpack.c.l.b16 %v670
        %v2908 = vunpack.c.h.b16 %v670
        %v2909 = vunpack.c.l.b16 %v671
        %v2910 = vunpack.c.h.b16 %v671
        %v2911 = vunpack.c.l.b16 %v672
        %v2912 = vunpack.c.h.b16 %v672
        %v2913 = vunpack.c.l.b16 %v673
        %v2914 = vunpack.c.h.b16 %v673
        %v2915 = vunpack.c.l.b16 %v674
        %v2916 = vunpack.c.h.b16 %v674
        %v2917 = vunpack.c.l.b16 %v675
        %v2918 = vunpack.c.h.b16 %v675
        %v2919 = vunpack.c.l.b16 %v676
        %v2920 = vunpack.c.h.b16 %v676
        %v2921 = vunpack.c.l.b16 %v677
        %v2922 = vunpack.c.h.b16 %v677
        %v2923 = vunpack.c.l.b16 %v678
        %v2924 = vunpack.c.h.b16 %v678
        %v2925 = vunpack.c.l.b16 %v679
        %v2926 = vunpack.c.h.b16 %v679
        %v2927 = vunpack.c.l.b16 %v680
        %v2928 = vunpack.c.h.b16 %v680
        %v2929 = vunpack.c.l.b16 %v681
        %v2930 = vunpack.c.h.b16 %v681
        %v2931 = vunpack.c.l.b16 %v682
        %v2932 = vunpack.c.h.b16 %v682
        %v2933 = vunpack.c.l.b16 %v683
        %v2934 = vunpack.c.h.b16 %v683
        %v2935 = vunpack.c.l.b16 %v684
        %v2936 = vunpack.c.h.b16 %v684
        %v2937 = vunpack.c.l.b16 %v685
        %v2938 = vunpack.c.h.b16 %v685
        %v2939 = vunpack.c.l.b16 %v686
        %v2940 = vunpack.c.h.b16 %v686
        %v2941 = vunpack.c.l.b16 %v687
        %v2942 = vunpack.c.h.b16 %v687
        %v2943 = vunpack.c.l.b16 %v688
        %v2944 = vunpack.c.h.b16 %v688
        %v2945 = vunpack.c.l.b16 %v689
        %v2946 = vunpack.c.h.b16 %v689
        %v2947 = vunpack.c.l.b16 %v690
        %v2948 = vunpack.c.h.b16 %v690
        %v2949 = vunpack.c.l.b16 %v691
        %v2950 = vunpack.c.h.b16 %v691
        %v2951 = vunpack.c.l.b16 %v692
        %v2952 = vunpack.c.h.b16 %v692
        %v2953 = vunpack.c.l.b16 %v693
        %v2954 = vunpack.c.h.b16 %v693
        %v2955 = vunpack.c.l.b16 %v694
        %v2956 = vunpack.c.h.b16 %v694
        %v2957 = vunpack.c.l.b16 %v695
        %v2958 = vunpack.c.h.b16 %v695
        %v2959 = vunpack.c.l.b16 %v696
        %v2960 = vunpack.c.h.b16 %v696
        %v2961 = vunpack.c.l.b16 %v697
        %v2962 = vunpack.c.h.b16 %v697
        %v2963 = vunpack.c.l.b16 %v698
        %v2964 = vunpack.c.h.b16 %v698
        %v2965 = vunpack.c.l.b16 %v699
        %v2966 = vunpack.c.h.b16 %v699
        %v2967 = vunpack.c.l.b16 %v700
        %v2968 = vunpack.c.h.b16 %v700
        %v2969 = vunpack.c.l.b16 %v701
        %v2970 = vunpack.c.h.b16 %v701
        %v2971 = vunpack.c.l.b16 %v702
        %v2972 = vunpack.c.h.b16 %v702
        %v2973 = vunpack.c.l.b16 %v703
        %v2974 = vunpack.c.h.b16 %v703
        %v2975 = vunpack.c.l.b16 %v704
        %v2976 = vunpack.c.h.b16 %v704
        %v2977 = vunpack.c.l.b16 %v705
        %v2978 = vunpack.c.h.b16 %v705
        %v2979 = vunpack.c.l.b16 %v706
        %v2980 = vunpack.c.h.b16 %v706
        %v2981 = vunpack.c.l.b16 %v707
        %v2982 = vunpack.c.h.b16 %v707
        %v2983 = vunpack.c.l.b16 %v708
        %v2984 = vunpack.c.h.b16 %v708
        %v2985 = vunpack.c.l.b16 %v709
        %v2986 = vunpack.c.h.b16 %v709
        %v2987 = vunpack.c.l.b16 %v710
        %v2988 = vunpack.c.h.b16 %v710
        %v2989 = vunpack.c.l.b16 %v711
        %v2990 = vunpack.c.h.b16 %v711
        %v2991 = vunpack.c.l.b16 %v712
        %v2992 = vunpack.c.h.b16 %v712
        %v2993 = vunpack.c.l.b16 %v713
        %v2994 = vunpack.c.h.b16 %v713
        %v2995 = vunpack.c.l.b16 %v714
        %v2996 = vunpack.c.h.b16 %v714
        %v2997 = vunpack.c.l.b16 %v715
        %v2998 = vunpack.c.h.b16 %v715
        %v2999 = vunpack.c.l.b16 %v716
        %v3000 = vunpack.c.h.b16 %v716
        %v3001 = vunpack.c.l.b16 %v717
        %v3002 = vunpack.c.h.b16 %v717
        %v3003 = vunpack.c.l.b16 %v718
        %v3004 = vunpack.c.h.b16 %v718
        %v3005 = vunpack.c.l.b16 %v719
        %v3006 = vunpack.c.h.b16 %v719
        %v3007 = vunpack.c.l.b16 %v720
        %v3008 = vunpack.c.h.b16 %v720
        %v3009 = vunpack.c.l.b16 %v721
        %v3010 = vunpack.c.h.b16 %v721
        %v3011 = vunpack.c.l.b16 %v722
        %v3012 = vunpack.c.h.b16 %v722
        %v3013 = vunpack.c.l.b16 %v723
        %v3014 = vunpack.c.h.b16 %v723
        %v3015 = vunpack.c.l.b16 %v724
        %v3016 = vunpack.c.h.b16 %v724
        %v3017 = vunpack.c.l.b16 %v725
        %v3018 = vunpack.c.h.b16 %v725
        %v3019 = vunpack.c.l.b16 %v726
        %v3020 = vunpack.c.h.b16 %v726
        %v3021 = vunpack.c.l.b16 %v727
        %v3022 = vunpack.c.h.b16 %v727
        %v3023 = vunpack.c.l.b16 %v728
        %v3024 = vunpack.c.h.b16 %v728
        %v3025 = vunpack.c.l.b16 %v729
        %v3026 = vunpack.c.h.b16 %v729
        %v3027 = vunpack.c.l.b16 %v730
        %v3028 = vunpack.c.h.b16 %v730
        %v3029 = vunpack.c.l.b16 %v731
        %v3030 = vunpack.c.h.b16 %v731
        %v3031 = vunpack.c.l.b16 %v732
        %v3032 = vunpack.c.h.b16 %v732
        %v3033 = vunpack.c.l.b16 %v733
        %v3034 = vunpack.c.h.b16 %v733
        %v3035 = vunpack.c.l.b16 %v734
        %v3036 = vunpack.c.h.b16 %v734
        %v3037 = vunpack.c.l.b16 %v735
        %v3038 = vunpack.c.h.b16 %v735
        %v3039 = vunpack.c.l.b16 %v736
        %v3040 = vunpack.c.h.b16 %v736
        %v3041 = vunpack.c.l.b16 %v737
        %v3042 = vunpack.c.h.b16 %v737
        %v3043 = vunpack.c.l.b16 %v738
        %v3044 = vunpack.c.h.b16 %v738
        %v3045 = vunpack.c.l.b16 %v739
        %v3046 = vunpack.c.h.b16 %v739
        %v3047 = vunpack.c.l.b16 %v740
        %v3048 = vunpack.c.h.b16 %v740
        %v3049 = vunpack.c.l.b16 %v741
        %v3050 = vunpack.c.h.b16 %v741
        %v3051 = vunpack.c.l.b16 %v742
        %v3052 = vunpack.c.h.b16 %v742
        %v3053 = vunpack.c.l.b16 %v743
        %v3054 = vunpack.c.h.b16 %v743
        %v3055 = vunpack.c.l.b16 %v744
        %v3056 = vunpack.c.h.b16 %v744
        %v3057 = vunpack.c.l.b16 %v745
        %v3058 = vunpack.c.h.b16 %v745
        %v3059 = vunpack.c.l.b16 %v746
        %v3060 = vunpack.c.h.b16 %v746
        %v3061 = vunpack.c.l.b16 %v747
        %v3062 = vunpack.c.h.b16 %v747
        %v3063 = vunpack.c.l.b16 %v748
        %v3064 = vunpack.c.h.b16 %v748
        %v3065 = vunpack.c.l.b16 %v749
        %v3066 = vunpack.c.h.b16 %v749
        %v3067 = vunpack.c.l.b16 %v750
        %v3068 = vunpack.c.h.b16 %v750
        %v3069 = vunpack.c.l.b16 %v751
        %v3070 = vunpack.c.h.b16 %v751
        %v3071 = vunpack.c.l.b16 %v752
        %v3072 = vunpack.c.h.b16 %v752
        %v3073 = vunpack.c.l.b16 %v753
        %v3074 = vunpack.c.h.b16 %v753
        %v3075 = vunpack.c.l.b16 %v754
        %v3076 = vunpack.c.h.b16 %v754
        %v3077 = vunpack.c.l.b16 %v755
        %v3078 = vunpack.c.h.b16 %v755
        %v3079 = vunpack.c.l.b16 %v756
        %v3080 = vunpack.c.h.b16 %v756
        %v3081 = vunpack.c.l.b16 %v757
        %v3082 = vunpack.c.h.b16 %v757
        %v3083 = vunpack.c.l.b16 %v758
        %v3084 = vunpack.c.h.b16 %v758
        %v3085 = vunpack.c.l.b16 %v759
        %v3086 = vunpack.c.h.b16 %v759
        %v3087 = vunpack.c.l.b16 %v760
        %v3088 = vunpack.c.h.b16 %v760
        %v3089 = vunpack.c.l.b16 %v761
        %v3090 = vunpack.c.h.b16 %v761
        %v3091 = vunpack.c.l.b16 %v762
        %v3092 = vunpack.c.h.b16 %v762
        %v3093 = vunpack.c.l.b16 %v763
        %v3094 = vunpack.c.h.b16 %v763
        %v3095 = vunpack.c.l.b16 %v764
        %v3096 = vunpack.c.h.b16 %v764
        %v3097 = vunpack.c.l.b16 %v765
        %v3098 = vunpack.c.h.b16 %v765
        %v3099 = vunpack.c.l.b16 %v766
        %v3100 = vunpack.c.h.b16 %v766
        %v3101 = vunpack.c.l.b16 %v767
        %v3102 = vunpack.c.h.b16 %v767
        %v3103 = vunpack.c.l.b16 %v768
        %v3104 = vunpack.c.h.b16 %v768
        %v3105 = vunpack.c.l.b16 %v769
        %v3106 = vunpack.c.h.b16 %v769
        %v3107 = vunpack.c.l.b16 %v770
        %v3108 = vunpack.c.h.b16 %v770
        %v3109 = vunpack.c.l.b16 %v771
        %v3110 = vunpack.c.h.b16 %v771
        %v3111 = vunpack.c.l.b16 %v772
        %v3112 = vunpack.c.h.b16 %v772
        %v3113 = vunpack.c.l.b16 %v773
        %v3114 = vunpack.c.h.b16 %v773
        %v3115 = vunpack.c.l.b16 %v774
        %v3116 = vunpack.c.h.b16 %v774
        %v3117 = vunpack.c.l.b16 %v775
        %v3118 = vunpack.c.h.b16 %v775
        %v3119 = vunpack.c.l.b16 %v776
        %v3120 = vunpack.c.h.b16 %v776
        %v3121 = vunpack.c.l.b16 %v777
        %v3122 = vunpack.c.h.b16 %v777
        %v3123 = vunpack.c.l.b16 %v778
        %v3124 = vunpack.c.h.b16 %v778
        %v3125 = vunpack.c.l.b16 %v779
        %v3126 = vunpack.c.h.b16 %v779
        %v3127 = vunpack.c.l.b16 %v780
        %v3128 = vunpack.c.h.b16 %v780
        %v3129 = vunpack.c.l.b16 %v781
        %v3130 = vunpack.c.h.b16 %v781
        %v3131 = vunpack.c.l.b16 %v782
        %v3132 = vunpack.c.h.b16 %v782
        %v3133 = vunpack.c.l.b16 %v783
        %v3134 = vunpack.c.h.b16 %v783
        %v3135 = vunpack.c.l.b16 %v784
        %v3136 = vunpack.c.h.b16 %v784
        %v3137 = vunpack.c.l.b16 %v785
        %v3138 = vunpack.c.h.b16 %v785
        %v3139 = vunpack.c.l.b16 %v786
        %v3140 = vunpack.c.h.b16 %v786
        %v3141 = vunpack.c.l.b16 %v787
        %v3142 = vunpack.c.h.b16 %v787
        %v3143 = vunpack.c.l.b16 %v788
        %v3144 = vunpack.c.h.b16 %v788
        %v3145 = vunpack.c.l.b16 %v789
        %v3146 = vunpack.c.h.b16 %v789
        %v3147 = vunpack.c.l.b16 %v790
        %v3148 = vunpack.c.h.b16 %v790
        %v3149 = vunpack.c.l.b16 %v791
        %v3150 = vunpack.c.h.b16 %v791
        %v3151 = vunpack.c.l.b16 %v792
        %v3152 = vunpack.c.h.b16 %v792
        %v3153 = vunpack.c.l.b16 %v793
        %v3154 = vunpack.c.h.b16 %v793
        %v3155 = vunpack.c.l.b16 %v794
        %v3156 = vunpack.c.h.b16 %v794
        %v3157 = vunpack.c.l.b16 %v795
        %v3158 = vunpack.c.h.b16 %v795
        %v3159 = vunpack.c.l.b16 %v796
        %v3160 = vunpack.c.h.b16 %v796
        %v3161 = vunpack.c.l.b16 %v797
        %v3162 = vunpack.c.h.b16 %v797
        %v3163 = vunpack.c.l.b16 %v798
        %v3164 = vunpack.c.h.b16 %v798
        %v3165 = vunpack.c.l.b16 %v799
        %v3166 = vunpack.c.h.b16 %v799
        %v3167 = vunpack.c.l.b16 %v800
        %v3168 = vunpack.c.h.b16 %v800
        %v3169 = vunpack.c.l.b16 %v801
        %v3170 = vunpack.c.h.b16 %v801
        %v3171 = vunpack.c.l.b16 %v802
        %v3172 = vunpack.c.h.b16 %v802
        %v3173 = vunpack.c.l.b16 %v803
        %v3174 = vunpack.c.h.b16 %v803
        %v3175 = vunpack.c.l.b16 %v804
        %v3176 = vunpack.c.h.b16 %v804
        %v3177 = vunpack.c.l.b16 %v805
        %v3178 = vunpack.c.h.b16 %v805
        %v3179 = vunpack.c.l.b16 %v806
        %v3180 = vunpack.c.h.b16 %v806
        %v3181 = vunpack.c.l.b16 %v807
        %v3182 = vunpack.c.h.b16 %v807
        %v3183 = vunpack.c.l.b16 %v808
        %v3184 = vunpack.c.h.b16 %v808
        %v3185 = vunpack.c.l.b16 %v809
        %v3186 = vunpack.c.h.b16 %v809
        %v3187 = vunpack.c.l.b16 %v810
        %v3188 = vunpack.c.h.b16 %v810
        %v3189 = vunpack.c.l.b16 %v811
        %v3190 = vunpack.c.h.b16 %v811
        %v3191 = vunpack.c.l.b16 %v812
        %v3192 = vunpack.c.h.b16 %v812
        %v3193 = vunpack.c.l.b16 %v813
        %v3194 = vunpack.c.h.b16 %v813
        %v3195 = vunpack.c.l.b16 %v814
        %v3196 = vunpack.c.h.b16 %v814
        %v3197 = vunpack.c.l.b16 %v815
        %v3198 = vunpack.c.h.b16 %v815
        %v3199 = vunpack.c.l.b16 %v816
        %v3200 = vunpack.c.h.b16 %v816
        %v3201 = vunpack.c.l.b16 %v817
        %v3202 = vunpack.c.h.b16 %v817
        %v3203 = vunpack.c.l.b16 %v818
        %v3204 = vunpack.c.h.b16 %v818
        %v3205 = vunpack.c.l.b16 %v819
        %v3206 = vunpack.c.h.b16 %v819
        %v3207 = vunpack.c.l.b16 %v820
        %v3208 = vunpack.c.h.b16 %v820
        %v3209 = vunpack.c.l.b16 %v821
        %v3210 = vunpack.c.h.b16 %v821
        %v3211 = vunpack.c.l.b16 %v822
        %v3212 = vunpack.c.h.b16 %v822
        %v3213 = vunpack.c.l.b16 %v823
        %v3214 = vunpack.c.h.b16 %v823
        %v3215 = vunpack.c.l.b16 %v824
        %v3216 = vunpack.c.h.b16 %v824
        %v3217 = vunpack.c.l.b16 %v825
        %v3218 = vunpack.c.h.b16 %v825
        %v3219 = vunpack.c.l.b16 %v826
        %v3220 = vunpack.c.h.b16 %v826
        %v3221 = vunpack.c.l.b16 %v827
        %v3222 = vunpack.c.h.b16 %v827
        %v3223 = vunpack.c.l.b16 %v828
        %v3224 = vunpack.c.h.b16 %v828
        %v3225 = vunpack.c.l.b16 %v829
        %v3226 = vunpack.c.h.b16 %v829
        %v3227 = vunpack.c.l.b16 %v830
        %v3228 = vunpack.c.h.b16 %v830
        %v3229 = vunpack.c.l.b16 %v831
        %v3230 = vunpack.c.h.b16 %v831
        %v3231 = vunpack.c.l.b16 %v832
        %v3232 = vunpack.c.h.b16 %v832
        %v3233 = vunpack.c.l.b16 %v833
        %v3234 = vunpack.c.h.b16 %v833
        %v3235 = vunpack.c.l.b16 %v834
        %v3236 = vunpack.c.h.b16 %v834
        %v3237 = vunpack.c.l.b16 %v835
        %v3238 = vunpack.c.h.b16 %v835
        %v3239 = vunpack.c.l.b16 %v836
        %v3240 = vunpack.c.h.b16 %v836
        %v3241 = vunpack.c.l.b16 %v837
        %v3242 = vunpack.c.h.b16 %v837
        %v3243 = vunpack.c.l.b16 %v838
        %v3244 = vunpack.c.h.b16 %v838
        %v3245 = vunpack.c.l.b16 %v839
        %v3246 = vunpack.c.h.b16 %v839
        %v3247 = vunpack.c.l.b16 %v840
        %v3248 = vunpack.c.h.b16 %v840
        %v3249 = vunpack.c.l.b16 %v841
        %v3250 = vunpack.c.h.b16 %v841
        %v3251 = vunpack.c.l.b16 %v842
        %v3252 = vunpack.c.h.b16 %v842
        %v3253 = vunpack.c.l.b16 %v843
        %v3254 = vunpack.c.h.b16 %v843
        %v3255 = vunpack.c.l.b16 %v844
        %v3256 = vunpack.c.h.b16 %v844
        %v3257 = vunpack.c.l.b16 %v845
        %v3258 = vunpack.c.h.b16 %v845
        %v3259 = vunpack.c.l.b16 %v846
        %v3260 = vunpack.c.h.b16 %v846
        %v3261 = vunpack.c.l.b16 %v847
        %v3262 = vunpack.c.h.b16 %v847
        %v3263 = vunpack.c.l.b16 %v848
        %v3264 = vunpack.c.h.b16 %v848
        %v3265 = vunpack.c.l.b16 %v849
        %v3266 = vunpack.c.h.b16 %v849
        %v3267 = vunpack.c.l.b16 %v850
        %v3268 = vunpack.c.h.b16 %v850
        %v3269 = vunpack.c.l.b16 %v851
        %v3270 = vunpack.c.h.b16 %v851
        %v3271 = vunpack.c.l.b16 %v852
        %v3272 = vunpack.c.h.b16 %v852
        %v3273 = vunpack.c.l.b16 %v853
        %v3274 = vunpack.c.h.b16 %v853
        %v3275 = vunpack.c.l.b16 %v854
        %v3276 = vunpack.c.h.b16 %v854
        %v3277 = vunpack.c.l.b16 %v855
        %v3278 = vunpack.c.h.b16 %v855
        %v3279 = vunpack.c.l.b16 %v856
        %v3280 = vunpack.c.h.b16 %v856
        %v3281 = vunpack.c.l.b16 %v857
        %v3282 = vunpack.c.h.b16 %v857
        %v3283 = vunpack.c.l.b16 %v858
        %v3284 = vunpack.c.h.b16 %v858
        %v3285 = vunpack.c.l.b16 %v859
        %v3286 = vunpack.c.h.b16 %v859
        %v3287 = vunpack.c.l.b16 %v860
        %v3288 = vunpack.c.h.b16 %v860
        %v3289 = vunpack.c.l.b16 %v861
        %v3290 = vunpack.c.h.b16 %v861
        %v3291 = vunpack.c.l.b16 %v862
        %v3292 = vunpack.c.h.b16 %v862
        %v3293 = vunpack.c.l.b16 %v863
        %v3294 = vunpack.c.h.b16 %v863
        %v3295 = vunpack.c.l.b16 %v864
        %v3296 = vunpack.c.h.b16 %v864
        %v3297 = vunpack.c.l.b16 %v865
        %v3298 = vunpack.c.h.b16 %v865
        %v3299 = vunpack.c.l.b16 %v866
        %v3300 = vunpack.c.h.b16 %v866
        %v3301 = vunpack.c.l.b16 %v867
        %v3302 = vunpack.c.h.b16 %v867
        %v3303 = vunpack.c.l.b16 %v868
        %v3304 = vunpack.c.h.b16 %v868
        %v3305 = vunpack.c.l.b16 %v869
        %v3306 = vunpack.c.h.b16 %v869
        %v3307 = vunpack.c.l.b16 %v870
        %v3308 = vunpack.c.h.b16 %v870
        %v3309 = vunpack.c.l.b16 %v871
        %v3310 = vunpack.c.h.b16 %v871
        %v3311 = vunpack.c.l.b16 %v872
        %v3312 = vunpack.c.h.b16 %v872
        %v3313 = vunpack.c.l.b16 %v873
        %v3314 = vunpack.c.h.b16 %v873
        %v3315 = vunpack.c.l.b16 %v874
        %v3316 = vunpack.c.h.b16 %v874
        %v3317 = vunpack.c.l.b16 %v875
        %v3318 = vunpack.c.h.b16 %v875
        %v3319 = vunpack.c.l.b16 %v876
        %v3320 = vunpack.c.h.b16 %v876
        %v3321 = vunpack.c.l.b16 %v877
        %v3322 = vunpack.c.h.b16 %v877
        %v3323 = vunpack.c.l.b16 %v878
        %v3324 = vunpack.c.h.b16 %v878
        %v3325 = vunpack.c.l.b16 %v879
        %v3326 = vunpack.c.h.b16 %v879
        %v3327 = vunpack.c.l.b16 %v880
        %v3328 = vunpack.c.h.b16 %v880
        %v3329 = vunpack.c.l.b16 %v881
        %v3330 = vunpack.c.h.b16 %v881
        %v3331 = vunpack.c.l.b16 %v882
        %v3332 = vunpack.c.h.b16 %v882
        %v3333 = vunpack.c.l.b16 %v883
        %v3334 = vunpack.c.h.b16 %v883
        %v3335 = vunpack.c.l.b16 %v884
        %v3336 = vunpack.c.h.b16 %v884
        %v3337 = vunpack.c.l.b16 %v885
        %v3338 = vunpack.c.h.b16 %v885
        %v3339 = vunpack.c.l.b16 %v886
        %v3340 = vunpack.c.h.b16 %v886
        %v3341 = vunpack.c.l.b16 %v887
        %v3342 = vunpack.c.h.b16 %v887
        %v3343 = vunpack.c.l.b16 %v888
        %v3344 = vunpack.c.h.b16 %v888
        %v3345 = vunpack.c.l.b16 %v889
        %v3346 = vunpack.c.h.b16 %v889
        %v3347 = vunpack.c.l.b16 %v890
        %v3348 = vunpack.c.h.b16 %v890
        %v3349 = vunpack.c.l.b16 %v891
        %v3350 = vunpack.c.h.b16 %v891
        %v3351 = vunpack.c.l.b16 %v892
        %v3352 = vunpack.c.h.b16 %v892
        %v3353 = vunpack.c.l.b16 %v893
        %v3354 = vunpack.c.h.b16 %v893
        %v3355 = vunpack.c.l.b16 %v894
        %v3356 = vunpack.c.h.b16 %v894
        %v3357 = vunpack.c.l.b16 %v895
        %v3358 = vunpack.c.h.b16 %v895
        %v3359 = vunpack.c.l.b16 %v896
        %v3360 = vunpack.c.h.b16 %v896
        %v3361 = vunpack.c.l.b16 %v897
        %v3362 = vunpack.c.h.b16 %v897
        %v3363 = vunpack.c.l.b16 %v898
        %v3364 = vunpack.c.h.b16 %v898
        %v3365 = vunpack.c.l.b16 %v899
        %v3366 = vunpack.c.h.b16 %v899
        %v3367 = vunpack.c.l.b16 %v900
        %v3368 = vunpack.c.h.b16 %v900
        %v3369 = vunpack.c.l.b16 %v901
        %v3370 = vunpack.c.h.b16 %v901
        %v3371 = vunpack.c.l.b16 %v902
        %v3372 = vunpack.c.h.b16 %v902
        %v3373 = vunpack.c.l.b16 %v903
        %v3374 = vunpack.c.h.b16 %v903
        %v3375 = vunpack.c.l.b16 %v904
        %v3376 = vunpack.c.h.b16 %v904
        %v3377 = vunpack.c.l.b16 %v905
        %v3378 = vunpack.c.h.b16 %v905
        %v3379 = vunpack.c.l.b16 %v906
        %v3380 = vunpack.c.h.b16 %v906
        %v3381 = vunpack.c.l.b16 %v907
        %v3382 = vunpack.c.h.b16 %v907
        %v3383 = vunpack.c.l.b16 %v908
        %v3384 = vunpack.c.h.b16 %v908
        %v3385 = vunpack.c.l.b16 %v909
        %v3386 = vunpack.c.h.b16 %v909
        %v3387 = vunpack.c.l.b16 %v910
        %v3388 = vunpack.c.h.b16 %v910
        %v3389 = vunpack.c.l.b16 %v911
        %v3390 = vunpack.c.h.b16 %v911
        %v3391 = vunpack.c.l.b16 %v912
        %v3392 = vunpack.c.h.b16 %v912
        %v3393 = vunpack.c.l.b16 %v913
        %v3394 = vunpack.c.h.b16 %v913
        %v3395 = vunpack.c.l.b16 %v914
        %v3396 = vunpack.c.h.b16 %v914
        %v3397 = vunpack.c.l.b16 %v915
        %v3398 = vunpack.c.h.b16 %v915
        %v3399 = vunpack.c.l.b16 %v916
        %v3400 = vunpack.c.h.b16 %v916
        %v3401 = vunpack.c.l.b16 %v917
        %v3402 = vunpack.c.h.b16 %v917
        %v3403 = vunpack.c.l.b16 %v918
        %v3404 = vunpack.c.h.b16 %v918
        %v3405 = vunpack.c.l.b16 %v919
        %v3406 = vunpack.c.h.b16 %v919
        %v3407 = vunpack.c.l.b16 %v920
        %v3408 = vunpack.c.h.b16 %v920
        %v3409 = vunpack.c.l.b16 %v921
        %v3410 = vunpack.c.h.b16 %v921
        %v3411 = vunpack.c.l.b16 %v922
        %v3412 = vunpack.c.h.b16 %v922
        %v3413 = vunpack.c.l.b16 %v923
        %v3414 = vunpack.c.h.b16 %v923
        %v3415 = vunpack.c.l.b16 %v924
        %v3416 = vunpack.c.h.b16 %v924
        %v3417 = vunpack.c.l.b16 %v925
        %v3418 = vunpack.c.h.b16 %v925
        %v3419 = vunpack.c.l.b16 %v926
        %v3420 = vunpack.c.h.b16 %v926
        %v3421 = vunpack.c.l.b16 %v927
        %v3422 = vunpack.c.h.b16 %v927
        %v3423 = vunpack.c.l.b16 %v928
        %v3424 = vunpack.c.h.b16 %v928
        %v3425 = vunpack.c.l.b16 %v929
        %v3426 = vunpack.c.h.b16 %v929
        %v3427 = vunpack.c.l.b16 %v930
        %v3428 = vunpack.c.h.b16 %v930
        %v3429 = vunpack.c.l.b16 %v931
        %v3430 = vunpack.c.h.b16 %v931
        %v3431 = vunpack.c.l.b16 %v932
        %v3432 = vunpack.c.h.b16 %v932
        %v3433 = vunpack.c.l.b16 %v933
        %v3434 = vunpack.c.h.b16 %v933
        %v3435 = vunpack.c.l.b16 %v934
        %v3436 = vunpack.c.h.b16 %v934
        %v3437 = vunpack.c.l.b16 %v935
        %v3438 = vunpack.c.h.b16 %v935
        %v3439 = vunpack.c.l.b16 %v936
        %v3440 = vunpack.c.h.b16 %v936
        %v3441 = vunpack.c.l.b16 %v937
        %v3442 = vunpack.c.h.b16 %v937
        %v3443 = vunpack.c.l.b16 %v938
        %v3444 = vunpack.c.h.b16 %v938
        %v3445 = vunpack.c.l.b16 %v939
        %v3446 = vunpack.c.h.b16 %v939
        %v3447 = vunpack.c.l.b16 %v940
        %v3448 = vunpack.c.h.b16 %v940
        %v3449 = vunpack.c.l.b16 %v941
        %v3450 = vunpack.c.h.b16 %v941
        %v3451 = vunpack.c.l.b16 %v942
        %v3452 = vunpack.c.h.b16 %v942
        %v3453 = vunpack.c.l.b16 %v943
        %v3454 = vunpack.c.h.b16 %v943
        %v3455 = vunpack.c.l.b16 %v944
        %v3456 = vunpack.c.h.b16 %v944
        %v3457 = vunpack.c.l.b16 %v945
        %v3458 = vunpack.c.h.b16 %v945
        %v3459 = vunpack.c.l.b16 %v946
        %v3460 = vunpack.c.h.b16 %v946
        %v3461 = vunpack.c.l.b16 %v947
        %v3462 = vunpack.c.h.b16 %v947
        %v3463 = vunpack.c.l.b16 %v948
        %v3464 = vunpack.c.h.b16 %v948
        %v3465 = vunpack.c.l.b16 %v949
        %v3466 = vunpack.c.h.b16 %v949
        %v3467 = vunpack.c.l.b16 %v950
        %v3468 = vunpack.c.h.b16 %v950
        %v3469 = vunpack.c.l.b16 %v951
        %v3470 = vunpack.c.h.b16 %v951
        %v3471 = vunpack.c.l.b16 %v952
        %v3472 = vunpack.c.h.b16 %v952
        %v3473 = vunpack.c.l.b16 %v953
        %v3474 = vunpack.c.h.b16 %v953
        %v3475 = vunpack.c.l.b16 %v954
        %v3476 = vunpack.c.h.b16 %v954
        %v3477 = vunpack.c.l.b16 %v955
        %v3478 = vunpack.c.h.b16 %v955
        %v3479 = vunpack.c.l.b16 %v956
        %v3480 = vunpack.c.h.b16 %v956
        %v3481 = vunpack.c.l.b16 %v957
        %v3482 = vunpack.c.h.b16 %v957
        %v3483 = vunpack.c.l.b16 %v958
        %v3484 = vunpack.c.h.b16 %v958
        %v3485 = vunpack.c.l.b16 %v959
        %v3486 = vunpack.c.h.b16 %v959
        %v3487 = vunpack.c.l.b16 %v960
        %v3488 = vunpack.c.h.b16 %v960
        %v3489 = vunpack.c.l.b16 %v961
        %v3490 = vunpack.c.h.b16 %v961
        %v3491 = vunpack.c.l.b16 %v962
        %v3492 = vunpack.c.h.b16 %v962
        %v3493 = vunpack.c.l.b16 %v963
        %v3494 = vunpack.c.h.b16 %v963
        %v3495 = vunpack.c.l.b16 %v964
        %v3496 = vunpack.c.h.b16 %v964
        %v3497 = vunpack.c.l.b16 %v965
        %v3498 = vunpack.c.h.b16 %v965
        %v3499 = vunpack.c.l.b16 %v966
        %v3500 = vunpack.c.h.b16 %v966
        %v3501 = vunpack.c.l.b16 %v967
        %v3502 = vunpack.c.h.b16 %v967
        %v3503 = vunpack.c.l.b16 %v968
        %v3504 = vunpack.c.h.b16 %v968
        %v3505 = vunpack.c.l.b16 %v969
        %v3506 = vunpack.c.h.b16 %v969
        %v3507 = vunpack.c.l.b16 %v970
        %v3508 = vunpack.c.h.b16 %v970
        %v3509 = vunpack.c.l.b16 %v971
        %v3510 = vunpack.c.h.b16 %v971
        %v3511 = vunpack.c.l.b16 %v972
        %v3512 = vunpack.c.h.b16 %v972
        %v3513 = vunpack.c.l.b16 %v973
        %v3514 = vunpack.c.h.b16 %v973
        %v3515 = vunpack.c.l.b16 %v974
        %v3516 = vunpack.c.h.b16 %v974
        %v3517 = vunpack.c.l.b16 %v975
        %v3518 = vunpack.c.h.b16 %v975
        %v3519 = vunpack.c.l.b16 %v976
        %v3520 = vunpack.c.h.b16 %v976
        %v3521 = vunpack.c.l.b16 %v977
        %v3522 = vunpack.c.h.b16 %v977
        %v3523 = vunpack.c.l.b16 %v978
        %v3524 = vunpack.c.h.b16 %v978
        %v3525 = vunpack.c.l.b16 %v979
        %v3526 = vunpack.c.h.b16 %v979
        %v3527 = vunpack.c.l.b16 %v980
        %v3528 = vunpack.c.h.b16 %v980
        %v3529 = vunpack.c.l.b16 %v981
        %v3530 = vunpack.c.h.b16 %v981
        %v3531 = vunpack.c.l.b16 %v982
        %v3532 = vunpack.c.h.b16 %v982
        %v3533 = vunpack.c.l.b16 %v983
        %v3534 = vunpack.c.h.b16 %v983
        %v3535 = vunpack.c.l.b16 %v984
        %v3536 = vunpack.c.h.b16 %v984
        %v3537 = vunpack.c.l.b16 %v985
        %v3538 = vunpack.c.h.b16 %v985
        %v3539 = vunpack.c.l.b16 %v986
        %v3540 = vunpack.c.h.b16 %v986
        %v3541 = vunpack.c.l.b16 %v987
        %v3542 = vunpack.c.h.b16 %v987
        %v3543 = vunpack.c.l.b16 %v988
        %v3544 = vunpack.c.h.b16 %v988
        %v3545 = vunpack.c.l.b16 %v989
        %v3546 = vunpack.c.h.b16 %v989
        %v3547 = vunpack.c.l.b16 %v990
        %v3548 = vunpack.c.h.b16 %v990
        %v3549 = vunpack.c.l.b16 %v991
        %v3550 = vunpack.c.h.b16 %v991
        %v3551 = vunpack.c.l.b16 %v992
        %v3552 = vunpack.c.h.b16 %v992
        %v3553 = vunpack.c.l.b16 %v993
        %v3554 = vunpack.c.h.b16 %v993
        %v3555 = vunpack.c.l.b16 %v994
        %v3556 = vunpack.c.h.b16 %v994
        %v3557 = vunpack.c.l.b16 %v995
        %v3558 = vunpack.c.h.b16 %v995
        %v3559 = vunpack.c.l.b16 %v996
        %v3560 = vunpack.c.h.b16 %v996
        %v3561 = vunpack.c.l.b16 %v997
        %v3562 = vunpack.c.h.b16 %v997
        %v3563 = vunpack.c.l.b16 %v998
        %v3564 = vunpack.c.h.b16 %v998
        %v3565 = vunpack.c.l.b16 %v999
        %v3566 = vunpack.c.h.b16 %v999
        %v3567 = vunpack.c.l.b16 %v1000
        %v3568 = vunpack.c.h.b16 %v1000
        %v3569 = vunpack.c.l.b16 %v1001
        %v3570 = vunpack.c.h.b16 %v1001
        %v3571 = vunpack.c.l.b16 %v1002
        %v3572 = vunpack.c.h.b16 %v1002
        %v3573 = vunpack.c.l.b16 %v1003
        %v3574 = vunpack.c.h.b16 %v1003
        %v3575 = vunpack.c.l.b16 %v1004
        %v3576 = vunpack.c.h.b16 %v1004
        %v3577 = vunpack.c.l.b16 %v1005
        %v3578 = vunpack.c.h.b16 %v1005
        %v3579 = vunpack.c.l.b16 %v1006
        %v3580 = vunpack.c.h.b16 %v1006
        %v3581 = vunpack.c.l.b16 %v1007
        %v3582 = vunpack.c.h.b16 %v1007
        %v3583 = vunpack.c.l.b16 %v1008
        %v3584 = vunpack.c.h.b16 %v1008
        %v3585 = vunpack.c.l.b16 %v1009
        %v3586 = vunpack.c.h.b16 %v1009
        %v3587 = vunpack.c.l.b16 %v1010
        %v3588 = vunpack.c.h.b16 %v1010
        %v3589 = vunpack.c.l.b16 %v1011
        %v3590 = vunpack.c.h.b16 %v1011
        %v3591 = vunpack.c.l.b16 %v1012
        %v3592 = vunpack.c.h.b16 %v1012
        %v3593 = vunpack.c.l.b16 %v1013
        %v3594 = vunpack.c.h.b16 %v1013
        %v3595 = vunpack.c.l.b16 %v1014
        %v3596 = vunpack.c.h.b16 %v1014
        %v3597 = vunpack.c.l.b16 %v1015
        %v3598 = vunpack.c.h.b16 %v1015
        %v3599 = vunpack.c.l.b16 %v1016
        %v3600 = vunpack.c.h.b16 %v1016
        %v3601 = vunpack.c.l.b16 %v1017
        %v3602 = vunpack.c.h.b16 %v1017
        %v3603 = vunpack.c.l.b16 %v1018
        %v3604 = vunpack.c.h.b16 %v1018
        %v3605 = vunpack.c.l.b16 %v1019
        %v3606 = vunpack.c.h.b16 %v1019
        %v3607 = vunpack.c.l.b16 %v1020
        %v3608 = vunpack.c.h.b16 %v1020
        %v3609 = vunpack.c.l.b16 %v1021
        %v3610 = vunpack.c.h.b16 %v1021
        %v3611 = vunpack.c.l.b16 %v1022
        %v3612 = vunpack.c.h.b16 %v1022
        %v3613 = vunpack.c.l.b16 %v1023
        %v3614 = vunpack.c.h.b16 %v1023
        %v3615 = vunpack.c.l.b16 %v1024
        %v3616 = vunpack.c.h.b16 %v1024
        %v3617 = vunpack.c.l.b16 %v1025
        %v3618 = vunpack.c.h.b16 %v1025
        %v3619 = vunpack.c.l.b16 %v1026
        %v3620 = vunpack.c.h.b16 %v1026
        %v3621 = vunpack.c.l.b16 %v1027
        %v3622 = vunpack.c.h.b16 %v1027
        %v3623 = vunpack.c.l.b16 %v1028
        %v3624 = vunpack.c.h.b16 %v1028
        %v3625 = vunpack.c.l.b16 %v1029
        %v3626 = vunpack.c.h.b16 %v1029
        %v3627 = vunpack.c.l.b16 %v1030
        %v3628 = vunpack.c.h.b16 %v1030
        %v3629 = vunpack.c.l.b16 %v1031
        %v3630 = vunpack.c.h.b16 %v1031
        %v3631 = vunpack.c.l.b16 %v1032
        %v3632 = vunpack.c.h.b16 %v1032
        %v3633 = vunpack.c.l.b16 %v1033
        %v3634 = vunpack.c.h.b16 %v1033
        %v3635 = vunpack.c.l.b16 %v1034
        %v3636 = vunpack.c.h.b16 %v1034
        %v3637 = vunpack.c.l.b16 %v1035
        %v3638 = vunpack.c.h.b16 %v1035
        %v3639 = vunpack.c.l.b16 %v1036
        %v3640 = vunpack.c.h.b16 %v1036
        %v3641 = vunpack.c.l.b16 %v1037
        %v3642 = vunpack.c.h.b16 %v1037
        %v3643 = vunpack.c.l.b16 %v1038
        %v3644 = vunpack.c.h.b16 %v1038
        %v3645 = vunpack.c.l.b16 %v1039
        %v3646 = vunpack.c.h.b16 %v1039
        %v3647 = vunpack.c.l.b16 %v1040
        %v3648 = vunpack.c.h.b16 %v1040
        %v3649 = vunpack.c.l.b16 %v1041
        %v3650 = vunpack.c.h.b16 %v1041
        %v3651 = vunpack.c.l.b16 %v1042
        %v3652 = vunpack.c.h.b16 %v1042
        %v3653 = vunpack.c.l.b16 %v1043
        %v3654 = vunpack.c.h.b16 %v1043
        %v3655 = vunpack.c.l.b16 %v1044
        %v3656 = vunpack.c.h.b16 %v1044
        %v3657 = vunpack.c.l.b16 %v1045
        %v3658 = vunpack.c.h.b16 %v1045
        %v3659 = vunpack.c.l.b16 %v1046
        %v3660 = vunpack.c.h.b16 %v1046
        %v3661 = vunpack.c.l.b16 %v1047
        %v3662 = vunpack.c.h.b16 %v1047
        %v3663 = vunpack.c.l.b16 %v1048
        %v3664 = vunpack.c.h.b16 %v1048
        %v3665 = vunpack.c.l.b16 %v1049
        %v3666 = vunpack.c.h.b16 %v1049
        %v3667 = vunpack.c.l.b16 %v1050
        %v3668 = vunpack.c.h.b16 %v1050
        %v3669 = vunpack.c.l.b16 %v1051
        %v3670 = vunpack.c.h.b16 %v1051
        %v3671 = vunpack.c.l.b16 %v1052
        %v3672 = vunpack.c.h.b16 %v1052
        %v3673 = vunpack.c.l.b16 %v1053
        %v3674 = vunpack.c.h.b16 %v1053
        %v3675 = vunpack.c.l.b16 %v1054
        %v3676 = vunpack.c.h.b16 %v1054
        %v3677 = vunpack.c.l.b16 %v1055
        %v3678 = vunpack.c.h.b16 %v1055
        %v3679 = vunpack.c.l.b16 %v1056
        %v3680 = vunpack.c.h.b16 %v1056
        %v3681 = vunpack.c.l.b16 %v1057
        %v3682 = vunpack.c.h.b16 %v1057
        %v3683 = vunpack.c.l.b16 %v1058
        %v3684 = vunpack.c.h.b16 %v1058
        %v3685 = vunpack.c.l.b16 %v1059
        %v3686 = vunpack.c.h.b16 %v1059
        %v3687 = vunpack.c.l.b16 %v1060
        %v3688 = vunpack.c.h.b16 %v1060
        %v3689 = vunpack.c.l.b16 %v1061
        %v3690 = vunpack.c.h.b16 %v1061
        %v3691 = vunpack.c.l.b16 %v1062
        %v3692 = vunpack.c.h.b16 %v1062
        %v3693 = vunpack.c.l.b16 %v1063
        %v3694 = vunpack.c.h.b16 %v1063
        %v3695 = vunpack.c.l.b16 %v1064
        %v3696 = vunpack.c.h.b16 %v1064
        %v3697 = vunpack.c.l.b16 %v1065
        %v3698 = vunpack.c.h.b16 %v1065
        %v3699 = vunpack.c.l.b16 %v1066
        %v3700 = vunpack.c.h.b16 %v1066
        %v3701 = vunpack.c.l.b16 %v1067
        %v3702 = vunpack.c.h.b16 %v1067
        %v3703 = vunpack.c.l.b16 %v1068
        %v3704 = vunpack.c.h.b16 %v1068
        %v3705 = vunpack.c.l.b16 %v1069
        %v3706 = vunpack.c.h.b16 %v1069
        %v3707 = vunpack.c.l.b16 %v1070
        %v3708 = vunpack.c.h.b16 %v1070
        %v3709 = vunpack.c.l.b16 %v1071
        %v3710 = vunpack.c.h.b16 %v1071
        %v3711 = vunpack.c.l.b16 %v1072
        %v3712 = vunpack.c.h.b16 %v1072
        %v3713 = vunpack.c.l.b16 %v1073
        %v3714 = vunpack.c.h.b16 %v1073
        %v3715 = vunpack.c.l.b16 %v1074
        %v3716 = vunpack.c.h.b16 %v1074
        %v3717 = vunpack.c.l.b16 %v1075
        %v3718 = vunpack.c.h.b16 %v1075
        %v3719 = vunpack.c.l.b16 %v1076
        %v3720 = vunpack.c.h.b16 %v1076
        %v3721 = vunpack.c.l.b16 %v1077
        %v3722 = vunpack.c.h.b16 %v1077
        %v3723 = vunpack.c.l.b16 %v1078
        %v3724 = vunpack.c.h.b16 %v1078
        %v3725 = vunpack.c.l.b16 %v1079
        %v3726 = vunpack.c.h.b16 %v1079
        %v3727 = vunpack.c.l.b16 %v1080
        %v3728 = vunpack.c.h.b16 %v1080
        %v3729 = vunpack.c.l.b16 %v1081
        %v3730 = vunpack.c.h.b16 %v1081
        %v3731 = vunpack.c.l.b16 %v1082
        %v3732 = vunpack.c.h.b16 %v1082
        %v3733 = vunpack.c.l.b16 %v1083
        %v3734 = vunpack.c.h.b16 %v1083
        %v3735 = vunpack.c.l.b16 %v1084
        %v3736 = vunpack.c.h.b16 %v1084
        %v3737 = vunpack.c.l.b16 %v1085
        %v3738 = vunpack.c.h.b16 %v1085
        %v3739 = vunpack.c.l.b16 %v1086
        %v3740 = vunpack.c.h.b16 %v1086
        %v3741 = vunpack.c.l.b16 %v1087
        %v3742 = vunpack.c.h.b16 %v1087
        %v3743 = vunpack.c.l.b16 %v1088
        %v3744 = vunpack.c.h.b16 %v1088
        %v3745 = vunpack.c.l.b16 %v1089
        %v3746 = vunpack.c.h.b16 %v1089
        %v3747 = vunpack.c.l.b16 %v1090
        %v3748 = vunpack.c.h.b16 %v1090
        %v3749 = vunpack.c.l.b16 %v1091
        %v3750 = vunpack.c.h.b16 %v1091
        %v3751 = vunpack.c.l.b16 %v1092
        %v3752 = vunpack.c.h.b16 %v1092
        %v3753 = vunpack.c.l.b16 %v1093
        %v3754 = vunpack.c.h.b16 %v1093
        %v3755 = vunpack.c.l.b16 %v1094
        %v3756 = vunpack.c.h.b16 %v1094
        %v3757 = vunpack.c.l.b16 %v1095
        %v3758 = vunpack.c.h.b16 %v1095
        %v3759 = vunpack.c.l.b16 %v1096
        %v3760 = vunpack.c.h.b16 %v1096
        %v3761 = vunpack.c.l.b16 %v1097
        %v3762 = vunpack.c.h.b16 %v1097
        %v3763 = vunpack.c.l.b16 %v1098
        %v3764 = vunpack.c.h.b16 %v1098
        %v3765 = vunpack.c.l.b16 %v1099
        %v3766 = vunpack.c.h.b16 %v1099
        %v3767 = vunpack.c.l.b16 %v1100
        %v3768 = vunpack.c.h.b16 %v1100
        %v3769 = vunpack.c.l.b16 %v1101
        %v3770 = vunpack.c.h.b16 %v1101
        %v3771 = vunpack.c.l.b16 %v1102
        %v3772 = vunpack.c.h.b16 %v1102
        %v3773 = vunpack.c.l.b16 %v1103
        %v3774 = vunpack.c.h.b16 %v1103
        %v3775 = vunpack.c.l.b16 %v1104
        %v3776 = vunpack.c.h.b16 %v1104
        %v3777 = vunpack.c.l.b16 %v1105
        %v3778 = vunpack.c.h.b16 %v1105
        %v3779 = vunpack.c.l.b16 %v1106
        %v3780 = vunpack.c.h.b16 %v1106
        %v3781 = vunpack.c.l.b16 %v1107
        %v3782 = vunpack.c.h.b16 %v1107
        %v3783 = vunpack.c.l.b16 %v1108
        %v3784 = vunpack.c.h.b16 %v1108
        %v3785 = vunpack.c.l.b16 %v1109
        %v3786 = vunpack.c.h.b16 %v1109
        %v3787 = vunpack.c.l.b16 %v1110
        %v3788 = vunpack.c.h.b16 %v1110
        %v3789 = vunpack.c.l.b16 %v1111
        %v3790 = vunpack.c.h.b16 %v1111
        %v3791 = vunpack.c.l.b16 %v1112
        %v3792 = vunpack.c.h.b16 %v1112
        %v3793 = vunpack.c.l.b16 %v1113
        %v3794 = vunpack.c.h.b16 %v1113
        %v3795 = vunpack.c.l.b16 %v1114
        %v3796 = vunpack.c.h.b16 %v1114
        %v3797 = vunpack.c.l.b16 %v1115
        %v3798 = vunpack.c.h.b16 %v1115
        %v3799 = vunpack.c.l.b16 %v1116
        %v3800 = vunpack.c.h.b16 %v1116
        %v3801 = vunpack.c.l.b16 %v1117
        %v3802 = vunpack.c.h.b16 %v1117
        %v3803 = vunpack.c.l.b16 %v1118
        %v3804 = vunpack.c.h.b16 %v1118
        %v3805 = vunpack.c.l.b16 %v1119
        %v3806 = vunpack.c.h.b16 %v1119
        %v3807 = vunpack.c.l.b16 %v1120
        %v3808 = vunpack.c.h.b16 %v1120
        %v3809 = vunpack.c.l.b16 %v1121
        %v3810 = vunpack.c.h.b16 %v1121
        %v3811 = vunpack.c.l.b16 %v1122
        %v3812 = vunpack.c.h.b16 %v1122
        %v3813 = vunpack.c.l.b16 %v1123
        %v3814 = vunpack.c.h.b16 %v1123
        %v3815 = vunpack.c.l.b16 %v1124
        %v3816 = vunpack.c.h.b16 %v1124
        %v3817 = vunpack.c.l.b16 %v1125
        %v3818 = vunpack.c.h.b16 %v1125
        %v3819 = vunpack.c.l.b16 %v1126
        %v3820 = vunpack.c.h.b16 %v1126
        %v3821 = vunpack.c.l.b16 %v1127
        %v3822 = vunpack.c.h.b16 %v1127
        %v3823 = vunpack.c.l.b16 %v1128
        %v3824 = vunpack.c.h.b16 %v1128
        %v3825 = vunpack.c.l.b16 %v1129
        %v3826 = vunpack.c.h.b16 %v1129
        %v3827 = vunpack.c.l.b16 %v1130
        %v3828 = vunpack.c.h.b16 %v1130
        %v3829 = vunpack.c.l.b16 %v1131
        %v3830 = vunpack.c.h.b16 %v1131
        %v3831 = vunpack.c.l.b16 %v1132
        %v3832 = vunpack.c.h.b16 %v1132
        %v3833 = vunpack.c.l.b16 %v1133
        %v3834 = vunpack.c.h.b16 %v1133
        %v3835 = vunpack.c.l.b16 %v1134
        %v3836 = vunpack.c.h.b16 %v1134
        %v3837 = vunpack.c.l.b16 %v1135
        %v3838 = vunpack.c.h.b16 %v1135
        %v3839 = vunpack.c.l.b16 %v1136
        %v3840 = vunpack.c.h.b16 %v1136
        %v3841 = vunpack.c.l.b16 %v1137
        %v3842 = vunpack.c.h.b16 %v1137
        %v3843 = vunpack.c.l.b16 %v1138
        %v3844 = vunpack.c.h.b16 %v1138
        %v3845 = vunpack.c.l.b16 %v1139
        %v3846 = vunpack.c.h.b16 %v1139
        %v3847 = vunpack.c.l.b16 %v1140
        %v3848 = vunpack.c.h.b16 %v1140
        %v3849 = vunpack.c.l.b16 %v1141
        %v3850 = vunpack.c.h.b16 %v1141
        %v3851 = vunpack.c.l.b16 %v1142
        %v3852 = vunpack.c.h.b16 %v1142
        %v3853 = vunpack.c.l.b16 %v1143
        %v3854 = vunpack.c.h.b16 %v1143
        %v3855 = vunpack.c.l.b16 %v1144
        %v3856 = vunpack.c.h.b16 %v1144
        %v3857 = vunpack.c.l.b16 %v1145
        %v3858 = vunpack.c.h.b16 %v1145
        %v3859 = vunpack.c.l.b16 %v1146
        %v3860 = vunpack.c.h.b16 %v1146
        %v3861 = vpack.c.b16 %v2135, %v2133
        %v3862 = vpack.c.b16 %v2136, %v2134
        %v3863 = vpack.c.b16 %v2139, %v2137
        %v3864 = vpack.c.b16 %v2140, %v2138
        %v3865 = vpack.c.b16 %v2143, %v2141
        %v3866 = vpack.c.b16 %v2144, %v2142
        %v3867 = vpack.c.b16 %v2147, %v2145
        %v3868 = vpack.c.b16 %v2148, %v2146
        %v3869 = vpack.c.b16 %v2151, %v2149
        %v3870 = vpack.c.b16 %v2152, %v2150
        %v3871 = vpack.c.b16 %v2155, %v2153
        %v3872 = vpack.c.b16 %v2156, %v2154
        %v3873 = vpack.c.b16 %v2159, %v2157
        %v3874 = vpack.c.b16 %v2160, %v2158
        %v3875 = vpack.c.b16 %v2163, %v2161
        %v3876 = vpack.c.b16 %v2164, %v2162
        %v3877 = vpack.c.b16 %v2167, %v2165
        %v3878 = vpack.c.b16 %v2168, %v2166
        %v3879 = vpack.c.b16 %v2171, %v2169
        %v3880 = vpack.c.b16 %v2172, %v2170
        %v3881 = vpack.c.b16 %v2175, %v2173
        %v3882 = vpack.c.b16 %v2176, %v2174
        %v3883 = vpack.c.b16 %v2179, %v2177
        %v3884 = vpack.c.b16 %v2180, %v2178
        %v3885 = vpack.c.b16 %v2183, %v2181
        %v3886 = vpack.c.b16 %v2184, %v2182
        %v3887 = vpack.c.b16 %v2187, %v2185
        %v3888 = vpack.c.b16 %v2188, %v2186
        %v3889 = vpack.c.b16 %v2191, %v2189
        %v3890 = vpack.c.b16 %v2192, %v2190
        %v3891 = vpack.c.b16 %v2195, %v2193
        %v3892 = vpack.c.b16 %v2196, %v2194
        %v3893 = vpack.c.b16 %v2199, %v2197
        %v3894 = vpack.c.b16 %v2200, %v2198
        %v3895 = vpack.c.b16 %v2203, %v2201
        %v3896 = vpack.c.b16 %v2204, %v2202
        %v3897 = vpack.c.b16 %v2207, %v2205
        %v3898 = vpack.c.b16 %v2208, %v2206
        %v3899 = vpack.c.b16 %v2211, %v2209
        %v3900 = vpack.c.b16 %v2212, %v2210
        %v3901 = vpack.c.b16 %v2215, %v2213
        %v3902 = vpack.c.b16 %v2216, %v2214
        %v3903 = vpack.c.b16 %v2219, %v2217
        %v3904 = vpack.c.b16 %v2220, %v2218
        %v3905 = vpack.c.b16 %v2223, %v2221
        %v3906 = vpack.c.b16 %v2224, %v2222
        %v3907 = vpack.c.b16 %v2227, %v2225
        %v3908 = vpack.c.b16 %v2228, %v2226
        %v3909 = vpack.c.b16 %v2231, %v2229
        %v3910 = vpack.c.b16 %v2232, %v2230
        %v3911 = vpack.c.b16 %v2235, %v2233
        %v3912 = vpack.c.b16 %v2236, %v2234
        %v3913 = vpack.c.b16 %v2239, %v2237
        %v3914 = vpack.c.b16 %v2240, %v2238
        %v3915 = vpack.c.b16 %v2243, %v2241
        %v3916 = vpack.c.b16 %v2244, %v2242
        %v3917 = vpack.c.b16 %v2247, %v2245
        %v3918 = vpack.c.b16 %v2248, %v2246
        %v3919 = vpack.c.b16 %v2251, %v2249
        %v3920 = vpack.c.b16 %v2252, %v2250
        %v3921 = vpack.c.b16 %v2255, %v2253
        %v3922 = vpack.c.b16 %v2256, %v2254
        %v3923 = vpack.c.b16 %v2259, %v2257
        %v3924 = vpack.c.b16 %v2260, %v2258
        %v3925 = vpack.c.b16 %v2263, %v2261
        %v3926 = vpack.c.b16 %v2264, %v2262
        %v3927 = vpack.c.b16 %v2267, %v2265
        %v3928 = vpack.c.b16 %v2268, %v2266
        %v3929 = vpack.c.b16 %v2271, %v2269
        %v3930 = vpack.c.b16 %v2272, %v2270
        %v3931 = vpack.c.b16 %v2275, %v2273
        %v3932 = vpack.c.b16 %v2276, %v2274
        %v3933 = vpack.c.b16 %v2279, %v2277
        %v3934 = vpack.c.b16 %v2280, %v2278
        %v3935 = vpack.c.b16 %v2283, %v2281
        %v3936 = vpack.c.b16 %v2284, %v2282
        %v3937 = vpack.c.b16 %v2287, %v2285
        %v3938 = vpack.c.b16 %v2288, %v2286
        %v3939 = vpack.c.b16 %v2291, %v2289
        %v3940 = vpack.c.b16 %v2292, %v2290
        %v3941 = vpack.c.b16 %v2295, %v2293
        %v3942 = vpack.c.b16 %v2296, %v2294
        %v3943 = vpack.c.b16 %v2299, %v2297
        %v3944 = vpack.c.b16 %v2300, %v2298
        %v3945 = vpack.c.b16 %v2303, %v2301
        %v3946 = vpack.c.b16 %v2304, %v2302
        %v3947 = vpack.c.b16 %v2307, %v2305
        %v3948 = vpack.c.b16 %v2308, %v2306
        %v3949 = vpack.c.b16 %v2311, %v2309
        %v3950 = vpack.c.b16 %v2312, %v2310
        %v3951 = vpack.c.b16 %v2315, %v2313
        %v3952 = vpack.c.b16 %v2316, %v2314
        %v3953 = vpack.c.b16 %v2319, %v2317
        %v3954 = vpack.c.b16 %v2320, %v2318
        %v3955 = vpack.c.b16 %v2323, %v2321
        %v3956 = vpack.c.b16 %v2324, %v2322
        %v3957 = vpack.c.b16 %v2327, %v2325
        %v3958 = vpack.c.b16 %v2328, %v2326
        %v3959 = vpack.c.b16 %v2331, %v2329
        %v3960 = vpack.c.b16 %v2332, %v2330
        %v3961 = vpack.c.b16 %v2335, %v2333
        %v3962 = vpack.c.b16 %v2336, %v2334
        %v3963 = vpack.c.b16 %v2339, %v2337
        %v3964 = vpack.c.b16 %v2340, %v2338
        %v3965 = vpack.c.b16 %v2343, %v2341
        %v3966 = vpack.c.b16 %v2344, %v2342
        %v3967 = vpack.c.b16 %v2347, %v2345
        %v3968 = vpack.c.b16 %v2348, %v2346
        %v3969 = vpack.c.b16 %v2351, %v2349
        %v3970 = vpack.c.b16 %v2352, %v2350
        %v3971 = vpack.c.b16 %v2355, %v2353
        %v3972 = vpack.c.b16 %v2356, %v2354
        %v3973 = vpack.c.b16 %v2359, %v2357
        %v3974 = vpack.c.b16 %v2360, %v2358
        %v3975 = vpack.c.b16 %v2363, %v2361
        %v3976 = vpack.c.b16 %v2364, %v2362
        %v3977 = vpack.c.b16 %v2367, %v2365
        %v3978 = vpack.c.b16 %v2368, %v2366
        %v3979 = vpack.c.b16 %v2371, %v2369
        %v3980 = vpack.c.b16 %v2372, %v2370
        %v3981 = vpack.c.b16 %v2375, %v2373
        %v3982 = vpack.c.b16 %v2376, %v2374
        %v3983 = vpack.c.b16 %v2379, %v2377
        %v3984 = vpack.c.b16 %v2380, %v2378
        %v3985 = vpack.c.b16 %v2383, %v2381
        %v3986 = vpack.c.b16 %v2384, %v2382
        %v3987 = vpack.c.b16 %v2387, %v2385
        %v3988 = vpack.c.b16 %v2388, %v2386
        %v3989 = vpack.c.b16 %v2391, %v2389
        %v3990 = vpack.c.b16 %v2392, %v2390
        %v3991 = vpack.c.b16 %v2395, %v2393
        %v3992 = vpack.c.b16 %v2396, %v2394
        %v3993 = vpack.c.b16 %v2399, %v2397
        %v3994 = vpack.c.b16 %v2400, %v2398
        %v3995 = vpack.c.b16 %v2403, %v2401
        %v3996 = vpack.c.b16 %v2404, %v2402
        %v3997 = vpack.c.b16 %v2407, %v2405
        %v3998 = vpack.c.b16 %v2408, %v2406
        %v3999 = vpack.c.b16 %v2411, %v2409
        %v4000 = vpack.c.b16 %v2412, %v2410
        %v4001 = vpack.c.b16 %v2415, %v2413
        %v4002 = vpack.c.b16 %v2416, %v2414
        %v4003 = vpack.c.b16 %v2419, %v2417
        %v4004 = vpack.c.b16 %v2420, %v2418
        %v4005 = vpack.c.b16 %v2423, %v2421
        %v4006 = vpack.c.b16 %v2424, %v2422
        %v4007 = vpack.c.b16 %v2427, %v2425
        %v4008 = vpack.c.b16 %v2428, %v2426
        %v4009 = vpack.c.b16 %v2431, %v2429
        %v4010 = vpack.c.b16 %v2432, %v2430
        %v4011 = vpack.c.b16 %v2435, %v2433
        %v4012 = vpack.c.b16 %v2436, %v2434
        %v4013 = vpack.c.b16 %v2439, %v2437
        %v4014 = vpack.c.b16 %v2440, %v2438
        %v4015 = vpack.c.b16 %v2443, %v2441
        %v4016 = vpack.c.b16 %v2444, %v2442
        %v4017 = vpack.c.b16 %v2447, %v2445
        %v4018 = vpack.c.b16 %v2448, %v2446
        %v4019 = vpack.c.b16 %v2451, %v2449
        %v4020 = vpack.c.b16 %v2452, %v2450
        %v4021 = vpack.c.b16 %v2455, %v2453
        %v4022 = vpack.c.b16 %v2456, %v2454
        %v4023 = vpack.c.b16 %v2459, %v2457
        %v4024 = vpack.c.b16 %v2460, %v2458
        %v4025 = vpack.c.b16 %v2463, %v2461
        %v4026 = vpack.c.b16 %v2464, %v2462
        %v4027 = vpack.c.b16 %v2467, %v2465
        %v4028 = vpack.c.b16 %v2468, %v2466
        %v4029 = vpack.c.b16 %v2471, %v2469
        %v4030 = vpack.c.b16 %v2472, %v2470
        %v4031 = vpack.c.b16 %v2475, %v2473
        %v4032 = vpack.c.b16 %v2476, %v2474
        %v4033 = vpack.c.b16 %v2479, %v2477
        %v4034 = vpack.c.b16 %v2480, %v2478
        %v4035 = vpack.c.b16 %v2483, %v2481
        %v4036 = vpack.c.b16 %v2484, %v2482
        %v4037 = vpack.c.b16 %v2487, %v2485
        %v4038 = vpack.c.b16 %v2488, %v2486
        %v4039 = vpack.c.b16 %v2491, %v2489
        %v4040 = vpack.c.b16 %v2492, %v2490
        %v4041 = vpack.c.b16 %v2495, %v2493
        %v4042 = vpack.c.b16 %v2496, %v2494
        %v4043 = vpack.c.b16 %v2499, %v2497
        %v4044 = vpack.c.b16 %v2500, %v2498
        %v4045 = vpack.c.b16 %v2503, %v2501
        %v4046 = vpack.c.b16 %v2504, %v2502
        %v4047 = vpack.c.b16 %v2507, %v2505
        %v4048 = vpack.c.b16 %v2508, %v2506
        %v4049 = vpack.c.b16 %v2511, %v2509
        %v4050 = vpack.c.b16 %v2512, %v2510
        %v4051 = vpack.c.b16 %v2515, %v2513
        %v4052 = vpack.c.b16 %v2516, %v2514
        %v4053 = vpack.c.b16 %v2519, %v2517
        %v4054 = vpack.c.b16 %v2520, %v2518
        %v4055 = vpack.c.b16 %v2523, %v2521
        %v4056 = vpack.c.b16 %v2524, %v2522
        %v4057 = vpack.c.b16 %v2527, %v2525
        %v4058 = vpack.c.b16 %v2528, %v2526
        %v4059 = vpack.c.b16 %v2531, %v2529
        %v4060 = vpack.c.b16 %v2532, %v2530
        %v4061 = vpack.c.b16 %v2535, %v2533
        %v4062 = vpack.c.b16 %v2536, %v2534
        %v4063 = vpack.c.b16 %v2539, %v2537
        %v4064 = vpack.c.b16 %v2540, %v2538
        %v4065 = vpack.c.b16 %v2543, %v2541
        %v4066 = vpack.c.b16 %v2544, %v2542
        %v4067 = vpack.c.b16 %v2547, %v2545
        %v4068 = vpack.c.b16 %v2548, %v2546
        %v4069 = vpack.c.b16 %v2551, %v2549
        %v4070 = vpack.c.b16 %v2552, %v2550
        %v4071 = vpack.c.b16 %v2555, %v2553
        %v4072 = vpack.c.b16 %v2556, %v2554
        %v4073 = vpack.c.b16 %v2559, %v2557
        %v4074 = vpack.c.b16 %v2560, %v2558
        %v4075 = vpack.c.b16 %v2563, %v2561
        %v4076 = vpack.c.b16 %v2564, %v2562
        %v4077 = vpack.c.b16 %v2567, %v2565
        %v4078 = vpack.c.b16 %v2568, %v2566
        %v4079 = vpack.c.b16 %v2571, %v2569
        %v4080 = vpack.c.b16 %v2572, %v2570
        %v4081 = vpack.c.b16 %v2575, %v2573
        %v4082 = vpack.c.b16 %v2576, %v2574
        %v4083 = vpack.c.b16 %v2579, %v2577
        %v4084 = vpack.c.b16 %v2580, %v2578
        %v4085 = vpack.c.b16 %v2583, %v2581
        %v4086 = vpack.c.b16 %v2584, %v2582
        %v4087 = vpack.c.b16 %v2587, %v2585
        %v4088 = vpack.c.b16 %v2588, %v2586
        %v4089 = vpack.c.b16 %v2591, %v2589
        %v4090 = vpack.c.b16 %v2592, %v2590
        %v4091 = vpack.c.b16 %v2595, %v2593
        %v4092 = vpack.c.b16 %v2596, %v2594
        %v4093 = vpack.c.b16 %v2599, %v2597
        %v4094 = vpack.c.b16 %v2600, %v2598
        %v4095 = vpack.c.b16 %v2603, %v2601
        %v4096 = vpack.c.b16 %v2604, %v2602
        %v4097 = vpack.c.b16 %v2607, %v2605
        %v4098 = vpack.c.b16 %v2608, %v2606
        %v4099 = vpack.c.b16 %v2611, %v2609
        %v4100 = vpack.c.b16 %v2612, %v2610
        %v4101 = vpack.c.b16 %v2615, %v2613
        %v4102 = vpack.c.b16 %v2616, %v2614
        %v4103 = vpack.c.b16 %v2619, %v2617
        %v4104 = vpack.c.b16 %v2620, %v2618
        %v4105 = vpack.c.b16 %v2623, %v2621
        %v4106 = vpack.c.b16 %v2624, %v2622
        %v4107 = vpack.c.b16 %v2627, %v2625
        %v4108 = vpack.c.b16 %v2628, %v2626
        %v4109 = vpack.c.b16 %v2631, %v2629
        %v4110 = vpack.c.b16 %v2632, %v2630
        %v4111 = vpack.c.b16 %v2635, %v2633
        %v4112 = vpack.c.b16 %v2636, %v2634
        %v4113 = vpack.c.b16 %v2639, %v2637
        %v4114 = vpack.c.b16 %v2640, %v2638
        %v4115 = vpack.c.b16 %v2643, %v2641
        %v4116 = vpack.c.b16 %v2644, %v2642
        %v4117 = vpack.c.b16 %v2647, %v2645
        %v4118 = vpack.c.b16 %v2648, %v2646
        %v4119 = vpack.c.b16 %v2651, %v2649
        %v4120 = vpack.c.b16 %v2652, %v2650
        %v4121 = vpack.c.b16 %v2655, %v2653
        %v4122 = vpack.c.b16 %v2656, %v2654
        %v4123 = vpack.c.b16 %v2659, %v2657
        %v4124 = vpack.c.b16 %v2660, %v2658
        %v4125 = vpack.c.b16 %v2663, %v2661
        %v4126 = vpack.c.b16 %v2664, %v2662
        %v4127 = vpack.c.b16 %v2667, %v2665
        %v4128 = vpack.c.b16 %v2668, %v2666
        %v4129 = vpack.c.b16 %v2671, %v2669
        %v4130 = vpack.c.b16 %v2672, %v2670
        %v4131 = vpack.c.b16 %v2675, %v2673
        %v4132 = vpack.c.b16 %v2676, %v2674
        %v4133 = vpack.c.b16 %v2679, %v2677
        %v4134 = vpack.c.b16 %v2680, %v2678
        %v4135 = vpack.c.b16 %v2683, %v2681
        %v4136 = vpack.c.b16 %v2684, %v2682
        %v4137 = vpack.c.b16 %v2687, %v2685
        %v4138 = vpack.c.b16 %v2688, %v2686
        %v4139 = vpack.c.b16 %v2691, %v2689
        %v4140 = vpack.c.b16 %v2692, %v2690
        %v4141 = vpack.c.b16 %v2695, %v2693
        %v4142 = vpack.c.b16 %v2696, %v2694
        %v4143 = vpack.c.b16 %v2699, %v2697
        %v4144 = vpack.c.b16 %v2700, %v2698
        %v4145 = vpack.c.b16 %v2703, %v2701
        %v4146 = vpack.c.b16 %v2704, %v2702
        %v4147 = vpack.c.b16 %v2707, %v2705
        %v4148 = vpack.c.b16 %v2708, %v2706
        %v4149 = vpack.c.b16 %v2711, %v2709
        %v4150 = vpack.c.b16 %v2712, %v2710
        %v4151 = vpack.c.b16 %v2715, %v2713
        %v4152 = vpack.c.b16 %v2716, %v2714
        %v4153 = vpack.c.b16 %v2719, %v2717
        %v4154 = vpack.c.b16 %v2720, %v2718
        %v4155 = vpack.c.b16 %v2723, %v2721
        %v4156 = vpack.c.b16 %v2724, %v2722
        %v4157 = vpack.c.b16 %v2727, %v2725
        %v4158 = vpack.c.b16 %v2728, %v2726
        %v4159 = vpack.c.b16 %v2731, %v2729
        %v4160 = vpack.c.b16 %v2732, %v2730
        %v4161 = vpack.c.b16 %v2735, %v2733
        %v4162 = vpack.c.b16 %v2736, %v2734
        %v4163 = vpack.c.b16 %v2739, %v2737
        %v4164 = vpack.c.b16 %v2740, %v2738
        %v4165 = vpack.c.b16 %v2743, %v2741
        %v4166 = vpack.c.b16 %v2744, %v2742
        %v4167 = vpack.c.b16 %v2747, %v2745
        %v4168 = vpack.c.b16 %v2748, %v2746
        %v4169 = vpack.c.b16 %v2751, %v2749
        %v4170 = vpack.c.b16 %v2752, %v2750
        %v4171 = vpack.c.b16 %v2755, %v2753
        %v4172 = vpack.c.b16 %v2756, %v2754
        %v4173 = vpack.c.b16 %v2759, %v2757
        %v4174 = vpack.c.b16 %v2760, %v2758
        %v4175 = vpack.c.b16 %v2763, %v2761
        %v4176 = vpack.c.b16 %v2764, %v2762
        %v4177 = vpack.c.b16 %v2767, %v2765
        %v4178 = vpack.c.b16 %v2768, %v2766
        %v4179 = vpack.c.b16 %v2771, %v2769
        %v4180 = vpack.c.b16 %v2772, %v2770
        %v4181 = vpack.c.b16 %v2775, %v2773
        %v4182 = vpack.c.b16 %v2776, %v2774
        %v4183 = vpack.c.b16 %v2779, %v2777
        %v4184 = vpack.c.b16 %v2780, %v2778
        %v4185 = vpack.c.b16 %v2783, %v2781
        %v4186 = vpack.c.b16 %v2784, %v2782
        %v4187 = vpack.c.b16 %v2787, %v2785
        %v4188 = vpack.c.b16 %v2788, %v2786
        %v4189 = vpack.c.b16 %v2791, %v2789
        %v4190 = vpack.c.b16 %v2792, %v2790
        %v4191 = vpack.c.b16 %v2795, %v2793
        %v4192 = vpack.c.b16 %v2796, %v2794
        %v4193 = vpack.c.b16 %v2799, %v2797
        %v4194 = vpack.c.b16 %v2800, %v2798
        %v4195 = vpack.c.b16 %v2803, %v2801
        %v4196 = vpack.c.b16 %v2804, %v2802
        %v4197 = vpack.c.b16 %v2807, %v2805
        %v4198 = vpack.c.b16 %v2808, %v2806
        %v4199 = vpack.c.b16 %v2811, %v2809
        %v4200 = vpack.c.b16 %v2812, %v2810
        %v4201 = vpack.c.b16 %v2815, %v2813
        %v4202 = vpack.c.b16 %v2816, %v2814
        %v4203 = vpack.c.b16 %v2819, %v2817
        %v4204 = vpack.c.b16 %v2820, %v2818
        %v4205 = vpack.c.b16 %v2823, %v2821
        %v4206 = vpack.c.b16 %v2824, %v2822
        %v4207 = vpack.c.b16 %v2827, %v2825
        %v4208 = vpack.c.b16 %v2828, %v2826
        %v4209 = vpack.c.b16 %v2831, %v2829
        %v4210 = vpack.c.b16 %v2832, %v2830
        %v4211 = vpack.c.b16 %v2835, %v2833
        %v4212 = vpack.c.b16 %v2836, %v2834
        %v4213 = vpack.c.b16 %v2839, %v2837
        %v4214 = vpack.c.b16 %v2840, %v2838
        %v4215 = vpack.c.b16 %v2843, %v2841
        %v4216 = vpack.c.b16 %v2844, %v2842
        %v4217 = vpack.c.b16 %v2847, %v2845
        %v4218 = vpack.c.b16 %v2848, %v2846
        %v4219 = vpack.c.b16 %v2851, %v2849
        %v4220 = vpack.c.b16 %v2852, %v2850
        %v4221 = vpack.c.b16 %v2855, %v2853
        %v4222 = vpack.c.b16 %v2856, %v2854
        %v4223 = vpack.c.b16 %v2859, %v2857
        %v4224 = vpack.c.b16 %v2860, %v2858
        %v4225 = vpack.c.b16 %v2863, %v2861
        %v4226 = vpack.c.b16 %v2864, %v2862
        %v4227 = vpack.c.b16 %v2867, %v2865
        %v4228 = vpack.c.b16 %v2868, %v2866
        %v4229 = vpack.c.b16 %v2871, %v2869
        %v4230 = vpack.c.b16 %v2872, %v2870
        %v4231 = vpack.c.b16 %v2875, %v2873
        %v4232 = vpack.c.b16 %v2876, %v2874
        %v4233 = vpack.c.b16 %v2879, %v2877
        %v4234 = vpack.c.b16 %v2880, %v2878
        %v4235 = vpack.c.b16 %v2883, %v2881
        %v4236 = vpack.c.b16 %v2884, %v2882
        %v4237 = vpack.c.b16 %v2887, %v2885
        %v4238 = vpack.c.b16 %v2888, %v2886
        %v4239 = vpack.c.b16 %v2891, %v2889
        %v4240 = vpack.c.b16 %v2892, %v2890
        %v4241 = vpack.c.b16 %v2895, %v2893
        %v4242 = vpack.c.b16 %v2896, %v2894
        %v4243 = vpack.c.b16 %v2899, %v2897
        %v4244 = vpack.c.b16 %v2900, %v2898
        %v4245 = vpack.c.b16 %v2903, %v2901
        %v4246 = vpack.c.b16 %v2904, %v2902
        %v4247 = vpack.c.b16 %v2907, %v2905
        %v4248 = vpack.c.b16 %v2908, %v2906
        %v4249 = vpack.c.b16 %v2911, %v2909
        %v4250 = vpack.c.b16 %v2912, %v2910
        %v4251 = vpack.c.b16 %v2915, %v2913
        %v4252 = vpack.c.b16 %v2916, %v2914
        %v4253 = vpack.c.b16 %v2919, %v2917
        %v4254 = vpack.c.b16 %v2920, %v2918
        %v4255 = vpack.c.b16 %v2923, %v2921
        %v4256 = vpack.c.b16 %v2924, %v2922
        %v4257 = vpack.c.b16 %v2927, %v2925
        %v4258 = vpack.c.b16 %v2928, %v2926
        %v4259 = vpack.c.b16 %v2931, %v2929
        %v4260 = vpack.c.b16 %v2932, %v2930
        %v4261 = vpack.c.b16 %v2935, %v2933
        %v4262 = vpack.c.b16 %v2936, %v2934
        %v4263 = vpack.c.b16 %v2939, %v2937
        %v4264 = vpack.c.b16 %v2940, %v2938
        %v4265 = vpack.c.b16 %v2943, %v2941
        %v4266 = vpack.c.b16 %v2944, %v2942
        %v4267 = vpack.c.b16 %v2947, %v2945
        %v4268 = vpack.c.b16 %v2948, %v2946
        %v4269 = vpack.c.b16 %v2951, %v2949
        %v4270 = vpack.c.b16 %v2952, %v2950
        %v4271 = vpack.c.b16 %v2955, %v2953
        %v4272 = vpack.c.b16 %v2956, %v2954
        %v4273 = vpack.c.b16 %v2959, %v2957
        %v4274 = vpack.c.b16 %v2960, %v2958
        %v4275 = vpack.c.b16 %v2963, %v2961
        %v4276 = vpack.c.b16 %v2964, %v2962
        %v4277 = vpack.c.b16 %v2967, %v2965
        %v4278 = vpack.c.b16 %v2968, %v2966
        %v4279 = vpack.c.b16 %v2971, %v2969
        %v4280 = vpack.c.b16 %v2972, %v2970
        %v4281 = vpack.c.b16 %v2975, %v2973
        %v4282 = vpack.c.b16 %v2976, %v2974
        %v4283 = vpack.c.b16 %v2979, %v2977
        %v4284 = vpack.c.b16 %v2980, %v2978
        %v4285 = vpack.c.b16 %v2983, %v2981
        %v4286 = vpack.c.b16 %v2984, %v2982
        %v4287 = vpack.c.b16 %v2987, %v2985
        %v4288 = vpack.c.b16 %v2988, %v2986
        %v4289 = vpack.c.b16 %v2991, %v2989
        %v4290 = vpack.c.b16 %v2992, %v2990
        %v4291 = vpack.c.b16 %v2995, %v2993
        %v4292 = vpack.c.b16 %v2996, %v2994
        %v4293 = vpack.c.b16 %v2999, %v2997
        %v4294 = vpack.c.b16 %v3000, %v2998
        %v4295 = vpack.c.b16 %v3003, %v3001
        %v4296 = vpack.c.b16 %v3004, %v3002
        %v4297 = vpack.c.b16 %v3007, %v3005
        %v4298 = vpack.c.b16 %v3008, %v3006
        %v4299 = vpack.c.b16 %v3011, %v3009
        %v4300 = vpack.c.b16 %v3012, %v3010
        %v4301 = vpack.c.b16 %v3015, %v3013
        %v4302 = vpack.c.b16 %v3016, %v3014
        %v4303 = vpack.c.b16 %v3019, %v3017
        %v4304 = vpack.c.b16 %v3020, %v3018
        %v4305 = vpack.c.b16 %v3023, %v3021
        %v4306 = vpack.c.b16 %v3024, %v3022
        %v4307 = vpack.c.b16 %v3027, %v3025
        %v4308 = vpack.c.b16 %v3028, %v3026
        %v4309 = vpack.c.b16 %v3031, %v3029
        %v4310 = vpack.c.b16 %v3032, %v3030
        %v4311 = vpack.c.b16 %v3035, %v3033
        %v4312 = vpack.c.b16 %v3036, %v3034
        %v4313 = vpack.c.b16 %v3039, %v3037
        %v4314 = vpack.c.b16 %v3040, %v3038
        %v4315 = vpack.c.b16 %v3043, %v3041
        %v4316 = vpack.c.b16 %v3044, %v3042
        %v4317 = vpack.c.b16 %v3047, %v3045
        %v4318 = vpack.c.b16 %v3048, %v3046
        %v4319 = vpack.c.b16 %v3051, %v3049
        %v4320 = vpack.c.b16 %v3052, %v3050
        %v4321 = vpack.c.b16 %v3055, %v3053
        %v4322 = vpack.c.b16 %v3056, %v3054
        %v4323 = vpack.c.b16 %v3059, %v3057
        %v4324 = vpack.c.b16 %v3060, %v3058
        %v4325 = vpack.c.b16 %v3063, %v3061
        %v4326 = vpack.c.b16 %v3064, %v3062
        %v4327 = vpack.c.b16 %v3067, %v3065
        %v4328 = vpack.c.b16 %v3068, %v3066
        %v4329 = vpack.c.b16 %v3071, %v3069
        %v4330 = vpack.c.b16 %v3072, %v3070
        %v4331 = vpack.c.b16 %v3075, %v3073
        %v4332 = vpack.c.b16 %v3076, %v3074
        %v4333 = vpack.c.b16 %v3079, %v3077
        %v4334 = vpack.c.b16 %v3080, %v3078
        %v4335 = vpack.c.b16 %v3083, %v3081
        %v4336 = vpack.c.b16 %v3084, %v3082
        %v4337 = vpack.c.b16 %v3087, %v3085
        %v4338 = vpack.c.b16 %v3088, %v3086
        %v4339 = vpack.c.b16 %v3091, %v3089
        %v4340 = vpack.c.b16 %v3092, %v3090
        %v4341 = vpack.c.b16 %v3095, %v3093
        %v4342 = vpack.c.b16 %v3096, %v3094
        %v4343 = vpack.c.b16 %v3099, %v3097
        %v4344 = vpack.c.b16 %v3100, %v3098
        %v4345 = vpack.c.b16 %v3103, %v3101
        %v4346 = vpack.c.b16 %v3104, %v3102
        %v4347 = vpack.c.b16 %v3107, %v3105
        %v4348 = vpack.c.b16 %v3108, %v3106
        %v4349 = vpack.c.b16 %v3111, %v3109
        %v4350 = vpack.c.b16 %v3112, %v3110
        %v4351 = vpack.c.b16 %v3115, %v3113
        %v4352 = vpack.c.b16 %v3116, %v3114
        %v4353 = vpack.c.b16 %v3119, %v3117
        %v4354 = vpack.c.b16 %v3120, %v3118
        %v4355 = vpack.c.b16 %v3123, %v3121
        %v4356 = vpack.c.b16 %v3124, %v3122
        %v4357 = vpack.c.b16 %v3127, %v3125
        %v4358 = vpack.c.b16 %v3128, %v3126
        %v4359 = vpack.c.b16 %v3131, %v3129
        %v4360 = vpack.c.b16 %v3132, %v3130
        %v4361 = vpack.c.b16 %v3135, %v3133
        %v4362 = vpack.c.b16 %v3136, %v3134
        %v4363 = vpack.c.b16 %v3139, %v3137
        %v4364 = vpack.c.b16 %v3140, %v3138
        %v4365 = vpack.c.b16 %v3143, %v3141
        %v4366 = vpack.c.b16 %v3144, %v3142
        %v4367 = vpack.c.b16 %v3147, %v3145
        %v4368 = vpack.c.b16 %v3148, %v3146
        %v4369 = vpack.c.b16 %v3151, %v3149
        %v4370 = vpack.c.b16 %v3152, %v3150
        %v4371 = vpack.c.b16 %v3155, %v3153
        %v4372 = vpack.c.b16 %v3156, %v3154
        %v4373 = vpack.c.b16 %v3159, %v3157
        %v4374 = vpack.c.b16 %v3160, %v3158
        %v4375 = vpack.c.b16 %v3163, %v3161
        %v4376 = vpack.c.b16 %v3164, %v3162
        %v4377 = vpack.c.b16 %v3167, %v3165
        %v4378 = vpack.c.b16 %v3168, %v3166
        %v4379 = vpack.c.b16 %v3171, %v3169
        %v4380 = vpack.c.b16 %v3172, %v3170
        %v4381 = vpack.c.b16 %v3175, %v3173
        %v4382 = vpack.c.b16 %v3176, %v3174
        %v4383 = vpack.c.b16 %v3179, %v3177
        %v4384 = vpack.c.b16 %v3180, %v3178
        %v4385 = vpack.c.b16 %v3183, %v3181
        %v4386 = vpack.c.b16 %v3184, %v3182
        %v4387 = vpack.c.b16 %v3187, %v3185
        %v4388 = vpack.c.b16 %v3188, %v3186
        %v4389 = vpack.c.b16 %v3191, %v3189
        %v4390 = vpack.c.b16 %v3192, %v3190
        %v4391 = vpack.c.b16 %v3195, %v3193
        %v4392 = vpack.c.b16 %v3196, %v3194
        %v4393 = vpack.c.b16 %v3199, %v3197
        %v4394 = vpack.c.b16 %v3200, %v3198
        %v4395 = vpack.c.b16 %v3203, %v3201
        %v4396 = vpack.c.b16 %v3204, %v3202
        %v4397 = vpack.c.b16 %v3207, %v3205
        %v4398 = vpack.c.b16 %v3208, %v3206
        %v4399 = vpack.c.b16 %v3211, %v3209
        %v4400 = vpack.c.b16 %v3212, %v3210
        %v4401 = vpack.c.b16 %v3215, %v3213
        %v4402 = vpack.c.b16 %v3216, %v3214
        %v4403 = vpack.c.b16 %v3219, %v3217
        %v4404 = vpack.c.b16 %v3220, %v3218
        %v4405 = vpack.c.b16 %v3223, %v3221
        %v4406 = vpack.c.b16 %v3224, %v3222
        %v4407 = vpack.c.b16 %v3227, %v3225
        %v4408 = vpack.c.b16 %v3228, %v3226
        %v4409 = vpack.c.b16 %v3231, %v3229
        %v4410 = vpack.c.b16 %v3232, %v3230
        %v4411 = vpack.c.b16 %v3235, %v3233
        %v4412 = vpack.c.b16 %v3236, %v3234
        %v4413 = vpack.c.b16 %v3239, %v3237
        %v4414 = vpack.c.b16 %v3240, %v3238
        %v4415 = vpack.c.b16 %v3243, %v3241
        %v4416 = vpack.c.b16 %v3244, %v3242
        %v4417 = vpack.c.b16 %v3247, %v3245
        %v4418 = vpack.c.b16 %v3248, %v3246
        %v4419 = vpack.c.b16 %v3251, %v3249
        %v4420 = vpack.c.b16 %v3252, %v3250
        %v4421 = vpack.c.b16 %v3255, %v3253
        %v4422 = vpack.c.b16 %v3256, %v3254
        %v4423 = vpack.c.b16 %v3259, %v3257
        %v4424 = vpack.c.b16 %v3260, %v3258
        %v4425 = vpack.c.b16 %v3263, %v3261
        %v4426 = vpack.c.b16 %v3264, %v3262
        %v4427 = vpack.c.b16 %v3267, %v3265
        %v4428 = vpack.c.b16 %v3268, %v3266
        %v4429 = vpack.c.b16 %v3271, %v3269
        %v4430 = vpack.c.b16 %v3272, %v3270
        %v4431 = vpack.c.b16 %v3275, %v3273
        %v4432 = vpack.c.b16 %v3276, %v3274
        %v4433 = vpack.c.b16 %v3279, %v3277
        %v4434 = vpack.c.b16 %v3280, %v3278
        %v4435 = vpack.c.b16 %v3283, %v3281
        %v4436 = vpack.c.b16 %v3284, %v3282
        %v4437 = vpack.c.b16 %v3287, %v3285
        %v4438 = vpack.c.b16 %v3288, %v3286
        %v4439 = vpack.c.b16 %v3291, %v3289
        %v4440 = vpack.c.b16 %v3292, %v3290
        %v4441 = vpack.c.b16 %v3295, %v3293
        %v4442 = vpack.c.b16 %v3296, %v3294
        %v4443 = vpack.c.b16 %v3299, %v3297
        %v4444 = vpack.c.b16 %v3300, %v3298
        %v4445 = vpack.c.b16 %v3303, %v3301
        %v4446 = vpack.c.b16 %v3304, %v3302
        %v4447 = vpack.c.b16 %v3307, %v3305
        %v4448 = vpack.c.b16 %v3308, %v3306
        %v4449 = vpack.c.b16 %v3311, %v3309
        %v4450 = vpack.c.b16 %v3312, %v3310
        %v4451 = vpack.c.b16 %v3315, %v3313
        %v4452 = vpack.c.b16 %v3316, %v3314
        %v4453 = vpack.c.b16 %v3319, %v3317
        %v4454 = vpack.c.b16 %v3320, %v3318
        %v4455 = vpack.c.b16 %v3323, %v3321
        %v4456 = vpack.c.b16 %v3324, %v3322
        %v4457 = vpack.c.b16 %v3327, %v3325
        %v4458 = vpack.c.b16 %v3328, %v3326
        %v4459 = vpack.c.b16 %v3331, %v3329
        %v4460 = vpack.c.b16 %v3332, %v3330
        %v4461 = vpack.c.b16 %v3335, %v3333
        %v4462 = vpack.c.b16 %v3336, %v3334
        %v4463 = vpack.c.b16 %v3339, %v3337
        %v4464 = vpack.c.b16 %v3340, %v3338
        %v4465 = vpack.c.b16 %v3343, %v3341
        %v4466 = vpack.c.b16 %v3344, %v3342
        %v4467 = vpack.c.b16 %v3347, %v3345
        %v4468 = vpack.c.b16 %v3348, %v3346
        %v4469 = vpack.c.b16 %v3351, %v3349
        %v4470 = vpack.c.b16 %v3352, %v3350
        %v4471 = vpack.c.b16 %v3355, %v3353
        %v4472 = vpack.c.b16 %v3356, %v3354
        %v4473 = vpack.c.b16 %v3359, %v3357
        %v4474 = vpack.c.b16 %v3360, %v3358
        %v4475 = vpack.c.b16 %v3363, %v3361
        %v4476 = vpack.c.b16 %v3364, %v3362
        %v4477 = vpack.c.b16 %v3367, %v3365
        %v4478 = vpack.c.b16 %v3368, %v3366
        %v4479 = vpack.c.b16 %v3371, %v3369
        %v4480 = vpack.c.b16 %v3372, %v3370
        %v4481 = vpack.c.b16 %v3375, %v3373
        %v4482 = vpack.c.b16 %v3376, %v3374
        %v4483 = vpack.c.b16 %v3379, %v3377
        %v4484 = vpack.c.b16 %v3380, %v3378
        %v4485 = vpack.c.b16 %v3383, %v3381
        %v4486 = vpack.c.b16 %v3384, %v3382
        %v4487 = vpack.c.b16 %v3387, %v3385
        %v4488 = vpack.c.b16 %v3388, %v3386
        %v4489 = vpack.c.b16 %v3391, %v3389
        %v4490 = vpack.c.b16 %v3392, %v3390
        %v4491 = vpack.c.b16 %v3395, %v3393
        %v4492 = vpack.c.b16 %v3396, %v3394
        %v4493 = vpack.c.b16 %v3399, %v3397
        %v4494 = vpack.c.b16 %v3400, %v3398
        %v4495 = vpack.c.b16 %v3403, %v3401
        %v4496 = vpack.c.b16 %v3404, %v3402
        %v4497 = vpack.c.b16 %v3407, %v3405
        %v4498 = vpack.c.b16 %v3408, %v3406
        %v4499 = vpack.c.b16 %v3411, %v3409
        %v4500 = vpack.c.b16 %v3412, %v3410
        %v4501 = vpack.c.b16 %v3415, %v3413
        %v4502 = vpack.c.b16 %v3416, %v3414
        %v4503 = vpack.c.b16 %v3419, %v3417
        %v4504 = vpack.c.b16 %v3420, %v3418
        %v4505 = vpack.c.b16 %v3423, %v3421
        %v4506 = vpack.c.b16 %v3424, %v3422
        %v4507 = vpack.c.b16 %v3427, %v3425
        %v4508 = vpack.c.b16 %v3428, %v3426
        %v4509 = vpack.c.b16 %v3431, %v3429
        %v4510 = vpack.c.b16 %v3432, %v3430
        %v4511 = vpack.c.b16 %v3435, %v3433
        %v4512 = vpack.c.b16 %v3436, %v3434
        %v4513 = vpack.c.b16 %v3439, %v3437
        %v4514 = vpack.c.b16 %v3440, %v3438
        %v4515 = vpack.c.b16 %v3443, %v3441
        %v4516 = vpack.c.b16 %v3444, %v3442
        %v4517 = vpack.c.b16 %v3447, %v3445
        %v4518 = vpack.c.b16 %v3448, %v3446
        %v4519 = vpack.c.b16 %v3451, %v3449
        %v4520 = vpack.c.b16 %v3452, %v3450
        %v4521 = vpack.c.b16 %v3455, %v3453
        %v4522 = vpack.c.b16 %v3456, %v3454
        %v4523 = vpack.c.b16 %v3459, %v3457
        %v4524 = vpack.c.b16 %v3460, %v3458
        %v4525 = vpack.c.b16 %v3463, %v3461
        %v4526 = vpack.c.b16 %v3464, %v3462
        %v4527 = vpack.c.b16 %v3467, %v3465
        %v4528 = vpack.c.b16 %v3468, %v3466
        %v4529 = vpack.c.b16 %v3471, %v3469
        %v4530 = vpack.c.b16 %v3472, %v3470
        %v4531 = vpack.c.b16 %v3475, %v3473
        %v4532 = vpack.c.b16 %v3476, %v3474
        %v4533 = vpack.c.b16 %v3479, %v3477
        %v4534 = vpack.c.b16 %v3480, %v3478
        %v4535 = vpack.c.b16 %v3483, %v3481
        %v4536 = vpack.c.b16 %v3484, %v3482
        %v4537 = vpack.c.b16 %v3487, %v3485
        %v4538 = vpack.c.b16 %v3488, %v3486
        %v4539 = vpack.c.b16 %v3491, %v3489
        %v4540 = vpack.c.b16 %v3492, %v3490
        %v4541 = vpack.c.b16 %v3495, %v3493
        %v4542 = vpack.c.b16 %v3496, %v3494
        %v4543 = vpack.c.b16 %v3499, %v3497
        %v4544 = vpack.c.b16 %v3500, %v3498
        %v4545 = vpack.c.b16 %v3503, %v3501
        %v4546 = vpack.c.b16 %v3504, %v3502
        %v4547 = vpack.c.b16 %v3507, %v3505
        %v4548 = vpack.c.b16 %v3508, %v3506
        %v4549 = vpack.c.b16 %v3511, %v3509
        %v4550 = vpack.c.b16 %v3512, %v3510
        %v4551 = vpack.c.b16 %v3515, %v3513
        %v4552 = vpack.c.b16 %v3516, %v3514
        %v4553 = vpack.c.b16 %v3519, %v3517
        %v4554 = vpack.c.b16 %v3520, %v3518
        %v4555 = vpack.c.b16 %v3523, %v3521
        %v4556 = vpack.c.b16 %v3524, %v3522
        %v4557 = vpack.c.b16 %v3527, %v3525
        %v4558 = vpack.c.b16 %v3528, %v3526
        %v4559 = vpack.c.b16 %v3531, %v3529
        %v4560 = vpack.c.b16 %v3532, %v3530
        %v4561 = vpack.c.b16 %v3535, %v3533
        %v4562 = vpack.c.b16 %v3536, %v3534
        %v4563 = vpack.c.b16 %v3539, %v3537
        %v4564 = vpack.c.b16 %v3540, %v3538
        %v4565 = vpack.c.b16 %v3543, %v3541
        %v4566 = vpack.c.b16 %v3544, %v3542
        %v4567 = vpack.c.b16 %v3547, %v3545
        %v4568 = vpack.c.b16 %v3548, %v3546
        %v4569 = vpack.c.b16 %v3551, %v3549
        %v4570 = vpack.c.b16 %v3552, %v3550
        %v4571 = vpack.c.b16 %v3555, %v3553
        %v4572 = vpack.c.b16 %v3556, %v3554
        %v4573 = vpack.c.b16 %v3559, %v3557
        %v4574 = vpack.c.b16 %v3560, %v3558
        %v4575 = vpack.c.b16 %v3563, %v3561
        %v4576 = vpack.c.b16 %v3564, %v3562
        %v4577 = vpack.c.b16 %v3567, %v3565
        %v4578 = vpack.c.b16 %v3568, %v3566
        %v4579 = vpack.c.b16 %v3571, %v3569
        %v4580 = vpack.c.b16 %v3572, %v3570
        %v4581 = vpack.c.b16 %v3575, %v3573
        %v4582 = vpack.c.b16 %v3576, %v3574
        %v4583 = vpack.c.b16 %v3579, %v3577
        %v4584 = vpack.c.b16 %v3580, %v3578
        %v4585 = vpack.c.b16 %v3583, %v3581
        %v4586 = vpack.c.b16 %v3584, %v3582
        %v4587 = vpack.c.b16 %v3587, %v3585
        %v4588 = vpack.c.b16 %v3588, %v3586
        %v4589 = vpack.c.b16 %v3591, %v3589
        %v4590 = vpack.c.b16 %v3592, %v3590
        %v4591 = vpack.c.b16 %v3595, %v3593
        %v4592 = vpack.c.b16 %v3596, %v3594
        %v4593 = vpack.c.b16 %v3599, %v3597
        %v4594 = vpack.c.b16 %v3600, %v3598
        %v4595 = vpack.c.b16 %v3603, %v3601
        %v4596 = vpack.c.b16 %v3604, %v3602
        %v4597 = vpack.c.b16 %v3607, %v3605
        %v4598 = vpack.c.b16 %v3608, %v3606
        %v4599 = vpack.c.b16 %v3611, %v3609
        %v4600 = vpack.c.b16 %v3612, %v3610
        %v4601 = vpack.c.b16 %v3615, %v3613
        %v4602 = vpack.c.b16 %v3616, %v3614
        %v4603 = vpack.c.b16 %v3619, %v3617
        %v4604 = vpack.c.b16 %v3620, %v3618
        %v4605 = vpack.c.b16 %v3623, %v3621
        %v4606 = vpack.c.b16 %v3624, %v3622
        %v4607 = vpack.c.b16 %v3627, %v3625
        %v4608 = vpack.c.b16 %v3628, %v3626
        %v4609 = vpack.c.b16 %v3631, %v3629
        %v4610 = vpack.c.b16 %v3632, %v3630
        %v4611 = vpack.c.b16 %v3635, %v3633
        %v4612 = vpack.c.b16 %v3636, %v3634
        %v4613 = vpack.c.b16 %v3639, %v3637
        %v4614 = vpack.c.b16 %v3640, %v3638
        %v4615 = vpack.c.b16 %v3643, %v3641
        %v4616 = vpack.c.b16 %v3644, %v3642
        %v4617 = vpack.c.b16 %v3647, %v3645
        %v4618 = vpack.c.b16 %v3648, %v3646
        %v4619 = vpack.c.b16 %v3651, %v3649
        %v4620 = vpack.c.b16 %v3652, %v3650
        %v4621 = vpack.c.b16 %v3655, %v3653
        %v4622 = vpack.c.b16 %v3656, %v3654
        %v4623 = vpack.c.b16 %v3659, %v3657
        %v4624 = vpack.c.b16 %v3660, %v3658
        %v4625 = vpack.c.b16 %v3663, %v3661
        %v4626 = vpack.c.b16 %v3664, %v3662
        %v4627 = vpack.c.b16 %v3667, %v3665
        %v4628 = vpack.c.b16 %v3668, %v3666
        %v4629 = vpack.c.b16 %v3671, %v3669
        %v4630 = vpack.c.b16 %v3672, %v3670
        %v4631 = vpack.c.b16 %v3675, %v3673
        %v4632 = vpack.c.b16 %v3676, %v3674
        %v4633 = vpack.c.b16 %v3679, %v3677
        %v4634 = vpack.c.b16 %v3680, %v3678
        %v4635 = vpack.c.b16 %v3683, %v3681
        %v4636 = vpack.c.b16 %v3684, %v3682
        %v4637 = vpack.c.b16 %v3687, %v3685
        %v4638 = vpack.c.b16 %v3688, %v3686
        %v4639 = vpack.c.b16 %v3691, %v3689
        %v4640 = vpack.c.b16 %v3692, %v3690
        %v4641 = vpack.c.b16 %v3695, %v3693
        %v4642 = vpack.c.b16 %v3696, %v3694
        %v4643 = vpack.c.b16 %v3699, %v3697
        %v4644 = vpack.c.b16 %v3700, %v3698
        %v4645 = vpack.c.b16 %v3703, %v3701
        %v4646 = vpack.c.b16 %v3704, %v3702
        %v4647 = vpack.c.b16 %v3707, %v3705
        %v4648 = vpack.c.b16 %v3708, %v3706
        %v4649 = vpack.c.b16 %v3711, %v3709
        %v4650 = vpack.c.b16 %v3712, %v3710
        %v4651 = vpack.c.b16 %v3715, %v3713
        %v4652 = vpack.c.b16 %v3716, %v3714
        %v4653 = vpack.c.b16 %v3719, %v3717
        %v4654 = vpack.c.b16 %v3720, %v3718
        %v4655 = vpack.c.b16 %v3723, %v3721
        %v4656 = vpack.c.b16 %v3724, %v3722
        %v4657 = vpack.c.b16 %v3727, %v3725
        %v4658 = vpack.c.b16 %v3728, %v3726
        %v4659 = vpack.c.b16 %v3731, %v3729
        %v4660 = vpack.c.b16 %v3732, %v3730
        %v4661 = vpack.c.b16 %v3735, %v3733
        %v4662 = vpack.c.b16 %v3736, %v3734
        %v4663 = vpack.c.b16 %v3739, %v3737
        %v4664 = vpack.c.b16 %v3740, %v3738
        %v4665 = vpack.c.b16 %v3743, %v3741
        %v4666 = vpack.c.b16 %v3744, %v3742
        %v4667 = vpack.c.b16 %v3747, %v3745
        %v4668 = vpack.c.b16 %v3748, %v3746
        %v4669 = vpack.c.b16 %v3751, %v3749
        %v4670 = vpack.c.b16 %v3752, %v3750
        %v4671 = vpack.c.b16 %v3755, %v3753
        %v4672 = vpack.c.b16 %v3756, %v3754
        %v4673 = vpack.c.b16 %v3759, %v3757
        %v4674 = vpack.c.b16 %v3760, %v3758
        %v4675 = vpack.c.b16 %v3763, %v3761
        %v4676 = vpack.c.b16 %v3764, %v3762
        %v4677 = vpack.c.b16 %v3767, %v3765
        %v4678 = vpack.c.b16 %v3768, %v3766
        %v4679 = vpack.c.b16 %v3771, %v3769
        %v4680 = vpack.c.b16 %v3772, %v3770
        %v4681 = vpack.c.b16 %v3775, %v3773
        %v4682 = vpack.c.b16 %v3776, %v3774
        %v4683 = vpack.c.b16 %v3779, %v3777
        %v4684 = vpack.c.b16 %v3780, %v3778
        %v4685 = vpack.c.b16 %v3783, %v3781
        %v4686 = vpack.c.b16 %v3784, %v3782
        %v4687 = vpack.c.b16 %v3787, %v3785
        %v4688 = vpack.c.b16 %v3788, %v3786
        %v4689 = vpack.c.b16 %v3791, %v3789
        %v4690 = vpack.c.b16 %v3792, %v3790
        %v4691 = vpack.c.b16 %v3795, %v3793
        %v4692 = vpack.c.b16 %v3796, %v3794
        %v4693 = vpack.c.b16 %v3799, %v3797
        %v4694 = vpack.c.b16 %v3800, %v3798
        %v4695 = vpack.c.b16 %v3803, %v3801
        %v4696 = vpack.c.b16 %v3804, %v3802
        %v4697 = vpack.c.b16 %v3807, %v3805
        %v4698 = vpack.c.b16 %v3808, %v3806
        %v4699 = vpack.c.b16 %v3811, %v3809
        %v4700 = vpack.c.b16 %v3812, %v3810
        %v4701 = vpack.c.b16 %v3815, %v3813
        %v4702 = vpack.c.b16 %v3816, %v3814
        %v4703 = vpack.c.b16 %v3819, %v3817
        %v4704 = vpack.c.b16 %v3820, %v3818
        %v4705 = vpack.c.b16 %v3823, %v3821
        %v4706 = vpack.c.b16 %v3824, %v3822
        %v4707 = vpack.c.b16 %v3827, %v3825
        %v4708 = vpack.c.b16 %v3828, %v3826
        %v4709 = vpack.c.b16 %v3831, %v3829
        %v4710 = vpack.c.b16 %v3832, %v3830
        %v4711 = vpack.c.b16 %v3835, %v3833
        %v4712 = vpack.c.b16 %v3836, %v3834
        %v4713 = vpack.c.b16 %v3839, %v3837
        %v4714 = vpack.c.b16 %v3840, %v3838
        %v4715 = vpack.c.b16 %v3843, %v3841
        %v4716 = vpack.c.b16 %v3844, %v3842
        %v4717 = vpack.c.b16 %v3847, %v3845
        %v4718 = vpack.c.b16 %v3848, %v3846
        %v4719 = vpack.c.b16 %v3851, %v3849
        %v4720 = vpack.c.b16 %v3852, %v3850
        %v4721 = vpack.c.b16 %v3855, %v3853
        %v4722 = vpack.c.b16 %v3856, %v3854
        %v4723 = vpack.c.b16 %v3859, %v3857
        %v4724 = vpack.c.b16 %v3860, %v3858
        %5589 = vmatpush.bf16.msra.mxu0 %v3875
        %5590 = vmatpush.bf16.msra.mxu0 %v3873
        %5591 = vmatpush.bf16.msra.mxu0 %v3871
        %5592 = vmatpush.bf16.msra.mxu0 %v3869
        %5593 = vmatpush.bf16.msra.mxu0 %v3867
        %5594 = vmatpush.bf16.msra.mxu0 %v3865
        %5595 = vmatpush.bf16.msra.mxu0 %v3863
        %5596 = vmatpush.bf16.msra.mxu0 %v3861
        %5597 = vmatmul.bf16.gmra.mxu0 %v1149
        %v5598 = vpop.f32.mrf.mxu0
        %v5599 = vadd.f32 0.0, %v5598
        %v5600 = vpop.f32.mrf.mxu0
        %5601 = vdwg.mxu0
        %5602 = vmatpush.bf16.msra.mxu0 %v3891
        %5603 = vmatpush.bf16.msra.mxu0 %v3889
        %5604 = vmatpush.bf16.msra.mxu0 %v3887
        %5605 = vmatpush.bf16.msra.mxu0 %v3885
        %5606 = vmatpush.bf16.msra.mxu0 %v3883
        %5607 = vmatpush.bf16.msra.mxu0 %v3881
        %5608 = vmatpush.bf16.msra.mxu0 %v3879
        %5609 = vmatpush.bf16.msra.mxu0 %v3877
        %5610 = vmatmul.bf16.gmra.mxu0 %v1150
        %v5611 = vpop.f32.mrf.mxu0
        %v5612 = vadd.f32 %v5599, %v5611
        %v5613 = vpop.f32.mrf.mxu0
        %5614 = vdwg.mxu0
        %5615 = vmatpush.bf16.msra.mxu0 %v3907
        %5616 = vmatpush.bf16.msra.mxu0 %v3905
        %5617 = vmatpush.bf16.msra.mxu0 %v3903
        %5618 = vmatpush.bf16.msra.mxu0 %v3901
        %5619 = vmatpush.bf16.msra.mxu0 %v3899
        %5620 = vmatpush.bf16.msra.mxu0 %v3897
        %5621 = vmatpush.bf16.msra.mxu0 %v3895
        %5622 = vmatpush.bf16.msra.mxu0 %v3893
        %5623 = vmatmul.bf16.gmra.mxu0 %v1151
        %v5624 = vpop.f32.mrf.mxu0
        %v5625 = vadd.f32 %v5612, %v5624
        %v5626 = vpop.f32.mrf.mxu0
        %5627 = vdwg.mxu0
        %5628 = vmatpush.bf16.msra.mxu0 %v3923
        %5629 = vmatpush.bf16.msra.mxu0 %v3921
        %5630 = vmatpush.bf16.msra.mxu0 %v3919
        %5631 = vmatpush.bf16.msra.mxu0 %v3917
        %5632 = vmatpush.bf16.msra.mxu0 %v3915
        %5633 = vmatpush.bf16.msra.mxu0 %v3913
        %5634 = vmatpush.bf16.msra.mxu0 %v3911
        %5635 = vmatpush.bf16.msra.mxu0 %v3909
        %5636 = vmatmul.bf16.gmra.mxu0 %v1152
        %v5637 = vpop.f32.mrf.mxu0
        %v5638 = vadd.f32 %v5625, %v5637
        %v5639 = vpop.f32.mrf.mxu0
        %5640 = vdwg.mxu0
        %5641 = vmatpush.bf16.msra.mxu0 %v3939
        %5642 = vmatpush.bf16.msra.mxu0 %v3937
        %5643 = vmatpush.bf16.msra.mxu0 %v3935
        %5644 = vmatpush.bf16.msra.mxu0 %v3933
        %5645 = vmatpush.bf16.msra.mxu0 %v3931
        %5646 = vmatpush.bf16.msra.mxu0 %v3929
        %5647 = vmatpush.bf16.msra.mxu0 %v3927
        %5648 = vmatpush.bf16.msra.mxu0 %v3925
        %5649 = vmatmul.bf16.gmra.mxu0 %v1153
        %v5650 = vpop.f32.mrf.mxu0
        %v5651 = vadd.f32 %v5638, %v5650
        %v5652 = vpop.f32.mrf.mxu0
        %5653 = vdwg.mxu0
        %5654 = vmatpush.bf16.msra.mxu0 %v3955
        %5655 = vmatpush.bf16.msra.mxu0 %v3953
        %5656 = vmatpush.bf16.msra.mxu0 %v3951
        %5657 = vmatpush.bf16.msra.mxu0 %v3949
        %5658 = vmatpush.bf16.msra.mxu0 %v3947
        %5659 = vmatpush.bf16.msra.mxu0 %v3945
        %5660 = vmatpush.bf16.msra.mxu0 %v3943
        %5661 = vmatpush.bf16.msra.mxu0 %v3941
        %5662 = vmatmul.bf16.gmra.mxu0 %v1154
        %v5663 = vpop.f32.mrf.mxu0
        %v5664 = vadd.f32 %v5651, %v5663
        %v5665 = vpop.f32.mrf.mxu0
        %5666 = vdwg.mxu0
        %5667 = vmatpush.bf16.msra.mxu0 %v3971
        %5668 = vmatpush.bf16.msra.mxu0 %v3969
        %5669 = vmatpush.bf16.msra.mxu0 %v3967
        %5670 = vmatpush.bf16.msra.mxu0 %v3965
        %5671 = vmatpush.bf16.msra.mxu0 %v3963
        %5672 = vmatpush.bf16.msra.mxu0 %v3961
        %5673 = vmatpush.bf16.msra.mxu0 %v3959
        %5674 = vmatpush.bf16.msra.mxu0 %v3957
        %5675 = vmatmul.bf16.gmra.mxu0 %v1155
        %v5676 = vpop.f32.mrf.mxu0
        %v5677 = vadd.f32 %v5664, %v5676
        %v5678 = vpop.f32.mrf.mxu0
        %5679 = vdwg.mxu0
        %5680 = vmatpush.bf16.msra.mxu0 %v3987
        %5681 = vmatpush.bf16.msra.mxu0 %v3985
        %5682 = vmatpush.bf16.msra.mxu0 %v3983
        %5683 = vmatpush.bf16.msra.mxu0 %v3981
        %5684 = vmatpush.bf16.msra.mxu0 %v3979
        %5685 = vmatpush.bf16.msra.mxu0 %v3977
        %5686 = vmatpush.bf16.msra.mxu0 %v3975
        %5687 = vmatpush.bf16.msra.mxu0 %v3973
        %5688 = vmatmul.bf16.gmra.mxu0 %v1156
        %v5689 = vpop.f32.mrf.mxu0
        %v5690 = vadd.f32 %v5677, %v5689
        %v5691 = vpop.f32.mrf.mxu0
        %5692 = vdwg.mxu0
        %5693 = vmatpush.bf16.msra.mxu0 %v4003
        %5694 = vmatpush.bf16.msra.mxu0 %v4001
        %5695 = vmatpush.bf16.msra.mxu0 %v3999
        %5696 = vmatpush.bf16.msra.mxu0 %v3997
        %5697 = vmatpush.bf16.msra.mxu0 %v3995
        %5698 = vmatpush.bf16.msra.mxu0 %v3993
        %5699 = vmatpush.bf16.msra.mxu0 %v3991
        %5700 = vmatpush.bf16.msra.mxu0 %v3989
        %5701 = vmatmul.bf16.gmra.mxu0 %v1159
        %v5702 = vpop.f32.mrf.mxu0
        %v5703 = vadd.f32 %v5690, %v5702
        %v5704 = vpop.f32.mrf.mxu0
        %5705 = vdwg.mxu0
        %5706 = vmatpush.bf16.msra.mxu0 %v4019
        %5707 = vmatpush.bf16.msra.mxu0 %v4017
        %5708 = vmatpush.bf16.msra.mxu0 %v4015
        %5709 = vmatpush.bf16.msra.mxu0 %v4013
        %5710 = vmatpush.bf16.msra.mxu0 %v4011
        %5711 = vmatpush.bf16.msra.mxu0 %v4009
        %5712 = vmatpush.bf16.msra.mxu0 %v4007
        %5713 = vmatpush.bf16.msra.mxu0 %v4005
        %5714 = vmatmul.bf16.gmra.mxu0 %v1160
        %v5715 = vpop.f32.mrf.mxu0
        %v5716 = vadd.f32 %v5703, %v5715
        %v5717 = vpop.f32.mrf.mxu0
        %5718 = vdwg.mxu0
        %5719 = vmatpush.bf16.msra.mxu0 %v4035
        %5720 = vmatpush.bf16.msra.mxu0 %v4033
        %5721 = vmatpush.bf16.msra.mxu0 %v4031
        %5722 = vmatpush.bf16.msra.mxu0 %v4029
        %5723 = vmatpush.bf16.msra.mxu0 %v4027
        %5724 = vmatpush.bf16.msra.mxu0 %v4025
        %5725 = vmatpush.bf16.msra.mxu0 %v4023
        %5726 = vmatpush.bf16.msra.mxu0 %v4021
        %5727 = vmatmul.bf16.gmra.mxu0 %v1161
        %v5728 = vpop.f32.mrf.mxu0
        %v5729 = vadd.f32 %v5716, %v5728
        %v5730 = vpop.f32.mrf.mxu0
        %5731 = vdwg.mxu0
        %5732 = vmatpush.bf16.msra.mxu0 %v4051
        %5733 = vmatpush.bf16.msra.mxu0 %v4049
        %5734 = vmatpush.bf16.msra.mxu0 %v4047
        %5735 = vmatpush.bf16.msra.mxu0 %v4045
        %5736 = vmatpush.bf16.msra.mxu0 %v4043
        %5737 = vmatpush.bf16.msra.mxu0 %v4041
        %5738 = vmatpush.bf16.msra.mxu0 %v4039
        %5739 = vmatpush.bf16.msra.mxu0 %v4037
        %5740 = vmatmul.bf16.gmra.mxu0 %v1162
        %v5741 = vpop.f32.mrf.mxu0
        %v5742 = vadd.f32 %v5729, %v5741
        %v5743 = vpop.f32.mrf.mxu0
        %5744 = vdwg.mxu0
        %5745 = vmatpush.bf16.msra.mxu0 %v4067
        %5746 = vmatpush.bf16.msra.mxu0 %v4065
        %5747 = vmatpush.bf16.msra.mxu0 %v4063
        %5748 = vmatpush.bf16.msra.mxu0 %v4061
        %5749 = vmatpush.bf16.msra.mxu0 %v4059
        %5750 = vmatpush.bf16.msra.mxu0 %v4057
        %5751 = vmatpush.bf16.msra.mxu0 %v4055
        %5752 = vmatpush.bf16.msra.mxu0 %v4053
        %5753 = vmatmul.bf16.gmra.mxu0 %v1163
        %v5754 = vpop.f32.mrf.mxu0
        %v5755 = vadd.f32 %v5742, %v5754
        %v5756 = vpop.f32.mrf.mxu0
        %5757 = vdwg.mxu0
        %5758 = vmatpush.bf16.msra.mxu0 %v4083
        %5759 = vmatpush.bf16.msra.mxu0 %v4081
        %5760 = vmatpush.bf16.msra.mxu0 %v4079
        %5761 = vmatpush.bf16.msra.mxu0 %v4077
        %5762 = vmatpush.bf16.msra.mxu0 %v4075
        %5763 = vmatpush.bf16.msra.mxu0 %v4073
        %5764 = vmatpush.bf16.msra.mxu0 %v4071
        %5765 = vmatpush.bf16.msra.mxu0 %v4069
        %5766 = vmatmul.bf16.gmra.mxu0 %v1164
        %v5767 = vpop.f32.mrf.mxu0
        %v5768 = vadd.f32 %v5755, %v5767
        %v5769 = vpop.f32.mrf.mxu0
        %5770 = vdwg.mxu0
        %5771 = vmatpush.bf16.msra.mxu0 %v4099
        %5772 = vmatpush.bf16.msra.mxu0 %v4097
        %5773 = vmatpush.bf16.msra.mxu0 %v4095
        %5774 = vmatpush.bf16.msra.mxu0 %v4093
        %5775 = vmatpush.bf16.msra.mxu0 %v4091
        %5776 = vmatpush.bf16.msra.mxu0 %v4089
        %5777 = vmatpush.bf16.msra.mxu0 %v4087
        %5778 = vmatpush.bf16.msra.mxu0 %v4085
        %5779 = vmatmul.bf16.gmra.mxu0 %v1165
        %v5780 = vpop.f32.mrf.mxu0
        %v5781 = vadd.f32 %v5768, %v5780
        %v5782 = vpop.f32.mrf.mxu0
        %5783 = vdwg.mxu0
        %5784 = vmatpush.bf16.msra.mxu0 %v4115
        %5785 = vmatpush.bf16.msra.mxu0 %v4113
        %5786 = vmatpush.bf16.msra.mxu0 %v4111
        %5787 = vmatpush.bf16.msra.mxu0 %v4109
        %5788 = vmatpush.bf16.msra.mxu0 %v4107
        %5789 = vmatpush.bf16.msra.mxu0 %v4105
        %5790 = vmatpush.bf16.msra.mxu0 %v4103
        %5791 = vmatpush.bf16.msra.mxu0 %v4101
        %5792 = vmatmul.bf16.gmra.mxu0 %v1166
        %v5793 = vpop.f32.mrf.mxu0
        %v5794 = vadd.f32 %v5781, %v5793
        %v5795 = vpop.f32.mrf.mxu0
        %5796 = vdwg.mxu0
        %5797 = vmatpush.bf16.msra.mxu0 %v4131
        %5798 = vmatpush.bf16.msra.mxu0 %v4129
        %5799 = vmatpush.bf16.msra.mxu0 %v4127
        %5800 = vmatpush.bf16.msra.mxu0 %v4125
        %5801 = vmatpush.bf16.msra.mxu0 %v4123
        %5802 = vmatpush.bf16.msra.mxu0 %v4121
        %5803 = vmatpush.bf16.msra.mxu0 %v4119
        %5804 = vmatpush.bf16.msra.mxu0 %v4117
        %5805 = vmatmul.bf16.gmra.mxu0 %v1169
        %v5806 = vpop.f32.mrf.mxu0
        %v5807 = vadd.f32 %v5794, %v5806
        %v5808 = vpop.f32.mrf.mxu0
        %5809 = vdwg.mxu0
        %5810 = vmatpush.bf16.msra.mxu0 %v4147
        %5811 = vmatpush.bf16.msra.mxu0 %v4145
        %5812 = vmatpush.bf16.msra.mxu0 %v4143
        %5813 = vmatpush.bf16.msra.mxu0 %v4141
        %5814 = vmatpush.bf16.msra.mxu0 %v4139
        %5815 = vmatpush.bf16.msra.mxu0 %v4137
        %5816 = vmatpush.bf16.msra.mxu0 %v4135
        %5817 = vmatpush.bf16.msra.mxu0 %v4133
        %5818 = vmatmul.bf16.gmra.mxu0 %v1170
        %v5819 = vpop.f32.mrf.mxu0
        %v5820 = vadd.f32 %v5807, %v5819
        %v5821 = vpop.f32.mrf.mxu0
        %5822 = vdwg.mxu0
        %5823 = vmatpush.bf16.msra.mxu0 %v4163
        %5824 = vmatpush.bf16.msra.mxu0 %v4161
        %5825 = vmatpush.bf16.msra.mxu0 %v4159
        %5826 = vmatpush.bf16.msra.mxu0 %v4157
        %5827 = vmatpush.bf16.msra.mxu0 %v4155
        %5828 = vmatpush.bf16.msra.mxu0 %v4153
        %5829 = vmatpush.bf16.msra.mxu0 %v4151
        %5830 = vmatpush.bf16.msra.mxu0 %v4149
        %5831 = vmatmul.bf16.gmra.mxu0 %v1171
        %v5832 = vpop.f32.mrf.mxu0
        %v5833 = vadd.f32 %v5820, %v5832
        %v5834 = vpop.f32.mrf.mxu0
        %5835 = vdwg.mxu0
        %5836 = vmatpush.bf16.msra.mxu0 %v4179
        %5837 = vmatpush.bf16.msra.mxu0 %v4177
        %5838 = vmatpush.bf16.msra.mxu0 %v4175
        %5839 = vmatpush.bf16.msra.mxu0 %v4173
        %5840 = vmatpush.bf16.msra.mxu0 %v4171
        %5841 = vmatpush.bf16.msra.mxu0 %v4169
        %5842 = vmatpush.bf16.msra.mxu0 %v4167
        %5843 = vmatpush.bf16.msra.mxu0 %v4165
        %5844 = vmatmul.bf16.gmra.mxu0 %v1172
        %v5845 = vpop.f32.mrf.mxu0
        %v5846 = vadd.f32 %v5833, %v5845
        %v5847 = vpop.f32.mrf.mxu0
        %5848 = vdwg.mxu0
        %5849 = vmatpush.bf16.msra.mxu0 %v4195
        %5850 = vmatpush.bf16.msra.mxu0 %v4193
        %5851 = vmatpush.bf16.msra.mxu0 %v4191
        %5852 = vmatpush.bf16.msra.mxu0 %v4189
        %5853 = vmatpush.bf16.msra.mxu0 %v4187
        %5854 = vmatpush.bf16.msra.mxu0 %v4185
        %5855 = vmatpush.bf16.msra.mxu0 %v4183
        %5856 = vmatpush.bf16.msra.mxu0 %v4181
        %5857 = vmatmul.bf16.gmra.mxu0 %v1173
        %v5858 = vpop.f32.mrf.mxu0
        %v5859 = vadd.f32 %v5846, %v5858
        %v5860 = vpop.f32.mrf.mxu0
        %5861 = vdwg.mxu0
        %5862 = vmatpush.bf16.msra.mxu0 %v4211
        %5863 = vmatpush.bf16.msra.mxu0 %v4209
        %5864 = vmatpush.bf16.msra.mxu0 %v4207
        %5865 = vmatpush.bf16.msra.mxu0 %v4205
        %5866 = vmatpush.bf16.msra.mxu0 %v4203
        %5867 = vmatpush.bf16.msra.mxu0 %v4201
        %5868 = vmatpush.bf16.msra.mxu0 %v4199
        %5869 = vmatpush.bf16.msra.mxu0 %v4197
        %5870 = vmatmul.bf16.gmra.mxu0 %v1174
        %v5871 = vpop.f32.mrf.mxu0
        %v5872 = vadd.f32 %v5859, %v5871
        %v5873 = vpop.f32.mrf.mxu0
        %5874 = vdwg.mxu0
        %5875 = vmatpush.bf16.msra.mxu0 %v4227
        %5876 = vmatpush.bf16.msra.mxu0 %v4225
        %5877 = vmatpush.bf16.msra.mxu0 %v4223
        %5878 = vmatpush.bf16.msra.mxu0 %v4221
        %5879 = vmatpush.bf16.msra.mxu0 %v4219
        %5880 = vmatpush.bf16.msra.mxu0 %v4217
        %5881 = vmatpush.bf16.msra.mxu0 %v4215
        %5882 = vmatpush.bf16.msra.mxu0 %v4213
        %5883 = vmatmul.bf16.gmra.mxu0 %v1175
        %v5884 = vpop.f32.mrf.mxu0
        %v5885 = vadd.f32 %v5872, %v5884
        %v5886 = vpop.f32.mrf.mxu0
        %5887 = vdwg.mxu0
        %5888 = vmatpush.bf16.msra.mxu0 %v4243
        %5889 = vmatpush.bf16.msra.mxu0 %v4241
        %5890 = vmatpush.bf16.msra.mxu0 %v4239
        %5891 = vmatpush.bf16.msra.mxu0 %v4237
        %5892 = vmatpush.bf16.msra.mxu0 %v4235
        %5893 = vmatpush.bf16.msra.mxu0 %v4233
        %5894 = vmatpush.bf16.msra.mxu0 %v4231
        %5895 = vmatpush.bf16.msra.mxu0 %v4229
        %5896 = vmatmul.bf16.gmra.mxu0 %v1176
        %v5897 = vpop.f32.mrf.mxu0
        %v5898 = vadd.f32 %v5885, %v5897
        %v5899 = vpop.f32.mrf.mxu0
        %5900 = vdwg.mxu0
        %5901 = vmatpush.bf16.msra.mxu0 %v4259
        %5902 = vmatpush.bf16.msra.mxu0 %v4257
        %5903 = vmatpush.bf16.msra.mxu0 %v4255
        %5904 = vmatpush.bf16.msra.mxu0 %v4253
        %5905 = vmatpush.bf16.msra.mxu0 %v4251
        %5906 = vmatpush.bf16.msra.mxu0 %v4249
        %5907 = vmatpush.bf16.msra.mxu0 %v4247
        %5908 = vmatpush.bf16.msra.mxu0 %v4245
        %5909 = vmatmul.bf16.gmra.mxu0 %v1179
        %v5910 = vpop.f32.mrf.mxu0
        %v5911 = vadd.f32 %v5898, %v5910
        %v5912 = vpop.f32.mrf.mxu0
        %5913 = vdwg.mxu0
        %5914 = vmatpush.bf16.msra.mxu0 %v4275
        %5915 = vmatpush.bf16.msra.mxu0 %v4273
        %5916 = vmatpush.bf16.msra.mxu0 %v4271
        %5917 = vmatpush.bf16.msra.mxu0 %v4269
        %5918 = vmatpush.bf16.msra.mxu0 %v4267
        %5919 = vmatpush.bf16.msra.mxu0 %v4265
        %5920 = vmatpush.bf16.msra.mxu0 %v4263
        %5921 = vmatpush.bf16.msra.mxu0 %v4261
        %5922 = vmatmul.bf16.gmra.mxu0 %v1180
        %v5923 = vpop.f32.mrf.mxu0
        %v5924 = vadd.f32 %v5911, %v5923
        %v5925 = vpop.f32.mrf.mxu0
        %5926 = vdwg.mxu0
        %5927 = vmatpush.bf16.msra.mxu0 %v4291
        %5928 = vmatpush.bf16.msra.mxu0 %v4289
        %5929 = vmatpush.bf16.msra.mxu0 %v4287
        %5930 = vmatpush.bf16.msra.mxu0 %v4285
        %5931 = vmatpush.bf16.msra.mxu0 %v4283
        %5932 = vmatpush.bf16.msra.mxu0 %v4281
        %5933 = vmatpush.bf16.msra.mxu0 %v4279
        %5934 = vmatpush.bf16.msra.mxu0 %v4277
        %5935 = vmatmul.bf16.gmra.mxu0 %v1181
        %v5936 = vpop.f32.mrf.mxu0
        %v5937 = vadd.f32 %v5924, %v5936
        %v5938 = vpop.f32.mrf.mxu0
        %5939 = vdwg.mxu0
        %5940 = vmatpush.bf16.msra.mxu0 %v4307
        %5941 = vmatpush.bf16.msra.mxu0 %v4305
        %5942 = vmatpush.bf16.msra.mxu0 %v4303
        %5943 = vmatpush.bf16.msra.mxu0 %v4301
        %5944 = vmatpush.bf16.msra.mxu0 %v4299
        %5945 = vmatpush.bf16.msra.mxu0 %v4297
        %5946 = vmatpush.bf16.msra.mxu0 %v4295
        %5947 = vmatpush.bf16.msra.mxu0 %v4293
        %5948 = vmatmul.bf16.gmra.mxu0 %v1182
        %v5949 = vpop.f32.mrf.mxu0
        %v5950 = vadd.f32 %v5937, %v5949
        %v5951 = vpop.f32.mrf.mxu0
        %5952 = vdwg.mxu0
        %5953 = vmatpush.bf16.msra.mxu0 %v4323
        %5954 = vmatpush.bf16.msra.mxu0 %v4321
        %5955 = vmatpush.bf16.msra.mxu0 %v4319
        %5956 = vmatpush.bf16.msra.mxu0 %v4317
        %5957 = vmatpush.bf16.msra.mxu0 %v4315
        %5958 = vmatpush.bf16.msra.mxu0 %v4313
        %5959 = vmatpush.bf16.msra.mxu0 %v4311
        %5960 = vmatpush.bf16.msra.mxu0 %v4309
        %5961 = vmatmul.bf16.gmra.mxu0 %v1183
        %v5962 = vpop.f32.mrf.mxu0
        %v5963 = vadd.f32 %v5950, %v5962
        %v5964 = vpop.f32.mrf.mxu0
        %5965 = vdwg.mxu0
        %5966 = vmatpush.bf16.msra.mxu0 %v4339
        %5967 = vmatpush.bf16.msra.mxu0 %v4337
        %5968 = vmatpush.bf16.msra.mxu0 %v4335
        %5969 = vmatpush.bf16.msra.mxu0 %v4333
        %5970 = vmatpush.bf16.msra.mxu0 %v4331
        %5971 = vmatpush.bf16.msra.mxu0 %v4329
        %5972 = vmatpush.bf16.msra.mxu0 %v4327
        %5973 = vmatpush.bf16.msra.mxu0 %v4325
        %5974 = vmatmul.bf16.gmra.mxu0 %v1184
        %v5975 = vpop.f32.mrf.mxu0
        %v5976 = vadd.f32 %v5963, %v5975
        %v5977 = vpop.f32.mrf.mxu0
        %5978 = vdwg.mxu0
        %5979 = vmatpush.bf16.msra.mxu0 %v4355
        %5980 = vmatpush.bf16.msra.mxu0 %v4353
        %5981 = vmatpush.bf16.msra.mxu0 %v4351
        %5982 = vmatpush.bf16.msra.mxu0 %v4349
        %5983 = vmatpush.bf16.msra.mxu0 %v4347
        %5984 = vmatpush.bf16.msra.mxu0 %v4345
        %5985 = vmatpush.bf16.msra.mxu0 %v4343
        %5986 = vmatpush.bf16.msra.mxu0 %v4341
        %5987 = vmatmul.bf16.gmra.mxu0 %v1185
        %v5988 = vpop.f32.mrf.mxu0
        %v5989 = vadd.f32 %v5976, %v5988
        %v5990 = vpop.f32.mrf.mxu0
        %5991 = vdwg.mxu0
        %5992 = vmatpush.bf16.msra.mxu0 %v4371
        %5993 = vmatpush.bf16.msra.mxu0 %v4369
        %5994 = vmatpush.bf16.msra.mxu0 %v4367
        %5995 = vmatpush.bf16.msra.mxu0 %v4365
        %5996 = vmatpush.bf16.msra.mxu0 %v4363
        %5997 = vmatpush.bf16.msra.mxu0 %v4361
        %5998 = vmatpush.bf16.msra.mxu0 %v4359
        %5999 = vmatpush.bf16.msra.mxu0 %v4357
        %6000 = vmatmul.bf16.gmra.mxu0 %v1186
        %v6001 = vpop.f32.mrf.mxu0
        %v6002 = vadd.f32 %v5989, %v6001
        %v6003 = vpop.f32.mrf.mxu0
        %6004 = vdwg.mxu0
        %6005 = vmatpush.bf16.msra.mxu0 %v4387
        %6006 = vmatpush.bf16.msra.mxu0 %v4385
        %6007 = vmatpush.bf16.msra.mxu0 %v4383
        %6008 = vmatpush.bf16.msra.mxu0 %v4381
        %6009 = vmatpush.bf16.msra.mxu0 %v4379
        %6010 = vmatpush.bf16.msra.mxu0 %v4377
        %6011 = vmatpush.bf16.msra.mxu0 %v4375
        %6012 = vmatpush.bf16.msra.mxu0 %v4373
        %6013 = vmatmul.bf16.gmra.mxu0 %v1189
        %v6014 = vpop.f32.mrf.mxu0
        %v6015 = vadd.f32 %v6002, %v6014
        %v6016 = vpop.f32.mrf.mxu0
        %6017 = vdwg.mxu0
        %6018 = vmatpush.bf16.msra.mxu0 %v4403
        %6019 = vmatpush.bf16.msra.mxu0 %v4401
        %6020 = vmatpush.bf16.msra.mxu0 %v4399
        %6021 = vmatpush.bf16.msra.mxu0 %v4397
        %6022 = vmatpush.bf16.msra.mxu0 %v4395
        %6023 = vmatpush.bf16.msra.mxu0 %v4393
        %6024 = vmatpush.bf16.msra.mxu0 %v4391
        %6025 = vmatpush.bf16.msra.mxu0 %v4389
        %6026 = vmatmul.bf16.gmra.mxu0 %v1190
        %v6027 = vpop.f32.mrf.mxu0
        %v6028 = vadd.f32 %v6015, %v6027
        %v6029 = vpop.f32.mrf.mxu0
        %6030 = vdwg.mxu0
        %6031 = vmatpush.bf16.msra.mxu0 %v4419
        %6032 = vmatpush.bf16.msra.mxu0 %v4417
        %6033 = vmatpush.bf16.msra.mxu0 %v4415
        %6034 = vmatpush.bf16.msra.mxu0 %v4413
        %6035 = vmatpush.bf16.msra.mxu0 %v4411
        %6036 = vmatpush.bf16.msra.mxu0 %v4409
        %6037 = vmatpush.bf16.msra.mxu0 %v4407
        %6038 = vmatpush.bf16.msra.mxu0 %v4405
        %6039 = vmatmul.bf16.gmra.mxu0 %v1191
        %v6040 = vpop.f32.mrf.mxu0
        %v6041 = vadd.f32 %v6028, %v6040
        %v6042 = vpop.f32.mrf.mxu0
        %6043 = vdwg.mxu0
        %6044 = vmatpush.bf16.msra.mxu0 %v4435
        %6045 = vmatpush.bf16.msra.mxu0 %v4433
        %6046 = vmatpush.bf16.msra.mxu0 %v4431
        %6047 = vmatpush.bf16.msra.mxu0 %v4429
        %6048 = vmatpush.bf16.msra.mxu0 %v4427
        %6049 = vmatpush.bf16.msra.mxu0 %v4425
        %6050 = vmatpush.bf16.msra.mxu0 %v4423
        %6051 = vmatpush.bf16.msra.mxu0 %v4421
        %6052 = vmatmul.bf16.gmra.mxu0 %v1192
        %v6053 = vpop.f32.mrf.mxu0
        %v6054 = vadd.f32 %v6041, %v6053
        %v6055 = vpop.f32.mrf.mxu0
        %6056 = vdwg.mxu0
        %6057 = vmatpush.bf16.msra.mxu0 %v4451
        %6058 = vmatpush.bf16.msra.mxu0 %v4449
        %6059 = vmatpush.bf16.msra.mxu0 %v4447
        %6060 = vmatpush.bf16.msra.mxu0 %v4445
        %6061 = vmatpush.bf16.msra.mxu0 %v4443
        %6062 = vmatpush.bf16.msra.mxu0 %v4441
        %6063 = vmatpush.bf16.msra.mxu0 %v4439
        %6064 = vmatpush.bf16.msra.mxu0 %v4437
        %6065 = vmatmul.bf16.gmra.mxu0 %v1193
        %v6066 = vpop.f32.mrf.mxu0
        %v6067 = vadd.f32 %v6054, %v6066
        %v6068 = vpop.f32.mrf.mxu0
        %6069 = vdwg.mxu0
        %6070 = vmatpush.bf16.msra.mxu0 %v4467
        %6071 = vmatpush.bf16.msra.mxu0 %v4465
        %6072 = vmatpush.bf16.msra.mxu0 %v4463
        %6073 = vmatpush.bf16.msra.mxu0 %v4461
        %6074 = vmatpush.bf16.msra.mxu0 %v4459
        %6075 = vmatpush.bf16.msra.mxu0 %v4457
        %6076 = vmatpush.bf16.msra.mxu0 %v4455
        %6077 = vmatpush.bf16.msra.mxu0 %v4453
        %6078 = vmatmul.bf16.gmra.mxu0 %v1194
        %v6079 = vpop.f32.mrf.mxu0
        %v6080 = vadd.f32 %v6067, %v6079
        %v6081 = vpop.f32.mrf.mxu0
        %6082 = vdwg.mxu0
        %6083 = vmatpush.bf16.msra.mxu0 %v4483
        %6084 = vmatpush.bf16.msra.mxu0 %v4481
        %6085 = vmatpush.bf16.msra.mxu0 %v4479
        %6086 = vmatpush.bf16.msra.mxu0 %v4477
        %6087 = vmatpush.bf16.msra.mxu0 %v4475
        %6088 = vmatpush.bf16.msra.mxu0 %v4473
        %6089 = vmatpush.bf16.msra.mxu0 %v4471
        %6090 = vmatpush.bf16.msra.mxu0 %v4469
        %6091 = vmatmul.bf16.gmra.mxu0 %v1195
        %v6092 = vpop.f32.mrf.mxu0
        %v6093 = vadd.f32 %v6080, %v6092
        %v6094 = vpop.f32.mrf.mxu0
        %6095 = vdwg.mxu0
        %6096 = vmatpush.bf16.msra.mxu0 %v4499
        %6097 = vmatpush.bf16.msra.mxu0 %v4497
        %6098 = vmatpush.bf16.msra.mxu0 %v4495
        %6099 = vmatpush.bf16.msra.mxu0 %v4493
        %6100 = vmatpush.bf16.msra.mxu0 %v4491
        %6101 = vmatpush.bf16.msra.mxu0 %v4489
        %6102 = vmatpush.bf16.msra.mxu0 %v4487
        %6103 = vmatpush.bf16.msra.mxu0 %v4485
        %6104 = vmatmul.bf16.gmra.mxu0 %v1196
        %v6105 = vpop.f32.mrf.mxu0
        %v6106 = vadd.f32 %v6093, %v6105
        %v6107 = vpop.f32.mrf.mxu0
        %6108 = vdwg.mxu0
        %6109 = vmatpush.bf16.msra.mxu0 %v4515
        %6110 = vmatpush.bf16.msra.mxu0 %v4513
        %6111 = vmatpush.bf16.msra.mxu0 %v4511
        %6112 = vmatpush.bf16.msra.mxu0 %v4509
        %6113 = vmatpush.bf16.msra.mxu0 %v4507
        %6114 = vmatpush.bf16.msra.mxu0 %v4505
        %6115 = vmatpush.bf16.msra.mxu0 %v4503
        %6116 = vmatpush.bf16.msra.mxu0 %v4501
        %6117 = vmatmul.bf16.gmra.mxu0 %v1199
        %v6118 = vpop.f32.mrf.mxu0
        %v6119 = vadd.f32 %v6106, %v6118
        %v6120 = vpop.f32.mrf.mxu0
        %6121 = vdwg.mxu0
        %6122 = vmatpush.bf16.msra.mxu0 %v4531
        %6123 = vmatpush.bf16.msra.mxu0 %v4529
        %6124 = vmatpush.bf16.msra.mxu0 %v4527
        %6125 = vmatpush.bf16.msra.mxu0 %v4525
        %6126 = vmatpush.bf16.msra.mxu0 %v4523
        %6127 = vmatpush.bf16.msra.mxu0 %v4521
        %6128 = vmatpush.bf16.msra.mxu0 %v4519
        %6129 = vmatpush.bf16.msra.mxu0 %v4517
        %6130 = vmatmul.bf16.gmra.mxu0 %v1200
        %v6131 = vpop.f32.mrf.mxu0
        %v6132 = vadd.f32 %v6119, %v6131
        %v6133 = vpop.f32.mrf.mxu0
        %6134 = vdwg.mxu0
        %6135 = vmatpush.bf16.msra.mxu0 %v4547
        %6136 = vmatpush.bf16.msra.mxu0 %v4545
        %6137 = vmatpush.bf16.msra.mxu0 %v4543
        %6138 = vmatpush.bf16.msra.mxu0 %v4541
        %6139 = vmatpush.bf16.msra.mxu0 %v4539
        %6140 = vmatpush.bf16.msra.mxu0 %v4537
        %6141 = vmatpush.bf16.msra.mxu0 %v4535
        %6142 = vmatpush.bf16.msra.mxu0 %v4533
        %6143 = vmatmul.bf16.gmra.mxu0 %v1201
        %v6144 = vpop.f32.mrf.mxu0
        %v6145 = vadd.f32 %v6132, %v6144
        %v6146 = vpop.f32.mrf.mxu0
        %6147 = vdwg.mxu0
        %6148 = vmatpush.bf16.msra.mxu0 %v4563
        %6149 = vmatpush.bf16.msra.mxu0 %v4561
        %6150 = vmatpush.bf16.msra.mxu0 %v4559
        %6151 = vmatpush.bf16.msra.mxu0 %v4557
        %6152 = vmatpush.bf16.msra.mxu0 %v4555
        %6153 = vmatpush.bf16.msra.mxu0 %v4553
        %6154 = vmatpush.bf16.msra.mxu0 %v4551
        %6155 = vmatpush.bf16.msra.mxu0 %v4549
        %6156 = vmatmul.bf16.gmra.mxu0 %v1202
        %v6157 = vpop.f32.mrf.mxu0
        %v6158 = vadd.f32 %v6145, %v6157
        %v6159 = vpop.f32.mrf.mxu0
        %6160 = vdwg.mxu0
        %6161 = vmatpush.bf16.msra.mxu0 %v4579
        %6162 = vmatpush.bf16.msra.mxu0 %v4577
        %6163 = vmatpush.bf16.msra.mxu0 %v4575
        %6164 = vmatpush.bf16.msra.mxu0 %v4573
        %6165 = vmatpush.bf16.msra.mxu0 %v4571
        %6166 = vmatpush.bf16.msra.mxu0 %v4569
        %6167 = vmatpush.bf16.msra.mxu0 %v4567
        %6168 = vmatpush.bf16.msra.mxu0 %v4565
        %6169 = vmatmul.bf16.gmra.mxu0 %v1203
        %v6170 = vpop.f32.mrf.mxu0
        %v6171 = vadd.f32 %v6158, %v6170
        %v6172 = vpop.f32.mrf.mxu0
        %6173 = vdwg.mxu0
        %6174 = vmatpush.bf16.msra.mxu0 %v4595
        %6175 = vmatpush.bf16.msra.mxu0 %v4593
        %6176 = vmatpush.bf16.msra.mxu0 %v4591
        %6177 = vmatpush.bf16.msra.mxu0 %v4589
        %6178 = vmatpush.bf16.msra.mxu0 %v4587
        %6179 = vmatpush.bf16.msra.mxu0 %v4585
        %6180 = vmatpush.bf16.msra.mxu0 %v4583
        %6181 = vmatpush.bf16.msra.mxu0 %v4581
        %6182 = vmatmul.bf16.gmra.mxu0 %v1204
        %v6183 = vpop.f32.mrf.mxu0
        %v6184 = vadd.f32 %v6171, %v6183
        %v6185 = vpop.f32.mrf.mxu0
        %6186 = vdwg.mxu0
        %6187 = vmatpush.bf16.msra.mxu0 %v4611
        %6188 = vmatpush.bf16.msra.mxu0 %v4609
        %6189 = vmatpush.bf16.msra.mxu0 %v4607
        %6190 = vmatpush.bf16.msra.mxu0 %v4605
        %6191 = vmatpush.bf16.msra.mxu0 %v4603
        %6192 = vmatpush.bf16.msra.mxu0 %v4601
        %6193 = vmatpush.bf16.msra.mxu0 %v4599
        %6194 = vmatpush.bf16.msra.mxu0 %v4597
        %6195 = vmatmul.bf16.gmra.mxu0 %v1205
        %v6196 = vpop.f32.mrf.mxu0
        %v6197 = vadd.f32 %v6184, %v6196
        %v6198 = vpop.f32.mrf.mxu0
        %6199 = vdwg.mxu0
        %6200 = vmatpush.bf16.msra.mxu0 %v4627
        %6201 = vmatpush.bf16.msra.mxu0 %v4625
        %6202 = vmatpush.bf16.msra.mxu0 %v4623
        %6203 = vmatpush.bf16.msra.mxu0 %v4621
        %6204 = vmatpush.bf16.msra.mxu0 %v4619
        %6205 = vmatpush.bf16.msra.mxu0 %v4617
        %6206 = vmatpush.bf16.msra.mxu0 %v4615
        %6207 = vmatpush.bf16.msra.mxu0 %v4613
        %6208 = vmatmul.bf16.gmra.mxu0 %v1206
        %v6209 = vpop.f32.mrf.mxu0
        %v6210 = vadd.f32 %v6197, %v6209
        %v6211 = vpop.f32.mrf.mxu0
        %6212 = vdwg.mxu0
        %6213 = vmatpush.bf16.msra.mxu0 %v4643
        %6214 = vmatpush.bf16.msra.mxu0 %v4641
        %6215 = vmatpush.bf16.msra.mxu0 %v4639
        %6216 = vmatpush.bf16.msra.mxu0 %v4637
        %6217 = vmatpush.bf16.msra.mxu0 %v4635
        %6218 = vmatpush.bf16.msra.mxu0 %v4633
        %6219 = vmatpush.bf16.msra.mxu0 %v4631
        %6220 = vmatpush.bf16.msra.mxu0 %v4629
        %6221 = vmatmul.bf16.gmra.mxu0 %v1209
        %v6222 = vpop.f32.mrf.mxu0
        %v6223 = vadd.f32 %v6210, %v6222
        %v6224 = vpop.f32.mrf.mxu0
        %6225 = vdwg.mxu0
        %6226 = vmatpush.bf16.msra.mxu0 %v4659
        %6227 = vmatpush.bf16.msra.mxu0 %v4657
        %6228 = vmatpush.bf16.msra.mxu0 %v4655
        %6229 = vmatpush.bf16.msra.mxu0 %v4653
        %6230 = vmatpush.bf16.msra.mxu0 %v4651
        %6231 = vmatpush.bf16.msra.mxu0 %v4649
        %6232 = vmatpush.bf16.msra.mxu0 %v4647
        %6233 = vmatpush.bf16.msra.mxu0 %v4645
        %6234 = vmatmul.bf16.gmra.mxu0 %v1210
        %v6235 = vpop.f32.mrf.mxu0
        %v6236 = vadd.f32 %v6223, %v6235
        %v6237 = vpop.f32.mrf.mxu0
        %6238 = vdwg.mxu0
        %6239 = vmatpush.bf16.msra.mxu0 %v4675
        %6240 = vmatpush.bf16.msra.mxu0 %v4673
        %6241 = vmatpush.bf16.msra.mxu0 %v4671
        %6242 = vmatpush.bf16.msra.mxu0 %v4669
        %6243 = vmatpush.bf16.msra.mxu0 %v4667
        %6244 = vmatpush.bf16.msra.mxu0 %v4665
        %6245 = vmatpush.bf16.msra.mxu0 %v4663
        %6246 = vmatpush.bf16.msra.mxu0 %v4661
        %6247 = vmatmul.bf16.gmra.mxu0 %v1211
        %v6248 = vpop.f32.mrf.mxu0
        %v6249 = vadd.f32 %v6236, %v6248
        %v6250 = vpop.f32.mrf.mxu0
        %6251 = vdwg.mxu0
        %6252 = vmatpush.bf16.msra.mxu0 %v4691
        %6253 = vmatpush.bf16.msra.mxu0 %v4689
        %6254 = vmatpush.bf16.msra.mxu0 %v4687
        %6255 = vmatpush.bf16.msra.mxu0 %v4685
        %6256 = vmatpush.bf16.msra.mxu0 %v4683
        %6257 = vmatpush.bf16.msra.mxu0 %v4681
        %6258 = vmatpush.bf16.msra.mxu0 %v4679
        %6259 = vmatpush.bf16.msra.mxu0 %v4677
        %6260 = vmatmul.bf16.gmra.mxu0 %v1212
        %v6261 = vpop.f32.mrf.mxu0
        %v6262 = vadd.f32 %v6249, %v6261
        %v6263 = vpop.f32.mrf.mxu0
        %6264 = vdwg.mxu0
        %6265 = vmatpush.bf16.msra.mxu0 %v4707
        %6266 = vmatpush.bf16.msra.mxu0 %v4705
        %6267 = vmatpush.bf16.msra.mxu0 %v4703
        %6268 = vmatpush.bf16.msra.mxu0 %v4701
        %6269 = vmatpush.bf16.msra.mxu0 %v4699
        %6270 = vmatpush.bf16.msra.mxu0 %v4697
        %6271 = vmatpush.bf16.msra.mxu0 %v4695
        %6272 = vmatpush.bf16.msra.mxu0 %v4693
        %6273 = vmatmul.bf16.gmra.mxu0 %v1213
        %v6274 = vpop.f32.mrf.mxu0
        %v6275 = vadd.f32 %v6262, %v6274
        %v6276 = vpop.f32.mrf.mxu0
        %6277 = vdwg.mxu0
        %6278 = vmatpush.bf16.msra.mxu0 %v4723
        %6279 = vmatpush.bf16.msra.mxu0 %v4721
        %6280 = vmatpush.bf16.msra.mxu0 %v4719
        %6281 = vmatpush.bf16.msra.mxu0 %v4717
        %6282 = vmatpush.bf16.msra.mxu0 %v4715
        %6283 = vmatpush.bf16.msra.mxu0 %v4713
        %6284 = vmatpush.bf16.msra.mxu0 %v4711
        %6285 = vmatpush.bf16.msra.mxu0 %v4709
        %6286 = vmatmul.bf16.gmra.mxu0 %v1214
        %v6287 = vpop.f32.mrf.mxu0
        %v6288 = vadd.f32 %v6275, %v6287
        %v6289 = vpop.f32.mrf.mxu0
        %6290 = vdwg.mxu0
        %6291 = vmatpush.bf16.msra.mxu0 %v3876
        %6292 = vmatpush.bf16.msra.mxu0 %v3874
        %6293 = vmatpush.bf16.msra.mxu0 %v3872
        %6294 = vmatpush.bf16.msra.mxu0 %v3870
        %6295 = vmatpush.bf16.msra.mxu0 %v3868
        %6296 = vmatpush.bf16.msra.mxu0 %v3866
        %6297 = vmatpush.bf16.msra.mxu0 %v3864
        %6298 = vmatpush.bf16.msra.mxu0 %v3862
        %6299 = vmatmul.bf16.gmra.mxu0 %v1149
        %v6300 = vpop.f32.mrf.mxu0
        %v6301 = vadd.f32 0.0, %v6300
        %v6302 = vpop.f32.mrf.mxu0
        %6303 = vdwg.mxu0
        %6304 = vmatpush.bf16.msra.mxu0 %v3892
        %6305 = vmatpush.bf16.msra.mxu0 %v3890
        %6306 = vmatpush.bf16.msra.mxu0 %v3888
        %6307 = vmatpush.bf16.msra.mxu0 %v3886
        %6308 = vmatpush.bf16.msra.mxu0 %v3884
        %6309 = vmatpush.bf16.msra.mxu0 %v3882
        %6310 = vmatpush.bf16.msra.mxu0 %v3880
        %6311 = vmatpush.bf16.msra.mxu0 %v3878
        %6312 = vmatmul.bf16.gmra.mxu0 %v1150
        %v6313 = vpop.f32.mrf.mxu0
        %v6314 = vadd.f32 %v6301, %v6313
        %v6315 = vpop.f32.mrf.mxu0
        %6316 = vdwg.mxu0
        %6317 = vmatpush.bf16.msra.mxu0 %v3908
        %6318 = vmatpush.bf16.msra.mxu0 %v3906
        %6319 = vmatpush.bf16.msra.mxu0 %v3904
        %6320 = vmatpush.bf16.msra.mxu0 %v3902
        %6321 = vmatpush.bf16.msra.mxu0 %v3900
        %6322 = vmatpush.bf16.msra.mxu0 %v3898
        %6323 = vmatpush.bf16.msra.mxu0 %v3896
        %6324 = vmatpush.bf16.msra.mxu0 %v3894
        %6325 = vmatmul.bf16.gmra.mxu0 %v1151
        %v6326 = vpop.f32.mrf.mxu0
        %v6327 = vadd.f32 %v6314, %v6326
        %v6328 = vpop.f32.mrf.mxu0
        %6329 = vdwg.mxu0
        %6330 = vmatpush.bf16.msra.mxu0 %v3924
        %6331 = vmatpush.bf16.msra.mxu0 %v3922
        %6332 = vmatpush.bf16.msra.mxu0 %v3920
        %6333 = vmatpush.bf16.msra.mxu0 %v3918
        %6334 = vmatpush.bf16.msra.mxu0 %v3916
        %6335 = vmatpush.bf16.msra.mxu0 %v3914
        %6336 = vmatpush.bf16.msra.mxu0 %v3912
        %6337 = vmatpush.bf16.msra.mxu0 %v3910
        %6338 = vmatmul.bf16.gmra.mxu0 %v1152
        %v6339 = vpop.f32.mrf.mxu0
        %v6340 = vadd.f32 %v6327, %v6339
        %v6341 = vpop.f32.mrf.mxu0
        %6342 = vdwg.mxu0
        %6343 = vmatpush.bf16.msra.mxu0 %v3940
        %6344 = vmatpush.bf16.msra.mxu0 %v3938
        %6345 = vmatpush.bf16.msra.mxu0 %v3936
        %6346 = vmatpush.bf16.msra.mxu0 %v3934
        %6347 = vmatpush.bf16.msra.mxu0 %v3932
        %6348 = vmatpush.bf16.msra.mxu0 %v3930
        %6349 = vmatpush.bf16.msra.mxu0 %v3928
        %6350 = vmatpush.bf16.msra.mxu0 %v3926
        %6351 = vmatmul.bf16.gmra.mxu0 %v1153
        %v6352 = vpop.f32.mrf.mxu0
        %v6353 = vadd.f32 %v6340, %v6352
        %v6354 = vpop.f32.mrf.mxu0
        %6355 = vdwg.mxu0
        %6356 = vmatpush.bf16.msra.mxu0 %v3956
        %6357 = vmatpush.bf16.msra.mxu0 %v3954
        %6358 = vmatpush.bf16.msra.mxu0 %v3952
        %6359 = vmatpush.bf16.msra.mxu0 %v3950
        %6360 = vmatpush.bf16.msra.mxu0 %v3948
        %6361 = vmatpush.bf16.msra.mxu0 %v3946
        %6362 = vmatpush.bf16.msra.mxu0 %v3944
        %6363 = vmatpush.bf16.msra.mxu0 %v3942
        %6364 = vmatmul.bf16.gmra.mxu0 %v1154
        %v6365 = vpop.f32.mrf.mxu0
        %v6366 = vadd.f32 %v6353, %v6365
        %v6367 = vpop.f32.mrf.mxu0
        %6368 = vdwg.mxu0
        %6369 = vmatpush.bf16.msra.mxu0 %v3972
        %6370 = vmatpush.bf16.msra.mxu0 %v3970
        %6371 = vmatpush.bf16.msra.mxu0 %v3968
        %6372 = vmatpush.bf16.msra.mxu0 %v3966
        %6373 = vmatpush.bf16.msra.mxu0 %v3964
        %6374 = vmatpush.bf16.msra.mxu0 %v3962
        %6375 = vmatpush.bf16.msra.mxu0 %v3960
        %6376 = vmatpush.bf16.msra.mxu0 %v3958
        %6377 = vmatmul.bf16.gmra.mxu0 %v1155
        %v6378 = vpop.f32.mrf.mxu0
        %v6379 = vadd.f32 %v6366, %v6378
        %v6380 = vpop.f32.mrf.mxu0
        %6381 = vdwg.mxu0
        %6382 = vmatpush.bf16.msra.mxu0 %v3988
        %6383 = vmatpush.bf16.msra.mxu0 %v3986
        %6384 = vmatpush.bf16.msra.mxu0 %v3984
        %6385 = vmatpush.bf16.msra.mxu0 %v3982
        %6386 = vmatpush.bf16.msra.mxu0 %v3980
        %6387 = vmatpush.bf16.msra.mxu0 %v3978
        %6388 = vmatpush.bf16.msra.mxu0 %v3976
        %6389 = vmatpush.bf16.msra.mxu0 %v3974
        %6390 = vmatmul.bf16.gmra.mxu0 %v1156
        %v6391 = vpop.f32.mrf.mxu0
        %v6392 = vadd.f32 %v6379, %v6391
        %v6393 = vpop.f32.mrf.mxu0
        %6394 = vdwg.mxu0
        %6395 = vmatpush.bf16.msra.mxu0 %v4004
        %6396 = vmatpush.bf16.msra.mxu0 %v4002
        %6397 = vmatpush.bf16.msra.mxu0 %v4000
        %6398 = vmatpush.bf16.msra.mxu0 %v3998
        %6399 = vmatpush.bf16.msra.mxu0 %v3996
        %6400 = vmatpush.bf16.msra.mxu0 %v3994
        %6401 = vmatpush.bf16.msra.mxu0 %v3992
        %6402 = vmatpush.bf16.msra.mxu0 %v3990
        %6403 = vmatmul.bf16.gmra.mxu0 %v1159
        %v6404 = vpop.f32.mrf.mxu0
        %v6405 = vadd.f32 %v6392, %v6404
        %v6406 = vpop.f32.mrf.mxu0
        %6407 = vdwg.mxu0
        %6408 = vmatpush.bf16.msra.mxu0 %v4020
        %6409 = vmatpush.bf16.msra.mxu0 %v4018
        %6410 = vmatpush.bf16.msra.mxu0 %v4016
        %6411 = vmatpush.bf16.msra.mxu0 %v4014
        %6412 = vmatpush.bf16.msra.mxu0 %v4012
        %6413 = vmatpush.bf16.msra.mxu0 %v4010
        %6414 = vmatpush.bf16.msra.mxu0 %v4008
        %6415 = vmatpush.bf16.msra.mxu0 %v4006
        %6416 = vmatmul.bf16.gmra.mxu0 %v1160
        %v6417 = vpop.f32.mrf.mxu0
        %v6418 = vadd.f32 %v6405, %v6417
        %v6419 = vpop.f32.mrf.mxu0
        %6420 = vdwg.mxu0
        %6421 = vmatpush.bf16.msra.mxu0 %v4036
        %6422 = vmatpush.bf16.msra.mxu0 %v4034
        %6423 = vmatpush.bf16.msra.mxu0 %v4032
        %6424 = vmatpush.bf16.msra.mxu0 %v4030
        %6425 = vmatpush.bf16.msra.mxu0 %v4028
        %6426 = vmatpush.bf16.msra.mxu0 %v4026
        %6427 = vmatpush.bf16.msra.mxu0 %v4024
        %6428 = vmatpush.bf16.msra.mxu0 %v4022
        %6429 = vmatmul.bf16.gmra.mxu0 %v1161
        %v6430 = vpop.f32.mrf.mxu0
        %v6431 = vadd.f32 %v6418, %v6430
        %v6432 = vpop.f32.mrf.mxu0
        %6433 = vdwg.mxu0
        %6434 = vmatpush.bf16.msra.mxu0 %v4052
        %6435 = vmatpush.bf16.msra.mxu0 %v4050
        %6436 = vmatpush.bf16.msra.mxu0 %v4048
        %6437 = vmatpush.bf16.msra.mxu0 %v4046
        %6438 = vmatpush.bf16.msra.mxu0 %v4044
        %6439 = vmatpush.bf16.msra.mxu0 %v4042
        %6440 = vmatpush.bf16.msra.mxu0 %v4040
        %6441 = vmatpush.bf16.msra.mxu0 %v4038
        %6442 = vmatmul.bf16.gmra.mxu0 %v1162
        %v6443 = vpop.f32.mrf.mxu0
        %v6444 = vadd.f32 %v6431, %v6443
        %v6445 = vpop.f32.mrf.mxu0
        %6446 = vdwg.mxu0
        %6447 = vmatpush.bf16.msra.mxu0 %v4068
        %6448 = vmatpush.bf16.msra.mxu0 %v4066
        %6449 = vmatpush.bf16.msra.mxu0 %v4064
        %6450 = vmatpush.bf16.msra.mxu0 %v4062
        %6451 = vmatpush.bf16.msra.mxu0 %v4060
        %6452 = vmatpush.bf16.msra.mxu0 %v4058
        %6453 = vmatpush.bf16.msra.mxu0 %v4056
        %6454 = vmatpush.bf16.msra.mxu0 %v4054
        %6455 = vmatmul.bf16.gmra.mxu0 %v1163
        %v6456 = vpop.f32.mrf.mxu0
        %v6457 = vadd.f32 %v6444, %v6456
        %v6458 = vpop.f32.mrf.mxu0
        %6459 = vdwg.mxu0
        %6460 = vmatpush.bf16.msra.mxu0 %v4084
        %6461 = vmatpush.bf16.msra.mxu0 %v4082
        %6462 = vmatpush.bf16.msra.mxu0 %v4080
        %6463 = vmatpush.bf16.msra.mxu0 %v4078
        %6464 = vmatpush.bf16.msra.mxu0 %v4076
        %6465 = vmatpush.bf16.msra.mxu0 %v4074
        %6466 = vmatpush.bf16.msra.mxu0 %v4072
        %6467 = vmatpush.bf16.msra.mxu0 %v4070
        %6468 = vmatmul.bf16.gmra.mxu0 %v1164
        %v6469 = vpop.f32.mrf.mxu0
        %v6470 = vadd.f32 %v6457, %v6469
        %v6471 = vpop.f32.mrf.mxu0
        %6472 = vdwg.mxu0
        %6473 = vmatpush.bf16.msra.mxu0 %v4100
        %6474 = vmatpush.bf16.msra.mxu0 %v4098
        %6475 = vmatpush.bf16.msra.mxu0 %v4096
        %6476 = vmatpush.bf16.msra.mxu0 %v4094
        %6477 = vmatpush.bf16.msra.mxu0 %v4092
        %6478 = vmatpush.bf16.msra.mxu0 %v4090
        %6479 = vmatpush.bf16.msra.mxu0 %v4088
        %6480 = vmatpush.bf16.msra.mxu0 %v4086
        %6481 = vmatmul.bf16.gmra.mxu0 %v1165
        %v6482 = vpop.f32.mrf.mxu0
        %v6483 = vadd.f32 %v6470, %v6482
        %v6484 = vpop.f32.mrf.mxu0
        %6485 = vdwg.mxu0
        %6486 = vmatpush.bf16.msra.mxu0 %v4116
        %6487 = vmatpush.bf16.msra.mxu0 %v4114
        %6488 = vmatpush.bf16.msra.mxu0 %v4112
        %6489 = vmatpush.bf16.msra.mxu0 %v4110
        %6490 = vmatpush.bf16.msra.mxu0 %v4108
        %6491 = vmatpush.bf16.msra.mxu0 %v4106
        %6492 = vmatpush.bf16.msra.mxu0 %v4104
        %6493 = vmatpush.bf16.msra.mxu0 %v4102
        %6494 = vmatmul.bf16.gmra.mxu0 %v1166
        %v6495 = vpop.f32.mrf.mxu0
        %v6496 = vadd.f32 %v6483, %v6495
        %v6497 = vpop.f32.mrf.mxu0
        %6498 = vdwg.mxu0
        %6499 = vmatpush.bf16.msra.mxu0 %v4132
        %6500 = vmatpush.bf16.msra.mxu0 %v4130
        %6501 = vmatpush.bf16.msra.mxu0 %v4128
        %6502 = vmatpush.bf16.msra.mxu0 %v4126
        %6503 = vmatpush.bf16.msra.mxu0 %v4124
        %6504 = vmatpush.bf16.msra.mxu0 %v4122
        %6505 = vmatpush.bf16.msra.mxu0 %v4120
        %6506 = vmatpush.bf16.msra.mxu0 %v4118
        %6507 = vmatmul.bf16.gmra.mxu0 %v1169
        %v6508 = vpop.f32.mrf.mxu0
        %v6509 = vadd.f32 %v6496, %v6508
        %v6510 = vpop.f32.mrf.mxu0
        %6511 = vdwg.mxu0
        %6512 = vmatpush.bf16.msra.mxu0 %v4148
        %6513 = vmatpush.bf16.msra.mxu0 %v4146
        %6514 = vmatpush.bf16.msra.mxu0 %v4144
        %6515 = vmatpush.bf16.msra.mxu0 %v4142
        %6516 = vmatpush.bf16.msra.mxu0 %v4140
        %6517 = vmatpush.bf16.msra.mxu0 %v4138
        %6518 = vmatpush.bf16.msra.mxu0 %v4136
        %6519 = vmatpush.bf16.msra.mxu0 %v4134
        %6520 = vmatmul.bf16.gmra.mxu0 %v1170
        %v6521 = vpop.f32.mrf.mxu0
        %v6522 = vadd.f32 %v6509, %v6521
        %v6523 = vpop.f32.mrf.mxu0
        %6524 = vdwg.mxu0
        %6525 = vmatpush.bf16.msra.mxu0 %v4164
        %6526 = vmatpush.bf16.msra.mxu0 %v4162
        %6527 = vmatpush.bf16.msra.mxu0 %v4160
        %6528 = vmatpush.bf16.msra.mxu0 %v4158
        %6529 = vmatpush.bf16.msra.mxu0 %v4156
        %6530 = vmatpush.bf16.msra.mxu0 %v4154
        %6531 = vmatpush.bf16.msra.mxu0 %v4152
        %6532 = vmatpush.bf16.msra.mxu0 %v4150
        %6533 = vmatmul.bf16.gmra.mxu0 %v1171
        %v6534 = vpop.f32.mrf.mxu0
        %v6535 = vadd.f32 %v6522, %v6534
        %v6536 = vpop.f32.mrf.mxu0
        %6537 = vdwg.mxu0
        %6538 = vmatpush.bf16.msra.mxu0 %v4180
        %6539 = vmatpush.bf16.msra.mxu0 %v4178
        %6540 = vmatpush.bf16.msra.mxu0 %v4176
        %6541 = vmatpush.bf16.msra.mxu0 %v4174
        %6542 = vmatpush.bf16.msra.mxu0 %v4172
        %6543 = vmatpush.bf16.msra.mxu0 %v4170
        %6544 = vmatpush.bf16.msra.mxu0 %v4168
        %6545 = vmatpush.bf16.msra.mxu0 %v4166
        %6546 = vmatmul.bf16.gmra.mxu0 %v1172
        %v6547 = vpop.f32.mrf.mxu0
        %v6548 = vadd.f32 %v6535, %v6547
        %v6549 = vpop.f32.mrf.mxu0
        %6550 = vdwg.mxu0
        %6551 = vmatpush.bf16.msra.mxu0 %v4196
        %6552 = vmatpush.bf16.msra.mxu0 %v4194
        %6553 = vmatpush.bf16.msra.mxu0 %v4192
        %6554 = vmatpush.bf16.msra.mxu0 %v4190
        %6555 = vmatpush.bf16.msra.mxu0 %v4188
        %6556 = vmatpush.bf16.msra.mxu0 %v4186
        %6557 = vmatpush.bf16.msra.mxu0 %v4184
        %6558 = vmatpush.bf16.msra.mxu0 %v4182
        %6559 = vmatmul.bf16.gmra.mxu0 %v1173
        %v6560 = vpop.f32.mrf.mxu0
        %v6561 = vadd.f32 %v6548, %v6560
        %v6562 = vpop.f32.mrf.mxu0
        %6563 = vdwg.mxu0
        %6564 = vmatpush.bf16.msra.mxu0 %v4212
        %6565 = vmatpush.bf16.msra.mxu0 %v4210
        %6566 = vmatpush.bf16.msra.mxu0 %v4208
        %6567 = vmatpush.bf16.msra.mxu0 %v4206
        %6568 = vmatpush.bf16.msra.mxu0 %v4204
        %6569 = vmatpush.bf16.msra.mxu0 %v4202
        %6570 = vmatpush.bf16.msra.mxu0 %v4200
        %6571 = vmatpush.bf16.msra.mxu0 %v4198
        %6572 = vmatmul.bf16.gmra.mxu0 %v1174
        %v6573 = vpop.f32.mrf.mxu0
        %v6574 = vadd.f32 %v6561, %v6573
        %v6575 = vpop.f32.mrf.mxu0
        %6576 = vdwg.mxu0
        %6577 = vmatpush.bf16.msra.mxu0 %v4228
        %6578 = vmatpush.bf16.msra.mxu0 %v4226
        %6579 = vmatpush.bf16.msra.mxu0 %v4224
        %6580 = vmatpush.bf16.msra.mxu0 %v4222
        %6581 = vmatpush.bf16.msra.mxu0 %v4220
        %6582 = vmatpush.bf16.msra.mxu0 %v4218
        %6583 = vmatpush.bf16.msra.mxu0 %v4216
        %6584 = vmatpush.bf16.msra.mxu0 %v4214
        %6585 = vmatmul.bf16.gmra.mxu0 %v1175
        %v6586 = vpop.f32.mrf.mxu0
        %v6587 = vadd.f32 %v6574, %v6586
        %v6588 = vpop.f32.mrf.mxu0
        %6589 = vdwg.mxu0
        %6590 = vmatpush.bf16.msra.mxu0 %v4244
        %6591 = vmatpush.bf16.msra.mxu0 %v4242
        %6592 = vmatpush.bf16.msra.mxu0 %v4240
        %6593 = vmatpush.bf16.msra.mxu0 %v4238
        %6594 = vmatpush.bf16.msra.mxu0 %v4236
        %6595 = vmatpush.bf16.msra.mxu0 %v4234
        %6596 = vmatpush.bf16.msra.mxu0 %v4232
        %6597 = vmatpush.bf16.msra.mxu0 %v4230
        %6598 = vmatmul.bf16.gmra.mxu0 %v1176
        %v6599 = vpop.f32.mrf.mxu0
        %v6600 = vadd.f32 %v6587, %v6599
        %v6601 = vpop.f32.mrf.mxu0
        %6602 = vdwg.mxu0
        %6603 = vmatpush.bf16.msra.mxu0 %v4260
        %6604 = vmatpush.bf16.msra.mxu0 %v4258
        %6605 = vmatpush.bf16.msra.mxu0 %v4256
        %6606 = vmatpush.bf16.msra.mxu0 %v4254
        %6607 = vmatpush.bf16.msra.mxu0 %v4252
        %6608 = vmatpush.bf16.msra.mxu0 %v4250
        %6609 = vmatpush.bf16.msra.mxu0 %v4248
        %6610 = vmatpush.bf16.msra.mxu0 %v4246
        %6611 = vmatmul.bf16.gmra.mxu0 %v1179
        %v6612 = vpop.f32.mrf.mxu0
        %v6613 = vadd.f32 %v6600, %v6612
        %v6614 = vpop.f32.mrf.mxu0
        %6615 = vdwg.mxu0
        %6616 = vmatpush.bf16.msra.mxu0 %v4276
        %6617 = vmatpush.bf16.msra.mxu0 %v4274
        %6618 = vmatpush.bf16.msra.mxu0 %v4272
        %6619 = vmatpush.bf16.msra.mxu0 %v4270
        %6620 = vmatpush.bf16.msra.mxu0 %v4268
        %6621 = vmatpush.bf16.msra.mxu0 %v4266
        %6622 = vmatpush.bf16.msra.mxu0 %v4264
        %6623 = vmatpush.bf16.msra.mxu0 %v4262
        %6624 = vmatmul.bf16.gmra.mxu0 %v1180
        %v6625 = vpop.f32.mrf.mxu0
        %v6626 = vadd.f32 %v6613, %v6625
        %v6627 = vpop.f32.mrf.mxu0
        %6628 = vdwg.mxu0
        %6629 = vmatpush.bf16.msra.mxu0 %v4292
        %6630 = vmatpush.bf16.msra.mxu0 %v4290
        %6631 = vmatpush.bf16.msra.mxu0 %v4288
        %6632 = vmatpush.bf16.msra.mxu0 %v4286
        %6633 = vmatpush.bf16.msra.mxu0 %v4284
        %6634 = vmatpush.bf16.msra.mxu0 %v4282
        %6635 = vmatpush.bf16.msra.mxu0 %v4280
        %6636 = vmatpush.bf16.msra.mxu0 %v4278
        %6637 = vmatmul.bf16.gmra.mxu0 %v1181
        %v6638 = vpop.f32.mrf.mxu0
        %v6639 = vadd.f32 %v6626, %v6638
        %v6640 = vpop.f32.mrf.mxu0
        %6641 = vdwg.mxu0
        %6642 = vmatpush.bf16.msra.mxu0 %v4308
        %6643 = vmatpush.bf16.msra.mxu0 %v4306
        %6644 = vmatpush.bf16.msra.mxu0 %v4304
        %6645 = vmatpush.bf16.msra.mxu0 %v4302
        %6646 = vmatpush.bf16.msra.mxu0 %v4300
        %6647 = vmatpush.bf16.msra.mxu0 %v4298
        %6648 = vmatpush.bf16.msra.mxu0 %v4296
        %6649 = vmatpush.bf16.msra.mxu0 %v4294
        %6650 = vmatmul.bf16.gmra.mxu0 %v1182
        %v6651 = vpop.f32.mrf.mxu0
        %v6652 = vadd.f32 %v6639, %v6651
        %v6653 = vpop.f32.mrf.mxu0
        %6654 = vdwg.mxu0
        %6655 = vmatpush.bf16.msra.mxu0 %v4324
        %6656 = vmatpush.bf16.msra.mxu0 %v4322
        %6657 = vmatpush.bf16.msra.mxu0 %v4320
        %6658 = vmatpush.bf16.msra.mxu0 %v4318
        %6659 = vmatpush.bf16.msra.mxu0 %v4316
        %6660 = vmatpush.bf16.msra.mxu0 %v4314
        %6661 = vmatpush.bf16.msra.mxu0 %v4312
        %6662 = vmatpush.bf16.msra.mxu0 %v4310
        %6663 = vmatmul.bf16.gmra.mxu0 %v1183
        %v6664 = vpop.f32.mrf.mxu0
        %v6665 = vadd.f32 %v6652, %v6664
        %v6666 = vpop.f32.mrf.mxu0
        %6667 = vdwg.mxu0
        %6668 = vmatpush.bf16.msra.mxu0 %v4340
        %6669 = vmatpush.bf16.msra.mxu0 %v4338
        %6670 = vmatpush.bf16.msra.mxu0 %v4336
        %6671 = vmatpush.bf16.msra.mxu0 %v4334
        %6672 = vmatpush.bf16.msra.mxu0 %v4332
        %6673 = vmatpush.bf16.msra.mxu0 %v4330
        %6674 = vmatpush.bf16.msra.mxu0 %v4328
        %6675 = vmatpush.bf16.msra.mxu0 %v4326
        %6676 = vmatmul.bf16.gmra.mxu0 %v1184
        %v6677 = vpop.f32.mrf.mxu0
        %v6678 = vadd.f32 %v6665, %v6677
        %v6679 = vpop.f32.mrf.mxu0
        %6680 = vdwg.mxu0
        %6681 = vmatpush.bf16.msra.mxu0 %v4356
        %6682 = vmatpush.bf16.msra.mxu0 %v4354
        %6683 = vmatpush.bf16.msra.mxu0 %v4352
        %6684 = vmatpush.bf16.msra.mxu0 %v4350
        %6685 = vmatpush.bf16.msra.mxu0 %v4348
        %6686 = vmatpush.bf16.msra.mxu0 %v4346
        %6687 = vmatpush.bf16.msra.mxu0 %v4344
        %6688 = vmatpush.bf16.msra.mxu0 %v4342
        %6689 = vmatmul.bf16.gmra.mxu0 %v1185
        %v6690 = vpop.f32.mrf.mxu0
        %v6691 = vadd.f32 %v6678, %v6690
        %v6692 = vpop.f32.mrf.mxu0
        %6693 = vdwg.mxu0
        %6694 = vmatpush.bf16.msra.mxu0 %v4372
        %6695 = vmatpush.bf16.msra.mxu0 %v4370
        %6696 = vmatpush.bf16.msra.mxu0 %v4368
        %6697 = vmatpush.bf16.msra.mxu0 %v4366
        %6698 = vmatpush.bf16.msra.mxu0 %v4364
        %6699 = vmatpush.bf16.msra.mxu0 %v4362
        %6700 = vmatpush.bf16.msra.mxu0 %v4360
        %6701 = vmatpush.bf16.msra.mxu0 %v4358
        %6702 = vmatmul.bf16.gmra.mxu0 %v1186
        %v6703 = vpop.f32.mrf.mxu0
        %v6704 = vadd.f32 %v6691, %v6703
        %v6705 = vpop.f32.mrf.mxu0
        %6706 = vdwg.mxu0
        %6707 = vmatpush.bf16.msra.mxu0 %v4388
        %6708 = vmatpush.bf16.msra.mxu0 %v4386
        %6709 = vmatpush.bf16.msra.mxu0 %v4384
        %6710 = vmatpush.bf16.msra.mxu0 %v4382
        %6711 = vmatpush.bf16.msra.mxu0 %v4380
        %6712 = vmatpush.bf16.msra.mxu0 %v4378
        %6713 = vmatpush.bf16.msra.mxu0 %v4376
        %6714 = vmatpush.bf16.msra.mxu0 %v4374
        %6715 = vmatmul.bf16.gmra.mxu0 %v1189
        %v6716 = vpop.f32.mrf.mxu0
        %v6717 = vadd.f32 %v6704, %v6716
        %v6718 = vpop.f32.mrf.mxu0
        %6719 = vdwg.mxu0
        %6720 = vmatpush.bf16.msra.mxu0 %v4404
        %6721 = vmatpush.bf16.msra.mxu0 %v4402
        %6722 = vmatpush.bf16.msra.mxu0 %v4400
        %6723 = vmatpush.bf16.msra.mxu0 %v4398
        %6724 = vmatpush.bf16.msra.mxu0 %v4396
        %6725 = vmatpush.bf16.msra.mxu0 %v4394
        %6726 = vmatpush.bf16.msra.mxu0 %v4392
        %6727 = vmatpush.bf16.msra.mxu0 %v4390
        %6728 = vmatmul.bf16.gmra.mxu0 %v1190
        %v6729 = vpop.f32.mrf.mxu0
        %v6730 = vadd.f32 %v6717, %v6729
        %v6731 = vpop.f32.mrf.mxu0
        %6732 = vdwg.mxu0
        %6733 = vmatpush.bf16.msra.mxu0 %v4420
        %6734 = vmatpush.bf16.msra.mxu0 %v4418
        %6735 = vmatpush.bf16.msra.mxu0 %v4416
        %6736 = vmatpush.bf16.msra.mxu0 %v4414
        %6737 = vmatpush.bf16.msra.mxu0 %v4412
        %6738 = vmatpush.bf16.msra.mxu0 %v4410
        %6739 = vmatpush.bf16.msra.mxu0 %v4408
        %6740 = vmatpush.bf16.msra.mxu0 %v4406
        %6741 = vmatmul.bf16.gmra.mxu0 %v1191
        %v6742 = vpop.f32.mrf.mxu0
        %v6743 = vadd.f32 %v6730, %v6742
        %v6744 = vpop.f32.mrf.mxu0
        %6745 = vdwg.mxu0
        %6746 = vmatpush.bf16.msra.mxu0 %v4436
        %6747 = vmatpush.bf16.msra.mxu0 %v4434
        %6748 = vmatpush.bf16.msra.mxu0 %v4432
        %6749 = vmatpush.bf16.msra.mxu0 %v4430
        %6750 = vmatpush.bf16.msra.mxu0 %v4428
        %6751 = vmatpush.bf16.msra.mxu0 %v4426
        %6752 = vmatpush.bf16.msra.mxu0 %v4424
        %6753 = vmatpush.bf16.msra.mxu0 %v4422
        %6754 = vmatmul.bf16.gmra.mxu0 %v1192
        %v6755 = vpop.f32.mrf.mxu0
        %v6756 = vadd.f32 %v6743, %v6755
        %v6757 = vpop.f32.mrf.mxu0
        %6758 = vdwg.mxu0
        %6759 = vmatpush.bf16.msra.mxu0 %v4452
        %6760 = vmatpush.bf16.msra.mxu0 %v4450
        %6761 = vmatpush.bf16.msra.mxu0 %v4448
        %6762 = vmatpush.bf16.msra.mxu0 %v4446
        %6763 = vmatpush.bf16.msra.mxu0 %v4444
        %6764 = vmatpush.bf16.msra.mxu0 %v4442
        %6765 = vmatpush.bf16.msra.mxu0 %v4440
        %6766 = vmatpush.bf16.msra.mxu0 %v4438
        %6767 = vmatmul.bf16.gmra.mxu0 %v1193
        %v6768 = vpop.f32.mrf.mxu0
        %v6769 = vadd.f32 %v6756, %v6768
        %v6770 = vpop.f32.mrf.mxu0
        %6771 = vdwg.mxu0
        %6772 = vmatpush.bf16.msra.mxu0 %v4468
        %6773 = vmatpush.bf16.msra.mxu0 %v4466
        %6774 = vmatpush.bf16.msra.mxu0 %v4464
        %6775 = vmatpush.bf16.msra.mxu0 %v4462
        %6776 = vmatpush.bf16.msra.mxu0 %v4460
        %6777 = vmatpush.bf16.msra.mxu0 %v4458
        %6778 = vmatpush.bf16.msra.mxu0 %v4456
        %6779 = vmatpush.bf16.msra.mxu0 %v4454
        %6780 = vmatmul.bf16.gmra.mxu0 %v1194
        %v6781 = vpop.f32.mrf.mxu0
        %v6782 = vadd.f32 %v6769, %v6781
        %v6783 = vpop.f32.mrf.mxu0
        %6784 = vdwg.mxu0
        %6785 = vmatpush.bf16.msra.mxu0 %v4484
        %6786 = vmatpush.bf16.msra.mxu0 %v4482
        %6787 = vmatpush.bf16.msra.mxu0 %v4480
        %6788 = vmatpush.bf16.msra.mxu0 %v4478
        %6789 = vmatpush.bf16.msra.mxu0 %v4476
        %6790 = vmatpush.bf16.msra.mxu0 %v4474
        %6791 = vmatpush.bf16.msra.mxu0 %v4472
        %6792 = vmatpush.bf16.msra.mxu0 %v4470
        %6793 = vmatmul.bf16.gmra.mxu0 %v1195
        %v6794 = vpop.f32.mrf.mxu0
        %v6795 = vadd.f32 %v6782, %v6794
        %v6796 = vpop.f32.mrf.mxu0
        %6797 = vdwg.mxu0
        %6798 = vmatpush.bf16.msra.mxu0 %v4500
        %6799 = vmatpush.bf16.msra.mxu0 %v4498
        %6800 = vmatpush.bf16.msra.mxu0 %v4496
        %6801 = vmatpush.bf16.msra.mxu0 %v4494
        %6802 = vmatpush.bf16.msra.mxu0 %v4492
        %6803 = vmatpush.bf16.msra.mxu0 %v4490
        %6804 = vmatpush.bf16.msra.mxu0 %v4488
        %6805 = vmatpush.bf16.msra.mxu0 %v4486
        %6806 = vmatmul.bf16.gmra.mxu0 %v1196
        %v6807 = vpop.f32.mrf.mxu0
        %v6808 = vadd.f32 %v6795, %v6807
        %v6809 = vpop.f32.mrf.mxu0
        %6810 = vdwg.mxu0
        %6811 = vmatpush.bf16.msra.mxu0 %v4516
        %6812 = vmatpush.bf16.msra.mxu0 %v4514
        %6813 = vmatpush.bf16.msra.mxu0 %v4512
        %6814 = vmatpush.bf16.msra.mxu0 %v4510
        %6815 = vmatpush.bf16.msra.mxu0 %v4508
        %6816 = vmatpush.bf16.msra.mxu0 %v4506
        %6817 = vmatpush.bf16.msra.mxu0 %v4504
        %6818 = vmatpush.bf16.msra.mxu0 %v4502
        %6819 = vmatmul.bf16.gmra.mxu0 %v1199
        %v6820 = vpop.f32.mrf.mxu0
        %v6821 = vadd.f32 %v6808, %v6820
        %v6822 = vpop.f32.mrf.mxu0
        %6823 = vdwg.mxu0
        %6824 = vmatpush.bf16.msra.mxu0 %v4532
        %6825 = vmatpush.bf16.msra.mxu0 %v4530
        %6826 = vmatpush.bf16.msra.mxu0 %v4528
        %6827 = vmatpush.bf16.msra.mxu0 %v4526
        %6828 = vmatpush.bf16.msra.mxu0 %v4524
        %6829 = vmatpush.bf16.msra.mxu0 %v4522
        %6830 = vmatpush.bf16.msra.mxu0 %v4520
        %6831 = vmatpush.bf16.msra.mxu0 %v4518
        %6832 = vmatmul.bf16.gmra.mxu0 %v1200
        %v6833 = vpop.f32.mrf.mxu0
        %v6834 = vadd.f32 %v6821, %v6833
        %v6835 = vpop.f32.mrf.mxu0
        %6836 = vdwg.mxu0
        %6837 = vmatpush.bf16.msra.mxu0 %v4548
        %6838 = vmatpush.bf16.msra.mxu0 %v4546
        %6839 = vmatpush.bf16.msra.mxu0 %v4544
        %6840 = vmatpush.bf16.msra.mxu0 %v4542
        %6841 = vmatpush.bf16.msra.mxu0 %v4540
        %6842 = vmatpush.bf16.msra.mxu0 %v4538
        %6843 = vmatpush.bf16.msra.mxu0 %v4536
        %6844 = vmatpush.bf16.msra.mxu0 %v4534
        %6845 = vmatmul.bf16.gmra.mxu0 %v1201
        %v6846 = vpop.f32.mrf.mxu0
        %v6847 = vadd.f32 %v6834, %v6846
        %v6848 = vpop.f32.mrf.mxu0
        %6849 = vdwg.mxu0
        %6850 = vmatpush.bf16.msra.mxu0 %v4564
        %6851 = vmatpush.bf16.msra.mxu0 %v4562
        %6852 = vmatpush.bf16.msra.mxu0 %v4560
        %6853 = vmatpush.bf16.msra.mxu0 %v4558
        %6854 = vmatpush.bf16.msra.mxu0 %v4556
        %6855 = vmatpush.bf16.msra.mxu0 %v4554
        %6856 = vmatpush.bf16.msra.mxu0 %v4552
        %6857 = vmatpush.bf16.msra.mxu0 %v4550
        %6858 = vmatmul.bf16.gmra.mxu0 %v1202
        %v6859 = vpop.f32.mrf.mxu0
        %v6860 = vadd.f32 %v6847, %v6859
        %v6861 = vpop.f32.mrf.mxu0
        %6862 = vdwg.mxu0
        %6863 = vmatpush.bf16.msra.mxu0 %v4580
        %6864 = vmatpush.bf16.msra.mxu0 %v4578
        %6865 = vmatpush.bf16.msra.mxu0 %v4576
        %6866 = vmatpush.bf16.msra.mxu0 %v4574
        %6867 = vmatpush.bf16.msra.mxu0 %v4572
        %6868 = vmatpush.bf16.msra.mxu0 %v4570
        %6869 = vmatpush.bf16.msra.mxu0 %v4568
        %6870 = vmatpush.bf16.msra.mxu0 %v4566
        %6871 = vmatmul.bf16.gmra.mxu0 %v1203
        %v6872 = vpop.f32.mrf.mxu0
        %v6873 = vadd.f32 %v6860, %v6872
        %v6874 = vpop.f32.mrf.mxu0
        %6875 = vdwg.mxu0
        %6876 = vmatpush.bf16.msra.mxu0 %v4596
        %6877 = vmatpush.bf16.msra.mxu0 %v4594
        %6878 = vmatpush.bf16.msra.mxu0 %v4592
        %6879 = vmatpush.bf16.msra.mxu0 %v4590
        %6880 = vmatpush.bf16.msra.mxu0 %v4588
        %6881 = vmatpush.bf16.msra.mxu0 %v4586
        %6882 = vmatpush.bf16.msra.mxu0 %v4584
        %6883 = vmatpush.bf16.msra.mxu0 %v4582
        %6884 = vmatmul.bf16.gmra.mxu0 %v1204
        %v6885 = vpop.f32.mrf.mxu0
        %v6886 = vadd.f32 %v6873, %v6885
        %v6887 = vpop.f32.mrf.mxu0
        %6888 = vdwg.mxu0
        %6889 = vmatpush.bf16.msra.mxu0 %v4612
        %6890 = vmatpush.bf16.msra.mxu0 %v4610
        %6891 = vmatpush.bf16.msra.mxu0 %v4608
        %6892 = vmatpush.bf16.msra.mxu0 %v4606
        %6893 = vmatpush.bf16.msra.mxu0 %v4604
        %6894 = vmatpush.bf16.msra.mxu0 %v4602
        %6895 = vmatpush.bf16.msra.mxu0 %v4600
        %6896 = vmatpush.bf16.msra.mxu0 %v4598
        %6897 = vmatmul.bf16.gmra.mxu0 %v1205
        %v6898 = vpop.f32.mrf.mxu0
        %v6899 = vadd.f32 %v6886, %v6898
        %v6900 = vpop.f32.mrf.mxu0
        %6901 = vdwg.mxu0
        %6902 = vmatpush.bf16.msra.mxu0 %v4628
        %6903 = vmatpush.bf16.msra.mxu0 %v4626
        %6904 = vmatpush.bf16.msra.mxu0 %v4624
        %6905 = vmatpush.bf16.msra.mxu0 %v4622
        %6906 = vmatpush.bf16.msra.mxu0 %v4620
        %6907 = vmatpush.bf16.msra.mxu0 %v4618
        %6908 = vmatpush.bf16.msra.mxu0 %v4616
        %6909 = vmatpush.bf16.msra.mxu0 %v4614
        %6910 = vmatmul.bf16.gmra.mxu0 %v1206
        %v6911 = vpop.f32.mrf.mxu0
        %v6912 = vadd.f32 %v6899, %v6911
        %v6913 = vpop.f32.mrf.mxu0
        %6914 = vdwg.mxu0
        %6915 = vmatpush.bf16.msra.mxu0 %v4644
        %6916 = vmatpush.bf16.msra.mxu0 %v4642
        %6917 = vmatpush.bf16.msra.mxu0 %v4640
        %6918 = vmatpush.bf16.msra.mxu0 %v4638
        %6919 = vmatpush.bf16.msra.mxu0 %v4636
        %6920 = vmatpush.bf16.msra.mxu0 %v4634
        %6921 = vmatpush.bf16.msra.mxu0 %v4632
        %6922 = vmatpush.bf16.msra.mxu0 %v4630
        %6923 = vmatmul.bf16.gmra.mxu0 %v1209
        %v6924 = vpop.f32.mrf.mxu0
        %v6925 = vadd.f32 %v6912, %v6924
        %v6926 = vpop.f32.mrf.mxu0
        %6927 = vdwg.mxu0
        %6928 = vmatpush.bf16.msra.mxu0 %v4660
        %6929 = vmatpush.bf16.msra.mxu0 %v4658
        %6930 = vmatpush.bf16.msra.mxu0 %v4656
        %6931 = vmatpush.bf16.msra.mxu0 %v4654
        %6932 = vmatpush.bf16.msra.mxu0 %v4652
        %6933 = vmatpush.bf16.msra.mxu0 %v4650
        %6934 = vmatpush.bf16.msra.mxu0 %v4648
        %6935 = vmatpush.bf16.msra.mxu0 %v4646
        %6936 = vmatmul.bf16.gmra.mxu0 %v1210
        %v6937 = vpop.f32.mrf.mxu0
        %v6938 = vadd.f32 %v6925, %v6937
        %v6939 = vpop.f32.mrf.mxu0
        %6940 = vdwg.mxu0
        %6941 = vmatpush.bf16.msra.mxu0 %v4676
        %6942 = vmatpush.bf16.msra.mxu0 %v4674
        %6943 = vmatpush.bf16.msra.mxu0 %v4672
        %6944 = vmatpush.bf16.msra.mxu0 %v4670
        %6945 = vmatpush.bf16.msra.mxu0 %v4668
        %6946 = vmatpush.bf16.msra.mxu0 %v4666
        %6947 = vmatpush.bf16.msra.mxu0 %v4664
        %6948 = vmatpush.bf16.msra.mxu0 %v4662
        %6949 = vmatmul.bf16.gmra.mxu0 %v1211
        %v6950 = vpop.f32.mrf.mxu0
        %v6951 = vadd.f32 %v6938, %v6950
        %v6952 = vpop.f32.mrf.mxu0
        %6953 = vdwg.mxu0
        %6954 = vmatpush.bf16.msra.mxu0 %v4692
        %6955 = vmatpush.bf16.msra.mxu0 %v4690
        %6956 = vmatpush.bf16.msra.mxu0 %v4688
        %6957 = vmatpush.bf16.msra.mxu0 %v4686
        %6958 = vmatpush.bf16.msra.mxu0 %v4684
        %6959 = vmatpush.bf16.msra.mxu0 %v4682
        %6960 = vmatpush.bf16.msra.mxu0 %v4680
        %6961 = vmatpush.bf16.msra.mxu0 %v4678
        %6962 = vmatmul.bf16.gmra.mxu0 %v1212
        %v6963 = vpop.f32.mrf.mxu0
        %v6964 = vadd.f32 %v6951, %v6963
        %v6965 = vpop.f32.mrf.mxu0
        %6966 = vdwg.mxu0
        %6967 = vmatpush.bf16.msra.mxu0 %v4708
        %6968 = vmatpush.bf16.msra.mxu0 %v4706
        %6969 = vmatpush.bf16.msra.mxu0 %v4704
        %6970 = vmatpush.bf16.msra.mxu0 %v4702
        %6971 = vmatpush.bf16.msra.mxu0 %v4700
        %6972 = vmatpush.bf16.msra.mxu0 %v4698
        %6973 = vmatpush.bf16.msra.mxu0 %v4696
        %6974 = vmatpush.bf16.msra.mxu0 %v4694
        %6975 = vmatmul.bf16.gmra.mxu0 %v1213
        %v6976 = vpop.f32.mrf.mxu0
        %v6977 = vadd.f32 %v6964, %v6976
        %v6978 = vpop.f32.mrf.mxu0
        %6979 = vdwg.mxu0
        %6980 = vmatpush.bf16.msra.mxu0 %v4724
        %6981 = vmatpush.bf16.msra.mxu0 %v4722
        %6982 = vmatpush.bf16.msra.mxu0 %v4720
        %6983 = vmatpush.bf16.msra.mxu0 %v4718
        %6984 = vmatpush.bf16.msra.mxu0 %v4716
        %6985 = vmatpush.bf16.msra.mxu0 %v4714
        %6986 = vmatpush.bf16.msra.mxu0 %v4712
        %6987 = vmatpush.bf16.msra.mxu0 %v4710
        %6988 = vmatmul.bf16.gmra.mxu0 %v1214
        %v6989 = vpop.f32.mrf.mxu0
        %v6990 = vadd.f32 %v6977, %v6989
        %v6991 = vpop.f32.mrf.mxu0
        %6992 = vdwg.mxu0
        %v6995 = vrot.slane %v6990, 6
        %vm6996 = vcmask 1041408
        %v6997 = vsel %vm6996, %v6288, %v6995
        %v6999 = vadd.f32 %v275, %v6997
        %7000 = vst [vmem:[#allocation2] sm:$0xf] %v6999
        %p7001 = scmp.eq.s32.totalorder %s28, 2
        // Predicated region
        $region45: #{custom_policy_forward.3} parent=31 // pred_check
          %p7002 = pneg %p7001
        $region46: #{custom_policy_forward.3} parent=31 // pred_check_branch
          %7004 = sbr.rel (%p7002) target = $region48
        $region47: #{custom_policy_forward.3} parent=31 // pred_region
          %v7005 = vld [vmem:[#allocation2] sm:$0xf]
          %v7006 = vld [vmem:[%s228] sm:$0x3]
          %v7008 = vperm.slane %v7006, 0
          %v7009 = vperm.slane %v7006, 1
          %v7010 = vrot.slane %v7009, 6
          %v7011 = vsel %vm6996, %v7008, %v7010
          %v7013 = vadd.f32 %v7005, %v7011
          %v7014 = vmax.f32 %v7013, 0.0
          %7015 = vst [vmem:[%s260] sm:$0xf] %v7014
        $region48: #{custom_policy_forward.3} parent=31 // pred_fallthru
          _
        %s7016 = sand.u32 %s123, 1
        %s7017 = scalar_lea.sflag [#allocation5], %s7016
        %s7018 = sand.u32 %s123, 1
        %s7019 = smul.addr %s7018, 4
        %s7020 = scalar_lea.vmem [#allocation8], %s7019
        // Predicated region
        $region49: #{custom_policy_forward.3} parent=31 // pred_check
          %p7021 = pneg %p133
        $region50: #{custom_policy_forward.3} parent=31 // pred_check_branch
          %7023 = sbr.rel (%p7021) target = $region52
        $region51: #{custom_policy_forward.3} parent=31 // pred_region
          %s7024 = smul.u32 2, %s27
          %7026 = vsyncadd %s7017, 0
          %s7027 = smul.addr %s7024, 2
          %s7028 = scalar_lea.hbm %s3, %s7027
          %s7030 = sshll.u32 %s7020, 4
          %s7031 = int_to_ptr.vmem [resolvable:$true] %s7030
          %s7032 = sshll.u32 %s7028, 4
          %s7033 = int_to_ptr.hbm [resolvable:$true] %s7032
          %7035 = dma.vmem_to_hbm [thread:$0]  %s7031, 64, %s7033, %s7017
        $region52: #{custom_policy_forward.3} parent=31 // pred_fallthru
          _
      $region32: #{custom_policy_forward.3} parent=5 // pred_fallthru
        _
      %p7036 = scmp.le.s32.totalorder 2, %s18
      // Predicated region
      $region53: #{custom_policy_forward.3} parent=5 // pred_check
        %p7037 = pneg %p7036
      $region54: #{custom_policy_forward.3} parent=5 // pred_check_branch
        %7039 = sbr.rel (%p7037) target = $region56
      $region55: #{custom_policy_forward.3} parent=5 // pred_region
        %s7040 = ssub.s32 %s18, 2
        // Predicated region
        $region57: #{custom_policy_forward.3} parent=55 // pred_check
          %p7041 = pneg %p139
        $region58: #{custom_policy_forward.3} parent=55 // pred_check_branch
          %7043 = sbr.rel (%p7041) target = $region60
        $region59: #{custom_policy_forward.3} parent=55 // pred_region
          %s7044 = sand.u32 %s124, 1
          %s7045 = scalar_lea.sflag [#allocation5], %s7044
          %s7046 = sand.u32 %s124, 1
          %s7047 = smul.addr %s7046, 4
          %s7048 = scalar_lea.vmem [#allocation8], %s7047
          %7050 = dma.done %s7045, 64
        $region60: #{custom_policy_forward.3} parent=55 // pred_fallthru
          _
      $region56: #{custom_policy_forward.3} parent=5 // pred_fallthru
        _
    $region6: #{custom_policy_forward.3} parent=1 // loop_footer
      %s22 = sadd.s32 1, %s18
    $region7: #{custom_policy_forward.3} parent=1 // loop_footer_branch
      %17 = sbr.rel target = $region3
    $region8: #{custom_policy_forward.3} parent=1 // loop_exit
      _
    %7051 = vsyncpa [#allocation4], 1
    %s7052 = scalar_lea.sflag [#allocation4], 1
    %7053 = vsyncpa %s7052, 1
    %7054 = vsyncpa [#allocation7], 1
    %s7055 = scalar_lea.sflag [#allocation7], 1
    %7056 = vsyncpa %s7055, 1
    %7057 = vsyncpa [#allocation5], 1
    %s7058 = scalar_lea.sflag [#allocation5], 1
    %7059 = vsyncpa %s7058, 1

</llo_original>
